<compile_context>
chip_gen: v5e
topology: v5e:2x2
jax: 0.10.0
libtpu: 0.0.40
codegen_flags: <defaults>
</compile_context>

<pallas_src>
import math
import functools

import jax
import jax.numpy as jnp
from jax import lax
from jax.experimental import pallas as pl
from jax.experimental.pallas import tpu as pltpu


def _round_up(x, m):
    return ((x + m - 1) // m) * m


def powerlaw_kernel(gx_ref, whh_ref, p_ref,
                    h0_ref, c0_ref, k0_ref,
                    out_ref, hf_ref, cf_ref, kf_ref,
                    h_sc, c_sc, k_sc,
                    *, hidden_p, time_block, tail_valid, epsilon):
    """One grid step = `time_block` recurrence steps for one batch tile.

    Grid = (batch tiles [parallel], time blocks [arbitrary/serial]).
    State (h, c, k) stays resident in VMEM scratch across time blocks.
    """
    tb = pl.program_id(1)                    # time-block index (serial axis)
    nt = pl.num_programs(1)
    Hp = hidden_p

    # Load the initial state at the start of each batch tile's time sweep.
    @pl.when(tb == 0)
    def _():
        h_sc[...] = h0_ref[...]
        c_sc[...] = c0_ref[...]
        k_sc[...] = k0_ref[...]

    # Loop-invariant values hoisted out of the unrolled time loop
    # (JAX does not CSE broadcast_in_dim; re-broadcasting per step is waste).
    w = whh_ref[...]                                   # (Hp, 3Hp) f32 or bf16
    p_b = jnp.broadcast_to(p_ref[...], h_sc.shape)     # (BB, Hp)
    t0 = (tb * time_block).astype(jnp.float32)         # global t of step 0
    not_last = tb < nt - 1                             # scalar, for tail mask

    h = h_sc[...]
    c = c_sc[...]
    k = k_sc[...]

    # Static Python unroll over the time block: every Ref index below is a
    # compile-time constant, so all loads/stores are static (lane-dense,
    # Hp multiple of 128) slices.
    for i in range(time_block):
        # gates = gates_x[t] + h @ W_hh^T   (x-projection precomputed outside;
        # matmul operands optionally bf16, accumulation in f32).
        gates = gx_ref[:, i, :] + jnp.dot(h.astype(w.dtype), w,
                                          preferred_element_type=jnp.float32)

        # Gate columns are 128-lane aligned (each gate owns an Hp block).
        rgate = jax.nn.sigmoid(gates[:, 0:Hp])
        outgate = jax.nn.sigmoid(gates[:, Hp:2 * Hp])
        cellgate = jnp.tanh(gates[:, 2 * Hp:3 * Hp])

        tf = t0 + float(i)
        k_new = rgate * (tf - epsilon) + (1.0 - rgate) * k
        d = tf - k_new
        base = (d + epsilon) / (d + 1.0)
        forgetgate = jnp.power(base, p_b)
        c_new = forgetgate * c + (1.0 - forgetgate) * cellgate
        h_new = outgate * jnp.tanh(c_new)

        # Per-step output, batch-major (padded rows/lanes sliced off outside).
        out_ref[:, i, :] = h_new.astype(out_ref.dtype)

        if i < tail_valid:
            # This step index can never be sequence padding in any block.
            h, c, k = h_new, c_new, k_new
        else:
            # Only the last time block carries padded steps; keep state exact.
            h = jnp.where(not_last, h_new, h)
            c = jnp.where(not_last, c_new, c)
            k = jnp.where(not_last, k_new, k)

    # Persist state for the next time block of this batch tile.
    h_sc[...] = h
    c_sc[...] = c
    k_sc[...] = k

    # Final-state outputs: written once, on the last time block only.
    @pl.when(tb == nt - 1)
    def _():
        hf_ref[...] = h
        cf_ref[...] = c
        kf_ref[...] = k


def powerlaw_layer(inputs, weight_ih, weight_hh, bias, p_vec, hidden=None, *,
                   epsilon=0.001, time_block=16, batch_block_max=128,
                   prefer_multicore=True, matmul_dtype=jnp.float32):
    """PowerLawLayerJIT.forward (batch_first=True, learn_p=False).

    inputs:    (B, T, I) float32
    weight_ih: (3H, I),  weight_hh: (3H, H),  bias: (3H,),  p_vec: (H,)
    hidden:    None or (h, c, k) each (B, H)
    matmul_dtype: jnp.float32 (exact, default) or jnp.bfloat16 (native MXU
                  precision; W_hh^T / h cast, f32 accumulate, ~1e-3 level err).
    Returns (outputs (B, T, H), (h, c, k)).
    (For learn_p=True pass jax.nn.sigmoid(p) as p_vec.)
    """
    B, T, I = inputs.shape
    H = weight_hh.shape[1]
    f32 = jnp.float32

    x = inputs.astype(f32)
    w_ih = weight_ih.astype(f32)
    w_hh = weight_hh.astype(f32)
    b = bias.astype(f32)
    p = p_vec.astype(f32)

    # ---- tile selection -------------------------------------------------
    Hp = _round_up(H, 128)                    # lanes

    # Batch tile: as large as allowed for MXU row fill, but capped so the
    # parallel batch axis keeps >= 2 tiles (2 TensorCores on v7x) when B allows.
    breq = _round_up(B, 8)                    # sublane alignment
    BB = min(breq, batch_block_max)
    if prefer_multicore and breq >= 16:
        BB = min(BB, _round_up((breq + 1) // 2, 8))
    Bp = _round_up(B, BB)
    NB = Bp // BB

    # Time block: amortizes per-grid-step overhead; shrunk when the batch tile
    # is large so the statically-unrolled loop stays out of vreg spills.
    TT = min(time_block, T)
    if BB >= 64:
        TT = min(TT, 8)
    if TT < T and TT % 8 != 0:
        TT = max(8, (TT // 8) * 8)
    Tp = _round_up(T, TT)
    NT = Tp // TT
    tail_valid = T - (NT - 1) * TT            # valid steps in the last block

    # ---- hoisted input projection ---------------------------------------
    # gates_x = x @ W_ih^T + bias, with the gate-column padding folded into
    # the (zero-padded) weight/bias so the einsum emits gx already laid out
    # with each gate at a 128-aligned Hp column block. No repack, no transpose.
    w_ih_p = jnp.zeros((3, Hp, I), f32).at[:, :H, :].set(
        w_ih.reshape(3, H, I)).reshape(3 * Hp, I)
    b_p = jnp.zeros((3, Hp), f32).at[:, :H].set(b.reshape(3, H)).reshape(3 * Hp)
    gx = jnp.einsum('bti,gi->btg', x, w_ih_p) + b_p          # (B, T, 3Hp)
    gx_p = jnp.pad(gx, ((0, Bp - B), (0, Tp - T), (0, 0)))   # (Bp, Tp, 3Hp)

    # Padded recurrent weight W_hh^T: (Hp, 3Hp), zero rows/cols so padded
    # lanes never feed real lanes. Stored in matmul_dtype (bf16 = native MXU
    # precision, halves its VMEM footprint).
    whhT = jnp.zeros((Hp, 3, Hp), f32).at[:H, :, :H].set(
        jnp.transpose(w_hh.reshape(3, H, H), (2, 0, 1)))
    whhT_p = whhT.reshape(Hp, 3 * Hp).astype(matmul_dtype)

    # p padded with zeros -> forgetgate == 1 on padded lanes (keeps them at 0).
    p_p = jnp.zeros((1, Hp), f32).at[0, :H].set(p)

    if hidden is None:
        h0 = jnp.zeros((Bp, Hp), f32)
        c0 = jnp.zeros((Bp, Hp), f32)
        k0 = jnp.full((Bp, Hp), -1.0, f32)
    else:
        h_in, c_in, k_in = hidden
        h0 = jnp.pad(h_in.astype(f32), ((0, Bp - B), (0, Hp - H)))
        c0 = jnp.pad(c_in.astype(f32), ((0, Bp - B), (0, Hp - H)))
        k0 = jnp.pad(k_in.astype(f32), ((0, Bp - B), (0, Hp - H)),
                     constant_values=-1.0)

    # ---- explicit VMEM budget (double-buffered streams + constants) ------
    gx_bytes = BB * TT * 3 * Hp * 4
    out_bytes = BB * TT * Hp * 4
    w_bytes = Hp * 3 * Hp * jnp.dtype(matmul_dtype).itemsize
    st_bytes = BB * Hp * 4
    vmem_need = (2 * (gx_bytes + out_bytes)           # pipelined in/out tiles
                 + 2 * (w_bytes + Hp * 4)             # W_hh^T + p (const index)
                 + 2 * 6 * st_bytes                   # h0/c0/k0 in + finals out
                 + 3 * st_bytes)                      # state scratch
    vmem_limit = int(min(64 << 20,
                         max(32 << 20, int(1.5 * vmem_need) + (2 << 20))))

    kernel = functools.partial(powerlaw_kernel, hidden_p=Hp, time_block=TT,
                               tail_valid=tail_valid, epsilon=epsilon)

    out_p, hF, cF, kF = pl.pallas_call(
        kernel,
        out_shape=(
            jax.ShapeDtypeStruct((Bp, Tp, Hp), f32),
            jax.ShapeDtypeStruct((Bp, Hp), f32),
            jax.ShapeDtypeStruct((Bp, Hp), f32),
            jax.ShapeDtypeStruct((Bp, Hp), f32),
        ),
        grid_spec=pltpu.PrefetchScalarGridSpec(
            num_scalar_prefetch=0,
            grid=(NB, NT),                       # (batch tiles, time blocks)
            in_specs=[
                pl.BlockSpec((BB, TT, 3 * Hp), lambda bb, tt: (bb, tt, 0)),  # gates_x
                pl.BlockSpec((Hp, 3 * Hp), lambda bb, tt: (0, 0)),           # W_hh^T
                pl.BlockSpec((1, Hp), lambda bb, tt: (0, 0)),                # p
                pl.BlockSpec((BB, Hp), lambda bb, tt: (bb, 0)),              # h0
                pl.BlockSpec((BB, Hp), lambda bb, tt: (bb, 0)),              # c0
                pl.BlockSpec((BB, Hp), lambda bb, tt: (bb, 0)),              # k0
            ],
            out_specs=[
                pl.BlockSpec((BB, TT, Hp), lambda bb, tt: (bb, tt, 0)),      # per-step h
                pl.BlockSpec((BB, Hp), lambda bb, tt: (bb, 0)),              # final h
                pl.BlockSpec((BB, Hp), lambda bb, tt: (bb, 0)),              # final c
                pl.BlockSpec((BB, Hp), lambda bb, tt: (bb, 0)),              # final k
            ],
            scratch_shapes=[
                pltpu.VMEM((BB, Hp), f32),   # h state
                pltpu.VMEM((BB, Hp), f32),   # c state
                pltpu.VMEM((BB, Hp), f32),   # k state
            ],
        ),
        compiler_params=pltpu.CompilerParams(
            # batch tiles are independent (2 TCs on v7x); time is a serial
            # recurrence.
            dimension_semantics=("parallel", "arbitrary"),
            vmem_limit_bytes=vmem_limit,
        ),
    )(gx_p, whhT_p, p_p, h0, c0, k0)

    outputs = out_p[:B, :T, :H]                            # already (B, T, H)
    return outputs, (hF[:B, :H], cF[:B, :H], kF[:B, :H])


def powerlaw_layer_ref(inputs, weight_ih, weight_hh, bias, p_vec, hidden=None,
                       *, epsilon=0.001):
    """Pure-JAX reference of the same forward pass (for verification)."""
    B, T, I = inputs.shape
    H = weight_hh.shape[1]
    if hidden is None:
        h = jnp.zeros((B, H)); c = jnp.zeros((B, H)); k = jnp.zeros((B, H)) - 1.0
    else:
        h, c, k = hidden
    x_tbi = jnp.transpose(inputs, (1, 0, 2))

    def step(carry, xt):
        h, c, k, t = carry
        gates = xt @ weight_ih.T + h @ weight_hh.T + bias
        r = jax.nn.sigmoid(gates[:, :H])
        o = jax.nn.sigmoid(gates[:, H:2 * H])
        g = jnp.tanh(gates[:, 2 * H:])
        k_new = r * (t - epsilon) + (1 - r) * k
        f = jnp.power((t - k_new + epsilon) / (t - k_new + 1.0), p_vec[None, :])
        c_new = f * c + (1 - f) * g
        h_new = o * jnp.tanh(c_new)
        return (h_new, c_new, k_new, t + 1.0), h_new

    (hF, cF, kF, _), hs = lax.scan(step, (h, c, k, jnp.float32(0.0)), x_tbi)
    return jnp.transpose(hs, (1, 0, 2)), (hF, cF, kF)


def _check(out, st, out_r, st_r, tag, atol=1e-4, rtol=1e-4):
    assert jnp.allclose(out, out_r, atol=atol, rtol=rtol), f"{tag}: outputs"
    for a, b, name in zip(st, st_r, ("h", "c", "k")):
        assert jnp.allclose(a, b, atol=atol, rtol=rtol), f"{tag}: final {name}"


if __name__ == "__main__":
    # Shapes consistent with the module: input_size=10, hidden_size=32, p=0.2,
    # learn_p=False, epsilon=0.001.
    B, T, I, H = 2, 8, 10, 32
    p_const = 0.2
    epsilon = 0.001

    key = jax.random.PRNGKey(0)
    k_x, k_ih, k_hh, k_b, k_x2, k_h2, k_c2, k_x3 = jax.random.split(key, 8)

    stdv = 1.0 / math.sqrt(H)
    weight_ih = jax.random.uniform(k_ih, (3 * H, I), jnp.float32, -stdv, stdv)
    weight_hh = jax.random.uniform(k_hh, (3 * H, H), jnp.float32, -stdv, stdv)
    bias = jax.random.uniform(k_b, (3 * H,), jnp.float32, -stdv, stdv)
    p_vec = jnp.full((H,), p_const, jnp.float32)   # learn_p=False

    # --- case 1: default hidden=None, exact f32 matmul path ---
    x = jax.random.normal(k_x, (B, T, I), jnp.float32)
    out, st = powerlaw_layer(x, weight_ih, weight_hh, bias, p_vec,
                             hidden=None, epsilon=epsilon,
                             matmul_dtype=jnp.float32)
    jax.block_until_ready(out)
    out_r, st_r = powerlaw_layer_ref(x, weight_ih, weight_hh, bias, p_vec,
                                     hidden=None, epsilon=epsilon)
    assert out.shape == (B, T, H)
    _check(out, st, out_r, st_r, "case1")

    # --- case 2: explicit hidden, batch/time not multiples of the tiles ---
    B2, T2 = 3, 13
    x2 = jax.random.normal(k_x2, (B2, T2, I), jnp.float32)
    hidden2 = (0.1 * jax.random.normal(k_h2, (B2, H), jnp.float32),
               0.1 * jax.random.normal(k_c2, (B2, H), jnp.float32),
               jnp.zeros((B2, H), jnp.float32) - 1.0)
    out2, st2 = powerlaw_layer(x2, weight_ih, weight_hh, bias, p_vec,
                               hidden=hidden2, epsilon=epsilon,
                               matmul_dtype=jnp.float32)
    jax.block_until_ready(out2)
    out2_r, st2_r = powerlaw_layer_ref(x2, weight_ih, weight_hh, bias, p_vec,
                                       hidden=hidden2, epsilon=epsilon)
    assert out2.shape == (B2, T2, H)
    _check(out2, st2, out2_r, st2_r, "case2")

    # --- case 3: larger batch exercising BB>8 / 2 batch tiles + bf16 MXU ---
    B3, T3 = 96, 16
    x3 = jax.random.normal(k_x3, (B3, T3, I), jnp.float32)
    out3, st3 = powerlaw_layer(x3, weight_ih, weight_hh, bias, p_vec,
                               hidden=None, epsilon=epsilon,
                               matmul_dtype=jnp.bfloat16)
    jax.block_until_ready(out3)
    out3_r, st3_r = powerlaw_layer_ref(x3, weight_ih, weight_hh, bias, p_vec,
                                       hidden=None, epsilon=epsilon)
    assert out3.shape == (B3, T3, H)
    _check(out3, st3, out3_r, st3_r, "case3(bf16)", atol=3e-2, rtol=3e-2)

    print("KERNEL_OK")
</pallas_src>

<mosaic_0001>
module attributes {stable_mosaic.version = 11 : i64} {
  func.func @powerlaw_kernel(%arg0: i32, %arg1: i32, %arg2: memref<8x8x384xf32, #tpu.memory_space<vmem>>, %arg3: memref<128x384xf32, #tpu.memory_space<vmem>>, %arg4: memref<1x128xf32, #tpu.memory_space<vmem>>, %arg5: memref<8x128xf32, #tpu.memory_space<vmem>>, %arg6: memref<8x128xf32, #tpu.memory_space<vmem>>, %arg7: memref<8x128xf32, #tpu.memory_space<vmem>>, %arg8: memref<8x8x128xf32, #tpu.memory_space<vmem>>, %arg9: memref<8x128xf32, #tpu.memory_space<vmem>>, %arg10: memref<8x128xf32, #tpu.memory_space<vmem>>, %arg11: memref<8x128xf32, #tpu.memory_space<vmem>>, %arg12: memref<8x128xf32, #tpu.memory_space<vmem>>, %arg13: memref<8x128xf32, #tpu.memory_space<vmem>>, %arg14: memref<8x128xf32, #tpu.memory_space<vmem>>) attributes {dimension_semantics = [#tpu.dimension_semantics<parallel>, #tpu.dimension_semantics<arbitrary>], iteration_bounds = array<i64: 1, 1>, scalar_prefetch = 0 : i64, scratch_operands = 3 : i64, tpu.core_type = #tpu.core_type<tc>, window_params = [{transform_indices = @transform_0, window_bounds = array<i64: 8, 8, 384>}, {pipeline_mode = #tpu.pipeline_mode<synchronous>, transform_indices = @transform_1, window_bounds = array<i64: 128, 384>}, {pipeline_mode = #tpu.pipeline_mode<synchronous>, transform_indices = @transform_2, window_bounds = array<i64: 1, 128>}, {transform_indices = @transform_3, window_bounds = array<i64: 8, 128>}, {transform_indices = @transform_4, window_bounds = array<i64: 8, 128>}, {transform_indices = @transform_5, window_bounds = array<i64: 8, 128>}, {transform_indices = @transform_6, window_bounds = array<i64: 8, 8, 128>}, {transform_indices = @transform_7, window_bounds = array<i64: 8, 128>}, {transform_indices = @transform_8, window_bounds = array<i64: 8, 128>}, {transform_indices = @transform_9, window_bounds = array<i64: 8, 128>}]} {
    %c0_i32 = arith.constant 0 : i32
    %0 = arith.cmpi eq, %arg1, %c0_i32 : i32
    %1 = arith.extui %0 : i1 to i32
    %c0_i32_0 = arith.constant 0 : i32
    %2 = arith.cmpi ne, %1, %c0_i32_0 : i32
    scf.if %2 {
      %c0_130 = arith.constant 0 : index
      %c0_131 = arith.constant 0 : index
      %370 = vector.load %arg5[%c0_130, %c0_131] : memref<8x128xf32, #tpu.memory_space<vmem>>, vector<8x128xf32>
      %c0_132 = arith.constant 0 : index
      %c0_133 = arith.constant 0 : index
      %371 = vector.load %arg12[%c0_132, %c0_133] : memref<8x128xf32, #tpu.memory_space<vmem>>, vector<8x128xf32>
      tpu.vector_store %arg12[%c0_132, %c0_133], %370 {strides = array<i32>} : memref<8x128xf32, #tpu.memory_space<vmem>>, vector<8x128xf32>,
      %c0_134 = arith.constant 0 : index
      %c0_135 = arith.constant 0 : index
      %372 = vector.load %arg6[%c0_134, %c0_135] : memref<8x128xf32, #tpu.memory_space<vmem>>, vector<8x128xf32>
      %c0_136 = arith.constant 0 : index
      %c0_137 = arith.constant 0 : index
      %373 = vector.load %arg13[%c0_136, %c0_137] : memref<8x128xf32, #tpu.memory_space<vmem>>, vector<8x128xf32>
      tpu.vector_store %arg13[%c0_136, %c0_137], %372 {strides = array<i32>} : memref<8x128xf32, #tpu.memory_space<vmem>>, vector<8x128xf32>,
      %c0_138 = arith.constant 0 : index
      %c0_139 = arith.constant 0 : index
      %374 = vector.load %arg7[%c0_138, %c0_139] : memref<8x128xf32, #tpu.memory_space<vmem>>, vector<8x128xf32>
      %c0_140 = arith.constant 0 : index
      %c0_141 = arith.constant 0 : index
      %375 = vector.load %arg14[%c0_140, %c0_141] : memref<8x128xf32, #tpu.memory_space<vmem>>, vector<8x128xf32>
      tpu.vector_store %arg14[%c0_140, %c0_141], %374 {strides = array<i32>} : memref<8x128xf32, #tpu.memory_space<vmem>>, vector<8x128xf32>,
    } else {
    }
    %c0 = arith.constant 0 : index
    %c0_1 = arith.constant 0 : index
    %3 = vector.load %arg3[%c0, %c0_1] : memref<128x384xf32, #tpu.memory_space<vmem>>, vector<128x384xf32>
    %c0_2 = arith.constant 0 : index
    %c0_3 = arith.constant 0 : index
    %4 = vector.load %arg4[%c0_2, %c0_3] : memref<1x128xf32, #tpu.memory_space<vmem>>, vector<1x128xf32>
    %5 = vector.shape_cast %4 : vector<1x128xf32> to vector<1x128xf32>
    %6 = vector.broadcast %5 : vector<1x128xf32> to vector<8x128xf32>
    %c8_i32 = arith.constant 8 : i32
    %7 = arith.muli %arg1, %c8_i32 : i32
    %8 = arith.sitofp %7 : i32 to f32
    %c0_4 = arith.constant 0 : index
    %c0_5 = arith.constant 0 : index
    %9 = vector.load %arg12[%c0_4, %c0_5] : memref<8x128xf32, #tpu.memory_space<vmem>>, vector<8x128xf32>
    %c0_6 = arith.constant 0 : index
    %c0_7 = arith.constant 0 : index
    %10 = vector.load %arg13[%c0_6, %c0_7] : memref<8x128xf32, #tpu.memory_space<vmem>>, vector<8x128xf32>
    %c0_8 = arith.constant 0 : index
    %c0_9 = arith.constant 0 : index
    %11 = vector.load %arg14[%c0_8, %c0_9] : memref<8x128xf32, #tpu.memory_space<vmem>>, vector<8x128xf32>
    %c0_10 = arith.constant 0 : index
    %c0_11 = arith.constant 0 : index
    %c0_12 = arith.constant 0 : index
    %12 = vector.load %arg2[%c0_10, %c0_11, %c0_12] : memref<8x8x384xf32, #tpu.memory_space<vmem>>, vector<8x1x384xf32>
    %13 = vector.shape_cast %12 : vector<8x1x384xf32> to vector<8x384xf32>
    %cst = arith.constant dense<0.000000e+00> : vector<8x384xf32>
    %14 = tpu.matmul %9, %3, %cst {dimension_numbers = #tpu.dot_dimension_numbers<[1], [0], [0], [1], [0, 0, 1, 1], [], []>} : vector<8x128xf32>, vector<128x384xf32>, vector<8x384xf32> -> vector<8x384xf32>
    %15 = arith.addf %13, %14 : vector<8x384xf32>
    %16 = vector.extract_strided_slice %15 {offsets = [0, 0], sizes = [8, 128], strides = [1, 1]} : vector<8x384xf32> to vector<8x128xf32>
    %17 = arith.negf %16 : vector<8x128xf32>
    %18 = math.exp %17 : vector<8x128xf32>
    %cst_13 = arith.constant 1.000000e+00 : f32
    %19 = vector.broadcast %cst_13 : f32 to vector<8x128xf32>
    %20 = arith.addf %19, %18 : vector<8x128xf32>
    %21 = arith.divf %19, %20 : vector<8x128xf32>
    %22 = vector.extract_strided_slice %15 {offsets = [0, 128], sizes = [8, 128], strides = [1, 1]} : vector<8x384xf32> to vector<8x128xf32>
    %23 = arith.negf %22 : vector<8x128xf32>
    %24 = math.exp %23 : vector<8x128xf32>
    %cst_14 = arith.constant 1.000000e+00 : f32
    %25 = vector.broadcast %cst_14 : f32 to vector<8x128xf32>
    %26 = arith.addf %25, %24 : vector<8x128xf32>
    %27 = arith.divf %25, %26 : vector<8x128xf32>
    %28 = vector.extract_strided_slice %15 {offsets = [0, 256], sizes = [8, 128], strides = [1, 1]} : vector<8x384xf32> to vector<8x128xf32>
    %29 = math.tanh %28 : vector<8x128xf32>
    %cst_15 = arith.constant 0.000000e+00 : f32
    %30 = arith.addf %8, %cst_15 : f32
    %cst_16 = arith.constant 1.000000e-03 : f32
    %31 = arith.subf %30, %cst_16 : f32
    %32 = vector.broadcast %31 : f32 to vector<8x128xf32>
    %33 = arith.mulf %21, %32 : vector<8x128xf32>
    %cst_17 = arith.constant 1.000000e+00 : f32
    %34 = vector.broadcast %cst_17 : f32 to vector<8x128xf32>
    %35 = arith.subf %34, %21 : vector<8x128xf32>
    %36 = arith.mulf %35, %11 : vector<8x128xf32>
    %37 = arith.addf %33, %36 : vector<8x128xf32>
    %38 = vector.broadcast %30 : f32 to vector<8x128xf32>
    %39 = arith.subf %38, %37 : vector<8x128xf32>
    %cst_18 = arith.constant 1.000000e-03 : f32
    %40 = vector.broadcast %cst_18 : f32 to vector<8x128xf32>
    %41 = arith.addf %39, %40 : vector<8x128xf32>
    %cst_19 = arith.constant 1.000000e+00 : f32
    %42 = vector.broadcast %cst_19 : f32 to vector<8x128xf32>
    %43 = arith.addf %39, %42 : vector<8x128xf32>
    %44 = arith.divf %41, %43 : vector<8x128xf32>
    %45 = math.powf %44, %6 : vector<8x128xf32>
    %46 = arith.mulf %45, %10 : vector<8x128xf32>
    %cst_20 = arith.constant 1.000000e+00 : f32
    %47 = vector.broadcast %cst_20 : f32 to vector<8x128xf32>
    %48 = arith.subf %47, %45 : vector<8x128xf32>
    %49 = arith.mulf %48, %29 : vector<8x128xf32>
    %50 = arith.addf %46, %49 : vector<8x128xf32>
    %51 = math.tanh %50 : vector<8x128xf32>
    %52 = arith.mulf %27, %51 : vector<8x128xf32>
    %c0_21 = arith.constant 0 : index
    %c0_22 = arith.constant 0 : index
    %c0_23 = arith.constant 0 : index
    %53 = vector.load %arg8[%c0_21, %c0_22, %c0_23] : memref<8x8x128xf32, #tpu.memory_space<vmem>>, vector<8x1x128xf32>
    %54 = vector.shape_cast %53 : vector<8x1x128xf32> to vector<8x128xf32>
    %55 = vector.shape_cast %52 : vector<8x128xf32> to vector<8x1x128xf32>
    tpu.vector_store %arg8[%c0_21, %c0_22, %c0_23], %55 {strides = array<i32>} : memref<8x8x128xf32, #tpu.memory_space<vmem>>, vector<8x1x128xf32>,
    %c0_24 = arith.constant 0 : index
    %c1 = arith.constant 1 : index
    %c0_25 = arith.constant 0 : index
    %56 = vector.load %arg2[%c0_24, %c1, %c0_25] : memref<8x8x384xf32, #tpu.memory_space<vmem>>, vector<8x1x384xf32>
    %57 = vector.shape_cast %56 : vector<8x1x384xf32> to vector<8x384xf32>
    %cst_26 = arith.constant dense<0.000000e+00> : vector<8x384xf32>
    %58 = tpu.matmul %52, %3, %cst_26 {dimension_numbers = #tpu.dot_dimension_numbers<[1], [0], [0], [1], [0, 0, 1, 1], [], []>} : vector<8x128xf32>, vector<128x384xf32>, vector<8x384xf32> -> vector<8x384xf32>
    %59 = arith.addf %57, %58 : vector<8x384xf32>
    %60 = vector.extract_strided_slice %59 {offsets = [0, 0], sizes = [8, 128], strides = [1, 1]} : vector<8x384xf32> to vector<8x128xf32>
    %61 = arith.negf %60 : vector<8x128xf32>
    %62 = math.exp %61 : vector<8x128xf32>
    %cst_27 = arith.constant 1.000000e+00 : f32
    %63 = vector.broadcast %cst_27 : f32 to vector<8x128xf32>
    %64 = arith.addf %63, %62 : vector<8x128xf32>
    %65 = arith.divf %63, %64 : vector<8x128xf32>
    %66 = vector.extract_strided_slice %59 {offsets = [0, 128], sizes = [8, 128], strides = [1, 1]} : vector<8x384xf32> to vector<8x128xf32>
    %67 = arith.negf %66 : vector<8x128xf32>
    %68 = math.exp %67 : vector<8x128xf32>
    %cst_28 = arith.constant 1.000000e+00 : f32
    %69 = vector.broadcast %cst_28 : f32 to vector<8x128xf32>
    %70 = arith.addf %69, %68 : vector<8x128xf32>
    %71 = arith.divf %69, %70 : vector<8x128xf32>
    %72 = vector.extract_strided_slice %59 {offsets = [0, 256], sizes = [8, 128], strides = [1, 1]} : vector<8x384xf32> to vector<8x128xf32>
    %73 = math.tanh %72 : vector<8x128xf32>
    %cst_29 = arith.constant 1.000000e+00 : f32
    %74 = arith.addf %8, %cst_29 : f32
    %cst_30 = arith.constant 1.000000e-03 : f32
    %75 = arith.subf %74, %cst_30 : f32
    %76 = vector.broadcast %75 : f32 to vector<8x128xf32>
    %77 = arith.mulf %65, %76 : vector<8x128xf32>
    %cst_31 = arith.constant 1.000000e+00 : f32
    %78 = vector.broadcast %cst_31 : f32 to vector<8x128xf32>
    %79 = arith.subf %78, %65 : vector<8x128xf32>
    %80 = arith.mulf %79, %37 : vector<8x128xf32>
    %81 = arith.addf %77, %80 : vector<8x128xf32>
    %82 = vector.broadcast %74 : f32 to vector<8x128xf32>
    %83 = arith.subf %82, %81 : vector<8x128xf32>
    %cst_32 = arith.constant 1.000000e-03 : f32
    %84 = vector.broadcast %cst_32 : f32 to vector<8x128xf32>
    %85 = arith.addf %83, %84 : vector<8x128xf32>
    %cst_33 = arith.constant 1.000000e+00 : f32
    %86 = vector.broadcast %cst_33 : f32 to vector<8x128xf32>
    %87 = arith.addf %83, %86 : vector<8x128xf32>
    %88 = arith.divf %85, %87 : vector<8x128xf32>
    %89 = math.powf %88, %6 : vector<8x128xf32>
    %90 = arith.mulf %89, %50 : vector<8x128xf32>
    %cst_34 = arith.constant 1.000000e+00 : f32
    %91 = vector.broadcast %cst_34 : f32 to vector<8x128xf32>
    %92 = arith.subf %91, %89 : vector<8x128xf32>
    %93 = arith.mulf %92, %73 : vector<8x128xf32>
    %94 = arith.addf %90, %93 : vector<8x128xf32>
    %95 = math.tanh %94 : vector<8x128xf32>
    %96 = arith.mulf %71, %95 : vector<8x128xf32>
    %c0_35 = arith.constant 0 : index
    %c1_36 = arith.constant 1 : index
    %c0_37 = arith.constant 0 : index
    %97 = vector.load %arg8[%c0_35, %c1_36, %c0_37] : memref<8x8x128xf32, #tpu.memory_space<vmem>>, vector<8x1x128xf32>
    %98 = vector.shape_cast %97 : vector<8x1x128xf32> to vector<8x128xf32>
    %99 = vector.shape_cast %96 : vector<8x128xf32> to vector<8x1x128xf32>
    tpu.vector_store %arg8[%c0_35, %c1_36, %c0_37], %99 {strides = array<i32>} : memref<8x8x128xf32, #tpu.memory_space<vmem>>, vector<8x1x128xf32>,
    %c0_38 = arith.constant 0 : index
    %c2 = arith.constant 2 : index
    %c0_39 = arith.constant 0 : index
    %100 = vector.load %arg2[%c0_38, %c2, %c0_39] : memref<8x8x384xf32, #tpu.memory_space<vmem>>, vector<8x1x384xf32>
    %101 = vector.shape_cast %100 : vector<8x1x384xf32> to vector<8x384xf32>
    %cst_40 = arith.constant dense<0.000000e+00> : vector<8x384xf32>
    %102 = tpu.matmul %96, %3, %cst_40 {dimension_numbers = #tpu.dot_dimension_numbers<[1], [0], [0], [1], [0, 0, 1, 1], [], []>} : vector<8x128xf32>, vector<128x384xf32>, vector<8x384xf32> -> vector<8x384xf32>
    %103 = arith.addf %101, %102 : vector<8x384xf32>
    %104 = vector.extract_strided_slice %103 {offsets = [0, 0], sizes = [8, 128], strides = [1, 1]} : vector<8x384xf32> to vector<8x128xf32>
    %105 = arith.negf %104 : vector<8x128xf32>
    %106 = math.exp %105 : vector<8x128xf32>
    %cst_41 = arith.constant 1.000000e+00 : f32
    %107 = vector.broadcast %cst_41 : f32 to vector<8x128xf32>
    %108 = arith.addf %107, %106 : vector<8x128xf32>
    %109 = arith.divf %107, %108 : vector<8x128xf32>
    %110 = vector.extract_strided_slice %103 {offsets = [0, 128], sizes = [8, 128], strides = [1, 1]} : vector<8x384xf32> to vector<8x128xf32>
    %111 = arith.negf %110 : vector<8x128xf32>
    %112 = math.exp %111 : vector<8x128xf32>
    %cst_42 = arith.constant 1.000000e+00 : f32
    %113 = vector.broadcast %cst_42 : f32 to vector<8x128xf32>
    %114 = arith.addf %113, %112 : vector<8x128xf32>
    %115 = arith.divf %113, %114 : vector<8x128xf32>
    %116 = vector.extract_strided_slice %103 {offsets = [0, 256], sizes = [8, 128], strides = [1, 1]} : vector<8x384xf32> to vector<8x128xf32>
    %117 = math.tanh %116 : vector<8x128xf32>
    %cst_43 = arith.constant 2.000000e+00 : f32
    %118 = arith.addf %8, %cst_43 : f32
    %cst_44 = arith.constant 1.000000e-03 : f32
    %119 = arith.subf %118, %cst_44 : f32
    %120 = vector.broadcast %119 : f32 to vector<8x128xf32>
    %121 = arith.mulf %109, %120 : vector<8x128xf32>
    %cst_45 = arith.constant 1.000000e+00 : f32
    %122 = vector.broadcast %cst_45 : f32 to vector<8x128xf32>
    %123 = arith.subf %122, %109 : vector<8x128xf32>
    %124 = arith.mulf %123, %81 : vector<8x128xf32>
    %125 = arith.addf %121, %124 : vector<8x128xf32>
    %126 = vector.broadcast %118 : f32 to vector<8x128xf32>
    %127 = arith.subf %126, %125 : vector<8x128xf32>
    %cst_46 = arith.constant 1.000000e-03 : f32
    %128 = vector.broadcast %cst_46 : f32 to vector<8x128xf32>
    %129 = arith.addf %127, %128 : vector<8x128xf32>
    %cst_47 = arith.constant 1.000000e+00 : f32
    %130 = vector.broadcast %cst_47 : f32 to vector<8x128xf32>
    %131 = arith.addf %127, %130 : vector<8x128xf32>
    %132 = arith.divf %129, %131 : vector<8x128xf32>
    %133 = math.powf %132, %6 : vector<8x128xf32>
    %134 = arith.mulf %133, %94 : vector<8x128xf32>
    %cst_48 = arith.constant 1.000000e+00 : f32
    %135 = vector.broadcast %cst_48 : f32 to vector<8x128xf32>
    %136 = arith.subf %135, %133 : vector<8x128xf32>
    %137 = arith.mulf %136, %117 : vector<8x128xf32>
    %138 = arith.addf %134, %137 : vector<8x128xf32>
    %139 = math.tanh %138 : vector<8x128xf32>
    %140 = arith.mulf %115, %139 : vector<8x128xf32>
    %c0_49 = arith.constant 0 : index
    %c2_50 = arith.constant 2 : index
    %c0_51 = arith.constant 0 : index
    %141 = vector.load %arg8[%c0_49, %c2_50, %c0_51] : memref<8x8x128xf32, #tpu.memory_space<vmem>>, vector<8x1x128xf32>
    %142 = vector.shape_cast %141 : vector<8x1x128xf32> to vector<8x128xf32>
    %143 = vector.shape_cast %140 : vector<8x128xf32> to vector<8x1x128xf32>
    tpu.vector_store %arg8[%c0_49, %c2_50, %c0_51], %143 {strides = array<i32>} : memref<8x8x128xf32, #tpu.memory_space<vmem>>, vector<8x1x128xf32>,
    %c0_52 = arith.constant 0 : index
    %c3 = arith.constant 3 : index
    %c0_53 = arith.constant 0 : index
    %144 = vector.load %arg2[%c0_52, %c3, %c0_53] : memref<8x8x384xf32, #tpu.memory_space<vmem>>, vector<8x1x384xf32>
    %145 = vector.shape_cast %144 : vector<8x1x384xf32> to vector<8x384xf32>
    %cst_54 = arith.constant dense<0.000000e+00> : vector<8x384xf32>
    %146 = tpu.matmul %140, %3, %cst_54 {dimension_numbers = #tpu.dot_dimension_numbers<[1], [0], [0], [1], [0, 0, 1, 1], [], []>} : vector<8x128xf32>, vector<128x384xf32>, vector<8x384xf32> -> vector<8x384xf32>
    %147 = arith.addf %145, %146 : vector<8x384xf32>
    %148 = vector.extract_strided_slice %147 {offsets = [0, 0], sizes = [8, 128], strides = [1, 1]} : vector<8x384xf32> to vector<8x128xf32>
    %149 = arith.negf %148 : vector<8x128xf32>
    %150 = math.exp %149 : vector<8x128xf32>
    %cst_55 = arith.constant 1.000000e+00 : f32
    %151 = vector.broadcast %cst_55 : f32 to vector<8x128xf32>
    %152 = arith.addf %151, %150 : vector<8x128xf32>
    %153 = arith.divf %151, %152 : vector<8x128xf32>
    %154 = vector.extract_strided_slice %147 {offsets = [0, 128], sizes = [8, 128], strides = [1, 1]} : vector<8x384xf32> to vector<8x128xf32>
    %155 = arith.negf %154 : vector<8x128xf32>
    %156 = math.exp %155 : vector<8x128xf32>
    %cst_56 = arith.constant 1.000000e+00 : f32
    %157 = vector.broadcast %cst_56 : f32 to vector<8x128xf32>
    %158 = arith.addf %157, %156 : vector<8x128xf32>
    %159 = arith.divf %157, %158 : vector<8x128xf32>
    %160 = vector.extract_strided_slice %147 {offsets = [0, 256], sizes = [8, 128], strides = [1, 1]} : vector<8x384xf32> to vector<8x128xf32>
    %161 = math.tanh %160 : vector<8x128xf32>
    %cst_57 = arith.constant 3.000000e+00 : f32
    %162 = arith.addf %8, %cst_57 : f32
    %cst_58 = arith.constant 1.000000e-03 : f32
    %163 = arith.subf %162, %cst_58 : f32
    %164 = vector.broadcast %163 : f32 to vector<8x128xf32>
    %165 = arith.mulf %153, %164 : vector<8x128xf32>
    %cst_59 = arith.constant 1.000000e+00 : f32
    %166 = vector.broadcast %cst_59 : f32 to vector<8x128xf32>
    %167 = arith.subf %166, %153 : vector<8x128xf32>
    %168 = arith.mulf %167, %125 : vector<8x128xf32>
    %169 = arith.addf %165, %168 : vector<8x128xf32>
    %170 = vector.broadcast %162 : f32 to vector<8x128xf32>
    %171 = arith.subf %170, %169 : vector<8x128xf32>
    %cst_60 = arith.constant 1.000000e-03 : f32
    %172 = vector.broadcast %cst_60 : f32 to vector<8x128xf32>
    %173 = arith.addf %171, %172 : vector<8x128xf32>
    %cst_61 = arith.constant 1.000000e+00 : f32
    %174 = vector.broadcast %cst_61 : f32 to vector<8x128xf32>
    %175 = arith.addf %171, %174 : vector<8x128xf32>
    %176 = arith.divf %173, %175 : vector<8x128xf32>
    %177 = math.powf %176, %6 : vector<8x128xf32>
    %178 = arith.mulf %177, %138 : vector<8x128xf32>
    %cst_62 = arith.constant 1.000000e+00 : f32
    %179 = vector.broadcast %cst_62 : f32 to vector<8x128xf32>
    %180 = arith.subf %179, %177 : vector<8x128xf32>
    %181 = arith.mulf %180, %161 : vector<8x128xf32>
    %182 = arith.addf %178, %181 : vector<8x128xf32>
    %183 = math.tanh %182 : vector<8x128xf32>
    %184 = arith.mulf %159, %183 : vector<8x128xf32>
    %c0_63 = arith.constant 0 : index
    %c3_64 = arith.constant 3 : index
    %c0_65 = arith.constant 0 : index
    %185 = vector.load %arg8[%c0_63, %c3_64, %c0_65] : memref<8x8x128xf32, #tpu.memory_space<vmem>>, vector<8x1x128xf32>
    %186 = vector.shape_cast %185 : vector<8x1x128xf32> to vector<8x128xf32>
    %187 = vector.shape_cast %184 : vector<8x128xf32> to vector<8x1x128xf32>
    tpu.vector_store %arg8[%c0_63, %c3_64, %c0_65], %187 {strides = array<i32>} : memref<8x8x128xf32, #tpu.memory_space<vmem>>, vector<8x1x128xf32>,
    %c0_66 = arith.constant 0 : index
    %c4 = arith.constant 4 : index
    %c0_67 = arith.constant 0 : index
    %188 = vector.load %arg2[%c0_66, %c4, %c0_67] : memref<8x8x384xf32, #tpu.memory_space<vmem>>, vector<8x1x384xf32>
    %189 = vector.shape_cast %188 : vector<8x1x384xf32> to vector<8x384xf32>
    %cst_68 = arith.constant dense<0.000000e+00> : vector<8x384xf32>
    %190 = tpu.matmul %184, %3, %cst_68 {dimension_numbers = #tpu.dot_dimension_numbers<[1], [0], [0], [1], [0, 0, 1, 1], [], []>} : vector<8x128xf32>, vector<128x384xf32>, vector<8x384xf32> -> vector<8x384xf32>
    %191 = arith.addf %189, %190 : vector<8x384xf32>
    %192 = vector.extract_strided_slice %191 {offsets = [0, 0], sizes = [8, 128], strides = [1, 1]} : vector<8x384xf32> to vector<8x128xf32>
    %193 = arith.negf %192 : vector<8x128xf32>
    %194 = math.exp %193 : vector<8x128xf32>
    %cst_69 = arith.constant 1.000000e+00 : f32
    %195 = vector.broadcast %cst_69 : f32 to vector<8x128xf32>
    %196 = arith.addf %195, %194 : vector<8x128xf32>
    %197 = arith.divf %195, %196 : vector<8x128xf32>
    %198 = vector.extract_strided_slice %191 {offsets = [0, 128], sizes = [8, 128], strides = [1, 1]} : vector<8x384xf32> to vector<8x128xf32>
    %199 = arith.negf %198 : vector<8x128xf32>
    %200 = math.exp %199 : vector<8x128xf32>
    %cst_70 = arith.constant 1.000000e+00 : f32
    %201 = vector.broadcast %cst_70 : f32 to vector<8x128xf32>
    %202 = arith.addf %201, %200 : vector<8x128xf32>
    %203 = arith.divf %201, %202 : vector<8x128xf32>
    %204 = vector.extract_strided_slice %191 {offsets = [0, 256], sizes = [8, 128], strides = [1, 1]} : vector<8x384xf32> to vector<8x128xf32>
    %205 = math.tanh %204 : vector<8x128xf32>
    %cst_71 = arith.constant 4.000000e+00 : f32
    %206 = arith.addf %8, %cst_71 : f32
    %cst_72 = arith.constant 1.000000e-03 : f32
    %207 = arith.subf %206, %cst_72 : f32
    %208 = vector.broadcast %207 : f32 to vector<8x128xf32>
    %209 = arith.mulf %197, %208 : vector<8x128xf32>
    %cst_73 = arith.constant 1.000000e+00 : f32
    %210 = vector.broadcast %cst_73 : f32 to vector<8x128xf32>
    %211 = arith.subf %210, %197 : vector<8x128xf32>
    %212 = arith.mulf %211, %169 : vector<8x128xf32>
    %213 = arith.addf %209, %212 : vector<8x128xf32>
    %214 = vector.broadcast %206 : f32 to vector<8x128xf32>
    %215 = arith.subf %214, %213 : vector<8x128xf32>
    %cst_74 = arith.constant 1.000000e-03 : f32
    %216 = vector.broadcast %cst_74 : f32 to vector<8x128xf32>
    %217 = arith.addf %215, %216 : vector<8x128xf32>
    %cst_75 = arith.constant 1.000000e+00 : f32
    %218 = vector.broadcast %cst_75 : f32 to vector<8x128xf32>
    %219 = arith.addf %215, %218 : vector<8x128xf32>
    %220 = arith.divf %217, %219 : vector<8x128xf32>
    %221 = math.powf %220, %6 : vector<8x128xf32>
    %222 = arith.mulf %221, %182 : vector<8x128xf32>
    %cst_76 = arith.constant 1.000000e+00 : f32
    %223 = vector.broadcast %cst_76 : f32 to vector<8x128xf32>
    %224 = arith.subf %223, %221 : vector<8x128xf32>
    %225 = arith.mulf %224, %205 : vector<8x128xf32>
    %226 = arith.addf %222, %225 : vector<8x128xf32>
    %227 = math.tanh %226 : vector<8x128xf32>
    %228 = arith.mulf %203, %227 : vector<8x128xf32>
    %c0_77 = arith.constant 0 : index
    %c4_78 = arith.constant 4 : index
    %c0_79 = arith.constant 0 : index
    %229 = vector.load %arg8[%c0_77, %c4_78, %c0_79] : memref<8x8x128xf32, #tpu.memory_space<vmem>>, vector<8x1x128xf32>
    %230 = vector.shape_cast %229 : vector<8x1x128xf32> to vector<8x128xf32>
    %231 = vector.shape_cast %228 : vector<8x128xf32> to vector<8x1x128xf32>
    tpu.vector_store %arg8[%c0_77, %c4_78, %c0_79], %231 {strides = array<i32>} : memref<8x8x128xf32, #tpu.memory_space<vmem>>, vector<8x1x128xf32>,
    %c0_80 = arith.constant 0 : index
    %c5 = arith.constant 5 : index
    %c0_81 = arith.constant 0 : index
    %232 = vector.load %arg2[%c0_80, %c5, %c0_81] : memref<8x8x384xf32, #tpu.memory_space<vmem>>, vector<8x1x384xf32>
    %233 = vector.shape_cast %232 : vector<8x1x384xf32> to vector<8x384xf32>
    %cst_82 = arith.constant dense<0.000000e+00> : vector<8x384xf32>
    %234 = tpu.matmul %228, %3, %cst_82 {dimension_numbers = #tpu.dot_dimension_numbers<[1], [0], [0], [1], [0, 0, 1, 1], [], []>} : vector<8x128xf32>, vector<128x384xf32>, vector<8x384xf32> -> vector<8x384xf32>
    %235 = arith.addf %233, %234 : vector<8x384xf32>
    %236 = vector.extract_strided_slice %235 {offsets = [0, 0], sizes = [8, 128], strides = [1, 1]} : vector<8x384xf32> to vector<8x128xf32>
    %237 = arith.negf %236 : vector<8x128xf32>
    %238 = math.exp %237 : vector<8x128xf32>
    %cst_83 = arith.constant 1.000000e+00 : f32
    %239 = vector.broadcast %cst_83 : f32 to vector<8x128xf32>
    %240 = arith.addf %239, %238 : vector<8x128xf32>
    %241 = arith.divf %239, %240 : vector<8x128xf32>
    %242 = vector.extract_strided_slice %235 {offsets = [0, 128], sizes = [8, 128], strides = [1, 1]} : vector<8x384xf32> to vector<8x128xf32>
    %243 = arith.negf %242 : vector<8x128xf32>
    %244 = math.exp %243 : vector<8x128xf32>
    %cst_84 = arith.constant 1.000000e+00 : f32
    %245 = vector.broadcast %cst_84 : f32 to vector<8x128xf32>
    %246 = arith.addf %245, %244 : vector<8x128xf32>
    %247 = arith.divf %245, %246 : vector<8x128xf32>
    %248 = vector.extract_strided_slice %235 {offsets = [0, 256], sizes = [8, 128], strides = [1, 1]} : vector<8x384xf32> to vector<8x128xf32>
    %249 = math.tanh %248 : vector<8x128xf32>
    %cst_85 = arith.constant 5.000000e+00 : f32
    %250 = arith.addf %8, %cst_85 : f32
    %cst_86 = arith.constant 1.000000e-03 : f32
    %251 = arith.subf %250, %cst_86 : f32
    %252 = vector.broadcast %251 : f32 to vector<8x128xf32>
    %253 = arith.mulf %241, %252 : vector<8x128xf32>
    %cst_87 = arith.constant 1.000000e+00 : f32
    %254 = vector.broadcast %cst_87 : f32 to vector<8x128xf32>
    %255 = arith.subf %254, %241 : vector<8x128xf32>
    %256 = arith.mulf %255, %213 : vector<8x128xf32>
    %257 = arith.addf %253, %256 : vector<8x128xf32>
    %258 = vector.broadcast %250 : f32 to vector<8x128xf32>
    %259 = arith.subf %258, %257 : vector<8x128xf32>
    %cst_88 = arith.constant 1.000000e-03 : f32
    %260 = vector.broadcast %cst_88 : f32 to vector<8x128xf32>
    %261 = arith.addf %259, %260 : vector<8x128xf32>
    %cst_89 = arith.constant 1.000000e+00 : f32
    %262 = vector.broadcast %cst_89 : f32 to vector<8x128xf32>
    %263 = arith.addf %259, %262 : vector<8x128xf32>
    %264 = arith.divf %261, %263 : vector<8x128xf32>
    %265 = math.powf %264, %6 : vector<8x128xf32>
    %266 = arith.mulf %265, %226 : vector<8x128xf32>
    %cst_90 = arith.constant 1.000000e+00 : f32
    %267 = vector.broadcast %cst_90 : f32 to vector<8x128xf32>
    %268 = arith.subf %267, %265 : vector<8x128xf32>
    %269 = arith.mulf %268, %249 : vector<8x128xf32>
    %270 = arith.addf %266, %269 : vector<8x128xf32>
    %271 = math.tanh %270 : vector<8x128xf32>
    %272 = arith.mulf %247, %271 : vector<8x128xf32>
    %c0_91 = arith.constant 0 : index
    %c5_92 = arith.constant 5 : index
    %c0_93 = arith.constant 0 : index
    %273 = vector.load %arg8[%c0_91, %c5_92, %c0_93] : memref<8x8x128xf32, #tpu.memory_space<vmem>>, vector<8x1x128xf32>
    %274 = vector.shape_cast %273 : vector<8x1x128xf32> to vector<8x128xf32>
    %275 = vector.shape_cast %272 : vector<8x128xf32> to vector<8x1x128xf32>
    tpu.vector_store %arg8[%c0_91, %c5_92, %c0_93], %275 {strides = array<i32>} : memref<8x8x128xf32, #tpu.memory_space<vmem>>, vector<8x1x128xf32>,
    %c0_94 = arith.constant 0 : index
    %c6 = arith.constant 6 : index
    %c0_95 = arith.constant 0 : index
    %276 = vector.load %arg2[%c0_94, %c6, %c0_95] : memref<8x8x384xf32, #tpu.memory_space<vmem>>, vector<8x1x384xf32>
    %277 = vector.shape_cast %276 : vector<8x1x384xf32> to vector<8x384xf32>
    %cst_96 = arith.constant dense<0.000000e+00> : vector<8x384xf32>
    %278 = tpu.matmul %272, %3, %cst_96 {dimension_numbers = #tpu.dot_dimension_numbers<[1], [0], [0], [1], [0, 0, 1, 1], [], []>} : vector<8x128xf32>, vector<128x384xf32>, vector<8x384xf32> -> vector<8x384xf32>
    %279 = arith.addf %277, %278 : vector<8x384xf32>
    %280 = vector.extract_strided_slice %279 {offsets = [0, 0], sizes = [8, 128], strides = [1, 1]} : vector<8x384xf32> to vector<8x128xf32>
    %281 = arith.negf %280 : vector<8x128xf32>
    %282 = math.exp %281 : vector<8x128xf32>
    %cst_97 = arith.constant 1.000000e+00 : f32
    %283 = vector.broadcast %cst_97 : f32 to vector<8x128xf32>
    %284 = arith.addf %283, %282 : vector<8x128xf32>
    %285 = arith.divf %283, %284 : vector<8x128xf32>
    %286 = vector.extract_strided_slice %279 {offsets = [0, 128], sizes = [8, 128], strides = [1, 1]} : vector<8x384xf32> to vector<8x128xf32>
    %287 = arith.negf %286 : vector<8x128xf32>
    %288 = math.exp %287 : vector<8x128xf32>
    %cst_98 = arith.constant 1.000000e+00 : f32
    %289 = vector.broadcast %cst_98 : f32 to vector<8x128xf32>
    %290 = arith.addf %289, %288 : vector<8x128xf32>
    %291 = arith.divf %289, %290 : vector<8x128xf32>
    %292 = vector.extract_strided_slice %279 {offsets = [0, 256], sizes = [8, 128], strides = [1, 1]} : vector<8x384xf32> to vector<8x128xf32>
    %293 = math.tanh %292 : vector<8x128xf32>
    %cst_99 = arith.constant 6.000000e+00 : f32
    %294 = arith.addf %8, %cst_99 : f32
    %cst_100 = arith.constant 1.000000e-03 : f32
    %295 = arith.subf %294, %cst_100 : f32
    %296 = vector.broadcast %295 : f32 to vector<8x128xf32>
    %297 = arith.mulf %285, %296 : vector<8x128xf32>
    %cst_101 = arith.constant 1.000000e+00 : f32
    %298 = vector.broadcast %cst_101 : f32 to vector<8x128xf32>
    %299 = arith.subf %298, %285 : vector<8x128xf32>
    %300 = arith.mulf %299, %257 : vector<8x128xf32>
    %301 = arith.addf %297, %300 : vector<8x128xf32>
    %302 = vector.broadcast %294 : f32 to vector<8x128xf32>
    %303 = arith.subf %302, %301 : vector<8x128xf32>
    %cst_102 = arith.constant 1.000000e-03 : f32
    %304 = vector.broadcast %cst_102 : f32 to vector<8x128xf32>
    %305 = arith.addf %303, %304 : vector<8x128xf32>
    %cst_103 = arith.constant 1.000000e+00 : f32
    %306 = vector.broadcast %cst_103 : f32 to vector<8x128xf32>
    %307 = arith.addf %303, %306 : vector<8x128xf32>
    %308 = arith.divf %305, %307 : vector<8x128xf32>
    %309 = math.powf %308, %6 : vector<8x128xf32>
    %310 = arith.mulf %309, %270 : vector<8x128xf32>
    %cst_104 = arith.constant 1.000000e+00 : f32
    %311 = vector.broadcast %cst_104 : f32 to vector<8x128xf32>
    %312 = arith.subf %311, %309 : vector<8x128xf32>
    %313 = arith.mulf %312, %293 : vector<8x128xf32>
    %314 = arith.addf %310, %313 : vector<8x128xf32>
    %315 = math.tanh %314 : vector<8x128xf32>
    %316 = arith.mulf %291, %315 : vector<8x128xf32>
    %c0_105 = arith.constant 0 : index
    %c6_106 = arith.constant 6 : index
    %c0_107 = arith.constant 0 : index
    %317 = vector.load %arg8[%c0_105, %c6_106, %c0_107] : memref<8x8x128xf32, #tpu.memory_space<vmem>>, vector<8x1x128xf32>
    %318 = vector.shape_cast %317 : vector<8x1x128xf32> to vector<8x128xf32>
    %319 = vector.shape_cast %316 : vector<8x128xf32> to vector<8x1x128xf32>
    tpu.vector_store %arg8[%c0_105, %c6_106, %c0_107], %319 {strides = array<i32>} : memref<8x8x128xf32, #tpu.memory_space<vmem>>, vector<8x1x128xf32>,
    %c0_108 = arith.constant 0 : index
    %c7 = arith.constant 7 : index
    %c0_109 = arith.constant 0 : index
    %320 = vector.load %arg2[%c0_108, %c7, %c0_109] : memref<8x8x384xf32, #tpu.memory_space<vmem>>, vector<8x1x384xf32>
    %321 = vector.shape_cast %320 : vector<8x1x384xf32> to vector<8x384xf32>
    %cst_110 = arith.constant dense<0.000000e+00> : vector<8x384xf32>
    %322 = tpu.matmul %316, %3, %cst_110 {dimension_numbers = #tpu.dot_dimension_numbers<[1], [0], [0], [1], [0, 0, 1, 1], [], []>} : vector<8x128xf32>, vector<128x384xf32>, vector<8x384xf32> -> vector<8x384xf32>
    %323 = arith.addf %321, %322 : vector<8x384xf32>
    %324 = vector.extract_strided_slice %323 {offsets = [0, 0], sizes = [8, 128], strides = [1, 1]} : vector<8x384xf32> to vector<8x128xf32>
    %325 = arith.negf %324 : vector<8x128xf32>
    %326 = math.exp %325 : vector<8x128xf32>
    %cst_111 = arith.constant 1.000000e+00 : f32
    %327 = vector.broadcast %cst_111 : f32 to vector<8x128xf32>
    %328 = arith.addf %327, %326 : vector<8x128xf32>
    %329 = arith.divf %327, %328 : vector<8x128xf32>
    %330 = vector.extract_strided_slice %323 {offsets = [0, 128], sizes = [8, 128], strides = [1, 1]} : vector<8x384xf32> to vector<8x128xf32>
    %331 = arith.negf %330 : vector<8x128xf32>
    %332 = math.exp %331 : vector<8x128xf32>
    %cst_112 = arith.constant 1.000000e+00 : f32
    %333 = vector.broadcast %cst_112 : f32 to vector<8x128xf32>
    %334 = arith.addf %333, %332 : vector<8x128xf32>
    %335 = arith.divf %333, %334 : vector<8x128xf32>
    %336 = vector.extract_strided_slice %323 {offsets = [0, 256], sizes = [8, 128], strides = [1, 1]} : vector<8x384xf32> to vector<8x128xf32>
    %337 = math.tanh %336 : vector<8x128xf32>
    %cst_113 = arith.constant 7.000000e+00 : f32
    %338 = arith.addf %8, %cst_113 : f32
    %cst_114 = arith.constant 1.000000e-03 : f32
    %339 = arith.subf %338, %cst_114 : f32
    %340 = vector.broadcast %339 : f32 to vector<8x128xf32>
    %341 = arith.mulf %329, %340 : vector<8x128xf32>
    %cst_115 = arith.constant 1.000000e+00 : f32
    %342 = vector.broadcast %cst_115 : f32 to vector<8x128xf32>
    %343 = arith.subf %342, %329 : vector<8x128xf32>
    %344 = arith.mulf %343, %301 : vector<8x128xf32>
    %345 = arith.addf %341, %344 : vector<8x128xf32>
    %346 = vector.broadcast %338 : f32 to vector<8x128xf32>
    %347 = arith.subf %346, %345 : vector<8x128xf32>
    %cst_116 = arith.constant 1.000000e-03 : f32
    %348 = vector.broadcast %cst_116 : f32 to vector<8x128xf32>
    %349 = arith.addf %347, %348 : vector<8x128xf32>
    %cst_117 = arith.constant 1.000000e+00 : f32
    %350 = vector.broadcast %cst_117 : f32 to vector<8x128xf32>
    %351 = arith.addf %347, %350 : vector<8x128xf32>
    %352 = arith.divf %349, %351 : vector<8x128xf32>
    %353 = math.powf %352, %6 : vector<8x128xf32>
    %354 = arith.mulf %353, %314 : vector<8x128xf32>
    %cst_118 = arith.constant 1.000000e+00 : f32
    %355 = vector.broadcast %cst_118 : f32 to vector<8x128xf32>
    %356 = arith.subf %355, %353 : vector<8x128xf32>
    %357 = arith.mulf %356, %337 : vector<8x128xf32>
    %358 = arith.addf %354, %357 : vector<8x128xf32>
    %359 = math.tanh %358 : vector<8x128xf32>
    %360 = arith.mulf %335, %359 : vector<8x128xf32>
    %c0_119 = arith.constant 0 : index
    %c7_120 = arith.constant 7 : index
    %c0_121 = arith.constant 0 : index
    %361 = vector.load %arg8[%c0_119, %c7_120, %c0_121] : memref<8x8x128xf32, #tpu.memory_space<vmem>>, vector<8x1x128xf32>
    %362 = vector.shape_cast %361 : vector<8x1x128xf32> to vector<8x128xf32>
    %363 = vector.shape_cast %360 : vector<8x128xf32> to vector<8x1x128xf32>
    tpu.vector_store %arg8[%c0_119, %c7_120, %c0_121], %363 {strides = array<i32>} : memref<8x8x128xf32, #tpu.memory_space<vmem>>, vector<8x1x128xf32>,
    %c0_122 = arith.constant 0 : index
    %c0_123 = arith.constant 0 : index
    %364 = vector.load %arg12[%c0_122, %c0_123] : memref<8x128xf32, #tpu.memory_space<vmem>>, vector<8x128xf32>
    tpu.vector_store %arg12[%c0_122, %c0_123], %360 {strides = array<i32>} : memref<8x128xf32, #tpu.memory_space<vmem>>, vector<8x128xf32>,
    %c0_124 = arith.constant 0 : index
    %c0_125 = arith.constant 0 : index
    %365 = vector.load %arg13[%c0_124, %c0_125] : memref<8x128xf32, #tpu.memory_space<vmem>>, vector<8x128xf32>
    tpu.vector_store %arg13[%c0_124, %c0_125], %358 {strides = array<i32>} : memref<8x128xf32, #tpu.memory_space<vmem>>, vector<8x128xf32>,
    %c0_126 = arith.constant 0 : index
    %c0_127 = arith.constant 0 : index
    %366 = vector.load %arg14[%c0_126, %c0_127] : memref<8x128xf32, #tpu.memory_space<vmem>>, vector<8x128xf32>
    tpu.vector_store %arg14[%c0_126, %c0_127], %345 {strides = array<i32>} : memref<8x128xf32, #tpu.memory_space<vmem>>, vector<8x128xf32>,
    %c0_i32_128 = arith.constant 0 : i32
    %367 = arith.cmpi eq, %arg1, %c0_i32_128 : i32
    %368 = arith.extui %367 : i1 to i32
    %c0_i32_129 = arith.constant 0 : i32
    %369 = arith.cmpi ne, %368, %c0_i32_129 : i32
    scf.if %369 {
      %c0_130 = arith.constant 0 : index
      %c0_131 = arith.constant 0 : index
      %370 = vector.load %arg9[%c0_130, %c0_131] : memref<8x128xf32, #tpu.memory_space<vmem>>, vector<8x128xf32>
      tpu.vector_store %arg9[%c0_130, %c0_131], %360 {strides = array<i32>} : memref<8x128xf32, #tpu.memory_space<vmem>>, vector<8x128xf32>,
      %c0_132 = arith.constant 0 : index
      %c0_133 = arith.constant 0 : index
      %371 = vector.load %arg10[%c0_132, %c0_133] : memref<8x128xf32, #tpu.memory_space<vmem>>, vector<8x128xf32>
      tpu.vector_store %arg10[%c0_132, %c0_133], %358 {strides = array<i32>} : memref<8x128xf32, #tpu.memory_space<vmem>>, vector<8x128xf32>,
      %c0_134 = arith.constant 0 : index
      %c0_135 = arith.constant 0 : index
      %372 = vector.load %arg11[%c0_134, %c0_135] : memref<8x128xf32, #tpu.memory_space<vmem>>, vector<8x128xf32>
      tpu.vector_store %arg11[%c0_134, %c0_135], %345 {strides = array<i32>} : memref<8x128xf32, #tpu.memory_space<vmem>>, vector<8x128xf32>,
    } else {
    }
    return
  }
  func.func @transform_0(%arg0: i32, %arg1: i32) -> (i32, i32, i32) {
    %c0_i32 = arith.constant 0 : i32
    %c0_i32_0 = arith.constant 0 : i32
    return %arg0, %arg1, %c0_i32 : i32, i32, i32
  }
  func.func @transform_1(%arg0: i32, %arg1: i32) -> (i32, i32) {
    %c0_i32 = arith.constant 0 : i32
    %c0_i32_0 = arith.constant 0 : i32
    %c0_i32_1 = arith.constant 0 : i32
    return %c0_i32, %c0_i32_0 : i32, i32
  }
  func.func @transform_2(%arg0: i32, %arg1: i32) -> (i32, i32) {
    %c0_i32 = arith.constant 0 : i32
    %c0_i32_0 = arith.constant 0 : i32
    %c0_i32_1 = arith.constant 0 : i32
    return %c0_i32, %c0_i32_0 : i32, i32
  }
  func.func @transform_3(%arg0: i32, %arg1: i32) -> (i32, i32) {
    %c0_i32 = arith.constant 0 : i32
    %c0_i32_0 = arith.constant 0 : i32
    return %arg0, %c0_i32 : i32, i32
  }
  func.func @transform_4(%arg0: i32, %arg1: i32) -> (i32, i32) {
    %c0_i32 = arith.constant 0 : i32
    %c0_i32_0 = arith.constant 0 : i32
    return %arg0, %c0_i32 : i32, i32
  }
  func.func @transform_5(%arg0: i32, %arg1: i32) -> (i32, i32) {
    %c0_i32 = arith.constant 0 : i32
    %c0_i32_0 = arith.constant 0 : i32
    return %arg0, %c0_i32 : i32, i32
  }
  func.func @transform_6(%arg0: i32, %arg1: i32) -> (i32, i32, i32) {
    %c0_i32 = arith.constant 0 : i32
    %c0_i32_0 = arith.constant 0 : i32
    return %arg0, %arg1, %c0_i32 : i32, i32, i32
  }
  func.func @transform_7(%arg0: i32, %arg1: i32) -> (i32, i32) {
    %c0_i32 = arith.constant 0 : i32
    %c0_i32_0 = arith.constant 0 : i32
    return %arg0, %c0_i32 : i32, i32
  }
  func.func @transform_8(%arg0: i32, %arg1: i32) -> (i32, i32) {
    %c0_i32 = arith.constant 0 : i32
    %c0_i32_0 = arith.constant 0 : i32
    return %arg0, %c0_i32 : i32, i32
  }
  func.func @transform_9(%arg0: i32, %arg1: i32) -> (i32, i32) {
    %c0_i32 = arith.constant 0 : i32
    %c0_i32_0 = arith.constant 0 : i32
    return %arg0, %c0_i32 : i32, i32
  }
}

</mosaic_0001>

<llo_original>
// kernel: tpu_custom_call.1
$region0: #{tpu_custom_call.1}
  #allocation0 [shape = 'u32[]', space=smem, size = 0x4, offset = 0x4, fixed_abs, tag = 'smem constant byte address 0x4 - core index']
  #allocation1 [shape = 'u32[72,128]{1,0:T(1,128)}', space=vmem, size = 0x9000, scoped, tag = 'internal scratch']
  #allocation2 [shape = 'f32[8,128]{1,0:T(8,128)}', space=vmem, size = 0x1000, scoped, tag = 'scratch operand']
  #allocation3 [shape = 'f32[8,128]{1,0:T(8,128)}', space=vmem, size = 0x1000, scoped, tag = 'scratch operand']
  #allocation4 [shape = 'f32[8,128]{1,0:T(8,128)}', space=vmem, size = 0x1000, scoped, tag = 'scratch operand']
  %s0 = inlined_call_operand.hbm [shape: f32[8,8,384], index: 0, kind: input, shape index: {}]
  %s1 = inlined_call_operand.hbm [shape: f32[128,384], index: 1, kind: input, shape index: {}]
  %s2 = inlined_call_operand.vmem [shape: f32[1,128], index: 2, kind: input, shape index: {}]
  %s3 = inlined_call_operand.hbm [shape: f32[8,128], index: 3, kind: input, shape index: {}]
  %s4 = inlined_call_operand.hbm [shape: f32[8,128], index: 4, kind: input, shape index: {}]
  %s5 = inlined_call_operand.hbm [shape: f32[8,128], index: 5, kind: input, shape index: {}]
  %s6 = inlined_call_operand.hbm [shape: f32[8,8,128], index: 6, kind: output, shape index: {0}]
  %s7 = inlined_call_operand.hbm [shape: f32[8,128], index: 7, kind: output, shape index: {1}]
  %s8 = inlined_call_operand.hbm [shape: f32[8,128], index: 8, kind: output, shape index: {2}]
  %s9 = inlined_call_operand.hbm [shape: f32[8,128], index: 9, kind: output, shape index: {3}]
  %10 = xla_tuple %s6, %s7, %s8, %s9
  %s11 = sld [smem:[#allocation0]]
  $region86: #{tpu_custom_call.1} parent=0
    _
  %s13 = ssub.s32 1, %s11
  %s14 = scalar_select 0, %s13, %s11
  $region1: #{tpu_custom_call.1} parent=0
    #allocation5 [shape = 'u8[98304]{0}', space=vmem, size = 0x18000, scoped, tag = 'input window, operand 0, single buffered']
    #allocation6 [shape = 's32[1]{0}', space=sflag, size = 0x4, scoped, tag = 'scoped memory for tpu_custom_call.1']
    #allocation7 [shape = 's32[1]{0}', space=sflag, size = 0x4, scoped, tag = 'scoped memory for tpu_custom_call.1']
    #allocation8 [shape = 'u8[196608]{0}', space=vmem, size = 0x30000, scoped, tag = 'input window, operand 1, single buffered']
    #allocation9 [shape = 's32[1]{0}', space=sflag, size = 0x4, scoped, tag = 'scoped memory for tpu_custom_call.1']
    #allocation10 [shape = 'u8[4096]{0}', space=vmem, size = 0x1000, scoped, tag = 'input window, operand 3, single buffered']
    #allocation11 [shape = 'u8[4096]{0}', space=vmem, size = 0x1000, scoped, tag = 'input window, operand 4, single buffered']
    #allocation12 [shape = 's32[1]{0}', space=sflag, size = 0x4, scoped, tag = 'scoped memory for tpu_custom_call.1']
    #allocation13 [shape = 'u8[4096]{0}', space=vmem, size = 0x1000, scoped, tag = 'input window, operand 5, single buffered']
    #allocation14 [shape = 'u8[32768]{0}', space=vmem, size = 0x8000, scoped, tag = 'output window, operand 0, single buffered']
    #allocation15 [shape = 'u8[4096]{0}', space=vmem, size = 0x1000, scoped, tag = 'output window, operand 1, single buffered']
    #allocation16 [shape = 's32[1]{0}', space=sflag, size = 0x4, scoped, tag = 'scoped memory for tpu_custom_call.1']
    #allocation17 [shape = 'u8[4096]{0}', space=vmem, size = 0x1000, scoped, tag = 'output window, operand 2, single buffered']
    #allocation18 [shape = 'u8[4096]{0}', space=vmem, size = 0x1000, scoped, tag = 'output window, operand 3, single buffered']
    #allocation19 [shape = 's32[1]{0}', space=sflag, size = 0x4, scoped, tag = 'scoped memory for tpu_custom_call.1']
    %15 = vsyncpa [#allocation6], 0
    %16 = vsyncpa [#allocation9], 0
    %17 = vsyncpa [#allocation12], 0
    %18 = vsyncpa [#allocation7], 0
    %19 = vsyncpa [#allocation16], 0
    %20 = vsyncpa [#allocation19], 0
    // Predicated region
    $region2: #{tpu_custom_call.1} parent=1 // pred_check
      _
    $region3: #{tpu_custom_call.1} parent=1 // pred_check_branch
      %22 = sbr.rel (0) target = $region5
    $region4: #{tpu_custom_call.1} parent=1 // pred_region
      %24 = vsyncadd [#allocation6], 0
      %s25 = sshll.u32 %s0, 4
      %s26 = int_to_ptr.hbm [resolvable:$true] %s25
      %s27 = sshll.u32 [#allocation5], 4
      %s28 = int_to_ptr.vmem [resolvable:$true] %s27
      %33 = dma.hbm_to_vmem [thread:$0]  %s26, 3072, %s28, [#allocation6], 384, 384, 24
    $region5: #{tpu_custom_call.1} parent=1 // pred_fallthru
      _
    // Predicated region
    $region6: #{tpu_custom_call.1} parent=1 // pred_check
      _
    $region7: #{tpu_custom_call.1} parent=1 // pred_check_branch
      %35 = sbr.rel (0) target = $region9
    $region8: #{tpu_custom_call.1} parent=1 // pred_region
      %37 = vsyncadd [#allocation9], 0
      %s38 = sshll.u32 %s1, 4
      %s39 = int_to_ptr.hbm [resolvable:$true] %s38
      %s40 = sshll.u32 [#allocation8], 4
      %s41 = int_to_ptr.vmem [resolvable:$true] %s40
      %46 = dma.hbm_to_vmem [thread:$0]  %s39, 6144, %s41, [#allocation9], 384, 384, 24
    $region9: #{tpu_custom_call.1} parent=1 // pred_fallthru
      _
    // Predicated region
    $region10: #{tpu_custom_call.1} parent=1 // pred_check
      _
    $region11: #{tpu_custom_call.1} parent=1 // pred_check_branch
      %48 = sbr.rel (0) target = $region13
    $region12: #{tpu_custom_call.1} parent=1 // pred_region
      _
    $region13: #{tpu_custom_call.1} parent=1 // pred_fallthru
      _
    // Predicated region
    $region14: #{tpu_custom_call.1} parent=1 // pred_check
      _
    $region15: #{tpu_custom_call.1} parent=1 // pred_check_branch
      %50 = sbr.rel (0) target = $region17
    $region16: #{tpu_custom_call.1} parent=1 // pred_region
      %52 = vsyncadd [#allocation9], 0
      %s54 = sshll.u32 %s3, 4
      %s55 = int_to_ptr.hbm [resolvable:$true] %s54
      %s56 = sshll.u32 [#allocation10], 4
      %s57 = int_to_ptr.vmem [resolvable:$true] %s56
      %59 = dma.hbm_to_vmem [thread:$0]  %s55, 128, %s57, [#allocation9]
    $region17: #{tpu_custom_call.1} parent=1 // pred_fallthru
      _
    // Predicated region
    $region18: #{tpu_custom_call.1} parent=1 // pred_check
      _
    $region19: #{tpu_custom_call.1} parent=1 // pred_check_branch
      %61 = sbr.rel (0) target = $region21
    $region20: #{tpu_custom_call.1} parent=1 // pred_region
      %63 = vsyncadd [#allocation12], 0
      %s65 = sshll.u32 %s4, 4
      %s66 = int_to_ptr.hbm [resolvable:$true] %s65
      %s67 = sshll.u32 [#allocation11], 4
      %s68 = int_to_ptr.vmem [resolvable:$true] %s67
      %70 = dma.hbm_to_vmem [thread:$0]  %s66, 128, %s68, [#allocation12]
    $region21: #{tpu_custom_call.1} parent=1 // pred_fallthru
      _
    // Predicated region
    $region22: #{tpu_custom_call.1} parent=1 // pred_check
      _
    $region23: #{tpu_custom_call.1} parent=1 // pred_check_branch
      %72 = sbr.rel (0) target = $region25
    $region24: #{tpu_custom_call.1} parent=1 // pred_region
      %74 = vsyncadd [#allocation12], 0
      %s76 = sshll.u32 %s5, 4
      %s77 = int_to_ptr.hbm [resolvable:$true] %s76
      %s78 = sshll.u32 [#allocation13], 4
      %s79 = int_to_ptr.vmem [resolvable:$true] %s78
      %81 = dma.hbm_to_vmem [thread:$0]  %s77, 128, %s79, [#allocation12]
    $region25: #{tpu_custom_call.1} parent=1 // pred_fallthru
      _
    // Predicated region
    $region26: #{tpu_custom_call.1} parent=1 // pred_check
      _
    $region27: #{tpu_custom_call.1} parent=1 // pred_check_branch
      %83 = sbr.rel (0) target = $region29
    $region28: #{tpu_custom_call.1} parent=1 // pred_region
      %85 = dma.done [#allocation6], 3072
    $region29: #{tpu_custom_call.1} parent=1 // pred_fallthru
      _
    // Predicated region
    $region30: #{tpu_custom_call.1} parent=1 // pred_check
      _
    $region31: #{tpu_custom_call.1} parent=1 // pred_check_branch
      %87 = sbr.rel (0) target = $region33
    $region32: #{tpu_custom_call.1} parent=1 // pred_region
      %89 = dma.done [#allocation9], 6144
    $region33: #{tpu_custom_call.1} parent=1 // pred_fallthru
      _
    // Predicated region
    $region34: #{tpu_custom_call.1} parent=1 // pred_check
      _
    $region35: #{tpu_custom_call.1} parent=1 // pred_check_branch
      %91 = sbr.rel (0) target = $region37
    $region36: #{tpu_custom_call.1} parent=1 // pred_region
      %93 = dma.done [#allocation9], 128
    $region37: #{tpu_custom_call.1} parent=1 // pred_fallthru
      _
    // Predicated region
    $region38: #{tpu_custom_call.1} parent=1 // pred_check
      _
    $region39: #{tpu_custom_call.1} parent=1 // pred_check_branch
      %95 = sbr.rel (0) target = $region41
    $region40: #{tpu_custom_call.1} parent=1 // pred_region
      %97 = dma.done [#allocation12], 128
    $region41: #{tpu_custom_call.1} parent=1 // pred_fallthru
      _
    // Predicated region
    $region42: #{tpu_custom_call.1} parent=1 // pred_check
      _
    $region43: #{tpu_custom_call.1} parent=1 // pred_check_branch
      %99 = sbr.rel (0) target = $region45
    $region44: #{tpu_custom_call.1} parent=1 // pred_region
      %101 = dma.done [#allocation12], 128
    $region45: #{tpu_custom_call.1} parent=1 // pred_fallthru
      _
    %p102 = scmp.eq.s32.totalorder 0, 0
    // Predicated region
    $region46: #{tpu_custom_call.1} parent=1 // pred_check
      %p103 = pneg %p102
    $region47: #{tpu_custom_call.1} parent=1 // pred_check_branch
      %105 = sbr.rel (%p103) target = $region49
    $region48: #{tpu_custom_call.1} parent=1 // pred_region
      %v106 = vld [vmem:[#allocation10] sm:$0xff]
      %107 = vst [vmem:[#allocation2] sm:$0xff] %v106
      %v108 = vld [vmem:[#allocation11] sm:$0xff]
      %109 = vst [vmem:[#allocation3] sm:$0xff] %v108
      %v110 = vld [vmem:[#allocation13] sm:$0xff]
      %111 = vst [vmem:[#allocation4] sm:$0xff] %v110
    $region49: #{tpu_custom_call.1} parent=1 // pred_fallthru
      _
    %v112 = vld [vmem:[#allocation8] sm:$0xff]
    %v113 = vld [vmem:[#allocation8 + $0x8] sm:$0xff]
    %v114 = vld [vmem:[#allocation8 + $0x10] sm:$0xff]
    %v115 = vld [vmem:[#allocation8 + $0x18] sm:$0xff]
    %v116 = vld [vmem:[#allocation8 + $0x20] sm:$0xff]
    %v117 = vld [vmem:[#allocation8 + $0x28] sm:$0xff]
    %v118 = vld [vmem:[#allocation8 + $0x30] sm:$0xff]
    %v119 = vld [vmem:[#allocation8 + $0x38] sm:$0xff]
    %v120 = vld [vmem:[#allocation8 + $0x40] sm:$0xff]
    %v121 = vld [vmem:[#allocation8 + $0x48] sm:$0xff]
    %v122 = vld [vmem:[#allocation8 + $0x50] sm:$0xff]
    %v123 = vld [vmem:[#allocation8 + $0x58] sm:$0xff]
    %v124 = vld [vmem:[#allocation8 + $0x60] sm:$0xff]
    %v125 = vld [vmem:[#allocation8 + $0x68] sm:$0xff]
    %v126 = vld [vmem:[#allocation8 + $0x70] sm:$0xff]
    %v127 = vld [vmem:[#allocation8 + $0x78] sm:$0xff]
    %v128 = vld [vmem:[#allocation8 + $0x80] sm:$0xff]
    %v129 = vld [vmem:[#allocation8 + $0x88] sm:$0xff]
    %v130 = vld [vmem:[#allocation8 + $0x90] sm:$0xff]
    %v131 = vld [vmem:[#allocation8 + $0x98] sm:$0xff]
    %v132 = vld [vmem:[#allocation8 + $0xa0] sm:$0xff]
    %v133 = vld [vmem:[#allocation8 + $0xa8] sm:$0xff]
    %v134 = vld [vmem:[#allocation8 + $0xb0] sm:$0xff]
    %v135 = vld [vmem:[#allocation8 + $0xb8] sm:$0xff]
    %v136 = vld [vmem:[#allocation8 + $0xc0] sm:$0xff]
    %v137 = vld [vmem:[#allocation8 + $0xc8] sm:$0xff]
    %v138 = vld [vmem:[#allocation8 + $0xd0] sm:$0xff]
    %v139 = vld [vmem:[#allocation8 + $0xd8] sm:$0xff]
    %v140 = vld [vmem:[#allocation8 + $0xe0] sm:$0xff]
    %v141 = vld [vmem:[#allocation8 + $0xe8] sm:$0xff]
    %v142 = vld [vmem:[#allocation8 + $0xf0] sm:$0xff]
    %v143 = vld [vmem:[#allocation8 + $0xf8] sm:$0xff]
    %v144 = vld [vmem:[#allocation8 + $0x100] sm:$0xff]
    %v145 = vld [vmem:[#allocation8 + $0x108] sm:$0xff]
    %v146 = vld [vmem:[#allocation8 + $0x110] sm:$0xff]
    %v147 = vld [vmem:[#allocation8 + $0x118] sm:$0xff]
    %v148 = vld [vmem:[#allocation8 + $0x120] sm:$0xff]
    %v149 = vld [vmem:[#allocation8 + $0x128] sm:$0xff]
    %v150 = vld [vmem:[#allocation8 + $0x130] sm:$0xff]
    %v151 = vld [vmem:[#allocation8 + $0x138] sm:$0xff]
    %v152 = vld [vmem:[#allocation8 + $0x140] sm:$0xff]
    %v153 = vld [vmem:[#allocation8 + $0x148] sm:$0xff]
    %v154 = vld [vmem:[#allocation8 + $0x150] sm:$0xff]
    %v155 = vld [vmem:[#allocation8 + $0x158] sm:$0xff]
    %v156 = vld [vmem:[#allocation8 + $0x160] sm:$0xff]
    %v157 = vld [vmem:[#allocation8 + $0x168] sm:$0xff]
    %v158 = vld [vmem:[#allocation8 + $0x170] sm:$0xff]
    %v159 = vld [vmem:[#allocation8 + $0x178] sm:$0xff]
    %v160 = vld [vmem:[%s2] sm:$0x1]
    %v162 = vperm.slane %v160, 0
    %s164 = smul.u32 0, 8
    %s165 = scvt.s32.f32 %s164
    %v166 = vld [vmem:[#allocation2] sm:$0xff]
    %v167 = vld [vmem:[#allocation3] sm:$0xff]
    %v168 = vld [vmem:[#allocation4] sm:$0xff]
    %v169 = vld [vmem:[#allocation5] ss:$8 sm:$0x7]
    %s170 = scalar_lea.vmem [#allocation5], 24
    %v171 = vld [vmem:[%s170] ss:$8 sm:$0x7]
    %s172 = scalar_lea.vmem [#allocation5], 48
    %v173 = vld [vmem:[%s172] ss:$8 sm:$0x7]
    %s174 = scalar_lea.vmem [#allocation5], 72
    %v175 = vld [vmem:[%s174] ss:$8 sm:$0x7]
    %s176 = scalar_lea.vmem [#allocation5], 96
    %v177 = vld [vmem:[%s176] ss:$8 sm:$0x7]
    %s178 = scalar_lea.vmem [#allocation5], 120
    %v179 = vld [vmem:[%s178] ss:$8 sm:$0x7]
    %s180 = scalar_lea.vmem [#allocation5], 144
    %v181 = vld [vmem:[%s180] ss:$8 sm:$0x7]
    %s182 = scalar_lea.vmem [#allocation5], 168
    %v183 = vld [vmem:[%s182] ss:$8 sm:$0x7]
    %184 = vmatpush.msra.mxu0 %v157
    %185 = vmatpush.msra.mxu0 %v154
    %186 = vmatpush.msra.mxu0 %v151
    %187 = vmatpush.msra.mxu0 %v148
    %188 = vmatpush.msra.mxu0 %v145
    %189 = vmatpush.msra.mxu0 %v142
    %190 = vmatpush.msra.mxu0 %v139
    %191 = vmatpush.msra.mxu0 %v136
    %192 = vmatpush.msra.mxu0 %v133
    %193 = vmatpush.msra.mxu0 %v130
    %194 = vmatpush.msra.mxu0 %v127
    %195 = vmatpush.msra.mxu0 %v124
    %196 = vmatpush.msra.mxu0 %v121
    %197 = vmatpush.msra.mxu0 %v118
    %198 = vmatpush.msra.mxu0 %v115
    %199 = vmatpush.msra.mxu0 %v112
    %200 = vmatmul.f32.gmra.mxu0 %v166
    %v201 = vpop.f32.mrf.mxu0
    %v202 = vadd.f32 0.0, %v201
    %203 = vdwg.mxu0
    %204 = vmatpush.msra.mxu0 %v158
    %205 = vmatpush.msra.mxu0 %v155
    %206 = vmatpush.msra.mxu0 %v152
    %207 = vmatpush.msra.mxu0 %v149
    %208 = vmatpush.msra.mxu0 %v146
    %209 = vmatpush.msra.mxu0 %v143
    %210 = vmatpush.msra.mxu0 %v140
    %211 = vmatpush.msra.mxu0 %v137
    %212 = vmatpush.msra.mxu0 %v134
    %213 = vmatpush.msra.mxu0 %v131
    %214 = vmatpush.msra.mxu0 %v128
    %215 = vmatpush.msra.mxu0 %v125
    %216 = vmatpush.msra.mxu0 %v122
    %217 = vmatpush.msra.mxu0 %v119
    %218 = vmatpush.msra.mxu0 %v116
    %219 = vmatpush.msra.mxu0 %v113
    %220 = vmatmul.f32.gmra.mxu0 %v166
    %v221 = vpop.f32.mrf.mxu0
    %v222 = vadd.f32 0.0, %v221
    %223 = vdwg.mxu0
    %224 = vmatpush.msra.mxu0 %v159
    %225 = vmatpush.msra.mxu0 %v156
    %226 = vmatpush.msra.mxu0 %v153
    %227 = vmatpush.msra.mxu0 %v150
    %228 = vmatpush.msra.mxu0 %v147
    %229 = vmatpush.msra.mxu0 %v144
    %230 = vmatpush.msra.mxu0 %v141
    %231 = vmatpush.msra.mxu0 %v138
    %232 = vmatpush.msra.mxu0 %v135
    %233 = vmatpush.msra.mxu0 %v132
    %234 = vmatpush.msra.mxu0 %v129
    %235 = vmatpush.msra.mxu0 %v126
    %236 = vmatpush.msra.mxu0 %v123
    %237 = vmatpush.msra.mxu0 %v120
    %238 = vmatpush.msra.mxu0 %v117
    %239 = vmatpush.msra.mxu0 %v114
    %240 = vmatmul.f32.gmra.mxu0 %v166
    %v241 = vpop.f32.mrf.mxu0
    %v242 = vadd.f32 0.0, %v241
    %243 = vdwg.mxu0
    %v247 = vrot.slane %v222, 7
    %v248 = vrot.slane %v242, 6
    %vm249 = vcmask 1040384
    %v250 = vsel %vm249, %v202, %v247
    %vm251 = vcmask 1041408
    %v252 = vsel %vm251, %v250, %v248
    %vm253 = vcmask 1041409
    %v254 = vsel %vm253, %v202, %v247
    %vm255 = vcmask 1042433
    %v256 = vsel %vm255, %v254, %v248
    %v257 = vrot.slane %v256, 1
    %vm258 = vcmask 1042434
    %v259 = vsel %vm258, %v202, %v247
    %vm260 = vcmask 1043458
    %v261 = vsel %vm260, %v259, %v248
    %v262 = vrot.slane %v261, 2
    %vm263 = vcmask 1043459
    %v264 = vsel %vm263, %v202, %v247
    %vm265 = vcmask 1044483
    %v266 = vsel %vm265, %v264, %v248
    %v267 = vrot.slane %v266, 3
    %vm268 = vcmask 1044484
    %v269 = vsel %vm268, %v202, %v247
    %vm270 = vcmask 1045508
    %v271 = vsel %vm270, %v269, %v248
    %v272 = vrot.slane %v271, 4
    %vm273 = vcmask 1045509
    %v274 = vsel %vm273, %v202, %v247
    %vm275 = vcmask 1046533
    %v276 = vsel %vm275, %v274, %v248
    %v277 = vrot.slane %v276, 5
    %vm278 = vcmask 1046534
    %v279 = vsel %vm278, %v202, %v247
    %vm280 = vcmask 1045504
    %v281 = vsel %vm280, %v248, %v279
    %v282 = vrot.slane %v281, 6
    %vm283 = vcmask 1046528
    %v284 = vsel %vm283, %v247, %v202
    %vm285 = vcmask 1046529
    %v286 = vsel %vm285, %v248, %v284
    %v287 = vrot.slane %v286, 7
    %v296 = vadd.f32 %v169, %v252
    %v297 = vadd.f32 %v171, %v257
    %v298 = vadd.f32 %v173, %v262
    %v299 = vadd.f32 %v175, %v267
    %v300 = vadd.f32 %v177, %v272
    %v301 = vadd.f32 %v179, %v277
    %v302 = vadd.f32 %v181, %v282
    %v303 = vadd.f32 %v183, %v287
    %v304 = vxor.u32 %v296, 2147483648
    %v305 = vxor.u32 %v297, 2147483648
    %v306 = vxor.u32 %v298, 2147483648
    %v307 = vxor.u32 %v299, 2147483648
    %v308 = vxor.u32 %v300, 2147483648
    %v309 = vxor.u32 %v301, 2147483648
    %v310 = vxor.u32 %v302, 2147483648
    %v311 = vxor.u32 %v303, 2147483648
    %v312 = vmul.f32 %v304, 1.442695
    %v313 = vpow.pop %v312
    %v314 = vmul.f32 %v305, 1.442695
    %v315 = vpow.pop %v314
    %v316 = vmul.f32 %v306, 1.442695
    %v317 = vpow.pop %v316
    %v318 = vmul.f32 %v307, 1.442695
    %v319 = vpow.pop %v318
    %v320 = vmul.f32 %v308, 1.442695
    %v321 = vpow.pop %v320
    %v322 = vmul.f32 %v309, 1.442695
    %v323 = vpow.pop %v322
    %v324 = vmul.f32 %v310, 1.442695
    %v325 = vpow.pop %v324
    %v326 = vmul.f32 %v311, 1.442695
    %v327 = vpow.pop %v326
    %v328 = vadd.f32 %v313, 1.0
    %v329 = vadd.f32 %v315, 1.0
    %v330 = vadd.f32 %v317, 1.0
    %v331 = vadd.f32 %v319, 1.0
    %v332 = vadd.f32 %v321, 1.0
    %v333 = vadd.f32 %v323, 1.0
    %v334 = vadd.f32 %v325, 1.0
    %v335 = vadd.f32 %v327, 1.0
    %v336 = vrcp.pop %v328
    %v337 = vmul.f32 %v328, %v336
    %v338 = vsub.f32 1.0, %v337
    %v339 = vmul.f32 %v336, %v338
    %v340 = vadd.f32 %v336, %v339
    %vm341 = vweird.f32 %v328
    %vm342 = vweird.f32 %v336
    %vm343 = vmor %vm341, %vm342
    %v344 = vsel %vm343, %v336, %v340
    %v345 = vand.u32 2147483647, %v328
    %vm346 = vcmp.eq.f32.partialorder %v345, 8.507059e+37
    %v347 = vand.u32 %v328, 2147483648
    %v348 = vor.u32 1.1754944e-38, %v347
    %v349 = vsel %vm346, %v348, %v344
    %v350 = vmul.f32 1.0, %v349
    %v351 = vrcp.pop %v329
    %v352 = vmul.f32 %v329, %v351
    %v353 = vsub.f32 1.0, %v352
    %v354 = vmul.f32 %v351, %v353
    %v355 = vadd.f32 %v351, %v354
    %vm356 = vweird.f32 %v329
    %vm357 = vweird.f32 %v351
    %vm358 = vmor %vm356, %vm357
    %v359 = vsel %vm358, %v351, %v355
    %v360 = vand.u32 2147483647, %v329
    %vm361 = vcmp.eq.f32.partialorder %v360, 8.507059e+37
    %v362 = vand.u32 %v329, 2147483648
    %v363 = vor.u32 1.1754944e-38, %v362
    %v364 = vsel %vm361, %v363, %v359
    %v365 = vmul.f32 1.0, %v364
    %v366 = vrcp.pop %v330
    %v367 = vmul.f32 %v330, %v366
    %v368 = vsub.f32 1.0, %v367
    %v369 = vmul.f32 %v366, %v368
    %v370 = vadd.f32 %v366, %v369
    %vm371 = vweird.f32 %v330
    %vm372 = vweird.f32 %v366
    %vm373 = vmor %vm371, %vm372
    %v374 = vsel %vm373, %v366, %v370
    %v375 = vand.u32 2147483647, %v330
    %vm376 = vcmp.eq.f32.partialorder %v375, 8.507059e+37
    %v377 = vand.u32 %v330, 2147483648
    %v378 = vor.u32 1.1754944e-38, %v377
    %v379 = vsel %vm376, %v378, %v374
    %v380 = vmul.f32 1.0, %v379
    %v381 = vrcp.pop %v331
    %v382 = vmul.f32 %v331, %v381
    %v383 = vsub.f32 1.0, %v382
    %v384 = vmul.f32 %v381, %v383
    %v385 = vadd.f32 %v381, %v384
    %vm386 = vweird.f32 %v331
    %vm387 = vweird.f32 %v381
    %vm388 = vmor %vm386, %vm387
    %v389 = vsel %vm388, %v381, %v385
    %v390 = vand.u32 2147483647, %v331
    %vm391 = vcmp.eq.f32.partialorder %v390, 8.507059e+37
    %v392 = vand.u32 %v331, 2147483648
    %v393 = vor.u32 1.1754944e-38, %v392
    %v394 = vsel %vm391, %v393, %v389
    %v395 = vmul.f32 1.0, %v394
    %v396 = vrcp.pop %v332
    %v397 = vmul.f32 %v332, %v396
    %v398 = vsub.f32 1.0, %v397
    %v399 = vmul.f32 %v396, %v398
    %v400 = vadd.f32 %v396, %v399
    %vm401 = vweird.f32 %v332
    %vm402 = vweird.f32 %v396
    %vm403 = vmor %vm401, %vm402
    %v404 = vsel %vm403, %v396, %v400
    %v405 = vand.u32 2147483647, %v332
    %vm406 = vcmp.eq.f32.partialorder %v405, 8.507059e+37
    %v407 = vand.u32 %v332, 2147483648
    %v408 = vor.u32 1.1754944e-38, %v407
    %v409 = vsel %vm406, %v408, %v404
    %v410 = vmul.f32 1.0, %v409
    %v411 = vrcp.pop %v333
    %v412 = vmul.f32 %v333, %v411
    %v413 = vsub.f32 1.0, %v412
    %v414 = vmul.f32 %v411, %v413
    %v415 = vadd.f32 %v411, %v414
    %vm416 = vweird.f32 %v333
    %vm417 = vweird.f32 %v411
    %vm418 = vmor %vm416, %vm417
    %v419 = vsel %vm418, %v411, %v415
    %v420 = vand.u32 2147483647, %v333
    %vm421 = vcmp.eq.f32.partialorder %v420, 8.507059e+37
    %v422 = vand.u32 %v333, 2147483648
    %v423 = vor.u32 1.1754944e-38, %v422
    %v424 = vsel %vm421, %v423, %v419
    %v425 = vmul.f32 1.0, %v424
    %v426 = vrcp.pop %v334
    %v427 = vmul.f32 %v334, %v426
    %v428 = vsub.f32 1.0, %v427
    %v429 = vmul.f32 %v426, %v428
    %v430 = vadd.f32 %v426, %v429
    %vm431 = vweird.f32 %v334
    %vm432 = vweird.f32 %v426
    %vm433 = vmor %vm431, %vm432
    %v434 = vsel %vm433, %v426, %v430
    %v435 = vand.u32 2147483647, %v334
    %vm436 = vcmp.eq.f32.partialorder %v435, 8.507059e+37
    %v437 = vand.u32 %v334, 2147483648
    %v438 = vor.u32 1.1754944e-38, %v437
    %v439 = vsel %vm436, %v438, %v434
    %v440 = vmul.f32 1.0, %v439
    %v441 = vrcp.pop %v335
    %v442 = vmul.f32 %v335, %v441
    %v443 = vsub.f32 1.0, %v442
    %v444 = vmul.f32 %v441, %v443
    %v445 = vadd.f32 %v441, %v444
    %vm446 = vweird.f32 %v335
    %vm447 = vweird.f32 %v441
    %vm448 = vmor %vm446, %vm447
    %v449 = vsel %vm448, %v441, %v445
    %v450 = vand.u32 2147483647, %v335
    %vm451 = vcmp.eq.f32.partialorder %v450, 8.507059e+37
    %v452 = vand.u32 %v335, 2147483648
    %v453 = vor.u32 1.1754944e-38, %v452
    %v454 = vsel %vm451, %v453, %v449
    %v455 = vmul.f32 1.0, %v454
    %v464 = vrot.slane %v296, 1
    %v465 = vrot.slane %v297, 1
    %v466 = vrot.slane %v298, 1
    %v467 = vrot.slane %v299, 1
    %v468 = vrot.slane %v300, 1
    %v469 = vrot.slane %v301, 1
    %v470 = vrot.slane %v302, 1
    %v471 = vrot.slane %v303, 1
    %v480 = vxor.u32 %v464, 2147483648
    %v481 = vxor.u32 %v465, 2147483648
    %v482 = vxor.u32 %v466, 2147483648
    %v483 = vxor.u32 %v467, 2147483648
    %v484 = vxor.u32 %v468, 2147483648
    %v485 = vxor.u32 %v469, 2147483648
    %v486 = vxor.u32 %v470, 2147483648
    %v487 = vxor.u32 %v471, 2147483648
    %v488 = vmul.f32 %v480, 1.442695
    %v489 = vpow.pop %v488
    %v490 = vmul.f32 %v481, 1.442695
    %v491 = vpow.pop %v490
    %v492 = vmul.f32 %v482, 1.442695
    %v493 = vpow.pop %v492
    %v494 = vmul.f32 %v483, 1.442695
    %v495 = vpow.pop %v494
    %v496 = vmul.f32 %v484, 1.442695
    %v497 = vpow.pop %v496
    %v498 = vmul.f32 %v485, 1.442695
    %v499 = vpow.pop %v498
    %v500 = vmul.f32 %v486, 1.442695
    %v501 = vpow.pop %v500
    %v502 = vmul.f32 %v487, 1.442695
    %v503 = vpow.pop %v502
    %v504 = vadd.f32 %v489, 1.0
    %v505 = vadd.f32 %v491, 1.0
    %v506 = vadd.f32 %v493, 1.0
    %v507 = vadd.f32 %v495, 1.0
    %v508 = vadd.f32 %v497, 1.0
    %v509 = vadd.f32 %v499, 1.0
    %v510 = vadd.f32 %v501, 1.0
    %v511 = vadd.f32 %v503, 1.0
    %v512 = vrcp.pop %v504
    %v513 = vmul.f32 %v504, %v512
    %v514 = vsub.f32 1.0, %v513
    %v515 = vmul.f32 %v512, %v514
    %v516 = vadd.f32 %v512, %v515
    %vm517 = vweird.f32 %v504
    %vm518 = vweird.f32 %v512
    %vm519 = vmor %vm517, %vm518
    %v520 = vsel %vm519, %v512, %v516
    %v521 = vand.u32 2147483647, %v504
    %vm522 = vcmp.eq.f32.partialorder %v521, 8.507059e+37
    %v523 = vand.u32 %v504, 2147483648
    %v524 = vor.u32 1.1754944e-38, %v523
    %v525 = vsel %vm522, %v524, %v520
    %v526 = vmul.f32 1.0, %v525
    %v527 = vrcp.pop %v505
    %v528 = vmul.f32 %v505, %v527
    %v529 = vsub.f32 1.0, %v528
    %v530 = vmul.f32 %v527, %v529
    %v531 = vadd.f32 %v527, %v530
    %vm532 = vweird.f32 %v505
    %vm533 = vweird.f32 %v527
    %vm534 = vmor %vm532, %vm533
    %v535 = vsel %vm534, %v527, %v531
    %v536 = vand.u32 2147483647, %v505
    %vm537 = vcmp.eq.f32.partialorder %v536, 8.507059e+37
    %v538 = vand.u32 %v505, 2147483648
    %v539 = vor.u32 1.1754944e-38, %v538
    %v540 = vsel %vm537, %v539, %v535
    %v541 = vmul.f32 1.0, %v540
    %v542 = vrcp.pop %v506
    %v543 = vmul.f32 %v506, %v542
    %v544 = vsub.f32 1.0, %v543
    %v545 = vmul.f32 %v542, %v544
    %v546 = vadd.f32 %v542, %v545
    %vm547 = vweird.f32 %v506
    %vm548 = vweird.f32 %v542
    %vm549 = vmor %vm547, %vm548
    %v550 = vsel %vm549, %v542, %v546
    %v551 = vand.u32 2147483647, %v506
    %vm552 = vcmp.eq.f32.partialorder %v551, 8.507059e+37
    %v553 = vand.u32 %v506, 2147483648
    %v554 = vor.u32 1.1754944e-38, %v553
    %v555 = vsel %vm552, %v554, %v550
    %v556 = vmul.f32 1.0, %v555
    %v557 = vrcp.pop %v507
    %v558 = vmul.f32 %v507, %v557
    %v559 = vsub.f32 1.0, %v558
    %v560 = vmul.f32 %v557, %v559
    %v561 = vadd.f32 %v557, %v560
    %vm562 = vweird.f32 %v507
    %vm563 = vweird.f32 %v557
    %vm564 = vmor %vm562, %vm563
    %v565 = vsel %vm564, %v557, %v561
    %v566 = vand.u32 2147483647, %v507
    %vm567 = vcmp.eq.f32.partialorder %v566, 8.507059e+37
    %v568 = vand.u32 %v507, 2147483648
    %v569 = vor.u32 1.1754944e-38, %v568
    %v570 = vsel %vm567, %v569, %v565
    %v571 = vmul.f32 1.0, %v570
    %v572 = vrcp.pop %v508
    %v573 = vmul.f32 %v508, %v572
    %v574 = vsub.f32 1.0, %v573
    %v575 = vmul.f32 %v572, %v574
    %v576 = vadd.f32 %v572, %v575
    %vm577 = vweird.f32 %v508
    %vm578 = vweird.f32 %v572
    %vm579 = vmor %vm577, %vm578
    %v580 = vsel %vm579, %v572, %v576
    %v581 = vand.u32 2147483647, %v508
    %vm582 = vcmp.eq.f32.partialorder %v581, 8.507059e+37
    %v583 = vand.u32 %v508, 2147483648
    %v584 = vor.u32 1.1754944e-38, %v583
    %v585 = vsel %vm582, %v584, %v580
    %v586 = vmul.f32 1.0, %v585
    %v587 = vrcp.pop %v509
    %v588 = vmul.f32 %v509, %v587
    %v589 = vsub.f32 1.0, %v588
    %v590 = vmul.f32 %v587, %v589
    %v591 = vadd.f32 %v587, %v590
    %vm592 = vweird.f32 %v509
    %vm593 = vweird.f32 %v587
    %vm594 = vmor %vm592, %vm593
    %v595 = vsel %vm594, %v587, %v591
    %v596 = vand.u32 2147483647, %v509
    %vm597 = vcmp.eq.f32.partialorder %v596, 8.507059e+37
    %v598 = vand.u32 %v509, 2147483648
    %v599 = vor.u32 1.1754944e-38, %v598
    %v600 = vsel %vm597, %v599, %v595
    %v601 = vmul.f32 1.0, %v600
    %v602 = vrcp.pop %v510
    %v603 = vmul.f32 %v510, %v602
    %v604 = vsub.f32 1.0, %v603
    %v605 = vmul.f32 %v602, %v604
    %v606 = vadd.f32 %v602, %v605
    %vm607 = vweird.f32 %v510
    %vm608 = vweird.f32 %v602
    %vm609 = vmor %vm607, %vm608
    %v610 = vsel %vm609, %v602, %v606
    %v611 = vand.u32 2147483647, %v510
    %vm612 = vcmp.eq.f32.partialorder %v611, 8.507059e+37
    %v613 = vand.u32 %v510, 2147483648
    %v614 = vor.u32 1.1754944e-38, %v613
    %v615 = vsel %vm612, %v614, %v610
    %v616 = vmul.f32 1.0, %v615
    %v617 = vrcp.pop %v511
    %v618 = vmul.f32 %v511, %v617
    %v619 = vsub.f32 1.0, %v618
    %v620 = vmul.f32 %v617, %v619
    %v621 = vadd.f32 %v617, %v620
    %vm622 = vweird.f32 %v511
    %vm623 = vweird.f32 %v617
    %vm624 = vmor %vm622, %vm623
    %v625 = vsel %vm624, %v617, %v621
    %v626 = vand.u32 2147483647, %v511
    %vm627 = vcmp.eq.f32.partialorder %v626, 8.507059e+37
    %v628 = vand.u32 %v511, 2147483648
    %v629 = vor.u32 1.1754944e-38, %v628
    %v630 = vsel %vm627, %v629, %v625
    %v631 = vmul.f32 1.0, %v630
    %v632 = vrot.slane %v296, 2
    %v633 = vrot.slane %v297, 2
    %v634 = vrot.slane %v298, 2
    %v635 = vrot.slane %v299, 2
    %v636 = vrot.slane %v300, 2
    %v637 = vrot.slane %v301, 2
    %v638 = vrot.slane %v302, 2
    %v639 = vrot.slane %v303, 2
    %v648 = vtanh.pop %v632
    %v649 = vtanh.pop %v633
    %v650 = vtanh.pop %v634
    %v651 = vtanh.pop %v635
    %v652 = vtanh.pop %v636
    %v653 = vtanh.pop %v637
    %v654 = vtanh.pop %v638
    %v655 = vtanh.pop %v639
    %s656 = sadd.f32 %s165, 0.0
    %s657 = ssub.f32 %s656, 0.001
    %v658 = vstv %s657
    %v659 = vmul.f32 %v350, %v658
    %v660 = vmul.f32 %v365, %v658
    %v661 = vmul.f32 %v380, %v658
    %v662 = vmul.f32 %v395, %v658
    %v663 = vmul.f32 %v410, %v658
    %v664 = vmul.f32 %v425, %v658
    %v665 = vmul.f32 %v440, %v658
    %v666 = vmul.f32 %v455, %v658
    %v667 = vsub.f32 1.0, %v350
    %v668 = vsub.f32 1.0, %v365
    %v669 = vsub.f32 1.0, %v380
    %v670 = vsub.f32 1.0, %v395
    %v671 = vsub.f32 1.0, %v410
    %v672 = vsub.f32 1.0, %v425
    %v673 = vsub.f32 1.0, %v440
    %v674 = vsub.f32 1.0, %v455
    %v676 = vrot.slane %v168, 1
    %v677 = vrot.slane %v168, 2
    %v678 = vrot.slane %v168, 3
    %v679 = vrot.slane %v168, 4
    %v680 = vrot.slane %v168, 5
    %v681 = vrot.slane %v168, 6
    %v682 = vrot.slane %v168, 7
    %v690 = vmul.f32 %v667, %v168
    %v691 = vmul.f32 %v668, %v676
    %v692 = vmul.f32 %v669, %v677
    %v693 = vmul.f32 %v670, %v678
    %v694 = vmul.f32 %v671, %v679
    %v695 = vmul.f32 %v672, %v680
    %v696 = vmul.f32 %v673, %v681
    %v697 = vmul.f32 %v674, %v682
    %v698 = vadd.f32 %v659, %v690
    %v699 = vadd.f32 %v660, %v691
    %v700 = vadd.f32 %v661, %v692
    %v701 = vadd.f32 %v662, %v693
    %v702 = vadd.f32 %v663, %v694
    %v703 = vadd.f32 %v664, %v695
    %v704 = vadd.f32 %v665, %v696
    %v705 = vadd.f32 %v666, %v697
    %v706 = vstv %s656
    %v707 = vsub.f32 %v706, %v698
    %v708 = vsub.f32 %v706, %v699
    %v709 = vsub.f32 %v706, %v700
    %v710 = vsub.f32 %v706, %v701
    %v711 = vsub.f32 %v706, %v702
    %v712 = vsub.f32 %v706, %v703
    %v713 = vsub.f32 %v706, %v704
    %v714 = vsub.f32 %v706, %v705
    %v715 = vadd.f32 %v707, 0.001
    %v716 = vadd.f32 %v708, 0.001
    %v717 = vadd.f32 %v709, 0.001
    %v718 = vadd.f32 %v710, 0.001
    %v719 = vadd.f32 %v711, 0.001
    %v720 = vadd.f32 %v712, 0.001
    %v721 = vadd.f32 %v713, 0.001
    %v722 = vadd.f32 %v714, 0.001
    %v723 = vadd.f32 %v707, 1.0
    %v724 = vadd.f32 %v708, 1.0
    %v725 = vadd.f32 %v709, 1.0
    %v726 = vadd.f32 %v710, 1.0
    %v727 = vadd.f32 %v711, 1.0
    %v728 = vadd.f32 %v712, 1.0
    %v729 = vadd.f32 %v713, 1.0
    %v730 = vadd.f32 %v714, 1.0
    %v731 = vrcp.pop %v723
    %v732 = vmul.f32 %v723, %v731
    %v733 = vsub.f32 1.0, %v732
    %v734 = vmul.f32 %v731, %v733
    %v735 = vadd.f32 %v731, %v734
    %vm736 = vweird.f32 %v723
    %vm737 = vweird.f32 %v731
    %vm738 = vmor %vm736, %vm737
    %v739 = vsel %vm738, %v731, %v735
    %v740 = vand.u32 2147483647, %v723
    %vm741 = vcmp.eq.f32.partialorder %v740, 8.507059e+37
    %v742 = vand.u32 %v723, 2147483648
    %v743 = vor.u32 1.1754944e-38, %v742
    %v744 = vsel %vm741, %v743, %v739
    %v745 = vmul.f32 %v715, %v744
    %v746 = vrcp.pop %v724
    %v747 = vmul.f32 %v724, %v746
    %v748 = vsub.f32 1.0, %v747
    %v749 = vmul.f32 %v746, %v748
    %v750 = vadd.f32 %v746, %v749
    %vm751 = vweird.f32 %v724
    %vm752 = vweird.f32 %v746
    %vm753 = vmor %vm751, %vm752
    %v754 = vsel %vm753, %v746, %v750
    %v755 = vand.u32 2147483647, %v724
    %vm756 = vcmp.eq.f32.partialorder %v755, 8.507059e+37
    %v757 = vand.u32 %v724, 2147483648
    %v758 = vor.u32 1.1754944e-38, %v757
    %v759 = vsel %vm756, %v758, %v754
    %v760 = vmul.f32 %v716, %v759
    %v761 = vrcp.pop %v725
    %v762 = vmul.f32 %v725, %v761
    %v763 = vsub.f32 1.0, %v762
    %v764 = vmul.f32 %v761, %v763
    %v765 = vadd.f32 %v761, %v764
    %vm766 = vweird.f32 %v725
    %vm767 = vweird.f32 %v761
    %vm768 = vmor %vm766, %vm767
    %v769 = vsel %vm768, %v761, %v765
    %v770 = vand.u32 2147483647, %v725
    %vm771 = vcmp.eq.f32.partialorder %v770, 8.507059e+37
    %v772 = vand.u32 %v725, 2147483648
    %v773 = vor.u32 1.1754944e-38, %v772
    %v774 = vsel %vm771, %v773, %v769
    %v775 = vmul.f32 %v717, %v774
    %v776 = vrcp.pop %v726
    %v777 = vmul.f32 %v726, %v776
    %v778 = vsub.f32 1.0, %v777
    %v779 = vmul.f32 %v776, %v778
    %v780 = vadd.f32 %v776, %v779
    %vm781 = vweird.f32 %v726
    %vm782 = vweird.f32 %v776
    %vm783 = vmor %vm781, %vm782
    %v784 = vsel %vm783, %v776, %v780
    %v785 = vand.u32 2147483647, %v726
    %vm786 = vcmp.eq.f32.partialorder %v785, 8.507059e+37
    %v787 = vand.u32 %v726, 2147483648
    %v788 = vor.u32 1.1754944e-38, %v787
    %v789 = vsel %vm786, %v788, %v784
    %v790 = vmul.f32 %v718, %v789
    %v791 = vrcp.pop %v727
    %v792 = vmul.f32 %v727, %v791
    %v793 = vsub.f32 1.0, %v792
    %v794 = vmul.f32 %v791, %v793
    %v795 = vadd.f32 %v791, %v794
    %vm796 = vweird.f32 %v727
    %vm797 = vweird.f32 %v791
    %vm798 = vmor %vm796, %vm797
    %v799 = vsel %vm798, %v791, %v795
    %v800 = vand.u32 2147483647, %v727
    %vm801 = vcmp.eq.f32.partialorder %v800, 8.507059e+37
    %v802 = vand.u32 %v727, 2147483648
    %v803 = vor.u32 1.1754944e-38, %v802
    %v804 = vsel %vm801, %v803, %v799
    %v805 = vmul.f32 %v719, %v804
    %v806 = vrcp.pop %v728
    %v807 = vmul.f32 %v728, %v806
    %v808 = vsub.f32 1.0, %v807
    %v809 = vmul.f32 %v806, %v808
    %v810 = vadd.f32 %v806, %v809
    %vm811 = vweird.f32 %v728
    %vm812 = vweird.f32 %v806
    %vm813 = vmor %vm811, %vm812
    %v814 = vsel %vm813, %v806, %v810
    %v815 = vand.u32 2147483647, %v728
    %vm816 = vcmp.eq.f32.partialorder %v815, 8.507059e+37
    %v817 = vand.u32 %v728, 2147483648
    %v818 = vor.u32 1.1754944e-38, %v817
    %v819 = vsel %vm816, %v818, %v814
    %v820 = vmul.f32 %v720, %v819
    %v821 = vrcp.pop %v729
    %v822 = vmul.f32 %v729, %v821
    %v823 = vsub.f32 1.0, %v822
    %v824 = vmul.f32 %v821, %v823
    %v825 = vadd.f32 %v821, %v824
    %vm826 = vweird.f32 %v729
    %vm827 = vweird.f32 %v821
    %vm828 = vmor %vm826, %vm827
    %v829 = vsel %vm828, %v821, %v825
    %v830 = vand.u32 2147483647, %v729
    %vm831 = vcmp.eq.f32.partialorder %v830, 8.507059e+37
    %v832 = vand.u32 %v729, 2147483648
    %v833 = vor.u32 1.1754944e-38, %v832
    %v834 = vsel %vm831, %v833, %v829
    %v835 = vmul.f32 %v721, %v834
    %v836 = vrcp.pop %v730
    %v837 = vmul.f32 %v730, %v836
    %v838 = vsub.f32 1.0, %v837
    %v839 = vmul.f32 %v836, %v838
    %v840 = vadd.f32 %v836, %v839
    %vm841 = vweird.f32 %v730
    %vm842 = vweird.f32 %v836
    %vm843 = vmor %vm841, %vm842
    %v844 = vsel %vm843, %v836, %v840
    %v845 = vand.u32 2147483647, %v730
    %vm846 = vcmp.eq.f32.partialorder %v845, 8.507059e+37
    %v847 = vand.u32 %v730, 2147483648
    %v848 = vor.u32 1.1754944e-38, %v847
    %v849 = vsel %vm846, %v848, %v844
    %v850 = vmul.f32 %v722, %v849
    %v851 = vrot.slane %v162, 1
    %v852 = vrot.slane %v162, 2
    %v853 = vrot.slane %v162, 3
    %v854 = vrot.slane %v162, 4
    %v855 = vrot.slane %v162, 5
    %v856 = vrot.slane %v162, 6
    %v857 = vrot.slane %v162, 7
    %v865 = vpow.f32 %v745, %v162
    %v866 = vpow.f32 %v760, %v851
    %v867 = vpow.f32 %v775, %v852
    %v868 = vpow.f32 %v790, %v853
    %v869 = vpow.f32 %v805, %v854
    %v870 = vpow.f32 %v820, %v855
    %v871 = vpow.f32 %v835, %v856
    %v872 = vpow.f32 %v850, %v857
    %v874 = vrot.slane %v167, 1
    %v875 = vrot.slane %v167, 2
    %v876 = vrot.slane %v167, 3
    %v877 = vrot.slane %v167, 4
    %v878 = vrot.slane %v167, 5
    %v879 = vrot.slane %v167, 6
    %v880 = vrot.slane %v167, 7
    %v888 = vmul.f32 %v865, %v167
    %v889 = vmul.f32 %v866, %v874
    %v890 = vmul.f32 %v867, %v875
    %v891 = vmul.f32 %v868, %v876
    %v892 = vmul.f32 %v869, %v877
    %v893 = vmul.f32 %v870, %v878
    %v894 = vmul.f32 %v871, %v879
    %v895 = vmul.f32 %v872, %v880
    %v896 = vsub.f32 1.0, %v865
    %v897 = vsub.f32 1.0, %v866
    %v898 = vsub.f32 1.0, %v867
    %v899 = vsub.f32 1.0, %v868
    %v900 = vsub.f32 1.0, %v869
    %v901 = vsub.f32 1.0, %v870
    %v902 = vsub.f32 1.0, %v871
    %v903 = vsub.f32 1.0, %v872
    %v904 = vmul.f32 %v896, %v648
    %v905 = vmul.f32 %v897, %v649
    %v906 = vmul.f32 %v898, %v650
    %v907 = vmul.f32 %v899, %v651
    %v908 = vmul.f32 %v900, %v652
    %v909 = vmul.f32 %v901, %v653
    %v910 = vmul.f32 %v902, %v654
    %v911 = vmul.f32 %v903, %v655
    %v912 = vadd.f32 %v888, %v904
    %v913 = vadd.f32 %v889, %v905
    %v914 = vadd.f32 %v890, %v906
    %v915 = vadd.f32 %v891, %v907
    %v916 = vadd.f32 %v892, %v908
    %v917 = vadd.f32 %v893, %v909
    %v918 = vadd.f32 %v894, %v910
    %v919 = vadd.f32 %v895, %v911
    %v920 = vtanh.pop %v912
    %v921 = vtanh.pop %v913
    %v922 = vtanh.pop %v914
    %v923 = vtanh.pop %v915
    %v924 = vtanh.pop %v916
    %v925 = vtanh.pop %v917
    %v926 = vtanh.pop %v918
    %v927 = vtanh.pop %v919
    %v928 = vmul.f32 %v526, %v920
    %v929 = vmul.f32 %v541, %v921
    %v930 = vmul.f32 %v556, %v922
    %v931 = vmul.f32 %v571, %v923
    %v932 = vmul.f32 %v586, %v924
    %v933 = vmul.f32 %v601, %v925
    %v934 = vmul.f32 %v616, %v926
    %v935 = vmul.f32 %v631, %v927
    %936 = vst [vmem:[#allocation14] sm:$0x1] %v928
    %937 = vst [vmem:[#allocation14 + $0x8] sm:$0x1] %v929
    %938 = vst [vmem:[#allocation14 + $0x10] sm:$0x1] %v930
    %939 = vst [vmem:[#allocation14 + $0x18] sm:$0x1] %v931
    %940 = vst [vmem:[#allocation14 + $0x20] sm:$0x1] %v932
    %941 = vst [vmem:[#allocation14 + $0x28] sm:$0x1] %v933
    %942 = vst [vmem:[#allocation14 + $0x30] sm:$0x1] %v934
    %943 = vst [vmem:[#allocation14 + $0x38] sm:$0x1] %v935
    %s944 = scalar_lea.vmem [#allocation5], 1
    %v945 = vld [vmem:[%s944] ss:$8 sm:$0x7]
    %s946 = scalar_lea.vmem [#allocation5], 25
    %v947 = vld [vmem:[%s946] ss:$8 sm:$0x7]
    %s948 = scalar_lea.vmem [#allocation5], 49
    %v949 = vld [vmem:[%s948] ss:$8 sm:$0x7]
    %s950 = scalar_lea.vmem [#allocation5], 73
    %v951 = vld [vmem:[%s950] ss:$8 sm:$0x7]
    %s952 = scalar_lea.vmem [#allocation5], 97
    %v953 = vld [vmem:[%s952] ss:$8 sm:$0x7]
    %s954 = scalar_lea.vmem [#allocation5], 121
    %v955 = vld [vmem:[%s954] ss:$8 sm:$0x7]
    %s956 = scalar_lea.vmem [#allocation5], 145
    %v957 = vld [vmem:[%s956] ss:$8 sm:$0x7]
    %s958 = scalar_lea.vmem [#allocation5], 169
    %v959 = vld [vmem:[%s958] ss:$8 sm:$0x7]
    %968 = vst [vmem:[#allocation1] ss:$9 sm:$0xff] %v928
    %s969 = scalar_lea.vmem [#allocation1], 1
    %970 = vst [vmem:[%s969] ss:$9 sm:$0xff] %v929
    %s971 = scalar_lea.vmem [#allocation1], 2
    %972 = vst [vmem:[%s971] ss:$9 sm:$0xff] %v930
    %s973 = scalar_lea.vmem [#allocation1], 3
    %974 = vst [vmem:[%s973] ss:$9 sm:$0xff] %v931
    %s975 = scalar_lea.vmem [#allocation1], 4
    %976 = vst [vmem:[%s975] ss:$9 sm:$0xff] %v932
    %s977 = scalar_lea.vmem [#allocation1], 5
    %978 = vst [vmem:[%s977] ss:$9 sm:$0xff] %v933
    %s979 = scalar_lea.vmem [#allocation1], 6
    %980 = vst [vmem:[%s979] ss:$9 sm:$0xff] %v934
    %s981 = scalar_lea.vmem [#allocation1], 7
    %982 = vst [vmem:[%s981] ss:$9 sm:$0xff] %v935
    %v983 = vld [vmem:[#allocation1] sm:$0xff]
    %985 = vmatpush.msra.mxu0 %v157
    %986 = vmatpush.msra.mxu0 %v154
    %987 = vmatpush.msra.mxu0 %v151
    %988 = vmatpush.msra.mxu0 %v148
    %989 = vmatpush.msra.mxu0 %v145
    %990 = vmatpush.msra.mxu0 %v142
    %991 = vmatpush.msra.mxu0 %v139
    %992 = vmatpush.msra.mxu0 %v136
    %993 = vmatpush.msra.mxu0 %v133
    %994 = vmatpush.msra.mxu0 %v130
    %995 = vmatpush.msra.mxu0 %v127
    %996 = vmatpush.msra.mxu0 %v124
    %997 = vmatpush.msra.mxu0 %v121
    %998 = vmatpush.msra.mxu0 %v118
    %999 = vmatpush.msra.mxu0 %v115
    %1000 = vmatpush.msra.mxu0 %v112
    %1001 = vmatmul.f32.gmra.mxu0 %v983
    %v1002 = vpop.f32.mrf.mxu0
    %v1003 = vadd.f32 0.0, %v1002
    %1004 = vdwg.mxu0
    %1005 = vmatpush.msra.mxu0 %v158
    %1006 = vmatpush.msra.mxu0 %v155
    %1007 = vmatpush.msra.mxu0 %v152
    %1008 = vmatpush.msra.mxu0 %v149
    %1009 = vmatpush.msra.mxu0 %v146
    %1010 = vmatpush.msra.mxu0 %v143
    %1011 = vmatpush.msra.mxu0 %v140
    %1012 = vmatpush.msra.mxu0 %v137
    %1013 = vmatpush.msra.mxu0 %v134
    %1014 = vmatpush.msra.mxu0 %v131
    %1015 = vmatpush.msra.mxu0 %v128
    %1016 = vmatpush.msra.mxu0 %v125
    %1017 = vmatpush.msra.mxu0 %v122
    %1018 = vmatpush.msra.mxu0 %v119
    %1019 = vmatpush.msra.mxu0 %v116
    %1020 = vmatpush.msra.mxu0 %v113
    %1021 = vmatmul.f32.gmra.mxu0 %v983
    %v1022 = vpop.f32.mrf.mxu0
    %v1023 = vadd.f32 0.0, %v1022
    %1024 = vdwg.mxu0
    %1025 = vmatpush.msra.mxu0 %v159
    %1026 = vmatpush.msra.mxu0 %v156
    %1027 = vmatpush.msra.mxu0 %v153
    %1028 = vmatpush.msra.mxu0 %v150
    %1029 = vmatpush.msra.mxu0 %v147
    %1030 = vmatpush.msra.mxu0 %v144
    %1031 = vmatpush.msra.mxu0 %v141
    %1032 = vmatpush.msra.mxu0 %v138
    %1033 = vmatpush.msra.mxu0 %v135
    %1034 = vmatpush.msra.mxu0 %v132
    %1035 = vmatpush.msra.mxu0 %v129
    %1036 = vmatpush.msra.mxu0 %v126
    %1037 = vmatpush.msra.mxu0 %v123
    %1038 = vmatpush.msra.mxu0 %v120
    %1039 = vmatpush.msra.mxu0 %v117
    %1040 = vmatpush.msra.mxu0 %v114
    %1041 = vmatmul.f32.gmra.mxu0 %v983
    %v1042 = vpop.f32.mrf.mxu0
    %v1043 = vadd.f32 0.0, %v1042
    %1044 = vdwg.mxu0
    %v1048 = vrot.slane %v1023, 7
    %v1049 = vrot.slane %v1043, 6
    %v1050 = vsel %vm249, %v1003, %v1048
    %v1051 = vsel %vm251, %v1050, %v1049
    %v1052 = vsel %vm253, %v1003, %v1048
    %v1053 = vsel %vm255, %v1052, %v1049
    %v1054 = vrot.slane %v1053, 1
    %v1055 = vsel %vm258, %v1003, %v1048
    %v1056 = vsel %vm260, %v1055, %v1049
    %v1057 = vrot.slane %v1056, 2
    %v1058 = vsel %vm263, %v1003, %v1048
    %v1059 = vsel %vm265, %v1058, %v1049
    %v1060 = vrot.slane %v1059, 3
    %v1061 = vsel %vm268, %v1003, %v1048
    %v1062 = vsel %vm270, %v1061, %v1049
    %v1063 = vrot.slane %v1062, 4
    %v1064 = vsel %vm273, %v1003, %v1048
    %v1065 = vsel %vm275, %v1064, %v1049
    %v1066 = vrot.slane %v1065, 5
    %v1067 = vsel %vm278, %v1003, %v1048
    %v1068 = vsel %vm280, %v1049, %v1067
    %v1069 = vrot.slane %v1068, 6
    %v1070 = vsel %vm283, %v1048, %v1003
    %v1071 = vsel %vm285, %v1049, %v1070
    %v1072 = vrot.slane %v1071, 7
    %v1081 = vadd.f32 %v945, %v1051
    %v1082 = vadd.f32 %v947, %v1054
    %v1083 = vadd.f32 %v949, %v1057
    %v1084 = vadd.f32 %v951, %v1060
    %v1085 = vadd.f32 %v953, %v1063
    %v1086 = vadd.f32 %v955, %v1066
    %v1087 = vadd.f32 %v957, %v1069
    %v1088 = vadd.f32 %v959, %v1072
    %v1089 = vxor.u32 %v1081, 2147483648
    %v1090 = vxor.u32 %v1082, 2147483648
    %v1091 = vxor.u32 %v1083, 2147483648
    %v1092 = vxor.u32 %v1084, 2147483648
    %v1093 = vxor.u32 %v1085, 2147483648
    %v1094 = vxor.u32 %v1086, 2147483648
    %v1095 = vxor.u32 %v1087, 2147483648
    %v1096 = vxor.u32 %v1088, 2147483648
    %v1097 = vmul.f32 %v1089, 1.442695
    %v1098 = vpow.pop %v1097
    %v1099 = vmul.f32 %v1090, 1.442695
    %v1100 = vpow.pop %v1099
    %v1101 = vmul.f32 %v1091, 1.442695
    %v1102 = vpow.pop %v1101
    %v1103 = vmul.f32 %v1092, 1.442695
    %v1104 = vpow.pop %v1103
    %v1105 = vmul.f32 %v1093, 1.442695
    %v1106 = vpow.pop %v1105
    %v1107 = vmul.f32 %v1094, 1.442695
    %v1108 = vpow.pop %v1107
    %v1109 = vmul.f32 %v1095, 1.442695
    %v1110 = vpow.pop %v1109
    %v1111 = vmul.f32 %v1096, 1.442695
    %v1112 = vpow.pop %v1111
    %v1113 = vadd.f32 %v1098, 1.0
    %v1114 = vadd.f32 %v1100, 1.0
    %v1115 = vadd.f32 %v1102, 1.0
    %v1116 = vadd.f32 %v1104, 1.0
    %v1117 = vadd.f32 %v1106, 1.0
    %v1118 = vadd.f32 %v1108, 1.0
    %v1119 = vadd.f32 %v1110, 1.0
    %v1120 = vadd.f32 %v1112, 1.0
    %v1121 = vrcp.pop %v1113
    %v1122 = vmul.f32 %v1113, %v1121
    %v1123 = vsub.f32 1.0, %v1122
    %v1124 = vmul.f32 %v1121, %v1123
    %v1125 = vadd.f32 %v1121, %v1124
    %vm1126 = vweird.f32 %v1113
    %vm1127 = vweird.f32 %v1121
    %vm1128 = vmor %vm1126, %vm1127
    %v1129 = vsel %vm1128, %v1121, %v1125
    %v1130 = vand.u32 2147483647, %v1113
    %vm1131 = vcmp.eq.f32.partialorder %v1130, 8.507059e+37
    %v1132 = vand.u32 %v1113, 2147483648
    %v1133 = vor.u32 1.1754944e-38, %v1132
    %v1134 = vsel %vm1131, %v1133, %v1129
    %v1135 = vmul.f32 1.0, %v1134
    %v1136 = vrcp.pop %v1114
    %v1137 = vmul.f32 %v1114, %v1136
    %v1138 = vsub.f32 1.0, %v1137
    %v1139 = vmul.f32 %v1136, %v1138
    %v1140 = vadd.f32 %v1136, %v1139
    %vm1141 = vweird.f32 %v1114
    %vm1142 = vweird.f32 %v1136
    %vm1143 = vmor %vm1141, %vm1142
    %v1144 = vsel %vm1143, %v1136, %v1140
    %v1145 = vand.u32 2147483647, %v1114
    %vm1146 = vcmp.eq.f32.partialorder %v1145, 8.507059e+37
    %v1147 = vand.u32 %v1114, 2147483648
    %v1148 = vor.u32 1.1754944e-38, %v1147
    %v1149 = vsel %vm1146, %v1148, %v1144
    %v1150 = vmul.f32 1.0, %v1149
    %v1151 = vrcp.pop %v1115
    %v1152 = vmul.f32 %v1115, %v1151
    %v1153 = vsub.f32 1.0, %v1152
    %v1154 = vmul.f32 %v1151, %v1153
    %v1155 = vadd.f32 %v1151, %v1154
    %vm1156 = vweird.f32 %v1115
    %vm1157 = vweird.f32 %v1151
    %vm1158 = vmor %vm1156, %vm1157
    %v1159 = vsel %vm1158, %v1151, %v1155
    %v1160 = vand.u32 2147483647, %v1115
    %vm1161 = vcmp.eq.f32.partialorder %v1160, 8.507059e+37
    %v1162 = vand.u32 %v1115, 2147483648
    %v1163 = vor.u32 1.1754944e-38, %v1162
    %v1164 = vsel %vm1161, %v1163, %v1159
    %v1165 = vmul.f32 1.0, %v1164
    %v1166 = vrcp.pop %v1116
    %v1167 = vmul.f32 %v1116, %v1166
    %v1168 = vsub.f32 1.0, %v1167
    %v1169 = vmul.f32 %v1166, %v1168
    %v1170 = vadd.f32 %v1166, %v1169
    %vm1171 = vweird.f32 %v1116
    %vm1172 = vweird.f32 %v1166
    %vm1173 = vmor %vm1171, %vm1172
    %v1174 = vsel %vm1173, %v1166, %v1170
    %v1175 = vand.u32 2147483647, %v1116
    %vm1176 = vcmp.eq.f32.partialorder %v1175, 8.507059e+37
    %v1177 = vand.u32 %v1116, 2147483648
    %v1178 = vor.u32 1.1754944e-38, %v1177
    %v1179 = vsel %vm1176, %v1178, %v1174
    %v1180 = vmul.f32 1.0, %v1179
    %v1181 = vrcp.pop %v1117
    %v1182 = vmul.f32 %v1117, %v1181
    %v1183 = vsub.f32 1.0, %v1182
    %v1184 = vmul.f32 %v1181, %v1183
    %v1185 = vadd.f32 %v1181, %v1184
    %vm1186 = vweird.f32 %v1117
    %vm1187 = vweird.f32 %v1181
    %vm1188 = vmor %vm1186, %vm1187
    %v1189 = vsel %vm1188, %v1181, %v1185
    %v1190 = vand.u32 2147483647, %v1117
    %vm1191 = vcmp.eq.f32.partialorder %v1190, 8.507059e+37
    %v1192 = vand.u32 %v1117, 2147483648
    %v1193 = vor.u32 1.1754944e-38, %v1192
    %v1194 = vsel %vm1191, %v1193, %v1189
    %v1195 = vmul.f32 1.0, %v1194
    %v1196 = vrcp.pop %v1118
    %v1197 = vmul.f32 %v1118, %v1196
    %v1198 = vsub.f32 1.0, %v1197
    %v1199 = vmul.f32 %v1196, %v1198
    %v1200 = vadd.f32 %v1196, %v1199
    %vm1201 = vweird.f32 %v1118
    %vm1202 = vweird.f32 %v1196
    %vm1203 = vmor %vm1201, %vm1202
    %v1204 = vsel %vm1203, %v1196, %v1200
    %v1205 = vand.u32 2147483647, %v1118
    %vm1206 = vcmp.eq.f32.partialorder %v1205, 8.507059e+37
    %v1207 = vand.u32 %v1118, 2147483648
    %v1208 = vor.u32 1.1754944e-38, %v1207
    %v1209 = vsel %vm1206, %v1208, %v1204
    %v1210 = vmul.f32 1.0, %v1209
    %v1211 = vrcp.pop %v1119
    %v1212 = vmul.f32 %v1119, %v1211
    %v1213 = vsub.f32 1.0, %v1212
    %v1214 = vmul.f32 %v1211, %v1213
    %v1215 = vadd.f32 %v1211, %v1214
    %vm1216 = vweird.f32 %v1119
    %vm1217 = vweird.f32 %v1211
    %vm1218 = vmor %vm1216, %vm1217
    %v1219 = vsel %vm1218, %v1211, %v1215
    %v1220 = vand.u32 2147483647, %v1119
    %vm1221 = vcmp.eq.f32.partialorder %v1220, 8.507059e+37
    %v1222 = vand.u32 %v1119, 2147483648
    %v1223 = vor.u32 1.1754944e-38, %v1222
    %v1224 = vsel %vm1221, %v1223, %v1219
    %v1225 = vmul.f32 1.0, %v1224
    %v1226 = vrcp.pop %v1120
    %v1227 = vmul.f32 %v1120, %v1226
    %v1228 = vsub.f32 1.0, %v1227
    %v1229 = vmul.f32 %v1226, %v1228
    %v1230 = vadd.f32 %v1226, %v1229
    %vm1231 = vweird.f32 %v1120
    %vm1232 = vweird.f32 %v1226
    %vm1233 = vmor %vm1231, %vm1232
    %v1234 = vsel %vm1233, %v1226, %v1230
    %v1235 = vand.u32 2147483647, %v1120
    %vm1236 = vcmp.eq.f32.partialorder %v1235, 8.507059e+37
    %v1237 = vand.u32 %v1120, 2147483648
    %v1238 = vor.u32 1.1754944e-38, %v1237
    %v1239 = vsel %vm1236, %v1238, %v1234
    %v1240 = vmul.f32 1.0, %v1239
    %v1249 = vrot.slane %v1081, 1
    %v1250 = vrot.slane %v1082, 1
    %v1251 = vrot.slane %v1083, 1
    %v1252 = vrot.slane %v1084, 1
    %v1253 = vrot.slane %v1085, 1
    %v1254 = vrot.slane %v1086, 1
    %v1255 = vrot.slane %v1087, 1
    %v1256 = vrot.slane %v1088, 1
    %v1265 = vxor.u32 %v1249, 2147483648
    %v1266 = vxor.u32 %v1250, 2147483648
    %v1267 = vxor.u32 %v1251, 2147483648
    %v1268 = vxor.u32 %v1252, 2147483648
    %v1269 = vxor.u32 %v1253, 2147483648
    %v1270 = vxor.u32 %v1254, 2147483648
    %v1271 = vxor.u32 %v1255, 2147483648
    %v1272 = vxor.u32 %v1256, 2147483648
    %v1273 = vmul.f32 %v1265, 1.442695
    %v1274 = vpow.pop %v1273
    %v1275 = vmul.f32 %v1266, 1.442695
    %v1276 = vpow.pop %v1275
    %v1277 = vmul.f32 %v1267, 1.442695
    %v1278 = vpow.pop %v1277
    %v1279 = vmul.f32 %v1268, 1.442695
    %v1280 = vpow.pop %v1279
    %v1281 = vmul.f32 %v1269, 1.442695
    %v1282 = vpow.pop %v1281
    %v1283 = vmul.f32 %v1270, 1.442695
    %v1284 = vpow.pop %v1283
    %v1285 = vmul.f32 %v1271, 1.442695
    %v1286 = vpow.pop %v1285
    %v1287 = vmul.f32 %v1272, 1.442695
    %v1288 = vpow.pop %v1287
    %v1289 = vadd.f32 %v1274, 1.0
    %v1290 = vadd.f32 %v1276, 1.0
    %v1291 = vadd.f32 %v1278, 1.0
    %v1292 = vadd.f32 %v1280, 1.0
    %v1293 = vadd.f32 %v1282, 1.0
    %v1294 = vadd.f32 %v1284, 1.0
    %v1295 = vadd.f32 %v1286, 1.0
    %v1296 = vadd.f32 %v1288, 1.0
    %v1297 = vrcp.pop %v1289
    %v1298 = vmul.f32 %v1289, %v1297
    %v1299 = vsub.f32 1.0, %v1298
    %v1300 = vmul.f32 %v1297, %v1299
    %v1301 = vadd.f32 %v1297, %v1300
    %vm1302 = vweird.f32 %v1289
    %vm1303 = vweird.f32 %v1297
    %vm1304 = vmor %vm1302, %vm1303
    %v1305 = vsel %vm1304, %v1297, %v1301
    %v1306 = vand.u32 2147483647, %v1289
    %vm1307 = vcmp.eq.f32.partialorder %v1306, 8.507059e+37
    %v1308 = vand.u32 %v1289, 2147483648
    %v1309 = vor.u32 1.1754944e-38, %v1308
    %v1310 = vsel %vm1307, %v1309, %v1305
    %v1311 = vmul.f32 1.0, %v1310
    %v1312 = vrcp.pop %v1290
    %v1313 = vmul.f32 %v1290, %v1312
    %v1314 = vsub.f32 1.0, %v1313
    %v1315 = vmul.f32 %v1312, %v1314
    %v1316 = vadd.f32 %v1312, %v1315
    %vm1317 = vweird.f32 %v1290
    %vm1318 = vweird.f32 %v1312
    %vm1319 = vmor %vm1317, %vm1318
    %v1320 = vsel %vm1319, %v1312, %v1316
    %v1321 = vand.u32 2147483647, %v1290
    %vm1322 = vcmp.eq.f32.partialorder %v1321, 8.507059e+37
    %v1323 = vand.u32 %v1290, 2147483648
    %v1324 = vor.u32 1.1754944e-38, %v1323
    %v1325 = vsel %vm1322, %v1324, %v1320
    %v1326 = vmul.f32 1.0, %v1325
    %v1327 = vrcp.pop %v1291
    %v1328 = vmul.f32 %v1291, %v1327
    %v1329 = vsub.f32 1.0, %v1328
    %v1330 = vmul.f32 %v1327, %v1329
    %v1331 = vadd.f32 %v1327, %v1330
    %vm1332 = vweird.f32 %v1291
    %vm1333 = vweird.f32 %v1327
    %vm1334 = vmor %vm1332, %vm1333
    %v1335 = vsel %vm1334, %v1327, %v1331
    %v1336 = vand.u32 2147483647, %v1291
    %vm1337 = vcmp.eq.f32.partialorder %v1336, 8.507059e+37
    %v1338 = vand.u32 %v1291, 2147483648
    %v1339 = vor.u32 1.1754944e-38, %v1338
    %v1340 = vsel %vm1337, %v1339, %v1335
    %v1341 = vmul.f32 1.0, %v1340
    %v1342 = vrcp.pop %v1292
    %v1343 = vmul.f32 %v1292, %v1342
    %v1344 = vsub.f32 1.0, %v1343
    %v1345 = vmul.f32 %v1342, %v1344
    %v1346 = vadd.f32 %v1342, %v1345
    %vm1347 = vweird.f32 %v1292
    %vm1348 = vweird.f32 %v1342
    %vm1349 = vmor %vm1347, %vm1348
    %v1350 = vsel %vm1349, %v1342, %v1346
    %v1351 = vand.u32 2147483647, %v1292
    %vm1352 = vcmp.eq.f32.partialorder %v1351, 8.507059e+37
    %v1353 = vand.u32 %v1292, 2147483648
    %v1354 = vor.u32 1.1754944e-38, %v1353
    %v1355 = vsel %vm1352, %v1354, %v1350
    %v1356 = vmul.f32 1.0, %v1355
    %v1357 = vrcp.pop %v1293
    %v1358 = vmul.f32 %v1293, %v1357
    %v1359 = vsub.f32 1.0, %v1358
    %v1360 = vmul.f32 %v1357, %v1359
    %v1361 = vadd.f32 %v1357, %v1360
    %vm1362 = vweird.f32 %v1293
    %vm1363 = vweird.f32 %v1357
    %vm1364 = vmor %vm1362, %vm1363
    %v1365 = vsel %vm1364, %v1357, %v1361
    %v1366 = vand.u32 2147483647, %v1293
    %vm1367 = vcmp.eq.f32.partialorder %v1366, 8.507059e+37
    %v1368 = vand.u32 %v1293, 2147483648
    %v1369 = vor.u32 1.1754944e-38, %v1368
    %v1370 = vsel %vm1367, %v1369, %v1365
    %v1371 = vmul.f32 1.0, %v1370
    %v1372 = vrcp.pop %v1294
    %v1373 = vmul.f32 %v1294, %v1372
    %v1374 = vsub.f32 1.0, %v1373
    %v1375 = vmul.f32 %v1372, %v1374
    %v1376 = vadd.f32 %v1372, %v1375
    %vm1377 = vweird.f32 %v1294
    %vm1378 = vweird.f32 %v1372
    %vm1379 = vmor %vm1377, %vm1378
    %v1380 = vsel %vm1379, %v1372, %v1376
    %v1381 = vand.u32 2147483647, %v1294
    %vm1382 = vcmp.eq.f32.partialorder %v1381, 8.507059e+37
    %v1383 = vand.u32 %v1294, 2147483648
    %v1384 = vor.u32 1.1754944e-38, %v1383
    %v1385 = vsel %vm1382, %v1384, %v1380
    %v1386 = vmul.f32 1.0, %v1385
    %v1387 = vrcp.pop %v1295
    %v1388 = vmul.f32 %v1295, %v1387
    %v1389 = vsub.f32 1.0, %v1388
    %v1390 = vmul.f32 %v1387, %v1389
    %v1391 = vadd.f32 %v1387, %v1390
    %vm1392 = vweird.f32 %v1295
    %vm1393 = vweird.f32 %v1387
    %vm1394 = vmor %vm1392, %vm1393
    %v1395 = vsel %vm1394, %v1387, %v1391
    %v1396 = vand.u32 2147483647, %v1295
    %vm1397 = vcmp.eq.f32.partialorder %v1396, 8.507059e+37
    %v1398 = vand.u32 %v1295, 2147483648
    %v1399 = vor.u32 1.1754944e-38, %v1398
    %v1400 = vsel %vm1397, %v1399, %v1395
    %v1401 = vmul.f32 1.0, %v1400
    %v1402 = vrcp.pop %v1296
    %v1403 = vmul.f32 %v1296, %v1402
    %v1404 = vsub.f32 1.0, %v1403
    %v1405 = vmul.f32 %v1402, %v1404
    %v1406 = vadd.f32 %v1402, %v1405
    %vm1407 = vweird.f32 %v1296
    %vm1408 = vweird.f32 %v1402
    %vm1409 = vmor %vm1407, %vm1408
    %v1410 = vsel %vm1409, %v1402, %v1406
    %v1411 = vand.u32 2147483647, %v1296
    %vm1412 = vcmp.eq.f32.partialorder %v1411, 8.507059e+37
    %v1413 = vand.u32 %v1296, 2147483648
    %v1414 = vor.u32 1.1754944e-38, %v1413
    %v1415 = vsel %vm1412, %v1414, %v1410
    %v1416 = vmul.f32 1.0, %v1415
    %v1417 = vrot.slane %v1081, 2
    %v1418 = vrot.slane %v1082, 2
    %v1419 = vrot.slane %v1083, 2
    %v1420 = vrot.slane %v1084, 2
    %v1421 = vrot.slane %v1085, 2
    %v1422 = vrot.slane %v1086, 2
    %v1423 = vrot.slane %v1087, 2
    %v1424 = vrot.slane %v1088, 2
    %v1433 = vtanh.pop %v1417
    %v1434 = vtanh.pop %v1418
    %v1435 = vtanh.pop %v1419
    %v1436 = vtanh.pop %v1420
    %v1437 = vtanh.pop %v1421
    %v1438 = vtanh.pop %v1422
    %v1439 = vtanh.pop %v1423
    %v1440 = vtanh.pop %v1424
    %s1441 = sadd.f32 %s165, 1.0
    %s1442 = ssub.f32 %s1441, 0.001
    %v1443 = vstv %s1442
    %v1444 = vmul.f32 %v1135, %v1443
    %v1445 = vmul.f32 %v1150, %v1443
    %v1446 = vmul.f32 %v1165, %v1443
    %v1447 = vmul.f32 %v1180, %v1443
    %v1448 = vmul.f32 %v1195, %v1443
    %v1449 = vmul.f32 %v1210, %v1443
    %v1450 = vmul.f32 %v1225, %v1443
    %v1451 = vmul.f32 %v1240, %v1443
    %v1452 = vsub.f32 1.0, %v1135
    %v1453 = vsub.f32 1.0, %v1150
    %v1454 = vsub.f32 1.0, %v1165
    %v1455 = vsub.f32 1.0, %v1180
    %v1456 = vsub.f32 1.0, %v1195
    %v1457 = vsub.f32 1.0, %v1210
    %v1458 = vsub.f32 1.0, %v1225
    %v1459 = vsub.f32 1.0, %v1240
    %v1460 = vmul.f32 %v1452, %v698
    %v1461 = vmul.f32 %v1453, %v699
    %v1462 = vmul.f32 %v1454, %v700
    %v1463 = vmul.f32 %v1455, %v701
    %v1464 = vmul.f32 %v1456, %v702
    %v1465 = vmul.f32 %v1457, %v703
    %v1466 = vmul.f32 %v1458, %v704
    %v1467 = vmul.f32 %v1459, %v705
    %v1468 = vadd.f32 %v1444, %v1460
    %v1469 = vadd.f32 %v1445, %v1461
    %v1470 = vadd.f32 %v1446, %v1462
    %v1471 = vadd.f32 %v1447, %v1463
    %v1472 = vadd.f32 %v1448, %v1464
    %v1473 = vadd.f32 %v1449, %v1465
    %v1474 = vadd.f32 %v1450, %v1466
    %v1475 = vadd.f32 %v1451, %v1467
    %v1476 = vstv %s1441
    %v1477 = vsub.f32 %v1476, %v1468
    %v1478 = vsub.f32 %v1476, %v1469
    %v1479 = vsub.f32 %v1476, %v1470
    %v1480 = vsub.f32 %v1476, %v1471
    %v1481 = vsub.f32 %v1476, %v1472
    %v1482 = vsub.f32 %v1476, %v1473
    %v1483 = vsub.f32 %v1476, %v1474
    %v1484 = vsub.f32 %v1476, %v1475
    %v1485 = vadd.f32 %v1477, 0.001
    %v1486 = vadd.f32 %v1478, 0.001
    %v1487 = vadd.f32 %v1479, 0.001
    %v1488 = vadd.f32 %v1480, 0.001
    %v1489 = vadd.f32 %v1481, 0.001
    %v1490 = vadd.f32 %v1482, 0.001
    %v1491 = vadd.f32 %v1483, 0.001
    %v1492 = vadd.f32 %v1484, 0.001
    %v1493 = vadd.f32 %v1477, 1.0
    %v1494 = vadd.f32 %v1478, 1.0
    %v1495 = vadd.f32 %v1479, 1.0
    %v1496 = vadd.f32 %v1480, 1.0
    %v1497 = vadd.f32 %v1481, 1.0
    %v1498 = vadd.f32 %v1482, 1.0
    %v1499 = vadd.f32 %v1483, 1.0
    %v1500 = vadd.f32 %v1484, 1.0
    %v1501 = vrcp.pop %v1493
    %v1502 = vmul.f32 %v1493, %v1501
    %v1503 = vsub.f32 1.0, %v1502
    %v1504 = vmul.f32 %v1501, %v1503
    %v1505 = vadd.f32 %v1501, %v1504
    %vm1506 = vweird.f32 %v1493
    %vm1507 = vweird.f32 %v1501
    %vm1508 = vmor %vm1506, %vm1507
    %v1509 = vsel %vm1508, %v1501, %v1505
    %v1510 = vand.u32 2147483647, %v1493
    %vm1511 = vcmp.eq.f32.partialorder %v1510, 8.507059e+37
    %v1512 = vand.u32 %v1493, 2147483648
    %v1513 = vor.u32 1.1754944e-38, %v1512
    %v1514 = vsel %vm1511, %v1513, %v1509
    %v1515 = vmul.f32 %v1485, %v1514
    %v1516 = vrcp.pop %v1494
    %v1517 = vmul.f32 %v1494, %v1516
    %v1518 = vsub.f32 1.0, %v1517
    %v1519 = vmul.f32 %v1516, %v1518
    %v1520 = vadd.f32 %v1516, %v1519
    %vm1521 = vweird.f32 %v1494
    %vm1522 = vweird.f32 %v1516
    %vm1523 = vmor %vm1521, %vm1522
    %v1524 = vsel %vm1523, %v1516, %v1520
    %v1525 = vand.u32 2147483647, %v1494
    %vm1526 = vcmp.eq.f32.partialorder %v1525, 8.507059e+37
    %v1527 = vand.u32 %v1494, 2147483648
    %v1528 = vor.u32 1.1754944e-38, %v1527
    %v1529 = vsel %vm1526, %v1528, %v1524
    %v1530 = vmul.f32 %v1486, %v1529
    %v1531 = vrcp.pop %v1495
    %v1532 = vmul.f32 %v1495, %v1531
    %v1533 = vsub.f32 1.0, %v1532
    %v1534 = vmul.f32 %v1531, %v1533
    %v1535 = vadd.f32 %v1531, %v1534
    %vm1536 = vweird.f32 %v1495
    %vm1537 = vweird.f32 %v1531
    %vm1538 = vmor %vm1536, %vm1537
    %v1539 = vsel %vm1538, %v1531, %v1535
    %v1540 = vand.u32 2147483647, %v1495
    %vm1541 = vcmp.eq.f32.partialorder %v1540, 8.507059e+37
    %v1542 = vand.u32 %v1495, 2147483648
    %v1543 = vor.u32 1.1754944e-38, %v1542
    %v1544 = vsel %vm1541, %v1543, %v1539
    %v1545 = vmul.f32 %v1487, %v1544
    %v1546 = vrcp.pop %v1496
    %v1547 = vmul.f32 %v1496, %v1546
    %v1548 = vsub.f32 1.0, %v1547
    %v1549 = vmul.f32 %v1546, %v1548
    %v1550 = vadd.f32 %v1546, %v1549
    %vm1551 = vweird.f32 %v1496
    %vm1552 = vweird.f32 %v1546
    %vm1553 = vmor %vm1551, %vm1552
    %v1554 = vsel %vm1553, %v1546, %v1550
    %v1555 = vand.u32 2147483647, %v1496
    %vm1556 = vcmp.eq.f32.partialorder %v1555, 8.507059e+37
    %v1557 = vand.u32 %v1496, 2147483648
    %v1558 = vor.u32 1.1754944e-38, %v1557
    %v1559 = vsel %vm1556, %v1558, %v1554
    %v1560 = vmul.f32 %v1488, %v1559
    %v1561 = vrcp.pop %v1497
    %v1562 = vmul.f32 %v1497, %v1561
    %v1563 = vsub.f32 1.0, %v1562
    %v1564 = vmul.f32 %v1561, %v1563
    %v1565 = vadd.f32 %v1561, %v1564
    %vm1566 = vweird.f32 %v1497
    %vm1567 = vweird.f32 %v1561
    %vm1568 = vmor %vm1566, %vm1567
    %v1569 = vsel %vm1568, %v1561, %v1565
    %v1570 = vand.u32 2147483647, %v1497
    %vm1571 = vcmp.eq.f32.partialorder %v1570, 8.507059e+37
    %v1572 = vand.u32 %v1497, 2147483648
    %v1573 = vor.u32 1.1754944e-38, %v1572
    %v1574 = vsel %vm1571, %v1573, %v1569
    %v1575 = vmul.f32 %v1489, %v1574
    %v1576 = vrcp.pop %v1498
    %v1577 = vmul.f32 %v1498, %v1576
    %v1578 = vsub.f32 1.0, %v1577
    %v1579 = vmul.f32 %v1576, %v1578
    %v1580 = vadd.f32 %v1576, %v1579
    %vm1581 = vweird.f32 %v1498
    %vm1582 = vweird.f32 %v1576
    %vm1583 = vmor %vm1581, %vm1582
    %v1584 = vsel %vm1583, %v1576, %v1580
    %v1585 = vand.u32 2147483647, %v1498
    %vm1586 = vcmp.eq.f32.partialorder %v1585, 8.507059e+37
    %v1587 = vand.u32 %v1498, 2147483648
    %v1588 = vor.u32 1.1754944e-38, %v1587
    %v1589 = vsel %vm1586, %v1588, %v1584
    %v1590 = vmul.f32 %v1490, %v1589
    %v1591 = vrcp.pop %v1499
    %v1592 = vmul.f32 %v1499, %v1591
    %v1593 = vsub.f32 1.0, %v1592
    %v1594 = vmul.f32 %v1591, %v1593
    %v1595 = vadd.f32 %v1591, %v1594
    %vm1596 = vweird.f32 %v1499
    %vm1597 = vweird.f32 %v1591
    %vm1598 = vmor %vm1596, %vm1597
    %v1599 = vsel %vm1598, %v1591, %v1595
    %v1600 = vand.u32 2147483647, %v1499
    %vm1601 = vcmp.eq.f32.partialorder %v1600, 8.507059e+37
    %v1602 = vand.u32 %v1499, 2147483648
    %v1603 = vor.u32 1.1754944e-38, %v1602
    %v1604 = vsel %vm1601, %v1603, %v1599
    %v1605 = vmul.f32 %v1491, %v1604
    %v1606 = vrcp.pop %v1500
    %v1607 = vmul.f32 %v1500, %v1606
    %v1608 = vsub.f32 1.0, %v1607
    %v1609 = vmul.f32 %v1606, %v1608
    %v1610 = vadd.f32 %v1606, %v1609
    %vm1611 = vweird.f32 %v1500
    %vm1612 = vweird.f32 %v1606
    %vm1613 = vmor %vm1611, %vm1612
    %v1614 = vsel %vm1613, %v1606, %v1610
    %v1615 = vand.u32 2147483647, %v1500
    %vm1616 = vcmp.eq.f32.partialorder %v1615, 8.507059e+37
    %v1617 = vand.u32 %v1500, 2147483648
    %v1618 = vor.u32 1.1754944e-38, %v1617
    %v1619 = vsel %vm1616, %v1618, %v1614
    %v1620 = vmul.f32 %v1492, %v1619
    %v1621 = vpow.f32 %v1515, %v162
    %v1622 = vpow.f32 %v1530, %v851
    %v1623 = vpow.f32 %v1545, %v852
    %v1624 = vpow.f32 %v1560, %v853
    %v1625 = vpow.f32 %v1575, %v854
    %v1626 = vpow.f32 %v1590, %v855
    %v1627 = vpow.f32 %v1605, %v856
    %v1628 = vpow.f32 %v1620, %v857
    %v1629 = vmul.f32 %v1621, %v912
    %v1630 = vmul.f32 %v1622, %v913
    %v1631 = vmul.f32 %v1623, %v914
    %v1632 = vmul.f32 %v1624, %v915
    %v1633 = vmul.f32 %v1625, %v916
    %v1634 = vmul.f32 %v1626, %v917
    %v1635 = vmul.f32 %v1627, %v918
    %v1636 = vmul.f32 %v1628, %v919
    %v1637 = vsub.f32 1.0, %v1621
    %v1638 = vsub.f32 1.0, %v1622
    %v1639 = vsub.f32 1.0, %v1623
    %v1640 = vsub.f32 1.0, %v1624
    %v1641 = vsub.f32 1.0, %v1625
    %v1642 = vsub.f32 1.0, %v1626
    %v1643 = vsub.f32 1.0, %v1627
    %v1644 = vsub.f32 1.0, %v1628
    %v1645 = vmul.f32 %v1637, %v1433
    %v1646 = vmul.f32 %v1638, %v1434
    %v1647 = vmul.f32 %v1639, %v1435
    %v1648 = vmul.f32 %v1640, %v1436
    %v1649 = vmul.f32 %v1641, %v1437
    %v1650 = vmul.f32 %v1642, %v1438
    %v1651 = vmul.f32 %v1643, %v1439
    %v1652 = vmul.f32 %v1644, %v1440
    %v1653 = vadd.f32 %v1629, %v1645
    %v1654 = vadd.f32 %v1630, %v1646
    %v1655 = vadd.f32 %v1631, %v1647
    %v1656 = vadd.f32 %v1632, %v1648
    %v1657 = vadd.f32 %v1633, %v1649
    %v1658 = vadd.f32 %v1634, %v1650
    %v1659 = vadd.f32 %v1635, %v1651
    %v1660 = vadd.f32 %v1636, %v1652
    %v1661 = vtanh.pop %v1653
    %v1662 = vtanh.pop %v1654
    %v1663 = vtanh.pop %v1655
    %v1664 = vtanh.pop %v1656
    %v1665 = vtanh.pop %v1657
    %v1666 = vtanh.pop %v1658
    %v1667 = vtanh.pop %v1659
    %v1668 = vtanh.pop %v1660
    %v1669 = vmul.f32 %v1311, %v1661
    %v1670 = vmul.f32 %v1326, %v1662
    %v1671 = vmul.f32 %v1341, %v1663
    %v1672 = vmul.f32 %v1356, %v1664
    %v1673 = vmul.f32 %v1371, %v1665
    %v1674 = vmul.f32 %v1386, %v1666
    %v1675 = vmul.f32 %v1401, %v1667
    %v1676 = vmul.f32 %v1416, %v1668
    %1677 = vst [vmem:[#allocation14 + $0x1] sm:$0x1] %v1669
    %1678 = vst [vmem:[#allocation14 + $0x9] sm:$0x1] %v1670
    %1679 = vst [vmem:[#allocation14 + $0x11] sm:$0x1] %v1671
    %1680 = vst [vmem:[#allocation14 + $0x19] sm:$0x1] %v1672
    %1681 = vst [vmem:[#allocation14 + $0x21] sm:$0x1] %v1673
    %1682 = vst [vmem:[#allocation14 + $0x29] sm:$0x1] %v1674
    %1683 = vst [vmem:[#allocation14 + $0x31] sm:$0x1] %v1675
    %1684 = vst [vmem:[#allocation14 + $0x39] sm:$0x1] %v1676
    %s1685 = scalar_lea.vmem [#allocation5], 2
    %v1686 = vld [vmem:[%s1685] ss:$8 sm:$0x7]
    %s1687 = scalar_lea.vmem [#allocation5], 26
    %v1688 = vld [vmem:[%s1687] ss:$8 sm:$0x7]
    %s1689 = scalar_lea.vmem [#allocation5], 50
    %v1690 = vld [vmem:[%s1689] ss:$8 sm:$0x7]
    %s1691 = scalar_lea.vmem [#allocation5], 74
    %v1692 = vld [vmem:[%s1691] ss:$8 sm:$0x7]
    %s1693 = scalar_lea.vmem [#allocation5], 98
    %v1694 = vld [vmem:[%s1693] ss:$8 sm:$0x7]
    %s1695 = scalar_lea.vmem [#allocation5], 122
    %v1696 = vld [vmem:[%s1695] ss:$8 sm:$0x7]
    %s1697 = scalar_lea.vmem [#allocation5], 146
    %v1698 = vld [vmem:[%s1697] ss:$8 sm:$0x7]
    %s1699 = scalar_lea.vmem [#allocation5], 170
    %v1700 = vld [vmem:[%s1699] ss:$8 sm:$0x7]
    %1709 = vst [vmem:[#allocation1] ss:$9 sm:$0xff] %v1669
    %s1710 = scalar_lea.vmem [#allocation1], 1
    %1711 = vst [vmem:[%s1710] ss:$9 sm:$0xff] %v1670
    %s1712 = scalar_lea.vmem [#allocation1], 2
    %1713 = vst [vmem:[%s1712] ss:$9 sm:$0xff] %v1671
    %s1714 = scalar_lea.vmem [#allocation1], 3
    %1715 = vst [vmem:[%s1714] ss:$9 sm:$0xff] %v1672
    %s1716 = scalar_lea.vmem [#allocation1], 4
    %1717 = vst [vmem:[%s1716] ss:$9 sm:$0xff] %v1673
    %s1718 = scalar_lea.vmem [#allocation1], 5
    %1719 = vst [vmem:[%s1718] ss:$9 sm:$0xff] %v1674
    %s1720 = scalar_lea.vmem [#allocation1], 6
    %1721 = vst [vmem:[%s1720] ss:$9 sm:$0xff] %v1675
    %s1722 = scalar_lea.vmem [#allocation1], 7
    %1723 = vst [vmem:[%s1722] ss:$9 sm:$0xff] %v1676
    %v1724 = vld [vmem:[#allocation1] sm:$0xff]
    %1726 = vmatpush.msra.mxu0 %v157
    %1727 = vmatpush.msra.mxu0 %v154
    %1728 = vmatpush.msra.mxu0 %v151
    %1729 = vmatpush.msra.mxu0 %v148
    %1730 = vmatpush.msra.mxu0 %v145
    %1731 = vmatpush.msra.mxu0 %v142
    %1732 = vmatpush.msra.mxu0 %v139
    %1733 = vmatpush.msra.mxu0 %v136
    %1734 = vmatpush.msra.mxu0 %v133
    %1735 = vmatpush.msra.mxu0 %v130
    %1736 = vmatpush.msra.mxu0 %v127
    %1737 = vmatpush.msra.mxu0 %v124
    %1738 = vmatpush.msra.mxu0 %v121
    %1739 = vmatpush.msra.mxu0 %v118
    %1740 = vmatpush.msra.mxu0 %v115
    %1741 = vmatpush.msra.mxu0 %v112
    %1742 = vmatmul.f32.gmra.mxu0 %v1724
    %v1743 = vpop.f32.mrf.mxu0
    %v1744 = vadd.f32 0.0, %v1743
    %1745 = vdwg.mxu0
    %1746 = vmatpush.msra.mxu0 %v158
    %1747 = vmatpush.msra.mxu0 %v155
    %1748 = vmatpush.msra.mxu0 %v152
    %1749 = vmatpush.msra.mxu0 %v149
    %1750 = vmatpush.msra.mxu0 %v146
    %1751 = vmatpush.msra.mxu0 %v143
    %1752 = vmatpush.msra.mxu0 %v140
    %1753 = vmatpush.msra.mxu0 %v137
    %1754 = vmatpush.msra.mxu0 %v134
    %1755 = vmatpush.msra.mxu0 %v131
    %1756 = vmatpush.msra.mxu0 %v128
    %1757 = vmatpush.msra.mxu0 %v125
    %1758 = vmatpush.msra.mxu0 %v122
    %1759 = vmatpush.msra.mxu0 %v119
    %1760 = vmatpush.msra.mxu0 %v116
    %1761 = vmatpush.msra.mxu0 %v113
    %1762 = vmatmul.f32.gmra.mxu0 %v1724
    %v1763 = vpop.f32.mrf.mxu0
    %v1764 = vadd.f32 0.0, %v1763
    %1765 = vdwg.mxu0
    %1766 = vmatpush.msra.mxu0 %v159
    %1767 = vmatpush.msra.mxu0 %v156
    %1768 = vmatpush.msra.mxu0 %v153
    %1769 = vmatpush.msra.mxu0 %v150
    %1770 = vmatpush.msra.mxu0 %v147
    %1771 = vmatpush.msra.mxu0 %v144
    %1772 = vmatpush.msra.mxu0 %v141
    %1773 = vmatpush.msra.mxu0 %v138
    %1774 = vmatpush.msra.mxu0 %v135
    %1775 = vmatpush.msra.mxu0 %v132
    %1776 = vmatpush.msra.mxu0 %v129
    %1777 = vmatpush.msra.mxu0 %v126
    %1778 = vmatpush.msra.mxu0 %v123
    %1779 = vmatpush.msra.mxu0 %v120
    %1780 = vmatpush.msra.mxu0 %v117
    %1781 = vmatpush.msra.mxu0 %v114
    %1782 = vmatmul.f32.gmra.mxu0 %v1724
    %v1783 = vpop.f32.mrf.mxu0
    %v1784 = vadd.f32 0.0, %v1783
    %1785 = vdwg.mxu0
    %v1789 = vrot.slane %v1764, 7
    %v1790 = vrot.slane %v1784, 6
    %v1791 = vsel %vm249, %v1744, %v1789
    %v1792 = vsel %vm251, %v1791, %v1790
    %v1793 = vsel %vm253, %v1744, %v1789
    %v1794 = vsel %vm255, %v1793, %v1790
    %v1795 = vrot.slane %v1794, 1
    %v1796 = vsel %vm258, %v1744, %v1789
    %v1797 = vsel %vm260, %v1796, %v1790
    %v1798 = vrot.slane %v1797, 2
    %v1799 = vsel %vm263, %v1744, %v1789
    %v1800 = vsel %vm265, %v1799, %v1790
    %v1801 = vrot.slane %v1800, 3
    %v1802 = vsel %vm268, %v1744, %v1789
    %v1803 = vsel %vm270, %v1802, %v1790
    %v1804 = vrot.slane %v1803, 4
    %v1805 = vsel %vm273, %v1744, %v1789
    %v1806 = vsel %vm275, %v1805, %v1790
    %v1807 = vrot.slane %v1806, 5
    %v1808 = vsel %vm278, %v1744, %v1789
    %v1809 = vsel %vm280, %v1790, %v1808
    %v1810 = vrot.slane %v1809, 6
    %v1811 = vsel %vm283, %v1789, %v1744
    %v1812 = vsel %vm285, %v1790, %v1811
    %v1813 = vrot.slane %v1812, 7
    %v1822 = vadd.f32 %v1686, %v1792
    %v1823 = vadd.f32 %v1688, %v1795
    %v1824 = vadd.f32 %v1690, %v1798
    %v1825 = vadd.f32 %v1692, %v1801
    %v1826 = vadd.f32 %v1694, %v1804
    %v1827 = vadd.f32 %v1696, %v1807
    %v1828 = vadd.f32 %v1698, %v1810
    %v1829 = vadd.f32 %v1700, %v1813
    %v1830 = vxor.u32 %v1822, 2147483648
    %v1831 = vxor.u32 %v1823, 2147483648
    %v1832 = vxor.u32 %v1824, 2147483648
    %v1833 = vxor.u32 %v1825, 2147483648
    %v1834 = vxor.u32 %v1826, 2147483648
    %v1835 = vxor.u32 %v1827, 2147483648
    %v1836 = vxor.u32 %v1828, 2147483648
    %v1837 = vxor.u32 %v1829, 2147483648
    %v1838 = vmul.f32 %v1830, 1.442695
    %v1839 = vpow.pop %v1838
    %v1840 = vmul.f32 %v1831, 1.442695
    %v1841 = vpow.pop %v1840
    %v1842 = vmul.f32 %v1832, 1.442695
    %v1843 = vpow.pop %v1842
    %v1844 = vmul.f32 %v1833, 1.442695
    %v1845 = vpow.pop %v1844
    %v1846 = vmul.f32 %v1834, 1.442695
    %v1847 = vpow.pop %v1846
    %v1848 = vmul.f32 %v1835, 1.442695
    %v1849 = vpow.pop %v1848
    %v1850 = vmul.f32 %v1836, 1.442695
    %v1851 = vpow.pop %v1850
    %v1852 = vmul.f32 %v1837, 1.442695
    %v1853 = vpow.pop %v1852
    %v1854 = vadd.f32 %v1839, 1.0
    %v1855 = vadd.f32 %v1841, 1.0
    %v1856 = vadd.f32 %v1843, 1.0
    %v1857 = vadd.f32 %v1845, 1.0
    %v1858 = vadd.f32 %v1847, 1.0
    %v1859 = vadd.f32 %v1849, 1.0
    %v1860 = vadd.f32 %v1851, 1.0
    %v1861 = vadd.f32 %v1853, 1.0
    %v1862 = vrcp.pop %v1854
    %v1863 = vmul.f32 %v1854, %v1862
    %v1864 = vsub.f32 1.0, %v1863
    %v1865 = vmul.f32 %v1862, %v1864
    %v1866 = vadd.f32 %v1862, %v1865
    %vm1867 = vweird.f32 %v1854
    %vm1868 = vweird.f32 %v1862
    %vm1869 = vmor %vm1867, %vm1868
    %v1870 = vsel %vm1869, %v1862, %v1866
    %v1871 = vand.u32 2147483647, %v1854
    %vm1872 = vcmp.eq.f32.partialorder %v1871, 8.507059e+37
    %v1873 = vand.u32 %v1854, 2147483648
    %v1874 = vor.u32 1.1754944e-38, %v1873
    %v1875 = vsel %vm1872, %v1874, %v1870
    %v1876 = vmul.f32 1.0, %v1875
    %v1877 = vrcp.pop %v1855
    %v1878 = vmul.f32 %v1855, %v1877
    %v1879 = vsub.f32 1.0, %v1878
    %v1880 = vmul.f32 %v1877, %v1879
    %v1881 = vadd.f32 %v1877, %v1880
    %vm1882 = vweird.f32 %v1855
    %vm1883 = vweird.f32 %v1877
    %vm1884 = vmor %vm1882, %vm1883
    %v1885 = vsel %vm1884, %v1877, %v1881
    %v1886 = vand.u32 2147483647, %v1855
    %vm1887 = vcmp.eq.f32.partialorder %v1886, 8.507059e+37
    %v1888 = vand.u32 %v1855, 2147483648
    %v1889 = vor.u32 1.1754944e-38, %v1888
    %v1890 = vsel %vm1887, %v1889, %v1885
    %v1891 = vmul.f32 1.0, %v1890
    %v1892 = vrcp.pop %v1856
    %v1893 = vmul.f32 %v1856, %v1892
    %v1894 = vsub.f32 1.0, %v1893
    %v1895 = vmul.f32 %v1892, %v1894
    %v1896 = vadd.f32 %v1892, %v1895
    %vm1897 = vweird.f32 %v1856
    %vm1898 = vweird.f32 %v1892
    %vm1899 = vmor %vm1897, %vm1898
    %v1900 = vsel %vm1899, %v1892, %v1896
    %v1901 = vand.u32 2147483647, %v1856
    %vm1902 = vcmp.eq.f32.partialorder %v1901, 8.507059e+37
    %v1903 = vand.u32 %v1856, 2147483648
    %v1904 = vor.u32 1.1754944e-38, %v1903
    %v1905 = vsel %vm1902, %v1904, %v1900
    %v1906 = vmul.f32 1.0, %v1905
    %v1907 = vrcp.pop %v1857
    %v1908 = vmul.f32 %v1857, %v1907
    %v1909 = vsub.f32 1.0, %v1908
    %v1910 = vmul.f32 %v1907, %v1909
    %v1911 = vadd.f32 %v1907, %v1910
    %vm1912 = vweird.f32 %v1857
    %vm1913 = vweird.f32 %v1907
    %vm1914 = vmor %vm1912, %vm1913
    %v1915 = vsel %vm1914, %v1907, %v1911
    %v1916 = vand.u32 2147483647, %v1857
    %vm1917 = vcmp.eq.f32.partialorder %v1916, 8.507059e+37
    %v1918 = vand.u32 %v1857, 2147483648
    %v1919 = vor.u32 1.1754944e-38, %v1918
    %v1920 = vsel %vm1917, %v1919, %v1915
    %v1921 = vmul.f32 1.0, %v1920
    %v1922 = vrcp.pop %v1858
    %v1923 = vmul.f32 %v1858, %v1922
    %v1924 = vsub.f32 1.0, %v1923
    %v1925 = vmul.f32 %v1922, %v1924
    %v1926 = vadd.f32 %v1922, %v1925
    %vm1927 = vweird.f32 %v1858
    %vm1928 = vweird.f32 %v1922
    %vm1929 = vmor %vm1927, %vm1928
    %v1930 = vsel %vm1929, %v1922, %v1926
    %v1931 = vand.u32 2147483647, %v1858
    %vm1932 = vcmp.eq.f32.partialorder %v1931, 8.507059e+37
    %v1933 = vand.u32 %v1858, 2147483648
    %v1934 = vor.u32 1.1754944e-38, %v1933
    %v1935 = vsel %vm1932, %v1934, %v1930
    %v1936 = vmul.f32 1.0, %v1935
    %v1937 = vrcp.pop %v1859
    %v1938 = vmul.f32 %v1859, %v1937
    %v1939 = vsub.f32 1.0, %v1938
    %v1940 = vmul.f32 %v1937, %v1939
    %v1941 = vadd.f32 %v1937, %v1940
    %vm1942 = vweird.f32 %v1859
    %vm1943 = vweird.f32 %v1937
    %vm1944 = vmor %vm1942, %vm1943
    %v1945 = vsel %vm1944, %v1937, %v1941
    %v1946 = vand.u32 2147483647, %v1859
    %vm1947 = vcmp.eq.f32.partialorder %v1946, 8.507059e+37
    %v1948 = vand.u32 %v1859, 2147483648
    %v1949 = vor.u32 1.1754944e-38, %v1948
    %v1950 = vsel %vm1947, %v1949, %v1945
    %v1951 = vmul.f32 1.0, %v1950
    %v1952 = vrcp.pop %v1860
    %v1953 = vmul.f32 %v1860, %v1952
    %v1954 = vsub.f32 1.0, %v1953
    %v1955 = vmul.f32 %v1952, %v1954
    %v1956 = vadd.f32 %v1952, %v1955
    %vm1957 = vweird.f32 %v1860
    %vm1958 = vweird.f32 %v1952
    %vm1959 = vmor %vm1957, %vm1958
    %v1960 = vsel %vm1959, %v1952, %v1956
    %v1961 = vand.u32 2147483647, %v1860
    %vm1962 = vcmp.eq.f32.partialorder %v1961, 8.507059e+37
    %v1963 = vand.u32 %v1860, 2147483648
    %v1964 = vor.u32 1.1754944e-38, %v1963
    %v1965 = vsel %vm1962, %v1964, %v1960
    %v1966 = vmul.f32 1.0, %v1965
    %v1967 = vrcp.pop %v1861
    %v1968 = vmul.f32 %v1861, %v1967
    %v1969 = vsub.f32 1.0, %v1968
    %v1970 = vmul.f32 %v1967, %v1969
    %v1971 = vadd.f32 %v1967, %v1970
    %vm1972 = vweird.f32 %v1861
    %vm1973 = vweird.f32 %v1967
    %vm1974 = vmor %vm1972, %vm1973
    %v1975 = vsel %vm1974, %v1967, %v1971
    %v1976 = vand.u32 2147483647, %v1861
    %vm1977 = vcmp.eq.f32.partialorder %v1976, 8.507059e+37
    %v1978 = vand.u32 %v1861, 2147483648
    %v1979 = vor.u32 1.1754944e-38, %v1978
    %v1980 = vsel %vm1977, %v1979, %v1975
    %v1981 = vmul.f32 1.0, %v1980
    %v1990 = vrot.slane %v1822, 1
    %v1991 = vrot.slane %v1823, 1
    %v1992 = vrot.slane %v1824, 1
    %v1993 = vrot.slane %v1825, 1
    %v1994 = vrot.slane %v1826, 1
    %v1995 = vrot.slane %v1827, 1
    %v1996 = vrot.slane %v1828, 1
    %v1997 = vrot.slane %v1829, 1
    %v2006 = vxor.u32 %v1990, 2147483648
    %v2007 = vxor.u32 %v1991, 2147483648
    %v2008 = vxor.u32 %v1992, 2147483648
    %v2009 = vxor.u32 %v1993, 2147483648
    %v2010 = vxor.u32 %v1994, 2147483648
    %v2011 = vxor.u32 %v1995, 2147483648
    %v2012 = vxor.u32 %v1996, 2147483648
    %v2013 = vxor.u32 %v1997, 2147483648
    %v2014 = vmul.f32 %v2006, 1.442695
    %v2015 = vpow.pop %v2014
    %v2016 = vmul.f32 %v2007, 1.442695
    %v2017 = vpow.pop %v2016
    %v2018 = vmul.f32 %v2008, 1.442695
    %v2019 = vpow.pop %v2018
    %v2020 = vmul.f32 %v2009, 1.442695
    %v2021 = vpow.pop %v2020
    %v2022 = vmul.f32 %v2010, 1.442695
    %v2023 = vpow.pop %v2022
    %v2024 = vmul.f32 %v2011, 1.442695
    %v2025 = vpow.pop %v2024
    %v2026 = vmul.f32 %v2012, 1.442695
    %v2027 = vpow.pop %v2026
    %v2028 = vmul.f32 %v2013, 1.442695
    %v2029 = vpow.pop %v2028
    %v2030 = vadd.f32 %v2015, 1.0
    %v2031 = vadd.f32 %v2017, 1.0
    %v2032 = vadd.f32 %v2019, 1.0
    %v2033 = vadd.f32 %v2021, 1.0
    %v2034 = vadd.f32 %v2023, 1.0
    %v2035 = vadd.f32 %v2025, 1.0
    %v2036 = vadd.f32 %v2027, 1.0
    %v2037 = vadd.f32 %v2029, 1.0
    %v2038 = vrcp.pop %v2030
    %v2039 = vmul.f32 %v2030, %v2038
    %v2040 = vsub.f32 1.0, %v2039
    %v2041 = vmul.f32 %v2038, %v2040
    %v2042 = vadd.f32 %v2038, %v2041
    %vm2043 = vweird.f32 %v2030
    %vm2044 = vweird.f32 %v2038
    %vm2045 = vmor %vm2043, %vm2044
    %v2046 = vsel %vm2045, %v2038, %v2042
    %v2047 = vand.u32 2147483647, %v2030
    %vm2048 = vcmp.eq.f32.partialorder %v2047, 8.507059e+37
    %v2049 = vand.u32 %v2030, 2147483648
    %v2050 = vor.u32 1.1754944e-38, %v2049
    %v2051 = vsel %vm2048, %v2050, %v2046
    %v2052 = vmul.f32 1.0, %v2051
    %v2053 = vrcp.pop %v2031
    %v2054 = vmul.f32 %v2031, %v2053
    %v2055 = vsub.f32 1.0, %v2054
    %v2056 = vmul.f32 %v2053, %v2055
    %v2057 = vadd.f32 %v2053, %v2056
    %vm2058 = vweird.f32 %v2031
    %vm2059 = vweird.f32 %v2053
    %vm2060 = vmor %vm2058, %vm2059
    %v2061 = vsel %vm2060, %v2053, %v2057
    %v2062 = vand.u32 2147483647, %v2031
    %vm2063 = vcmp.eq.f32.partialorder %v2062, 8.507059e+37
    %v2064 = vand.u32 %v2031, 2147483648
    %v2065 = vor.u32 1.1754944e-38, %v2064
    %v2066 = vsel %vm2063, %v2065, %v2061
    %v2067 = vmul.f32 1.0, %v2066
    %v2068 = vrcp.pop %v2032
    %v2069 = vmul.f32 %v2032, %v2068
    %v2070 = vsub.f32 1.0, %v2069
    %v2071 = vmul.f32 %v2068, %v2070
    %v2072 = vadd.f32 %v2068, %v2071
    %vm2073 = vweird.f32 %v2032
    %vm2074 = vweird.f32 %v2068
    %vm2075 = vmor %vm2073, %vm2074
    %v2076 = vsel %vm2075, %v2068, %v2072
    %v2077 = vand.u32 2147483647, %v2032
    %vm2078 = vcmp.eq.f32.partialorder %v2077, 8.507059e+37
    %v2079 = vand.u32 %v2032, 2147483648
    %v2080 = vor.u32 1.1754944e-38, %v2079
    %v2081 = vsel %vm2078, %v2080, %v2076
    %v2082 = vmul.f32 1.0, %v2081
    %v2083 = vrcp.pop %v2033
    %v2084 = vmul.f32 %v2033, %v2083
    %v2085 = vsub.f32 1.0, %v2084
    %v2086 = vmul.f32 %v2083, %v2085
    %v2087 = vadd.f32 %v2083, %v2086
    %vm2088 = vweird.f32 %v2033
    %vm2089 = vweird.f32 %v2083
    %vm2090 = vmor %vm2088, %vm2089
    %v2091 = vsel %vm2090, %v2083, %v2087
    %v2092 = vand.u32 2147483647, %v2033
    %vm2093 = vcmp.eq.f32.partialorder %v2092, 8.507059e+37
    %v2094 = vand.u32 %v2033, 2147483648
    %v2095 = vor.u32 1.1754944e-38, %v2094
    %v2096 = vsel %vm2093, %v2095, %v2091
    %v2097 = vmul.f32 1.0, %v2096
    %v2098 = vrcp.pop %v2034
    %v2099 = vmul.f32 %v2034, %v2098
    %v2100 = vsub.f32 1.0, %v2099
    %v2101 = vmul.f32 %v2098, %v2100
    %v2102 = vadd.f32 %v2098, %v2101
    %vm2103 = vweird.f32 %v2034
    %vm2104 = vweird.f32 %v2098
    %vm2105 = vmor %vm2103, %vm2104
    %v2106 = vsel %vm2105, %v2098, %v2102
    %v2107 = vand.u32 2147483647, %v2034
    %vm2108 = vcmp.eq.f32.partialorder %v2107, 8.507059e+37
    %v2109 = vand.u32 %v2034, 2147483648
    %v2110 = vor.u32 1.1754944e-38, %v2109
    %v2111 = vsel %vm2108, %v2110, %v2106
    %v2112 = vmul.f32 1.0, %v2111
    %v2113 = vrcp.pop %v2035
    %v2114 = vmul.f32 %v2035, %v2113
    %v2115 = vsub.f32 1.0, %v2114
    %v2116 = vmul.f32 %v2113, %v2115
    %v2117 = vadd.f32 %v2113, %v2116
    %vm2118 = vweird.f32 %v2035
    %vm2119 = vweird.f32 %v2113
    %vm2120 = vmor %vm2118, %vm2119
    %v2121 = vsel %vm2120, %v2113, %v2117
    %v2122 = vand.u32 2147483647, %v2035
    %vm2123 = vcmp.eq.f32.partialorder %v2122, 8.507059e+37
    %v2124 = vand.u32 %v2035, 2147483648
    %v2125 = vor.u32 1.1754944e-38, %v2124
    %v2126 = vsel %vm2123, %v2125, %v2121
    %v2127 = vmul.f32 1.0, %v2126
    %v2128 = vrcp.pop %v2036
    %v2129 = vmul.f32 %v2036, %v2128
    %v2130 = vsub.f32 1.0, %v2129
    %v2131 = vmul.f32 %v2128, %v2130
    %v2132 = vadd.f32 %v2128, %v2131
    %vm2133 = vweird.f32 %v2036
    %vm2134 = vweird.f32 %v2128
    %vm2135 = vmor %vm2133, %vm2134
    %v2136 = vsel %vm2135, %v2128, %v2132
    %v2137 = vand.u32 2147483647, %v2036
    %vm2138 = vcmp.eq.f32.partialorder %v2137, 8.507059e+37
    %v2139 = vand.u32 %v2036, 2147483648
    %v2140 = vor.u32 1.1754944e-38, %v2139
    %v2141 = vsel %vm2138, %v2140, %v2136
    %v2142 = vmul.f32 1.0, %v2141
    %v2143 = vrcp.pop %v2037
    %v2144 = vmul.f32 %v2037, %v2143
    %v2145 = vsub.f32 1.0, %v2144
    %v2146 = vmul.f32 %v2143, %v2145
    %v2147 = vadd.f32 %v2143, %v2146
    %vm2148 = vweird.f32 %v2037
    %vm2149 = vweird.f32 %v2143
    %vm2150 = vmor %vm2148, %vm2149
    %v2151 = vsel %vm2150, %v2143, %v2147
    %v2152 = vand.u32 2147483647, %v2037
    %vm2153 = vcmp.eq.f32.partialorder %v2152, 8.507059e+37
    %v2154 = vand.u32 %v2037, 2147483648
    %v2155 = vor.u32 1.1754944e-38, %v2154
    %v2156 = vsel %vm2153, %v2155, %v2151
    %v2157 = vmul.f32 1.0, %v2156
    %v2158 = vrot.slane %v1822, 2
    %v2159 = vrot.slane %v1823, 2
    %v2160 = vrot.slane %v1824, 2
    %v2161 = vrot.slane %v1825, 2
    %v2162 = vrot.slane %v1826, 2
    %v2163 = vrot.slane %v1827, 2
    %v2164 = vrot.slane %v1828, 2
    %v2165 = vrot.slane %v1829, 2
    %v2174 = vtanh.pop %v2158
    %v2175 = vtanh.pop %v2159
    %v2176 = vtanh.pop %v2160
    %v2177 = vtanh.pop %v2161
    %v2178 = vtanh.pop %v2162
    %v2179 = vtanh.pop %v2163
    %v2180 = vtanh.pop %v2164
    %v2181 = vtanh.pop %v2165
    %s2182 = sadd.f32 %s165, 2.0
    %s2183 = ssub.f32 %s2182, 0.001
    %v2184 = vstv %s2183
    %v2185 = vmul.f32 %v1876, %v2184
    %v2186 = vmul.f32 %v1891, %v2184
    %v2187 = vmul.f32 %v1906, %v2184
    %v2188 = vmul.f32 %v1921, %v2184
    %v2189 = vmul.f32 %v1936, %v2184
    %v2190 = vmul.f32 %v1951, %v2184
    %v2191 = vmul.f32 %v1966, %v2184
    %v2192 = vmul.f32 %v1981, %v2184
    %v2193 = vsub.f32 1.0, %v1876
    %v2194 = vsub.f32 1.0, %v1891
    %v2195 = vsub.f32 1.0, %v1906
    %v2196 = vsub.f32 1.0, %v1921
    %v2197 = vsub.f32 1.0, %v1936
    %v2198 = vsub.f32 1.0, %v1951
    %v2199 = vsub.f32 1.0, %v1966
    %v2200 = vsub.f32 1.0, %v1981
    %v2201 = vmul.f32 %v2193, %v1468
    %v2202 = vmul.f32 %v2194, %v1469
    %v2203 = vmul.f32 %v2195, %v1470
    %v2204 = vmul.f32 %v2196, %v1471
    %v2205 = vmul.f32 %v2197, %v1472
    %v2206 = vmul.f32 %v2198, %v1473
    %v2207 = vmul.f32 %v2199, %v1474
    %v2208 = vmul.f32 %v2200, %v1475
    %v2209 = vadd.f32 %v2185, %v2201
    %v2210 = vadd.f32 %v2186, %v2202
    %v2211 = vadd.f32 %v2187, %v2203
    %v2212 = vadd.f32 %v2188, %v2204
    %v2213 = vadd.f32 %v2189, %v2205
    %v2214 = vadd.f32 %v2190, %v2206
    %v2215 = vadd.f32 %v2191, %v2207
    %v2216 = vadd.f32 %v2192, %v2208
    %v2217 = vstv %s2182
    %v2218 = vsub.f32 %v2217, %v2209
    %v2219 = vsub.f32 %v2217, %v2210
    %v2220 = vsub.f32 %v2217, %v2211
    %v2221 = vsub.f32 %v2217, %v2212
    %v2222 = vsub.f32 %v2217, %v2213
    %v2223 = vsub.f32 %v2217, %v2214
    %v2224 = vsub.f32 %v2217, %v2215
    %v2225 = vsub.f32 %v2217, %v2216
    %v2226 = vadd.f32 %v2218, 0.001
    %v2227 = vadd.f32 %v2219, 0.001
    %v2228 = vadd.f32 %v2220, 0.001
    %v2229 = vadd.f32 %v2221, 0.001
    %v2230 = vadd.f32 %v2222, 0.001
    %v2231 = vadd.f32 %v2223, 0.001
    %v2232 = vadd.f32 %v2224, 0.001
    %v2233 = vadd.f32 %v2225, 0.001
    %v2234 = vadd.f32 %v2218, 1.0
    %v2235 = vadd.f32 %v2219, 1.0
    %v2236 = vadd.f32 %v2220, 1.0
    %v2237 = vadd.f32 %v2221, 1.0
    %v2238 = vadd.f32 %v2222, 1.0
    %v2239 = vadd.f32 %v2223, 1.0
    %v2240 = vadd.f32 %v2224, 1.0
    %v2241 = vadd.f32 %v2225, 1.0
    %v2242 = vrcp.pop %v2234
    %v2243 = vmul.f32 %v2234, %v2242
    %v2244 = vsub.f32 1.0, %v2243
    %v2245 = vmul.f32 %v2242, %v2244
    %v2246 = vadd.f32 %v2242, %v2245
    %vm2247 = vweird.f32 %v2234
    %vm2248 = vweird.f32 %v2242
    %vm2249 = vmor %vm2247, %vm2248
    %v2250 = vsel %vm2249, %v2242, %v2246
    %v2251 = vand.u32 2147483647, %v2234
    %vm2252 = vcmp.eq.f32.partialorder %v2251, 8.507059e+37
    %v2253 = vand.u32 %v2234, 2147483648
    %v2254 = vor.u32 1.1754944e-38, %v2253
    %v2255 = vsel %vm2252, %v2254, %v2250
    %v2256 = vmul.f32 %v2226, %v2255
    %v2257 = vrcp.pop %v2235
    %v2258 = vmul.f32 %v2235, %v2257
    %v2259 = vsub.f32 1.0, %v2258
    %v2260 = vmul.f32 %v2257, %v2259
    %v2261 = vadd.f32 %v2257, %v2260
    %vm2262 = vweird.f32 %v2235
    %vm2263 = vweird.f32 %v2257
    %vm2264 = vmor %vm2262, %vm2263
    %v2265 = vsel %vm2264, %v2257, %v2261
    %v2266 = vand.u32 2147483647, %v2235
    %vm2267 = vcmp.eq.f32.partialorder %v2266, 8.507059e+37
    %v2268 = vand.u32 %v2235, 2147483648
    %v2269 = vor.u32 1.1754944e-38, %v2268
    %v2270 = vsel %vm2267, %v2269, %v2265
    %v2271 = vmul.f32 %v2227, %v2270
    %v2272 = vrcp.pop %v2236
    %v2273 = vmul.f32 %v2236, %v2272
    %v2274 = vsub.f32 1.0, %v2273
    %v2275 = vmul.f32 %v2272, %v2274
    %v2276 = vadd.f32 %v2272, %v2275
    %vm2277 = vweird.f32 %v2236
    %vm2278 = vweird.f32 %v2272
    %vm2279 = vmor %vm2277, %vm2278
    %v2280 = vsel %vm2279, %v2272, %v2276
    %v2281 = vand.u32 2147483647, %v2236
    %vm2282 = vcmp.eq.f32.partialorder %v2281, 8.507059e+37
    %v2283 = vand.u32 %v2236, 2147483648
    %v2284 = vor.u32 1.1754944e-38, %v2283
    %v2285 = vsel %vm2282, %v2284, %v2280
    %v2286 = vmul.f32 %v2228, %v2285
    %v2287 = vrcp.pop %v2237
    %v2288 = vmul.f32 %v2237, %v2287
    %v2289 = vsub.f32 1.0, %v2288
    %v2290 = vmul.f32 %v2287, %v2289
    %v2291 = vadd.f32 %v2287, %v2290
    %vm2292 = vweird.f32 %v2237
    %vm2293 = vweird.f32 %v2287
    %vm2294 = vmor %vm2292, %vm2293
    %v2295 = vsel %vm2294, %v2287, %v2291
    %v2296 = vand.u32 2147483647, %v2237
    %vm2297 = vcmp.eq.f32.partialorder %v2296, 8.507059e+37
    %v2298 = vand.u32 %v2237, 2147483648
    %v2299 = vor.u32 1.1754944e-38, %v2298
    %v2300 = vsel %vm2297, %v2299, %v2295
    %v2301 = vmul.f32 %v2229, %v2300
    %v2302 = vrcp.pop %v2238
    %v2303 = vmul.f32 %v2238, %v2302
    %v2304 = vsub.f32 1.0, %v2303
    %v2305 = vmul.f32 %v2302, %v2304
    %v2306 = vadd.f32 %v2302, %v2305
    %vm2307 = vweird.f32 %v2238
    %vm2308 = vweird.f32 %v2302
    %vm2309 = vmor %vm2307, %vm2308
    %v2310 = vsel %vm2309, %v2302, %v2306
    %v2311 = vand.u32 2147483647, %v2238
    %vm2312 = vcmp.eq.f32.partialorder %v2311, 8.507059e+37
    %v2313 = vand.u32 %v2238, 2147483648
    %v2314 = vor.u32 1.1754944e-38, %v2313
    %v2315 = vsel %vm2312, %v2314, %v2310
    %v2316 = vmul.f32 %v2230, %v2315
    %v2317 = vrcp.pop %v2239
    %v2318 = vmul.f32 %v2239, %v2317
    %v2319 = vsub.f32 1.0, %v2318
    %v2320 = vmul.f32 %v2317, %v2319
    %v2321 = vadd.f32 %v2317, %v2320
    %vm2322 = vweird.f32 %v2239
    %vm2323 = vweird.f32 %v2317
    %vm2324 = vmor %vm2322, %vm2323
    %v2325 = vsel %vm2324, %v2317, %v2321
    %v2326 = vand.u32 2147483647, %v2239
    %vm2327 = vcmp.eq.f32.partialorder %v2326, 8.507059e+37
    %v2328 = vand.u32 %v2239, 2147483648
    %v2329 = vor.u32 1.1754944e-38, %v2328
    %v2330 = vsel %vm2327, %v2329, %v2325
    %v2331 = vmul.f32 %v2231, %v2330
    %v2332 = vrcp.pop %v2240
    %v2333 = vmul.f32 %v2240, %v2332
    %v2334 = vsub.f32 1.0, %v2333
    %v2335 = vmul.f32 %v2332, %v2334
    %v2336 = vadd.f32 %v2332, %v2335
    %vm2337 = vweird.f32 %v2240
    %vm2338 = vweird.f32 %v2332
    %vm2339 = vmor %vm2337, %vm2338
    %v2340 = vsel %vm2339, %v2332, %v2336
    %v2341 = vand.u32 2147483647, %v2240
    %vm2342 = vcmp.eq.f32.partialorder %v2341, 8.507059e+37
    %v2343 = vand.u32 %v2240, 2147483648
    %v2344 = vor.u32 1.1754944e-38, %v2343
    %v2345 = vsel %vm2342, %v2344, %v2340
    %v2346 = vmul.f32 %v2232, %v2345
    %v2347 = vrcp.pop %v2241
    %v2348 = vmul.f32 %v2241, %v2347
    %v2349 = vsub.f32 1.0, %v2348
    %v2350 = vmul.f32 %v2347, %v2349
    %v2351 = vadd.f32 %v2347, %v2350
    %vm2352 = vweird.f32 %v2241
    %vm2353 = vweird.f32 %v2347
    %vm2354 = vmor %vm2352, %vm2353
    %v2355 = vsel %vm2354, %v2347, %v2351
    %v2356 = vand.u32 2147483647, %v2241
    %vm2357 = vcmp.eq.f32.partialorder %v2356, 8.507059e+37
    %v2358 = vand.u32 %v2241, 2147483648
    %v2359 = vor.u32 1.1754944e-38, %v2358
    %v2360 = vsel %vm2357, %v2359, %v2355
    %v2361 = vmul.f32 %v2233, %v2360
    %v2362 = vpow.f32 %v2256, %v162
    %v2363 = vpow.f32 %v2271, %v851
    %v2364 = vpow.f32 %v2286, %v852
    %v2365 = vpow.f32 %v2301, %v853
    %v2366 = vpow.f32 %v2316, %v854
    %v2367 = vpow.f32 %v2331, %v855
    %v2368 = vpow.f32 %v2346, %v856
    %v2369 = vpow.f32 %v2361, %v857
    %v2370 = vmul.f32 %v2362, %v1653
    %v2371 = vmul.f32 %v2363, %v1654
    %v2372 = vmul.f32 %v2364, %v1655
    %v2373 = vmul.f32 %v2365, %v1656
    %v2374 = vmul.f32 %v2366, %v1657
    %v2375 = vmul.f32 %v2367, %v1658
    %v2376 = vmul.f32 %v2368, %v1659
    %v2377 = vmul.f32 %v2369, %v1660
    %v2378 = vsub.f32 1.0, %v2362
    %v2379 = vsub.f32 1.0, %v2363
    %v2380 = vsub.f32 1.0, %v2364
    %v2381 = vsub.f32 1.0, %v2365
    %v2382 = vsub.f32 1.0, %v2366
    %v2383 = vsub.f32 1.0, %v2367
    %v2384 = vsub.f32 1.0, %v2368
    %v2385 = vsub.f32 1.0, %v2369
    %v2386 = vmul.f32 %v2378, %v2174
    %v2387 = vmul.f32 %v2379, %v2175
    %v2388 = vmul.f32 %v2380, %v2176
    %v2389 = vmul.f32 %v2381, %v2177
    %v2390 = vmul.f32 %v2382, %v2178
    %v2391 = vmul.f32 %v2383, %v2179
    %v2392 = vmul.f32 %v2384, %v2180
    %v2393 = vmul.f32 %v2385, %v2181
    %v2394 = vadd.f32 %v2370, %v2386
    %v2395 = vadd.f32 %v2371, %v2387
    %v2396 = vadd.f32 %v2372, %v2388
    %v2397 = vadd.f32 %v2373, %v2389
    %v2398 = vadd.f32 %v2374, %v2390
    %v2399 = vadd.f32 %v2375, %v2391
    %v2400 = vadd.f32 %v2376, %v2392
    %v2401 = vadd.f32 %v2377, %v2393
    %v2402 = vtanh.pop %v2394
    %v2403 = vtanh.pop %v2395
    %v2404 = vtanh.pop %v2396
    %v2405 = vtanh.pop %v2397
    %v2406 = vtanh.pop %v2398
    %v2407 = vtanh.pop %v2399
    %v2408 = vtanh.pop %v2400
    %v2409 = vtanh.pop %v2401
    %v2410 = vmul.f32 %v2052, %v2402
    %v2411 = vmul.f32 %v2067, %v2403
    %v2412 = vmul.f32 %v2082, %v2404
    %v2413 = vmul.f32 %v2097, %v2405
    %v2414 = vmul.f32 %v2112, %v2406
    %v2415 = vmul.f32 %v2127, %v2407
    %v2416 = vmul.f32 %v2142, %v2408
    %v2417 = vmul.f32 %v2157, %v2409
    %2418 = vst [vmem:[#allocation14 + $0x2] sm:$0x1] %v2410
    %2419 = vst [vmem:[#allocation14 + $0xa] sm:$0x1] %v2411
    %2420 = vst [vmem:[#allocation14 + $0x12] sm:$0x1] %v2412
    %2421 = vst [vmem:[#allocation14 + $0x1a] sm:$0x1] %v2413
    %2422 = vst [vmem:[#allocation14 + $0x22] sm:$0x1] %v2414
    %2423 = vst [vmem:[#allocation14 + $0x2a] sm:$0x1] %v2415
    %2424 = vst [vmem:[#allocation14 + $0x32] sm:$0x1] %v2416
    %2425 = vst [vmem:[#allocation14 + $0x3a] sm:$0x1] %v2417
    %s2426 = scalar_lea.vmem [#allocation5], 3
    %v2427 = vld [vmem:[%s2426] ss:$8 sm:$0x7]
    %s2428 = scalar_lea.vmem [#allocation5], 27
    %v2429 = vld [vmem:[%s2428] ss:$8 sm:$0x7]
    %s2430 = scalar_lea.vmem [#allocation5], 51
    %v2431 = vld [vmem:[%s2430] ss:$8 sm:$0x7]
    %s2432 = scalar_lea.vmem [#allocation5], 75
    %v2433 = vld [vmem:[%s2432] ss:$8 sm:$0x7]
    %s2434 = scalar_lea.vmem [#allocation5], 99
    %v2435 = vld [vmem:[%s2434] ss:$8 sm:$0x7]
    %s2436 = scalar_lea.vmem [#allocation5], 123
    %v2437 = vld [vmem:[%s2436] ss:$8 sm:$0x7]
    %s2438 = scalar_lea.vmem [#allocation5], 147
    %v2439 = vld [vmem:[%s2438] ss:$8 sm:$0x7]
    %s2440 = scalar_lea.vmem [#allocation5], 171
    %v2441 = vld [vmem:[%s2440] ss:$8 sm:$0x7]
    %2450 = vst [vmem:[#allocation1] ss:$9 sm:$0xff] %v2410
    %s2451 = scalar_lea.vmem [#allocation1], 1
    %2452 = vst [vmem:[%s2451] ss:$9 sm:$0xff] %v2411
    %s2453 = scalar_lea.vmem [#allocation1], 2
    %2454 = vst [vmem:[%s2453] ss:$9 sm:$0xff] %v2412
    %s2455 = scalar_lea.vmem [#allocation1], 3
    %2456 = vst [vmem:[%s2455] ss:$9 sm:$0xff] %v2413
    %s2457 = scalar_lea.vmem [#allocation1], 4
    %2458 = vst [vmem:[%s2457] ss:$9 sm:$0xff] %v2414
    %s2459 = scalar_lea.vmem [#allocation1], 5
    %2460 = vst [vmem:[%s2459] ss:$9 sm:$0xff] %v2415
    %s2461 = scalar_lea.vmem [#allocation1], 6
    %2462 = vst [vmem:[%s2461] ss:$9 sm:$0xff] %v2416
    %s2463 = scalar_lea.vmem [#allocation1], 7
    %2464 = vst [vmem:[%s2463] ss:$9 sm:$0xff] %v2417
    %v2465 = vld [vmem:[#allocation1] sm:$0xff]
    %2467 = vmatpush.msra.mxu0 %v157
    %2468 = vmatpush.msra.mxu0 %v154
    %2469 = vmatpush.msra.mxu0 %v151
    %2470 = vmatpush.msra.mxu0 %v148
    %2471 = vmatpush.msra.mxu0 %v145
    %2472 = vmatpush.msra.mxu0 %v142
    %2473 = vmatpush.msra.mxu0 %v139
    %2474 = vmatpush.msra.mxu0 %v136
    %2475 = vmatpush.msra.mxu0 %v133
    %2476 = vmatpush.msra.mxu0 %v130
    %2477 = vmatpush.msra.mxu0 %v127
    %2478 = vmatpush.msra.mxu0 %v124
    %2479 = vmatpush.msra.mxu0 %v121
    %2480 = vmatpush.msra.mxu0 %v118
    %2481 = vmatpush.msra.mxu0 %v115
    %2482 = vmatpush.msra.mxu0 %v112
    %2483 = vmatmul.f32.gmra.mxu0 %v2465
    %v2484 = vpop.f32.mrf.mxu0
    %v2485 = vadd.f32 0.0, %v2484
    %2486 = vdwg.mxu0
    %2487 = vmatpush.msra.mxu0 %v158
    %2488 = vmatpush.msra.mxu0 %v155
    %2489 = vmatpush.msra.mxu0 %v152
    %2490 = vmatpush.msra.mxu0 %v149
    %2491 = vmatpush.msra.mxu0 %v146
    %2492 = vmatpush.msra.mxu0 %v143
    %2493 = vmatpush.msra.mxu0 %v140
    %2494 = vmatpush.msra.mxu0 %v137
    %2495 = vmatpush.msra.mxu0 %v134
    %2496 = vmatpush.msra.mxu0 %v131
    %2497 = vmatpush.msra.mxu0 %v128
    %2498 = vmatpush.msra.mxu0 %v125
    %2499 = vmatpush.msra.mxu0 %v122
    %2500 = vmatpush.msra.mxu0 %v119
    %2501 = vmatpush.msra.mxu0 %v116
    %2502 = vmatpush.msra.mxu0 %v113
    %2503 = vmatmul.f32.gmra.mxu0 %v2465
    %v2504 = vpop.f32.mrf.mxu0
    %v2505 = vadd.f32 0.0, %v2504
    %2506 = vdwg.mxu0
    %2507 = vmatpush.msra.mxu0 %v159
    %2508 = vmatpush.msra.mxu0 %v156
    %2509 = vmatpush.msra.mxu0 %v153
    %2510 = vmatpush.msra.mxu0 %v150
    %2511 = vmatpush.msra.mxu0 %v147
    %2512 = vmatpush.msra.mxu0 %v144
    %2513 = vmatpush.msra.mxu0 %v141
    %2514 = vmatpush.msra.mxu0 %v138
    %2515 = vmatpush.msra.mxu0 %v135
    %2516 = vmatpush.msra.mxu0 %v132
    %2517 = vmatpush.msra.mxu0 %v129
    %2518 = vmatpush.msra.mxu0 %v126
    %2519 = vmatpush.msra.mxu0 %v123
    %2520 = vmatpush.msra.mxu0 %v120
    %2521 = vmatpush.msra.mxu0 %v117
    %2522 = vmatpush.msra.mxu0 %v114
    %2523 = vmatmul.f32.gmra.mxu0 %v2465
    %v2524 = vpop.f32.mrf.mxu0
    %v2525 = vadd.f32 0.0, %v2524
    %2526 = vdwg.mxu0
    %v2530 = vrot.slane %v2505, 7
    %v2531 = vrot.slane %v2525, 6
    %v2532 = vsel %vm249, %v2485, %v2530
    %v2533 = vsel %vm251, %v2532, %v2531
    %v2534 = vsel %vm253, %v2485, %v2530
    %v2535 = vsel %vm255, %v2534, %v2531
    %v2536 = vrot.slane %v2535, 1
    %v2537 = vsel %vm258, %v2485, %v2530
    %v2538 = vsel %vm260, %v2537, %v2531
    %v2539 = vrot.slane %v2538, 2
    %v2540 = vsel %vm263, %v2485, %v2530
    %v2541 = vsel %vm265, %v2540, %v2531
    %v2542 = vrot.slane %v2541, 3
    %v2543 = vsel %vm268, %v2485, %v2530
    %v2544 = vsel %vm270, %v2543, %v2531
    %v2545 = vrot.slane %v2544, 4
    %v2546 = vsel %vm273, %v2485, %v2530
    %v2547 = vsel %vm275, %v2546, %v2531
    %v2548 = vrot.slane %v2547, 5
    %v2549 = vsel %vm278, %v2485, %v2530
    %v2550 = vsel %vm280, %v2531, %v2549
    %v2551 = vrot.slane %v2550, 6
    %v2552 = vsel %vm283, %v2530, %v2485
    %v2553 = vsel %vm285, %v2531, %v2552
    %v2554 = vrot.slane %v2553, 7
    %v2563 = vadd.f32 %v2427, %v2533
    %v2564 = vadd.f32 %v2429, %v2536
    %v2565 = vadd.f32 %v2431, %v2539
    %v2566 = vadd.f32 %v2433, %v2542
    %v2567 = vadd.f32 %v2435, %v2545
    %v2568 = vadd.f32 %v2437, %v2548
    %v2569 = vadd.f32 %v2439, %v2551
    %v2570 = vadd.f32 %v2441, %v2554
    %v2571 = vxor.u32 %v2563, 2147483648
    %v2572 = vxor.u32 %v2564, 2147483648
    %v2573 = vxor.u32 %v2565, 2147483648
    %v2574 = vxor.u32 %v2566, 2147483648
    %v2575 = vxor.u32 %v2567, 2147483648
    %v2576 = vxor.u32 %v2568, 2147483648
    %v2577 = vxor.u32 %v2569, 2147483648
    %v2578 = vxor.u32 %v2570, 2147483648
    %v2579 = vmul.f32 %v2571, 1.442695
    %v2580 = vpow.pop %v2579
    %v2581 = vmul.f32 %v2572, 1.442695
    %v2582 = vpow.pop %v2581
    %v2583 = vmul.f32 %v2573, 1.442695
    %v2584 = vpow.pop %v2583
    %v2585 = vmul.f32 %v2574, 1.442695
    %v2586 = vpow.pop %v2585
    %v2587 = vmul.f32 %v2575, 1.442695
    %v2588 = vpow.pop %v2587
    %v2589 = vmul.f32 %v2576, 1.442695
    %v2590 = vpow.pop %v2589
    %v2591 = vmul.f32 %v2577, 1.442695
    %v2592 = vpow.pop %v2591
    %v2593 = vmul.f32 %v2578, 1.442695
    %v2594 = vpow.pop %v2593
    %v2595 = vadd.f32 %v2580, 1.0
    %v2596 = vadd.f32 %v2582, 1.0
    %v2597 = vadd.f32 %v2584, 1.0
    %v2598 = vadd.f32 %v2586, 1.0
    %v2599 = vadd.f32 %v2588, 1.0
    %v2600 = vadd.f32 %v2590, 1.0
    %v2601 = vadd.f32 %v2592, 1.0
    %v2602 = vadd.f32 %v2594, 1.0
    %v2603 = vrcp.pop %v2595
    %v2604 = vmul.f32 %v2595, %v2603
    %v2605 = vsub.f32 1.0, %v2604
    %v2606 = vmul.f32 %v2603, %v2605
    %v2607 = vadd.f32 %v2603, %v2606
    %vm2608 = vweird.f32 %v2595
    %vm2609 = vweird.f32 %v2603
    %vm2610 = vmor %vm2608, %vm2609
    %v2611 = vsel %vm2610, %v2603, %v2607
    %v2612 = vand.u32 2147483647, %v2595
    %vm2613 = vcmp.eq.f32.partialorder %v2612, 8.507059e+37
    %v2614 = vand.u32 %v2595, 2147483648
    %v2615 = vor.u32 1.1754944e-38, %v2614
    %v2616 = vsel %vm2613, %v2615, %v2611
    %v2617 = vmul.f32 1.0, %v2616
    %v2618 = vrcp.pop %v2596
    %v2619 = vmul.f32 %v2596, %v2618
    %v2620 = vsub.f32 1.0, %v2619
    %v2621 = vmul.f32 %v2618, %v2620
    %v2622 = vadd.f32 %v2618, %v2621
    %vm2623 = vweird.f32 %v2596
    %vm2624 = vweird.f32 %v2618
    %vm2625 = vmor %vm2623, %vm2624
    %v2626 = vsel %vm2625, %v2618, %v2622
    %v2627 = vand.u32 2147483647, %v2596
    %vm2628 = vcmp.eq.f32.partialorder %v2627, 8.507059e+37
    %v2629 = vand.u32 %v2596, 2147483648
    %v2630 = vor.u32 1.1754944e-38, %v2629
    %v2631 = vsel %vm2628, %v2630, %v2626
    %v2632 = vmul.f32 1.0, %v2631
    %v2633 = vrcp.pop %v2597
    %v2634 = vmul.f32 %v2597, %v2633
    %v2635 = vsub.f32 1.0, %v2634
    %v2636 = vmul.f32 %v2633, %v2635
    %v2637 = vadd.f32 %v2633, %v2636
    %vm2638 = vweird.f32 %v2597
    %vm2639 = vweird.f32 %v2633
    %vm2640 = vmor %vm2638, %vm2639
    %v2641 = vsel %vm2640, %v2633, %v2637
    %v2642 = vand.u32 2147483647, %v2597
    %vm2643 = vcmp.eq.f32.partialorder %v2642, 8.507059e+37
    %v2644 = vand.u32 %v2597, 2147483648
    %v2645 = vor.u32 1.1754944e-38, %v2644
    %v2646 = vsel %vm2643, %v2645, %v2641
    %v2647 = vmul.f32 1.0, %v2646
    %v2648 = vrcp.pop %v2598
    %v2649 = vmul.f32 %v2598, %v2648
    %v2650 = vsub.f32 1.0, %v2649
    %v2651 = vmul.f32 %v2648, %v2650
    %v2652 = vadd.f32 %v2648, %v2651
    %vm2653 = vweird.f32 %v2598
    %vm2654 = vweird.f32 %v2648
    %vm2655 = vmor %vm2653, %vm2654
    %v2656 = vsel %vm2655, %v2648, %v2652
    %v2657 = vand.u32 2147483647, %v2598
    %vm2658 = vcmp.eq.f32.partialorder %v2657, 8.507059e+37
    %v2659 = vand.u32 %v2598, 2147483648
    %v2660 = vor.u32 1.1754944e-38, %v2659
    %v2661 = vsel %vm2658, %v2660, %v2656
    %v2662 = vmul.f32 1.0, %v2661
    %v2663 = vrcp.pop %v2599
    %v2664 = vmul.f32 %v2599, %v2663
    %v2665 = vsub.f32 1.0, %v2664
    %v2666 = vmul.f32 %v2663, %v2665
    %v2667 = vadd.f32 %v2663, %v2666
    %vm2668 = vweird.f32 %v2599
    %vm2669 = vweird.f32 %v2663
    %vm2670 = vmor %vm2668, %vm2669
    %v2671 = vsel %vm2670, %v2663, %v2667
    %v2672 = vand.u32 2147483647, %v2599
    %vm2673 = vcmp.eq.f32.partialorder %v2672, 8.507059e+37
    %v2674 = vand.u32 %v2599, 2147483648
    %v2675 = vor.u32 1.1754944e-38, %v2674
    %v2676 = vsel %vm2673, %v2675, %v2671
    %v2677 = vmul.f32 1.0, %v2676
    %v2678 = vrcp.pop %v2600
    %v2679 = vmul.f32 %v2600, %v2678
    %v2680 = vsub.f32 1.0, %v2679
    %v2681 = vmul.f32 %v2678, %v2680
    %v2682 = vadd.f32 %v2678, %v2681
    %vm2683 = vweird.f32 %v2600
    %vm2684 = vweird.f32 %v2678
    %vm2685 = vmor %vm2683, %vm2684
    %v2686 = vsel %vm2685, %v2678, %v2682
    %v2687 = vand.u32 2147483647, %v2600
    %vm2688 = vcmp.eq.f32.partialorder %v2687, 8.507059e+37
    %v2689 = vand.u32 %v2600, 2147483648
    %v2690 = vor.u32 1.1754944e-38, %v2689
    %v2691 = vsel %vm2688, %v2690, %v2686
    %v2692 = vmul.f32 1.0, %v2691
    %v2693 = vrcp.pop %v2601
    %v2694 = vmul.f32 %v2601, %v2693
    %v2695 = vsub.f32 1.0, %v2694
    %v2696 = vmul.f32 %v2693, %v2695
    %v2697 = vadd.f32 %v2693, %v2696
    %vm2698 = vweird.f32 %v2601
    %vm2699 = vweird.f32 %v2693
    %vm2700 = vmor %vm2698, %vm2699
    %v2701 = vsel %vm2700, %v2693, %v2697
    %v2702 = vand.u32 2147483647, %v2601
    %vm2703 = vcmp.eq.f32.partialorder %v2702, 8.507059e+37
    %v2704 = vand.u32 %v2601, 2147483648
    %v2705 = vor.u32 1.1754944e-38, %v2704
    %v2706 = vsel %vm2703, %v2705, %v2701
    %v2707 = vmul.f32 1.0, %v2706
    %v2708 = vrcp.pop %v2602
    %v2709 = vmul.f32 %v2602, %v2708
    %v2710 = vsub.f32 1.0, %v2709
    %v2711 = vmul.f32 %v2708, %v2710
    %v2712 = vadd.f32 %v2708, %v2711
    %vm2713 = vweird.f32 %v2602
    %vm2714 = vweird.f32 %v2708
    %vm2715 = vmor %vm2713, %vm2714
    %v2716 = vsel %vm2715, %v2708, %v2712
    %v2717 = vand.u32 2147483647, %v2602
    %vm2718 = vcmp.eq.f32.partialorder %v2717, 8.507059e+37
    %v2719 = vand.u32 %v2602, 2147483648
    %v2720 = vor.u32 1.1754944e-38, %v2719
    %v2721 = vsel %vm2718, %v2720, %v2716
    %v2722 = vmul.f32 1.0, %v2721
    %v2731 = vrot.slane %v2563, 1
    %v2732 = vrot.slane %v2564, 1
    %v2733 = vrot.slane %v2565, 1
    %v2734 = vrot.slane %v2566, 1
    %v2735 = vrot.slane %v2567, 1
    %v2736 = vrot.slane %v2568, 1
    %v2737 = vrot.slane %v2569, 1
    %v2738 = vrot.slane %v2570, 1
    %v2747 = vxor.u32 %v2731, 2147483648
    %v2748 = vxor.u32 %v2732, 2147483648
    %v2749 = vxor.u32 %v2733, 2147483648
    %v2750 = vxor.u32 %v2734, 2147483648
    %v2751 = vxor.u32 %v2735, 2147483648
    %v2752 = vxor.u32 %v2736, 2147483648
    %v2753 = vxor.u32 %v2737, 2147483648
    %v2754 = vxor.u32 %v2738, 2147483648
    %v2755 = vmul.f32 %v2747, 1.442695
    %v2756 = vpow.pop %v2755
    %v2757 = vmul.f32 %v2748, 1.442695
    %v2758 = vpow.pop %v2757
    %v2759 = vmul.f32 %v2749, 1.442695
    %v2760 = vpow.pop %v2759
    %v2761 = vmul.f32 %v2750, 1.442695
    %v2762 = vpow.pop %v2761
    %v2763 = vmul.f32 %v2751, 1.442695
    %v2764 = vpow.pop %v2763
    %v2765 = vmul.f32 %v2752, 1.442695
    %v2766 = vpow.pop %v2765
    %v2767 = vmul.f32 %v2753, 1.442695
    %v2768 = vpow.pop %v2767
    %v2769 = vmul.f32 %v2754, 1.442695
    %v2770 = vpow.pop %v2769
    %v2771 = vadd.f32 %v2756, 1.0
    %v2772 = vadd.f32 %v2758, 1.0
    %v2773 = vadd.f32 %v2760, 1.0
    %v2774 = vadd.f32 %v2762, 1.0
    %v2775 = vadd.f32 %v2764, 1.0
    %v2776 = vadd.f32 %v2766, 1.0
    %v2777 = vadd.f32 %v2768, 1.0
    %v2778 = vadd.f32 %v2770, 1.0
    %v2779 = vrcp.pop %v2771
    %v2780 = vmul.f32 %v2771, %v2779
    %v2781 = vsub.f32 1.0, %v2780
    %v2782 = vmul.f32 %v2779, %v2781
    %v2783 = vadd.f32 %v2779, %v2782
    %vm2784 = vweird.f32 %v2771
    %vm2785 = vweird.f32 %v2779
    %vm2786 = vmor %vm2784, %vm2785
    %v2787 = vsel %vm2786, %v2779, %v2783
    %v2788 = vand.u32 2147483647, %v2771
    %vm2789 = vcmp.eq.f32.partialorder %v2788, 8.507059e+37
    %v2790 = vand.u32 %v2771, 2147483648
    %v2791 = vor.u32 1.1754944e-38, %v2790
    %v2792 = vsel %vm2789, %v2791, %v2787
    %v2793 = vmul.f32 1.0, %v2792
    %v2794 = vrcp.pop %v2772
    %v2795 = vmul.f32 %v2772, %v2794
    %v2796 = vsub.f32 1.0, %v2795
    %v2797 = vmul.f32 %v2794, %v2796
    %v2798 = vadd.f32 %v2794, %v2797
    %vm2799 = vweird.f32 %v2772
    %vm2800 = vweird.f32 %v2794
    %vm2801 = vmor %vm2799, %vm2800
    %v2802 = vsel %vm2801, %v2794, %v2798
    %v2803 = vand.u32 2147483647, %v2772
    %vm2804 = vcmp.eq.f32.partialorder %v2803, 8.507059e+37
    %v2805 = vand.u32 %v2772, 2147483648
    %v2806 = vor.u32 1.1754944e-38, %v2805
    %v2807 = vsel %vm2804, %v2806, %v2802
    %v2808 = vmul.f32 1.0, %v2807
    %v2809 = vrcp.pop %v2773
    %v2810 = vmul.f32 %v2773, %v2809
    %v2811 = vsub.f32 1.0, %v2810
    %v2812 = vmul.f32 %v2809, %v2811
    %v2813 = vadd.f32 %v2809, %v2812
    %vm2814 = vweird.f32 %v2773
    %vm2815 = vweird.f32 %v2809
    %vm2816 = vmor %vm2814, %vm2815
    %v2817 = vsel %vm2816, %v2809, %v2813
    %v2818 = vand.u32 2147483647, %v2773
    %vm2819 = vcmp.eq.f32.partialorder %v2818, 8.507059e+37
    %v2820 = vand.u32 %v2773, 2147483648
    %v2821 = vor.u32 1.1754944e-38, %v2820
    %v2822 = vsel %vm2819, %v2821, %v2817
    %v2823 = vmul.f32 1.0, %v2822
    %v2824 = vrcp.pop %v2774
    %v2825 = vmul.f32 %v2774, %v2824
    %v2826 = vsub.f32 1.0, %v2825
    %v2827 = vmul.f32 %v2824, %v2826
    %v2828 = vadd.f32 %v2824, %v2827
    %vm2829 = vweird.f32 %v2774
    %vm2830 = vweird.f32 %v2824
    %vm2831 = vmor %vm2829, %vm2830
    %v2832 = vsel %vm2831, %v2824, %v2828
    %v2833 = vand.u32 2147483647, %v2774
    %vm2834 = vcmp.eq.f32.partialorder %v2833, 8.507059e+37
    %v2835 = vand.u32 %v2774, 2147483648
    %v2836 = vor.u32 1.1754944e-38, %v2835
    %v2837 = vsel %vm2834, %v2836, %v2832
    %v2838 = vmul.f32 1.0, %v2837
    %v2839 = vrcp.pop %v2775
    %v2840 = vmul.f32 %v2775, %v2839
    %v2841 = vsub.f32 1.0, %v2840
    %v2842 = vmul.f32 %v2839, %v2841
    %v2843 = vadd.f32 %v2839, %v2842
    %vm2844 = vweird.f32 %v2775
    %vm2845 = vweird.f32 %v2839
    %vm2846 = vmor %vm2844, %vm2845
    %v2847 = vsel %vm2846, %v2839, %v2843
    %v2848 = vand.u32 2147483647, %v2775
    %vm2849 = vcmp.eq.f32.partialorder %v2848, 8.507059e+37
    %v2850 = vand.u32 %v2775, 2147483648
    %v2851 = vor.u32 1.1754944e-38, %v2850
    %v2852 = vsel %vm2849, %v2851, %v2847
    %v2853 = vmul.f32 1.0, %v2852
    %v2854 = vrcp.pop %v2776
    %v2855 = vmul.f32 %v2776, %v2854
    %v2856 = vsub.f32 1.0, %v2855
    %v2857 = vmul.f32 %v2854, %v2856
    %v2858 = vadd.f32 %v2854, %v2857
    %vm2859 = vweird.f32 %v2776
    %vm2860 = vweird.f32 %v2854
    %vm2861 = vmor %vm2859, %vm2860
    %v2862 = vsel %vm2861, %v2854, %v2858
    %v2863 = vand.u32 2147483647, %v2776
    %vm2864 = vcmp.eq.f32.partialorder %v2863, 8.507059e+37
    %v2865 = vand.u32 %v2776, 2147483648
    %v2866 = vor.u32 1.1754944e-38, %v2865
    %v2867 = vsel %vm2864, %v2866, %v2862
    %v2868 = vmul.f32 1.0, %v2867
    %v2869 = vrcp.pop %v2777
    %v2870 = vmul.f32 %v2777, %v2869
    %v2871 = vsub.f32 1.0, %v2870
    %v2872 = vmul.f32 %v2869, %v2871
    %v2873 = vadd.f32 %v2869, %v2872
    %vm2874 = vweird.f32 %v2777
    %vm2875 = vweird.f32 %v2869
    %vm2876 = vmor %vm2874, %vm2875
    %v2877 = vsel %vm2876, %v2869, %v2873
    %v2878 = vand.u32 2147483647, %v2777
    %vm2879 = vcmp.eq.f32.partialorder %v2878, 8.507059e+37
    %v2880 = vand.u32 %v2777, 2147483648
    %v2881 = vor.u32 1.1754944e-38, %v2880
    %v2882 = vsel %vm2879, %v2881, %v2877
    %v2883 = vmul.f32 1.0, %v2882
    %v2884 = vrcp.pop %v2778
    %v2885 = vmul.f32 %v2778, %v2884
    %v2886 = vsub.f32 1.0, %v2885
    %v2887 = vmul.f32 %v2884, %v2886
    %v2888 = vadd.f32 %v2884, %v2887
    %vm2889 = vweird.f32 %v2778
    %vm2890 = vweird.f32 %v2884
    %vm2891 = vmor %vm2889, %vm2890
    %v2892 = vsel %vm2891, %v2884, %v2888
    %v2893 = vand.u32 2147483647, %v2778
    %vm2894 = vcmp.eq.f32.partialorder %v2893, 8.507059e+37
    %v2895 = vand.u32 %v2778, 2147483648
    %v2896 = vor.u32 1.1754944e-38, %v2895
    %v2897 = vsel %vm2894, %v2896, %v2892
    %v2898 = vmul.f32 1.0, %v2897
    %v2899 = vrot.slane %v2563, 2
    %v2900 = vrot.slane %v2564, 2
    %v2901 = vrot.slane %v2565, 2
    %v2902 = vrot.slane %v2566, 2
    %v2903 = vrot.slane %v2567, 2
    %v2904 = vrot.slane %v2568, 2
    %v2905 = vrot.slane %v2569, 2
    %v2906 = vrot.slane %v2570, 2
    %v2915 = vtanh.pop %v2899
    %v2916 = vtanh.pop %v2900
    %v2917 = vtanh.pop %v2901
    %v2918 = vtanh.pop %v2902
    %v2919 = vtanh.pop %v2903
    %v2920 = vtanh.pop %v2904
    %v2921 = vtanh.pop %v2905
    %v2922 = vtanh.pop %v2906
    %s2923 = sadd.f32 %s165, 3.0
    %s2924 = ssub.f32 %s2923, 0.001
    %v2925 = vstv %s2924
    %v2926 = vmul.f32 %v2617, %v2925
    %v2927 = vmul.f32 %v2632, %v2925
    %v2928 = vmul.f32 %v2647, %v2925
    %v2929 = vmul.f32 %v2662, %v2925
    %v2930 = vmul.f32 %v2677, %v2925
    %v2931 = vmul.f32 %v2692, %v2925
    %v2932 = vmul.f32 %v2707, %v2925
    %v2933 = vmul.f32 %v2722, %v2925
    %v2934 = vsub.f32 1.0, %v2617
    %v2935 = vsub.f32 1.0, %v2632
    %v2936 = vsub.f32 1.0, %v2647
    %v2937 = vsub.f32 1.0, %v2662
    %v2938 = vsub.f32 1.0, %v2677
    %v2939 = vsub.f32 1.0, %v2692
    %v2940 = vsub.f32 1.0, %v2707
    %v2941 = vsub.f32 1.0, %v2722
    %v2942 = vmul.f32 %v2934, %v2209
    %v2943 = vmul.f32 %v2935, %v2210
    %v2944 = vmul.f32 %v2936, %v2211
    %v2945 = vmul.f32 %v2937, %v2212
    %v2946 = vmul.f32 %v2938, %v2213
    %v2947 = vmul.f32 %v2939, %v2214
    %v2948 = vmul.f32 %v2940, %v2215
    %v2949 = vmul.f32 %v2941, %v2216
    %v2950 = vadd.f32 %v2926, %v2942
    %v2951 = vadd.f32 %v2927, %v2943
    %v2952 = vadd.f32 %v2928, %v2944
    %v2953 = vadd.f32 %v2929, %v2945
    %v2954 = vadd.f32 %v2930, %v2946
    %v2955 = vadd.f32 %v2931, %v2947
    %v2956 = vadd.f32 %v2932, %v2948
    %v2957 = vadd.f32 %v2933, %v2949
    %v2958 = vstv %s2923
    %v2959 = vsub.f32 %v2958, %v2950
    %v2960 = vsub.f32 %v2958, %v2951
    %v2961 = vsub.f32 %v2958, %v2952
    %v2962 = vsub.f32 %v2958, %v2953
    %v2963 = vsub.f32 %v2958, %v2954
    %v2964 = vsub.f32 %v2958, %v2955
    %v2965 = vsub.f32 %v2958, %v2956
    %v2966 = vsub.f32 %v2958, %v2957
    %v2967 = vadd.f32 %v2959, 0.001
    %v2968 = vadd.f32 %v2960, 0.001
    %v2969 = vadd.f32 %v2961, 0.001
    %v2970 = vadd.f32 %v2962, 0.001
    %v2971 = vadd.f32 %v2963, 0.001
    %v2972 = vadd.f32 %v2964, 0.001
    %v2973 = vadd.f32 %v2965, 0.001
    %v2974 = vadd.f32 %v2966, 0.001
    %v2975 = vadd.f32 %v2959, 1.0
    %v2976 = vadd.f32 %v2960, 1.0
    %v2977 = vadd.f32 %v2961, 1.0
    %v2978 = vadd.f32 %v2962, 1.0
    %v2979 = vadd.f32 %v2963, 1.0
    %v2980 = vadd.f32 %v2964, 1.0
    %v2981 = vadd.f32 %v2965, 1.0
    %v2982 = vadd.f32 %v2966, 1.0
    %v2983 = vrcp.pop %v2975
    %v2984 = vmul.f32 %v2975, %v2983
    %v2985 = vsub.f32 1.0, %v2984
    %v2986 = vmul.f32 %v2983, %v2985
    %v2987 = vadd.f32 %v2983, %v2986
    %vm2988 = vweird.f32 %v2975
    %vm2989 = vweird.f32 %v2983
    %vm2990 = vmor %vm2988, %vm2989
    %v2991 = vsel %vm2990, %v2983, %v2987
    %v2992 = vand.u32 2147483647, %v2975
    %vm2993 = vcmp.eq.f32.partialorder %v2992, 8.507059e+37
    %v2994 = vand.u32 %v2975, 2147483648
    %v2995 = vor.u32 1.1754944e-38, %v2994
    %v2996 = vsel %vm2993, %v2995, %v2991
    %v2997 = vmul.f32 %v2967, %v2996
    %v2998 = vrcp.pop %v2976
    %v2999 = vmul.f32 %v2976, %v2998
    %v3000 = vsub.f32 1.0, %v2999
    %v3001 = vmul.f32 %v2998, %v3000
    %v3002 = vadd.f32 %v2998, %v3001
    %vm3003 = vweird.f32 %v2976
    %vm3004 = vweird.f32 %v2998
    %vm3005 = vmor %vm3003, %vm3004
    %v3006 = vsel %vm3005, %v2998, %v3002
    %v3007 = vand.u32 2147483647, %v2976
    %vm3008 = vcmp.eq.f32.partialorder %v3007, 8.507059e+37
    %v3009 = vand.u32 %v2976, 2147483648
    %v3010 = vor.u32 1.1754944e-38, %v3009
    %v3011 = vsel %vm3008, %v3010, %v3006
    %v3012 = vmul.f32 %v2968, %v3011
    %v3013 = vrcp.pop %v2977
    %v3014 = vmul.f32 %v2977, %v3013
    %v3015 = vsub.f32 1.0, %v3014
    %v3016 = vmul.f32 %v3013, %v3015
    %v3017 = vadd.f32 %v3013, %v3016
    %vm3018 = vweird.f32 %v2977
    %vm3019 = vweird.f32 %v3013
    %vm3020 = vmor %vm3018, %vm3019
    %v3021 = vsel %vm3020, %v3013, %v3017
    %v3022 = vand.u32 2147483647, %v2977
    %vm3023 = vcmp.eq.f32.partialorder %v3022, 8.507059e+37
    %v3024 = vand.u32 %v2977, 2147483648
    %v3025 = vor.u32 1.1754944e-38, %v3024
    %v3026 = vsel %vm3023, %v3025, %v3021
    %v3027 = vmul.f32 %v2969, %v3026
    %v3028 = vrcp.pop %v2978
    %v3029 = vmul.f32 %v2978, %v3028
    %v3030 = vsub.f32 1.0, %v3029
    %v3031 = vmul.f32 %v3028, %v3030
    %v3032 = vadd.f32 %v3028, %v3031
    %vm3033 = vweird.f32 %v2978
    %vm3034 = vweird.f32 %v3028
    %vm3035 = vmor %vm3033, %vm3034
    %v3036 = vsel %vm3035, %v3028, %v3032
    %v3037 = vand.u32 2147483647, %v2978
    %vm3038 = vcmp.eq.f32.partialorder %v3037, 8.507059e+37
    %v3039 = vand.u32 %v2978, 2147483648
    %v3040 = vor.u32 1.1754944e-38, %v3039
    %v3041 = vsel %vm3038, %v3040, %v3036
    %v3042 = vmul.f32 %v2970, %v3041
    %v3043 = vrcp.pop %v2979
    %v3044 = vmul.f32 %v2979, %v3043
    %v3045 = vsub.f32 1.0, %v3044
    %v3046 = vmul.f32 %v3043, %v3045
    %v3047 = vadd.f32 %v3043, %v3046
    %vm3048 = vweird.f32 %v2979
    %vm3049 = vweird.f32 %v3043
    %vm3050 = vmor %vm3048, %vm3049
    %v3051 = vsel %vm3050, %v3043, %v3047
    %v3052 = vand.u32 2147483647, %v2979
    %vm3053 = vcmp.eq.f32.partialorder %v3052, 8.507059e+37
    %v3054 = vand.u32 %v2979, 2147483648
    %v3055 = vor.u32 1.1754944e-38, %v3054
    %v3056 = vsel %vm3053, %v3055, %v3051
    %v3057 = vmul.f32 %v2971, %v3056
    %v3058 = vrcp.pop %v2980
    %v3059 = vmul.f32 %v2980, %v3058
    %v3060 = vsub.f32 1.0, %v3059
    %v3061 = vmul.f32 %v3058, %v3060
    %v3062 = vadd.f32 %v3058, %v3061
    %vm3063 = vweird.f32 %v2980
    %vm3064 = vweird.f32 %v3058
    %vm3065 = vmor %vm3063, %vm3064
    %v3066 = vsel %vm3065, %v3058, %v3062
    %v3067 = vand.u32 2147483647, %v2980
    %vm3068 = vcmp.eq.f32.partialorder %v3067, 8.507059e+37
    %v3069 = vand.u32 %v2980, 2147483648
    %v3070 = vor.u32 1.1754944e-38, %v3069
    %v3071 = vsel %vm3068, %v3070, %v3066
    %v3072 = vmul.f32 %v2972, %v3071
    %v3073 = vrcp.pop %v2981
    %v3074 = vmul.f32 %v2981, %v3073
    %v3075 = vsub.f32 1.0, %v3074
    %v3076 = vmul.f32 %v3073, %v3075
    %v3077 = vadd.f32 %v3073, %v3076
    %vm3078 = vweird.f32 %v2981
    %vm3079 = vweird.f32 %v3073
    %vm3080 = vmor %vm3078, %vm3079
    %v3081 = vsel %vm3080, %v3073, %v3077
    %v3082 = vand.u32 2147483647, %v2981
    %vm3083 = vcmp.eq.f32.partialorder %v3082, 8.507059e+37
    %v3084 = vand.u32 %v2981, 2147483648
    %v3085 = vor.u32 1.1754944e-38, %v3084
    %v3086 = vsel %vm3083, %v3085, %v3081
    %v3087 = vmul.f32 %v2973, %v3086
    %v3088 = vrcp.pop %v2982
    %v3089 = vmul.f32 %v2982, %v3088
    %v3090 = vsub.f32 1.0, %v3089
    %v3091 = vmul.f32 %v3088, %v3090
    %v3092 = vadd.f32 %v3088, %v3091
    %vm3093 = vweird.f32 %v2982
    %vm3094 = vweird.f32 %v3088
    %vm3095 = vmor %vm3093, %vm3094
    %v3096 = vsel %vm3095, %v3088, %v3092
    %v3097 = vand.u32 2147483647, %v2982
    %vm3098 = vcmp.eq.f32.partialorder %v3097, 8.507059e+37
    %v3099 = vand.u32 %v2982, 2147483648
    %v3100 = vor.u32 1.1754944e-38, %v3099
    %v3101 = vsel %vm3098, %v3100, %v3096
    %v3102 = vmul.f32 %v2974, %v3101
    %v3103 = vpow.f32 %v2997, %v162
    %v3104 = vpow.f32 %v3012, %v851
    %v3105 = vpow.f32 %v3027, %v852
    %v3106 = vpow.f32 %v3042, %v853
    %v3107 = vpow.f32 %v3057, %v854
    %v3108 = vpow.f32 %v3072, %v855
    %v3109 = vpow.f32 %v3087, %v856
    %v3110 = vpow.f32 %v3102, %v857
    %v3111 = vmul.f32 %v3103, %v2394
    %v3112 = vmul.f32 %v3104, %v2395
    %v3113 = vmul.f32 %v3105, %v2396
    %v3114 = vmul.f32 %v3106, %v2397
    %v3115 = vmul.f32 %v3107, %v2398
    %v3116 = vmul.f32 %v3108, %v2399
    %v3117 = vmul.f32 %v3109, %v2400
    %v3118 = vmul.f32 %v3110, %v2401
    %v3119 = vsub.f32 1.0, %v3103
    %v3120 = vsub.f32 1.0, %v3104
    %v3121 = vsub.f32 1.0, %v3105
    %v3122 = vsub.f32 1.0, %v3106
    %v3123 = vsub.f32 1.0, %v3107
    %v3124 = vsub.f32 1.0, %v3108
    %v3125 = vsub.f32 1.0, %v3109
    %v3126 = vsub.f32 1.0, %v3110
    %v3127 = vmul.f32 %v3119, %v2915
    %v3128 = vmul.f32 %v3120, %v2916
    %v3129 = vmul.f32 %v3121, %v2917
    %v3130 = vmul.f32 %v3122, %v2918
    %v3131 = vmul.f32 %v3123, %v2919
    %v3132 = vmul.f32 %v3124, %v2920
    %v3133 = vmul.f32 %v3125, %v2921
    %v3134 = vmul.f32 %v3126, %v2922
    %v3135 = vadd.f32 %v3111, %v3127
    %v3136 = vadd.f32 %v3112, %v3128
    %v3137 = vadd.f32 %v3113, %v3129
    %v3138 = vadd.f32 %v3114, %v3130
    %v3139 = vadd.f32 %v3115, %v3131
    %v3140 = vadd.f32 %v3116, %v3132
    %v3141 = vadd.f32 %v3117, %v3133
    %v3142 = vadd.f32 %v3118, %v3134
    %v3143 = vtanh.pop %v3135
    %v3144 = vtanh.pop %v3136
    %v3145 = vtanh.pop %v3137
    %v3146 = vtanh.pop %v3138
    %v3147 = vtanh.pop %v3139
    %v3148 = vtanh.pop %v3140
    %v3149 = vtanh.pop %v3141
    %v3150 = vtanh.pop %v3142
    %v3151 = vmul.f32 %v2793, %v3143
    %v3152 = vmul.f32 %v2808, %v3144
    %v3153 = vmul.f32 %v2823, %v3145
    %v3154 = vmul.f32 %v2838, %v3146
    %v3155 = vmul.f32 %v2853, %v3147
    %v3156 = vmul.f32 %v2868, %v3148
    %v3157 = vmul.f32 %v2883, %v3149
    %v3158 = vmul.f32 %v2898, %v3150
    %3159 = vst [vmem:[#allocation14 + $0x3] sm:$0x1] %v3151
    %3160 = vst [vmem:[#allocation14 + $0xb] sm:$0x1] %v3152
    %3161 = vst [vmem:[#allocation14 + $0x13] sm:$0x1] %v3153
    %3162 = vst [vmem:[#allocation14 + $0x1b] sm:$0x1] %v3154
    %3163 = vst [vmem:[#allocation14 + $0x23] sm:$0x1] %v3155
    %3164 = vst [vmem:[#allocation14 + $0x2b] sm:$0x1] %v3156
    %3165 = vst [vmem:[#allocation14 + $0x33] sm:$0x1] %v3157
    %3166 = vst [vmem:[#allocation14 + $0x3b] sm:$0x1] %v3158
    %s3167 = scalar_lea.vmem [#allocation5], 4
    %v3168 = vld [vmem:[%s3167] ss:$8 sm:$0x7]
    %s3169 = scalar_lea.vmem [#allocation5], 28
    %v3170 = vld [vmem:[%s3169] ss:$8 sm:$0x7]
    %s3171 = scalar_lea.vmem [#allocation5], 52
    %v3172 = vld [vmem:[%s3171] ss:$8 sm:$0x7]
    %s3173 = scalar_lea.vmem [#allocation5], 76
    %v3174 = vld [vmem:[%s3173] ss:$8 sm:$0x7]
    %s3175 = scalar_lea.vmem [#allocation5], 100
    %v3176 = vld [vmem:[%s3175] ss:$8 sm:$0x7]
    %s3177 = scalar_lea.vmem [#allocation5], 124
    %v3178 = vld [vmem:[%s3177] ss:$8 sm:$0x7]
    %s3179 = scalar_lea.vmem [#allocation5], 148
    %v3180 = vld [vmem:[%s3179] ss:$8 sm:$0x7]
    %s3181 = scalar_lea.vmem [#allocation5], 172
    %v3182 = vld [vmem:[%s3181] ss:$8 sm:$0x7]
    %3191 = vst [vmem:[#allocation1] ss:$9 sm:$0xff] %v3151
    %s3192 = scalar_lea.vmem [#allocation1], 1
    %3193 = vst [vmem:[%s3192] ss:$9 sm:$0xff] %v3152
    %s3194 = scalar_lea.vmem [#allocation1], 2
    %3195 = vst [vmem:[%s3194] ss:$9 sm:$0xff] %v3153
    %s3196 = scalar_lea.vmem [#allocation1], 3
    %3197 = vst [vmem:[%s3196] ss:$9 sm:$0xff] %v3154
    %s3198 = scalar_lea.vmem [#allocation1], 4
    %3199 = vst [vmem:[%s3198] ss:$9 sm:$0xff] %v3155
    %s3200 = scalar_lea.vmem [#allocation1], 5
    %3201 = vst [vmem:[%s3200] ss:$9 sm:$0xff] %v3156
    %s3202 = scalar_lea.vmem [#allocation1], 6
    %3203 = vst [vmem:[%s3202] ss:$9 sm:$0xff] %v3157
    %s3204 = scalar_lea.vmem [#allocation1], 7
    %3205 = vst [vmem:[%s3204] ss:$9 sm:$0xff] %v3158
    %v3206 = vld [vmem:[#allocation1] sm:$0xff]
    %3208 = vmatpush.msra.mxu0 %v157
    %3209 = vmatpush.msra.mxu0 %v154
    %3210 = vmatpush.msra.mxu0 %v151
    %3211 = vmatpush.msra.mxu0 %v148
    %3212 = vmatpush.msra.mxu0 %v145
    %3213 = vmatpush.msra.mxu0 %v142
    %3214 = vmatpush.msra.mxu0 %v139
    %3215 = vmatpush.msra.mxu0 %v136
    %3216 = vmatpush.msra.mxu0 %v133
    %3217 = vmatpush.msra.mxu0 %v130
    %3218 = vmatpush.msra.mxu0 %v127
    %3219 = vmatpush.msra.mxu0 %v124
    %3220 = vmatpush.msra.mxu0 %v121
    %3221 = vmatpush.msra.mxu0 %v118
    %3222 = vmatpush.msra.mxu0 %v115
    %3223 = vmatpush.msra.mxu0 %v112
    %3224 = vmatmul.f32.gmra.mxu0 %v3206
    %v3225 = vpop.f32.mrf.mxu0
    %v3226 = vadd.f32 0.0, %v3225
    %3227 = vdwg.mxu0
    %3228 = vmatpush.msra.mxu0 %v158
    %3229 = vmatpush.msra.mxu0 %v155
    %3230 = vmatpush.msra.mxu0 %v152
    %3231 = vmatpush.msra.mxu0 %v149
    %3232 = vmatpush.msra.mxu0 %v146
    %3233 = vmatpush.msra.mxu0 %v143
    %3234 = vmatpush.msra.mxu0 %v140
    %3235 = vmatpush.msra.mxu0 %v137
    %3236 = vmatpush.msra.mxu0 %v134
    %3237 = vmatpush.msra.mxu0 %v131
    %3238 = vmatpush.msra.mxu0 %v128
    %3239 = vmatpush.msra.mxu0 %v125
    %3240 = vmatpush.msra.mxu0 %v122
    %3241 = vmatpush.msra.mxu0 %v119
    %3242 = vmatpush.msra.mxu0 %v116
    %3243 = vmatpush.msra.mxu0 %v113
    %3244 = vmatmul.f32.gmra.mxu0 %v3206
    %v3245 = vpop.f32.mrf.mxu0
    %v3246 = vadd.f32 0.0, %v3245
    %3247 = vdwg.mxu0
    %3248 = vmatpush.msra.mxu0 %v159
    %3249 = vmatpush.msra.mxu0 %v156
    %3250 = vmatpush.msra.mxu0 %v153
    %3251 = vmatpush.msra.mxu0 %v150
    %3252 = vmatpush.msra.mxu0 %v147
    %3253 = vmatpush.msra.mxu0 %v144
    %3254 = vmatpush.msra.mxu0 %v141
    %3255 = vmatpush.msra.mxu0 %v138
    %3256 = vmatpush.msra.mxu0 %v135
    %3257 = vmatpush.msra.mxu0 %v132
    %3258 = vmatpush.msra.mxu0 %v129
    %3259 = vmatpush.msra.mxu0 %v126
    %3260 = vmatpush.msra.mxu0 %v123
    %3261 = vmatpush.msra.mxu0 %v120
    %3262 = vmatpush.msra.mxu0 %v117
    %3263 = vmatpush.msra.mxu0 %v114
    %3264 = vmatmul.f32.gmra.mxu0 %v3206
    %v3265 = vpop.f32.mrf.mxu0
    %v3266 = vadd.f32 0.0, %v3265
    %3267 = vdwg.mxu0
    %v3271 = vrot.slane %v3246, 7
    %v3272 = vrot.slane %v3266, 6
    %v3273 = vsel %vm249, %v3226, %v3271
    %v3274 = vsel %vm251, %v3273, %v3272
    %v3275 = vsel %vm253, %v3226, %v3271
    %v3276 = vsel %vm255, %v3275, %v3272
    %v3277 = vrot.slane %v3276, 1
    %v3278 = vsel %vm258, %v3226, %v3271
    %v3279 = vsel %vm260, %v3278, %v3272
    %v3280 = vrot.slane %v3279, 2
    %v3281 = vsel %vm263, %v3226, %v3271
    %v3282 = vsel %vm265, %v3281, %v3272
    %v3283 = vrot.slane %v3282, 3
    %v3284 = vsel %vm268, %v3226, %v3271
    %v3285 = vsel %vm270, %v3284, %v3272
    %v3286 = vrot.slane %v3285, 4
    %v3287 = vsel %vm273, %v3226, %v3271
    %v3288 = vsel %vm275, %v3287, %v3272
    %v3289 = vrot.slane %v3288, 5
    %v3290 = vsel %vm278, %v3226, %v3271
    %v3291 = vsel %vm280, %v3272, %v3290
    %v3292 = vrot.slane %v3291, 6
    %v3293 = vsel %vm283, %v3271, %v3226
    %v3294 = vsel %vm285, %v3272, %v3293
    %v3295 = vrot.slane %v3294, 7
    %v3304 = vadd.f32 %v3168, %v3274
    %v3305 = vadd.f32 %v3170, %v3277
    %v3306 = vadd.f32 %v3172, %v3280
    %v3307 = vadd.f32 %v3174, %v3283
    %v3308 = vadd.f32 %v3176, %v3286
    %v3309 = vadd.f32 %v3178, %v3289
    %v3310 = vadd.f32 %v3180, %v3292
    %v3311 = vadd.f32 %v3182, %v3295
    %v3312 = vxor.u32 %v3304, 2147483648
    %v3313 = vxor.u32 %v3305, 2147483648
    %v3314 = vxor.u32 %v3306, 2147483648
    %v3315 = vxor.u32 %v3307, 2147483648
    %v3316 = vxor.u32 %v3308, 2147483648
    %v3317 = vxor.u32 %v3309, 2147483648
    %v3318 = vxor.u32 %v3310, 2147483648
    %v3319 = vxor.u32 %v3311, 2147483648
    %v3320 = vmul.f32 %v3312, 1.442695
    %v3321 = vpow.pop %v3320
    %v3322 = vmul.f32 %v3313, 1.442695
    %v3323 = vpow.pop %v3322
    %v3324 = vmul.f32 %v3314, 1.442695
    %v3325 = vpow.pop %v3324
    %v3326 = vmul.f32 %v3315, 1.442695
    %v3327 = vpow.pop %v3326
    %v3328 = vmul.f32 %v3316, 1.442695
    %v3329 = vpow.pop %v3328
    %v3330 = vmul.f32 %v3317, 1.442695
    %v3331 = vpow.pop %v3330
    %v3332 = vmul.f32 %v3318, 1.442695
    %v3333 = vpow.pop %v3332
    %v3334 = vmul.f32 %v3319, 1.442695
    %v3335 = vpow.pop %v3334
    %v3336 = vadd.f32 %v3321, 1.0
    %v3337 = vadd.f32 %v3323, 1.0
    %v3338 = vadd.f32 %v3325, 1.0
    %v3339 = vadd.f32 %v3327, 1.0
    %v3340 = vadd.f32 %v3329, 1.0
    %v3341 = vadd.f32 %v3331, 1.0
    %v3342 = vadd.f32 %v3333, 1.0
    %v3343 = vadd.f32 %v3335, 1.0
    %v3344 = vrcp.pop %v3336
    %v3345 = vmul.f32 %v3336, %v3344
    %v3346 = vsub.f32 1.0, %v3345
    %v3347 = vmul.f32 %v3344, %v3346
    %v3348 = vadd.f32 %v3344, %v3347
    %vm3349 = vweird.f32 %v3336
    %vm3350 = vweird.f32 %v3344
    %vm3351 = vmor %vm3349, %vm3350
    %v3352 = vsel %vm3351, %v3344, %v3348
    %v3353 = vand.u32 2147483647, %v3336
    %vm3354 = vcmp.eq.f32.partialorder %v3353, 8.507059e+37
    %v3355 = vand.u32 %v3336, 2147483648
    %v3356 = vor.u32 1.1754944e-38, %v3355
    %v3357 = vsel %vm3354, %v3356, %v3352
    %v3358 = vmul.f32 1.0, %v3357
    %v3359 = vrcp.pop %v3337
    %v3360 = vmul.f32 %v3337, %v3359
    %v3361 = vsub.f32 1.0, %v3360
    %v3362 = vmul.f32 %v3359, %v3361
    %v3363 = vadd.f32 %v3359, %v3362
    %vm3364 = vweird.f32 %v3337
    %vm3365 = vweird.f32 %v3359
    %vm3366 = vmor %vm3364, %vm3365
    %v3367 = vsel %vm3366, %v3359, %v3363
    %v3368 = vand.u32 2147483647, %v3337
    %vm3369 = vcmp.eq.f32.partialorder %v3368, 8.507059e+37
    %v3370 = vand.u32 %v3337, 2147483648
    %v3371 = vor.u32 1.1754944e-38, %v3370
    %v3372 = vsel %vm3369, %v3371, %v3367
    %v3373 = vmul.f32 1.0, %v3372
    %v3374 = vrcp.pop %v3338
    %v3375 = vmul.f32 %v3338, %v3374
    %v3376 = vsub.f32 1.0, %v3375
    %v3377 = vmul.f32 %v3374, %v3376
    %v3378 = vadd.f32 %v3374, %v3377
    %vm3379 = vweird.f32 %v3338
    %vm3380 = vweird.f32 %v3374
    %vm3381 = vmor %vm3379, %vm3380
    %v3382 = vsel %vm3381, %v3374, %v3378
    %v3383 = vand.u32 2147483647, %v3338
    %vm3384 = vcmp.eq.f32.partialorder %v3383, 8.507059e+37
    %v3385 = vand.u32 %v3338, 2147483648
    %v3386 = vor.u32 1.1754944e-38, %v3385
    %v3387 = vsel %vm3384, %v3386, %v3382
    %v3388 = vmul.f32 1.0, %v3387
    %v3389 = vrcp.pop %v3339
    %v3390 = vmul.f32 %v3339, %v3389
    %v3391 = vsub.f32 1.0, %v3390
    %v3392 = vmul.f32 %v3389, %v3391
    %v3393 = vadd.f32 %v3389, %v3392
    %vm3394 = vweird.f32 %v3339
    %vm3395 = vweird.f32 %v3389
    %vm3396 = vmor %vm3394, %vm3395
    %v3397 = vsel %vm3396, %v3389, %v3393
    %v3398 = vand.u32 2147483647, %v3339
    %vm3399 = vcmp.eq.f32.partialorder %v3398, 8.507059e+37
    %v3400 = vand.u32 %v3339, 2147483648
    %v3401 = vor.u32 1.1754944e-38, %v3400
    %v3402 = vsel %vm3399, %v3401, %v3397
    %v3403 = vmul.f32 1.0, %v3402
    %v3404 = vrcp.pop %v3340
    %v3405 = vmul.f32 %v3340, %v3404
    %v3406 = vsub.f32 1.0, %v3405
    %v3407 = vmul.f32 %v3404, %v3406
    %v3408 = vadd.f32 %v3404, %v3407
    %vm3409 = vweird.f32 %v3340
    %vm3410 = vweird.f32 %v3404
    %vm3411 = vmor %vm3409, %vm3410
    %v3412 = vsel %vm3411, %v3404, %v3408
    %v3413 = vand.u32 2147483647, %v3340
    %vm3414 = vcmp.eq.f32.partialorder %v3413, 8.507059e+37
    %v3415 = vand.u32 %v3340, 2147483648
    %v3416 = vor.u32 1.1754944e-38, %v3415
    %v3417 = vsel %vm3414, %v3416, %v3412
    %v3418 = vmul.f32 1.0, %v3417
    %v3419 = vrcp.pop %v3341
    %v3420 = vmul.f32 %v3341, %v3419
    %v3421 = vsub.f32 1.0, %v3420
    %v3422 = vmul.f32 %v3419, %v3421
    %v3423 = vadd.f32 %v3419, %v3422
    %vm3424 = vweird.f32 %v3341
    %vm3425 = vweird.f32 %v3419
    %vm3426 = vmor %vm3424, %vm3425
    %v3427 = vsel %vm3426, %v3419, %v3423
    %v3428 = vand.u32 2147483647, %v3341
    %vm3429 = vcmp.eq.f32.partialorder %v3428, 8.507059e+37
    %v3430 = vand.u32 %v3341, 2147483648
    %v3431 = vor.u32 1.1754944e-38, %v3430
    %v3432 = vsel %vm3429, %v3431, %v3427
    %v3433 = vmul.f32 1.0, %v3432
    %v3434 = vrcp.pop %v3342
    %v3435 = vmul.f32 %v3342, %v3434
    %v3436 = vsub.f32 1.0, %v3435
    %v3437 = vmul.f32 %v3434, %v3436
    %v3438 = vadd.f32 %v3434, %v3437
    %vm3439 = vweird.f32 %v3342
    %vm3440 = vweird.f32 %v3434
    %vm3441 = vmor %vm3439, %vm3440
    %v3442 = vsel %vm3441, %v3434, %v3438
    %v3443 = vand.u32 2147483647, %v3342
    %vm3444 = vcmp.eq.f32.partialorder %v3443, 8.507059e+37
    %v3445 = vand.u32 %v3342, 2147483648
    %v3446 = vor.u32 1.1754944e-38, %v3445
    %v3447 = vsel %vm3444, %v3446, %v3442
    %v3448 = vmul.f32 1.0, %v3447
    %v3449 = vrcp.pop %v3343
    %v3450 = vmul.f32 %v3343, %v3449
    %v3451 = vsub.f32 1.0, %v3450
    %v3452 = vmul.f32 %v3449, %v3451
    %v3453 = vadd.f32 %v3449, %v3452
    %vm3454 = vweird.f32 %v3343
    %vm3455 = vweird.f32 %v3449
    %vm3456 = vmor %vm3454, %vm3455
    %v3457 = vsel %vm3456, %v3449, %v3453
    %v3458 = vand.u32 2147483647, %v3343
    %vm3459 = vcmp.eq.f32.partialorder %v3458, 8.507059e+37
    %v3460 = vand.u32 %v3343, 2147483648
    %v3461 = vor.u32 1.1754944e-38, %v3460
    %v3462 = vsel %vm3459, %v3461, %v3457
    %v3463 = vmul.f32 1.0, %v3462
    %v3472 = vrot.slane %v3304, 1
    %v3473 = vrot.slane %v3305, 1
    %v3474 = vrot.slane %v3306, 1
    %v3475 = vrot.slane %v3307, 1
    %v3476 = vrot.slane %v3308, 1
    %v3477 = vrot.slane %v3309, 1
    %v3478 = vrot.slane %v3310, 1
    %v3479 = vrot.slane %v3311, 1
    %v3488 = vxor.u32 %v3472, 2147483648
    %v3489 = vxor.u32 %v3473, 2147483648
    %v3490 = vxor.u32 %v3474, 2147483648
    %v3491 = vxor.u32 %v3475, 2147483648
    %v3492 = vxor.u32 %v3476, 2147483648
    %v3493 = vxor.u32 %v3477, 2147483648
    %v3494 = vxor.u32 %v3478, 2147483648
    %v3495 = vxor.u32 %v3479, 2147483648
    %v3496 = vmul.f32 %v3488, 1.442695
    %v3497 = vpow.pop %v3496
    %v3498 = vmul.f32 %v3489, 1.442695
    %v3499 = vpow.pop %v3498
    %v3500 = vmul.f32 %v3490, 1.442695
    %v3501 = vpow.pop %v3500
    %v3502 = vmul.f32 %v3491, 1.442695
    %v3503 = vpow.pop %v3502
    %v3504 = vmul.f32 %v3492, 1.442695
    %v3505 = vpow.pop %v3504
    %v3506 = vmul.f32 %v3493, 1.442695
    %v3507 = vpow.pop %v3506
    %v3508 = vmul.f32 %v3494, 1.442695
    %v3509 = vpow.pop %v3508
    %v3510 = vmul.f32 %v3495, 1.442695
    %v3511 = vpow.pop %v3510
    %v3512 = vadd.f32 %v3497, 1.0
    %v3513 = vadd.f32 %v3499, 1.0
    %v3514 = vadd.f32 %v3501, 1.0
    %v3515 = vadd.f32 %v3503, 1.0
    %v3516 = vadd.f32 %v3505, 1.0
    %v3517 = vadd.f32 %v3507, 1.0
    %v3518 = vadd.f32 %v3509, 1.0
    %v3519 = vadd.f32 %v3511, 1.0
    %v3520 = vrcp.pop %v3512
    %v3521 = vmul.f32 %v3512, %v3520
    %v3522 = vsub.f32 1.0, %v3521
    %v3523 = vmul.f32 %v3520, %v3522
    %v3524 = vadd.f32 %v3520, %v3523
    %vm3525 = vweird.f32 %v3512
    %vm3526 = vweird.f32 %v3520
    %vm3527 = vmor %vm3525, %vm3526
    %v3528 = vsel %vm3527, %v3520, %v3524
    %v3529 = vand.u32 2147483647, %v3512
    %vm3530 = vcmp.eq.f32.partialorder %v3529, 8.507059e+37
    %v3531 = vand.u32 %v3512, 2147483648
    %v3532 = vor.u32 1.1754944e-38, %v3531
    %v3533 = vsel %vm3530, %v3532, %v3528
    %v3534 = vmul.f32 1.0, %v3533
    %v3535 = vrcp.pop %v3513
    %v3536 = vmul.f32 %v3513, %v3535
    %v3537 = vsub.f32 1.0, %v3536
    %v3538 = vmul.f32 %v3535, %v3537
    %v3539 = vadd.f32 %v3535, %v3538
    %vm3540 = vweird.f32 %v3513
    %vm3541 = vweird.f32 %v3535
    %vm3542 = vmor %vm3540, %vm3541
    %v3543 = vsel %vm3542, %v3535, %v3539
    %v3544 = vand.u32 2147483647, %v3513
    %vm3545 = vcmp.eq.f32.partialorder %v3544, 8.507059e+37
    %v3546 = vand.u32 %v3513, 2147483648
    %v3547 = vor.u32 1.1754944e-38, %v3546
    %v3548 = vsel %vm3545, %v3547, %v3543
    %v3549 = vmul.f32 1.0, %v3548
    %v3550 = vrcp.pop %v3514
    %v3551 = vmul.f32 %v3514, %v3550
    %v3552 = vsub.f32 1.0, %v3551
    %v3553 = vmul.f32 %v3550, %v3552
    %v3554 = vadd.f32 %v3550, %v3553
    %vm3555 = vweird.f32 %v3514
    %vm3556 = vweird.f32 %v3550
    %vm3557 = vmor %vm3555, %vm3556
    %v3558 = vsel %vm3557, %v3550, %v3554
    %v3559 = vand.u32 2147483647, %v3514
    %vm3560 = vcmp.eq.f32.partialorder %v3559, 8.507059e+37
    %v3561 = vand.u32 %v3514, 2147483648
    %v3562 = vor.u32 1.1754944e-38, %v3561
    %v3563 = vsel %vm3560, %v3562, %v3558
    %v3564 = vmul.f32 1.0, %v3563
    %v3565 = vrcp.pop %v3515
    %v3566 = vmul.f32 %v3515, %v3565
    %v3567 = vsub.f32 1.0, %v3566
    %v3568 = vmul.f32 %v3565, %v3567
    %v3569 = vadd.f32 %v3565, %v3568
    %vm3570 = vweird.f32 %v3515
    %vm3571 = vweird.f32 %v3565
    %vm3572 = vmor %vm3570, %vm3571
    %v3573 = vsel %vm3572, %v3565, %v3569
    %v3574 = vand.u32 2147483647, %v3515
    %vm3575 = vcmp.eq.f32.partialorder %v3574, 8.507059e+37
    %v3576 = vand.u32 %v3515, 2147483648
    %v3577 = vor.u32 1.1754944e-38, %v3576
    %v3578 = vsel %vm3575, %v3577, %v3573
    %v3579 = vmul.f32 1.0, %v3578
    %v3580 = vrcp.pop %v3516
    %v3581 = vmul.f32 %v3516, %v3580
    %v3582 = vsub.f32 1.0, %v3581
    %v3583 = vmul.f32 %v3580, %v3582
    %v3584 = vadd.f32 %v3580, %v3583
    %vm3585 = vweird.f32 %v3516
    %vm3586 = vweird.f32 %v3580
    %vm3587 = vmor %vm3585, %vm3586
    %v3588 = vsel %vm3587, %v3580, %v3584
    %v3589 = vand.u32 2147483647, %v3516
    %vm3590 = vcmp.eq.f32.partialorder %v3589, 8.507059e+37
    %v3591 = vand.u32 %v3516, 2147483648
    %v3592 = vor.u32 1.1754944e-38, %v3591
    %v3593 = vsel %vm3590, %v3592, %v3588
    %v3594 = vmul.f32 1.0, %v3593
    %v3595 = vrcp.pop %v3517
    %v3596 = vmul.f32 %v3517, %v3595
    %v3597 = vsub.f32 1.0, %v3596
    %v3598 = vmul.f32 %v3595, %v3597
    %v3599 = vadd.f32 %v3595, %v3598
    %vm3600 = vweird.f32 %v3517
    %vm3601 = vweird.f32 %v3595
    %vm3602 = vmor %vm3600, %vm3601
    %v3603 = vsel %vm3602, %v3595, %v3599
    %v3604 = vand.u32 2147483647, %v3517
    %vm3605 = vcmp.eq.f32.partialorder %v3604, 8.507059e+37
    %v3606 = vand.u32 %v3517, 2147483648
    %v3607 = vor.u32 1.1754944e-38, %v3606
    %v3608 = vsel %vm3605, %v3607, %v3603
    %v3609 = vmul.f32 1.0, %v3608
    %v3610 = vrcp.pop %v3518
    %v3611 = vmul.f32 %v3518, %v3610
    %v3612 = vsub.f32 1.0, %v3611
    %v3613 = vmul.f32 %v3610, %v3612
    %v3614 = vadd.f32 %v3610, %v3613
    %vm3615 = vweird.f32 %v3518
    %vm3616 = vweird.f32 %v3610
    %vm3617 = vmor %vm3615, %vm3616
    %v3618 = vsel %vm3617, %v3610, %v3614
    %v3619 = vand.u32 2147483647, %v3518
    %vm3620 = vcmp.eq.f32.partialorder %v3619, 8.507059e+37
    %v3621 = vand.u32 %v3518, 2147483648
    %v3622 = vor.u32 1.1754944e-38, %v3621
    %v3623 = vsel %vm3620, %v3622, %v3618
    %v3624 = vmul.f32 1.0, %v3623
    %v3625 = vrcp.pop %v3519
    %v3626 = vmul.f32 %v3519, %v3625
    %v3627 = vsub.f32 1.0, %v3626
    %v3628 = vmul.f32 %v3625, %v3627
    %v3629 = vadd.f32 %v3625, %v3628
    %vm3630 = vweird.f32 %v3519
    %vm3631 = vweird.f32 %v3625
    %vm3632 = vmor %vm3630, %vm3631
    %v3633 = vsel %vm3632, %v3625, %v3629
    %v3634 = vand.u32 2147483647, %v3519
    %vm3635 = vcmp.eq.f32.partialorder %v3634, 8.507059e+37
    %v3636 = vand.u32 %v3519, 2147483648
    %v3637 = vor.u32 1.1754944e-38, %v3636
    %v3638 = vsel %vm3635, %v3637, %v3633
    %v3639 = vmul.f32 1.0, %v3638
    %v3640 = vrot.slane %v3304, 2
    %v3641 = vrot.slane %v3305, 2
    %v3642 = vrot.slane %v3306, 2
    %v3643 = vrot.slane %v3307, 2
    %v3644 = vrot.slane %v3308, 2
    %v3645 = vrot.slane %v3309, 2
    %v3646 = vrot.slane %v3310, 2
    %v3647 = vrot.slane %v3311, 2
    %v3656 = vtanh.pop %v3640
    %v3657 = vtanh.pop %v3641
    %v3658 = vtanh.pop %v3642
    %v3659 = vtanh.pop %v3643
    %v3660 = vtanh.pop %v3644
    %v3661 = vtanh.pop %v3645
    %v3662 = vtanh.pop %v3646
    %v3663 = vtanh.pop %v3647
    %s3664 = sadd.f32 %s165, 4.0
    %s3665 = ssub.f32 %s3664, 0.001
    %v3666 = vstv %s3665
    %v3667 = vmul.f32 %v3358, %v3666
    %v3668 = vmul.f32 %v3373, %v3666
    %v3669 = vmul.f32 %v3388, %v3666
    %v3670 = vmul.f32 %v3403, %v3666
    %v3671 = vmul.f32 %v3418, %v3666
    %v3672 = vmul.f32 %v3433, %v3666
    %v3673 = vmul.f32 %v3448, %v3666
    %v3674 = vmul.f32 %v3463, %v3666
    %v3675 = vsub.f32 1.0, %v3358
    %v3676 = vsub.f32 1.0, %v3373
    %v3677 = vsub.f32 1.0, %v3388
    %v3678 = vsub.f32 1.0, %v3403
    %v3679 = vsub.f32 1.0, %v3418
    %v3680 = vsub.f32 1.0, %v3433
    %v3681 = vsub.f32 1.0, %v3448
    %v3682 = vsub.f32 1.0, %v3463
    %v3683 = vmul.f32 %v3675, %v2950
    %v3684 = vmul.f32 %v3676, %v2951
    %v3685 = vmul.f32 %v3677, %v2952
    %v3686 = vmul.f32 %v3678, %v2953
    %v3687 = vmul.f32 %v3679, %v2954
    %v3688 = vmul.f32 %v3680, %v2955
    %v3689 = vmul.f32 %v3681, %v2956
    %v3690 = vmul.f32 %v3682, %v2957
    %v3691 = vadd.f32 %v3667, %v3683
    %v3692 = vadd.f32 %v3668, %v3684
    %v3693 = vadd.f32 %v3669, %v3685
    %v3694 = vadd.f32 %v3670, %v3686
    %v3695 = vadd.f32 %v3671, %v3687
    %v3696 = vadd.f32 %v3672, %v3688
    %v3697 = vadd.f32 %v3673, %v3689
    %v3698 = vadd.f32 %v3674, %v3690
    %v3699 = vstv %s3664
    %v3700 = vsub.f32 %v3699, %v3691
    %v3701 = vsub.f32 %v3699, %v3692
    %v3702 = vsub.f32 %v3699, %v3693
    %v3703 = vsub.f32 %v3699, %v3694
    %v3704 = vsub.f32 %v3699, %v3695
    %v3705 = vsub.f32 %v3699, %v3696
    %v3706 = vsub.f32 %v3699, %v3697
    %v3707 = vsub.f32 %v3699, %v3698
    %v3708 = vadd.f32 %v3700, 0.001
    %v3709 = vadd.f32 %v3701, 0.001
    %v3710 = vadd.f32 %v3702, 0.001
    %v3711 = vadd.f32 %v3703, 0.001
    %v3712 = vadd.f32 %v3704, 0.001
    %v3713 = vadd.f32 %v3705, 0.001
    %v3714 = vadd.f32 %v3706, 0.001
    %v3715 = vadd.f32 %v3707, 0.001
    %v3716 = vadd.f32 %v3700, 1.0
    %v3717 = vadd.f32 %v3701, 1.0
    %v3718 = vadd.f32 %v3702, 1.0
    %v3719 = vadd.f32 %v3703, 1.0
    %v3720 = vadd.f32 %v3704, 1.0
    %v3721 = vadd.f32 %v3705, 1.0
    %v3722 = vadd.f32 %v3706, 1.0
    %v3723 = vadd.f32 %v3707, 1.0
    %v3724 = vrcp.pop %v3716
    %v3725 = vmul.f32 %v3716, %v3724
    %v3726 = vsub.f32 1.0, %v3725
    %v3727 = vmul.f32 %v3724, %v3726
    %v3728 = vadd.f32 %v3724, %v3727
    %vm3729 = vweird.f32 %v3716
    %vm3730 = vweird.f32 %v3724
    %vm3731 = vmor %vm3729, %vm3730
    %v3732 = vsel %vm3731, %v3724, %v3728
    %v3733 = vand.u32 2147483647, %v3716
    %vm3734 = vcmp.eq.f32.partialorder %v3733, 8.507059e+37
    %v3735 = vand.u32 %v3716, 2147483648
    %v3736 = vor.u32 1.1754944e-38, %v3735
    %v3737 = vsel %vm3734, %v3736, %v3732
    %v3738 = vmul.f32 %v3708, %v3737
    %v3739 = vrcp.pop %v3717
    %v3740 = vmul.f32 %v3717, %v3739
    %v3741 = vsub.f32 1.0, %v3740
    %v3742 = vmul.f32 %v3739, %v3741
    %v3743 = vadd.f32 %v3739, %v3742
    %vm3744 = vweird.f32 %v3717
    %vm3745 = vweird.f32 %v3739
    %vm3746 = vmor %vm3744, %vm3745
    %v3747 = vsel %vm3746, %v3739, %v3743
    %v3748 = vand.u32 2147483647, %v3717
    %vm3749 = vcmp.eq.f32.partialorder %v3748, 8.507059e+37
    %v3750 = vand.u32 %v3717, 2147483648
    %v3751 = vor.u32 1.1754944e-38, %v3750
    %v3752 = vsel %vm3749, %v3751, %v3747
    %v3753 = vmul.f32 %v3709, %v3752
    %v3754 = vrcp.pop %v3718
    %v3755 = vmul.f32 %v3718, %v3754
    %v3756 = vsub.f32 1.0, %v3755
    %v3757 = vmul.f32 %v3754, %v3756
    %v3758 = vadd.f32 %v3754, %v3757
    %vm3759 = vweird.f32 %v3718
    %vm3760 = vweird.f32 %v3754
    %vm3761 = vmor %vm3759, %vm3760
    %v3762 = vsel %vm3761, %v3754, %v3758
    %v3763 = vand.u32 2147483647, %v3718
    %vm3764 = vcmp.eq.f32.partialorder %v3763, 8.507059e+37
    %v3765 = vand.u32 %v3718, 2147483648
    %v3766 = vor.u32 1.1754944e-38, %v3765
    %v3767 = vsel %vm3764, %v3766, %v3762
    %v3768 = vmul.f32 %v3710, %v3767
    %v3769 = vrcp.pop %v3719
    %v3770 = vmul.f32 %v3719, %v3769
    %v3771 = vsub.f32 1.0, %v3770
    %v3772 = vmul.f32 %v3769, %v3771
    %v3773 = vadd.f32 %v3769, %v3772
    %vm3774 = vweird.f32 %v3719
    %vm3775 = vweird.f32 %v3769
    %vm3776 = vmor %vm3774, %vm3775
    %v3777 = vsel %vm3776, %v3769, %v3773
    %v3778 = vand.u32 2147483647, %v3719
    %vm3779 = vcmp.eq.f32.partialorder %v3778, 8.507059e+37
    %v3780 = vand.u32 %v3719, 2147483648
    %v3781 = vor.u32 1.1754944e-38, %v3780
    %v3782 = vsel %vm3779, %v3781, %v3777
    %v3783 = vmul.f32 %v3711, %v3782
    %v3784 = vrcp.pop %v3720
    %v3785 = vmul.f32 %v3720, %v3784
    %v3786 = vsub.f32 1.0, %v3785
    %v3787 = vmul.f32 %v3784, %v3786
    %v3788 = vadd.f32 %v3784, %v3787
    %vm3789 = vweird.f32 %v3720
    %vm3790 = vweird.f32 %v3784
    %vm3791 = vmor %vm3789, %vm3790
    %v3792 = vsel %vm3791, %v3784, %v3788
    %v3793 = vand.u32 2147483647, %v3720
    %vm3794 = vcmp.eq.f32.partialorder %v3793, 8.507059e+37
    %v3795 = vand.u32 %v3720, 2147483648
    %v3796 = vor.u32 1.1754944e-38, %v3795
    %v3797 = vsel %vm3794, %v3796, %v3792
    %v3798 = vmul.f32 %v3712, %v3797
    %v3799 = vrcp.pop %v3721
    %v3800 = vmul.f32 %v3721, %v3799
    %v3801 = vsub.f32 1.0, %v3800
    %v3802 = vmul.f32 %v3799, %v3801
    %v3803 = vadd.f32 %v3799, %v3802
    %vm3804 = vweird.f32 %v3721
    %vm3805 = vweird.f32 %v3799
    %vm3806 = vmor %vm3804, %vm3805
    %v3807 = vsel %vm3806, %v3799, %v3803
    %v3808 = vand.u32 2147483647, %v3721
    %vm3809 = vcmp.eq.f32.partialorder %v3808, 8.507059e+37
    %v3810 = vand.u32 %v3721, 2147483648
    %v3811 = vor.u32 1.1754944e-38, %v3810
    %v3812 = vsel %vm3809, %v3811, %v3807
    %v3813 = vmul.f32 %v3713, %v3812
    %v3814 = vrcp.pop %v3722
    %v3815 = vmul.f32 %v3722, %v3814
    %v3816 = vsub.f32 1.0, %v3815
    %v3817 = vmul.f32 %v3814, %v3816
    %v3818 = vadd.f32 %v3814, %v3817
    %vm3819 = vweird.f32 %v3722
    %vm3820 = vweird.f32 %v3814
    %vm3821 = vmor %vm3819, %vm3820
    %v3822 = vsel %vm3821, %v3814, %v3818
    %v3823 = vand.u32 2147483647, %v3722
    %vm3824 = vcmp.eq.f32.partialorder %v3823, 8.507059e+37
    %v3825 = vand.u32 %v3722, 2147483648
    %v3826 = vor.u32 1.1754944e-38, %v3825
    %v3827 = vsel %vm3824, %v3826, %v3822
    %v3828 = vmul.f32 %v3714, %v3827
    %v3829 = vrcp.pop %v3723
    %v3830 = vmul.f32 %v3723, %v3829
    %v3831 = vsub.f32 1.0, %v3830
    %v3832 = vmul.f32 %v3829, %v3831
    %v3833 = vadd.f32 %v3829, %v3832
    %vm3834 = vweird.f32 %v3723
    %vm3835 = vweird.f32 %v3829
    %vm3836 = vmor %vm3834, %vm3835
    %v3837 = vsel %vm3836, %v3829, %v3833
    %v3838 = vand.u32 2147483647, %v3723
    %vm3839 = vcmp.eq.f32.partialorder %v3838, 8.507059e+37
    %v3840 = vand.u32 %v3723, 2147483648
    %v3841 = vor.u32 1.1754944e-38, %v3840
    %v3842 = vsel %vm3839, %v3841, %v3837
    %v3843 = vmul.f32 %v3715, %v3842
    %v3844 = vpow.f32 %v3738, %v162
    %v3845 = vpow.f32 %v3753, %v851
    %v3846 = vpow.f32 %v3768, %v852
    %v3847 = vpow.f32 %v3783, %v853
    %v3848 = vpow.f32 %v3798, %v854
    %v3849 = vpow.f32 %v3813, %v855
    %v3850 = vpow.f32 %v3828, %v856
    %v3851 = vpow.f32 %v3843, %v857
    %v3852 = vmul.f32 %v3844, %v3135
    %v3853 = vmul.f32 %v3845, %v3136
    %v3854 = vmul.f32 %v3846, %v3137
    %v3855 = vmul.f32 %v3847, %v3138
    %v3856 = vmul.f32 %v3848, %v3139
    %v3857 = vmul.f32 %v3849, %v3140
    %v3858 = vmul.f32 %v3850, %v3141
    %v3859 = vmul.f32 %v3851, %v3142
    %v3860 = vsub.f32 1.0, %v3844
    %v3861 = vsub.f32 1.0, %v3845
    %v3862 = vsub.f32 1.0, %v3846
    %v3863 = vsub.f32 1.0, %v3847
    %v3864 = vsub.f32 1.0, %v3848
    %v3865 = vsub.f32 1.0, %v3849
    %v3866 = vsub.f32 1.0, %v3850
    %v3867 = vsub.f32 1.0, %v3851
    %v3868 = vmul.f32 %v3860, %v3656
    %v3869 = vmul.f32 %v3861, %v3657
    %v3870 = vmul.f32 %v3862, %v3658
    %v3871 = vmul.f32 %v3863, %v3659
    %v3872 = vmul.f32 %v3864, %v3660
    %v3873 = vmul.f32 %v3865, %v3661
    %v3874 = vmul.f32 %v3866, %v3662
    %v3875 = vmul.f32 %v3867, %v3663
    %v3876 = vadd.f32 %v3852, %v3868
    %v3877 = vadd.f32 %v3853, %v3869
    %v3878 = vadd.f32 %v3854, %v3870
    %v3879 = vadd.f32 %v3855, %v3871
    %v3880 = vadd.f32 %v3856, %v3872
    %v3881 = vadd.f32 %v3857, %v3873
    %v3882 = vadd.f32 %v3858, %v3874
    %v3883 = vadd.f32 %v3859, %v3875
    %v3884 = vtanh.pop %v3876
    %v3885 = vtanh.pop %v3877
    %v3886 = vtanh.pop %v3878
    %v3887 = vtanh.pop %v3879
    %v3888 = vtanh.pop %v3880
    %v3889 = vtanh.pop %v3881
    %v3890 = vtanh.pop %v3882
    %v3891 = vtanh.pop %v3883
    %v3892 = vmul.f32 %v3534, %v3884
    %v3893 = vmul.f32 %v3549, %v3885
    %v3894 = vmul.f32 %v3564, %v3886
    %v3895 = vmul.f32 %v3579, %v3887
    %v3896 = vmul.f32 %v3594, %v3888
    %v3897 = vmul.f32 %v3609, %v3889
    %v3898 = vmul.f32 %v3624, %v3890
    %v3899 = vmul.f32 %v3639, %v3891
    %3900 = vst [vmem:[#allocation14 + $0x4] sm:$0x1] %v3892
    %3901 = vst [vmem:[#allocation14 + $0xc] sm:$0x1] %v3893
    %3902 = vst [vmem:[#allocation14 + $0x14] sm:$0x1] %v3894
    %3903 = vst [vmem:[#allocation14 + $0x1c] sm:$0x1] %v3895
    %3904 = vst [vmem:[#allocation14 + $0x24] sm:$0x1] %v3896
    %3905 = vst [vmem:[#allocation14 + $0x2c] sm:$0x1] %v3897
    %3906 = vst [vmem:[#allocation14 + $0x34] sm:$0x1] %v3898
    %3907 = vst [vmem:[#allocation14 + $0x3c] sm:$0x1] %v3899
    %s3908 = scalar_lea.vmem [#allocation5], 5
    %v3909 = vld [vmem:[%s3908] ss:$8 sm:$0x7]
    %s3910 = scalar_lea.vmem [#allocation5], 29
    %v3911 = vld [vmem:[%s3910] ss:$8 sm:$0x7]
    %s3912 = scalar_lea.vmem [#allocation5], 53
    %v3913 = vld [vmem:[%s3912] ss:$8 sm:$0x7]
    %s3914 = scalar_lea.vmem [#allocation5], 77
    %v3915 = vld [vmem:[%s3914] ss:$8 sm:$0x7]
    %s3916 = scalar_lea.vmem [#allocation5], 101
    %v3917 = vld [vmem:[%s3916] ss:$8 sm:$0x7]
    %s3918 = scalar_lea.vmem [#allocation5], 125
    %v3919 = vld [vmem:[%s3918] ss:$8 sm:$0x7]
    %s3920 = scalar_lea.vmem [#allocation5], 149
    %v3921 = vld [vmem:[%s3920] ss:$8 sm:$0x7]
    %s3922 = scalar_lea.vmem [#allocation5], 173
    %v3923 = vld [vmem:[%s3922] ss:$8 sm:$0x7]
    %3932 = vst [vmem:[#allocation1] ss:$9 sm:$0xff] %v3892
    %s3933 = scalar_lea.vmem [#allocation1], 1
    %3934 = vst [vmem:[%s3933] ss:$9 sm:$0xff] %v3893
    %s3935 = scalar_lea.vmem [#allocation1], 2
    %3936 = vst [vmem:[%s3935] ss:$9 sm:$0xff] %v3894
    %s3937 = scalar_lea.vmem [#allocation1], 3
    %3938 = vst [vmem:[%s3937] ss:$9 sm:$0xff] %v3895
    %s3939 = scalar_lea.vmem [#allocation1], 4
    %3940 = vst [vmem:[%s3939] ss:$9 sm:$0xff] %v3896
    %s3941 = scalar_lea.vmem [#allocation1], 5
    %3942 = vst [vmem:[%s3941] ss:$9 sm:$0xff] %v3897
    %s3943 = scalar_lea.vmem [#allocation1], 6
    %3944 = vst [vmem:[%s3943] ss:$9 sm:$0xff] %v3898
    %s3945 = scalar_lea.vmem [#allocation1], 7
    %3946 = vst [vmem:[%s3945] ss:$9 sm:$0xff] %v3899
    %v3947 = vld [vmem:[#allocation1] sm:$0xff]
    %3949 = vmatpush.msra.mxu0 %v157
    %3950 = vmatpush.msra.mxu0 %v154
    %3951 = vmatpush.msra.mxu0 %v151
    %3952 = vmatpush.msra.mxu0 %v148
    %3953 = vmatpush.msra.mxu0 %v145
    %3954 = vmatpush.msra.mxu0 %v142
    %3955 = vmatpush.msra.mxu0 %v139
    %3956 = vmatpush.msra.mxu0 %v136
    %3957 = vmatpush.msra.mxu0 %v133
    %3958 = vmatpush.msra.mxu0 %v130
    %3959 = vmatpush.msra.mxu0 %v127
    %3960 = vmatpush.msra.mxu0 %v124
    %3961 = vmatpush.msra.mxu0 %v121
    %3962 = vmatpush.msra.mxu0 %v118
    %3963 = vmatpush.msra.mxu0 %v115
    %3964 = vmatpush.msra.mxu0 %v112
    %3965 = vmatmul.f32.gmra.mxu0 %v3947
    %v3966 = vpop.f32.mrf.mxu0
    %v3967 = vadd.f32 0.0, %v3966
    %3968 = vdwg.mxu0
    %3969 = vmatpush.msra.mxu0 %v158
    %3970 = vmatpush.msra.mxu0 %v155
    %3971 = vmatpush.msra.mxu0 %v152
    %3972 = vmatpush.msra.mxu0 %v149
    %3973 = vmatpush.msra.mxu0 %v146
    %3974 = vmatpush.msra.mxu0 %v143
    %3975 = vmatpush.msra.mxu0 %v140
    %3976 = vmatpush.msra.mxu0 %v137
    %3977 = vmatpush.msra.mxu0 %v134
    %3978 = vmatpush.msra.mxu0 %v131
    %3979 = vmatpush.msra.mxu0 %v128
    %3980 = vmatpush.msra.mxu0 %v125
    %3981 = vmatpush.msra.mxu0 %v122
    %3982 = vmatpush.msra.mxu0 %v119
    %3983 = vmatpush.msra.mxu0 %v116
    %3984 = vmatpush.msra.mxu0 %v113
    %3985 = vmatmul.f32.gmra.mxu0 %v3947
    %v3986 = vpop.f32.mrf.mxu0
    %v3987 = vadd.f32 0.0, %v3986
    %3988 = vdwg.mxu0
    %3989 = vmatpush.msra.mxu0 %v159
    %3990 = vmatpush.msra.mxu0 %v156
    %3991 = vmatpush.msra.mxu0 %v153
    %3992 = vmatpush.msra.mxu0 %v150
    %3993 = vmatpush.msra.mxu0 %v147
    %3994 = vmatpush.msra.mxu0 %v144
    %3995 = vmatpush.msra.mxu0 %v141
    %3996 = vmatpush.msra.mxu0 %v138
    %3997 = vmatpush.msra.mxu0 %v135
    %3998 = vmatpush.msra.mxu0 %v132
    %3999 = vmatpush.msra.mxu0 %v129
    %4000 = vmatpush.msra.mxu0 %v126
    %4001 = vmatpush.msra.mxu0 %v123
    %4002 = vmatpush.msra.mxu0 %v120
    %4003 = vmatpush.msra.mxu0 %v117
    %4004 = vmatpush.msra.mxu0 %v114
    %4005 = vmatmul.f32.gmra.mxu0 %v3947
    %v4006 = vpop.f32.mrf.mxu0
    %v4007 = vadd.f32 0.0, %v4006
    %4008 = vdwg.mxu0
    %v4012 = vrot.slane %v3987, 7
    %v4013 = vrot.slane %v4007, 6
    %v4014 = vsel %vm249, %v3967, %v4012
    %v4015 = vsel %vm251, %v4014, %v4013
    %v4016 = vsel %vm253, %v3967, %v4012
    %v4017 = vsel %vm255, %v4016, %v4013
    %v4018 = vrot.slane %v4017, 1
    %v4019 = vsel %vm258, %v3967, %v4012
    %v4020 = vsel %vm260, %v4019, %v4013
    %v4021 = vrot.slane %v4020, 2
    %v4022 = vsel %vm263, %v3967, %v4012
    %v4023 = vsel %vm265, %v4022, %v4013
    %v4024 = vrot.slane %v4023, 3
    %v4025 = vsel %vm268, %v3967, %v4012
    %v4026 = vsel %vm270, %v4025, %v4013
    %v4027 = vrot.slane %v4026, 4
    %v4028 = vsel %vm273, %v3967, %v4012
    %v4029 = vsel %vm275, %v4028, %v4013
    %v4030 = vrot.slane %v4029, 5
    %v4031 = vsel %vm278, %v3967, %v4012
    %v4032 = vsel %vm280, %v4013, %v4031
    %v4033 = vrot.slane %v4032, 6
    %v4034 = vsel %vm283, %v4012, %v3967
    %v4035 = vsel %vm285, %v4013, %v4034
    %v4036 = vrot.slane %v4035, 7
    %v4045 = vadd.f32 %v3909, %v4015
    %v4046 = vadd.f32 %v3911, %v4018
    %v4047 = vadd.f32 %v3913, %v4021
    %v4048 = vadd.f32 %v3915, %v4024
    %v4049 = vadd.f32 %v3917, %v4027
    %v4050 = vadd.f32 %v3919, %v4030
    %v4051 = vadd.f32 %v3921, %v4033
    %v4052 = vadd.f32 %v3923, %v4036
    %v4053 = vxor.u32 %v4045, 2147483648
    %v4054 = vxor.u32 %v4046, 2147483648
    %v4055 = vxor.u32 %v4047, 2147483648
    %v4056 = vxor.u32 %v4048, 2147483648
    %v4057 = vxor.u32 %v4049, 2147483648
    %v4058 = vxor.u32 %v4050, 2147483648
    %v4059 = vxor.u32 %v4051, 2147483648
    %v4060 = vxor.u32 %v4052, 2147483648
    %v4061 = vmul.f32 %v4053, 1.442695
    %v4062 = vpow.pop %v4061
    %v4063 = vmul.f32 %v4054, 1.442695
    %v4064 = vpow.pop %v4063
    %v4065 = vmul.f32 %v4055, 1.442695
    %v4066 = vpow.pop %v4065
    %v4067 = vmul.f32 %v4056, 1.442695
    %v4068 = vpow.pop %v4067
    %v4069 = vmul.f32 %v4057, 1.442695
    %v4070 = vpow.pop %v4069
    %v4071 = vmul.f32 %v4058, 1.442695
    %v4072 = vpow.pop %v4071
    %v4073 = vmul.f32 %v4059, 1.442695
    %v4074 = vpow.pop %v4073
    %v4075 = vmul.f32 %v4060, 1.442695
    %v4076 = vpow.pop %v4075
    %v4077 = vadd.f32 %v4062, 1.0
    %v4078 = vadd.f32 %v4064, 1.0
    %v4079 = vadd.f32 %v4066, 1.0
    %v4080 = vadd.f32 %v4068, 1.0
    %v4081 = vadd.f32 %v4070, 1.0
    %v4082 = vadd.f32 %v4072, 1.0
    %v4083 = vadd.f32 %v4074, 1.0
    %v4084 = vadd.f32 %v4076, 1.0
    %v4085 = vrcp.pop %v4077
    %v4086 = vmul.f32 %v4077, %v4085
    %v4087 = vsub.f32 1.0, %v4086
    %v4088 = vmul.f32 %v4085, %v4087
    %v4089 = vadd.f32 %v4085, %v4088
    %vm4090 = vweird.f32 %v4077
    %vm4091 = vweird.f32 %v4085
    %vm4092 = vmor %vm4090, %vm4091
    %v4093 = vsel %vm4092, %v4085, %v4089
    %v4094 = vand.u32 2147483647, %v4077
    %vm4095 = vcmp.eq.f32.partialorder %v4094, 8.507059e+37
    %v4096 = vand.u32 %v4077, 2147483648
    %v4097 = vor.u32 1.1754944e-38, %v4096
    %v4098 = vsel %vm4095, %v4097, %v4093
    %v4099 = vmul.f32 1.0, %v4098
    %v4100 = vrcp.pop %v4078
    %v4101 = vmul.f32 %v4078, %v4100
    %v4102 = vsub.f32 1.0, %v4101
    %v4103 = vmul.f32 %v4100, %v4102
    %v4104 = vadd.f32 %v4100, %v4103
    %vm4105 = vweird.f32 %v4078
    %vm4106 = vweird.f32 %v4100
    %vm4107 = vmor %vm4105, %vm4106
    %v4108 = vsel %vm4107, %v4100, %v4104
    %v4109 = vand.u32 2147483647, %v4078
    %vm4110 = vcmp.eq.f32.partialorder %v4109, 8.507059e+37
    %v4111 = vand.u32 %v4078, 2147483648
    %v4112 = vor.u32 1.1754944e-38, %v4111
    %v4113 = vsel %vm4110, %v4112, %v4108
    %v4114 = vmul.f32 1.0, %v4113
    %v4115 = vrcp.pop %v4079
    %v4116 = vmul.f32 %v4079, %v4115
    %v4117 = vsub.f32 1.0, %v4116
    %v4118 = vmul.f32 %v4115, %v4117
    %v4119 = vadd.f32 %v4115, %v4118
    %vm4120 = vweird.f32 %v4079
    %vm4121 = vweird.f32 %v4115
    %vm4122 = vmor %vm4120, %vm4121
    %v4123 = vsel %vm4122, %v4115, %v4119
    %v4124 = vand.u32 2147483647, %v4079
    %vm4125 = vcmp.eq.f32.partialorder %v4124, 8.507059e+37
    %v4126 = vand.u32 %v4079, 2147483648
    %v4127 = vor.u32 1.1754944e-38, %v4126
    %v4128 = vsel %vm4125, %v4127, %v4123
    %v4129 = vmul.f32 1.0, %v4128
    %v4130 = vrcp.pop %v4080
    %v4131 = vmul.f32 %v4080, %v4130
    %v4132 = vsub.f32 1.0, %v4131
    %v4133 = vmul.f32 %v4130, %v4132
    %v4134 = vadd.f32 %v4130, %v4133
    %vm4135 = vweird.f32 %v4080
    %vm4136 = vweird.f32 %v4130
    %vm4137 = vmor %vm4135, %vm4136
    %v4138 = vsel %vm4137, %v4130, %v4134
    %v4139 = vand.u32 2147483647, %v4080
    %vm4140 = vcmp.eq.f32.partialorder %v4139, 8.507059e+37
    %v4141 = vand.u32 %v4080, 2147483648
    %v4142 = vor.u32 1.1754944e-38, %v4141
    %v4143 = vsel %vm4140, %v4142, %v4138
    %v4144 = vmul.f32 1.0, %v4143
    %v4145 = vrcp.pop %v4081
    %v4146 = vmul.f32 %v4081, %v4145
    %v4147 = vsub.f32 1.0, %v4146
    %v4148 = vmul.f32 %v4145, %v4147
    %v4149 = vadd.f32 %v4145, %v4148
    %vm4150 = vweird.f32 %v4081
    %vm4151 = vweird.f32 %v4145
    %vm4152 = vmor %vm4150, %vm4151
    %v4153 = vsel %vm4152, %v4145, %v4149
    %v4154 = vand.u32 2147483647, %v4081
    %vm4155 = vcmp.eq.f32.partialorder %v4154, 8.507059e+37
    %v4156 = vand.u32 %v4081, 2147483648
    %v4157 = vor.u32 1.1754944e-38, %v4156
    %v4158 = vsel %vm4155, %v4157, %v4153
    %v4159 = vmul.f32 1.0, %v4158
    %v4160 = vrcp.pop %v4082
    %v4161 = vmul.f32 %v4082, %v4160
    %v4162 = vsub.f32 1.0, %v4161
    %v4163 = vmul.f32 %v4160, %v4162
    %v4164 = vadd.f32 %v4160, %v4163
    %vm4165 = vweird.f32 %v4082
    %vm4166 = vweird.f32 %v4160
    %vm4167 = vmor %vm4165, %vm4166
    %v4168 = vsel %vm4167, %v4160, %v4164
    %v4169 = vand.u32 2147483647, %v4082
    %vm4170 = vcmp.eq.f32.partialorder %v4169, 8.507059e+37
    %v4171 = vand.u32 %v4082, 2147483648
    %v4172 = vor.u32 1.1754944e-38, %v4171
    %v4173 = vsel %vm4170, %v4172, %v4168
    %v4174 = vmul.f32 1.0, %v4173
    %v4175 = vrcp.pop %v4083
    %v4176 = vmul.f32 %v4083, %v4175
    %v4177 = vsub.f32 1.0, %v4176
    %v4178 = vmul.f32 %v4175, %v4177
    %v4179 = vadd.f32 %v4175, %v4178
    %vm4180 = vweird.f32 %v4083
    %vm4181 = vweird.f32 %v4175
    %vm4182 = vmor %vm4180, %vm4181
    %v4183 = vsel %vm4182, %v4175, %v4179
    %v4184 = vand.u32 2147483647, %v4083
    %vm4185 = vcmp.eq.f32.partialorder %v4184, 8.507059e+37
    %v4186 = vand.u32 %v4083, 2147483648
    %v4187 = vor.u32 1.1754944e-38, %v4186
    %v4188 = vsel %vm4185, %v4187, %v4183
    %v4189 = vmul.f32 1.0, %v4188
    %v4190 = vrcp.pop %v4084
    %v4191 = vmul.f32 %v4084, %v4190
    %v4192 = vsub.f32 1.0, %v4191
    %v4193 = vmul.f32 %v4190, %v4192
    %v4194 = vadd.f32 %v4190, %v4193
    %vm4195 = vweird.f32 %v4084
    %vm4196 = vweird.f32 %v4190
    %vm4197 = vmor %vm4195, %vm4196
    %v4198 = vsel %vm4197, %v4190, %v4194
    %v4199 = vand.u32 2147483647, %v4084
    %vm4200 = vcmp.eq.f32.partialorder %v4199, 8.507059e+37
    %v4201 = vand.u32 %v4084, 2147483648
    %v4202 = vor.u32 1.1754944e-38, %v4201
    %v4203 = vsel %vm4200, %v4202, %v4198
    %v4204 = vmul.f32 1.0, %v4203
    %v4213 = vrot.slane %v4045, 1
    %v4214 = vrot.slane %v4046, 1
    %v4215 = vrot.slane %v4047, 1
    %v4216 = vrot.slane %v4048, 1
    %v4217 = vrot.slane %v4049, 1
    %v4218 = vrot.slane %v4050, 1
    %v4219 = vrot.slane %v4051, 1
    %v4220 = vrot.slane %v4052, 1
    %v4229 = vxor.u32 %v4213, 2147483648
    %v4230 = vxor.u32 %v4214, 2147483648
    %v4231 = vxor.u32 %v4215, 2147483648
    %v4232 = vxor.u32 %v4216, 2147483648
    %v4233 = vxor.u32 %v4217, 2147483648
    %v4234 = vxor.u32 %v4218, 2147483648
    %v4235 = vxor.u32 %v4219, 2147483648
    %v4236 = vxor.u32 %v4220, 2147483648
    %v4237 = vmul.f32 %v4229, 1.442695
    %v4238 = vpow.pop %v4237
    %v4239 = vmul.f32 %v4230, 1.442695
    %v4240 = vpow.pop %v4239
    %v4241 = vmul.f32 %v4231, 1.442695
    %v4242 = vpow.pop %v4241
    %v4243 = vmul.f32 %v4232, 1.442695
    %v4244 = vpow.pop %v4243
    %v4245 = vmul.f32 %v4233, 1.442695
    %v4246 = vpow.pop %v4245
    %v4247 = vmul.f32 %v4234, 1.442695
    %v4248 = vpow.pop %v4247
    %v4249 = vmul.f32 %v4235, 1.442695
    %v4250 = vpow.pop %v4249
    %v4251 = vmul.f32 %v4236, 1.442695
    %v4252 = vpow.pop %v4251
    %v4253 = vadd.f32 %v4238, 1.0
    %v4254 = vadd.f32 %v4240, 1.0
    %v4255 = vadd.f32 %v4242, 1.0
    %v4256 = vadd.f32 %v4244, 1.0
    %v4257 = vadd.f32 %v4246, 1.0
    %v4258 = vadd.f32 %v4248, 1.0
    %v4259 = vadd.f32 %v4250, 1.0
    %v4260 = vadd.f32 %v4252, 1.0
    %v4261 = vrcp.pop %v4253
    %v4262 = vmul.f32 %v4253, %v4261
    %v4263 = vsub.f32 1.0, %v4262
    %v4264 = vmul.f32 %v4261, %v4263
    %v4265 = vadd.f32 %v4261, %v4264
    %vm4266 = vweird.f32 %v4253
    %vm4267 = vweird.f32 %v4261
    %vm4268 = vmor %vm4266, %vm4267
    %v4269 = vsel %vm4268, %v4261, %v4265
    %v4270 = vand.u32 2147483647, %v4253
    %vm4271 = vcmp.eq.f32.partialorder %v4270, 8.507059e+37
    %v4272 = vand.u32 %v4253, 2147483648
    %v4273 = vor.u32 1.1754944e-38, %v4272
    %v4274 = vsel %vm4271, %v4273, %v4269
    %v4275 = vmul.f32 1.0, %v4274
    %v4276 = vrcp.pop %v4254
    %v4277 = vmul.f32 %v4254, %v4276
    %v4278 = vsub.f32 1.0, %v4277
    %v4279 = vmul.f32 %v4276, %v4278
    %v4280 = vadd.f32 %v4276, %v4279
    %vm4281 = vweird.f32 %v4254
    %vm4282 = vweird.f32 %v4276
    %vm4283 = vmor %vm4281, %vm4282
    %v4284 = vsel %vm4283, %v4276, %v4280
    %v4285 = vand.u32 2147483647, %v4254
    %vm4286 = vcmp.eq.f32.partialorder %v4285, 8.507059e+37
    %v4287 = vand.u32 %v4254, 2147483648
    %v4288 = vor.u32 1.1754944e-38, %v4287
    %v4289 = vsel %vm4286, %v4288, %v4284
    %v4290 = vmul.f32 1.0, %v4289
    %v4291 = vrcp.pop %v4255
    %v4292 = vmul.f32 %v4255, %v4291
    %v4293 = vsub.f32 1.0, %v4292
    %v4294 = vmul.f32 %v4291, %v4293
    %v4295 = vadd.f32 %v4291, %v4294
    %vm4296 = vweird.f32 %v4255
    %vm4297 = vweird.f32 %v4291
    %vm4298 = vmor %vm4296, %vm4297
    %v4299 = vsel %vm4298, %v4291, %v4295
    %v4300 = vand.u32 2147483647, %v4255
    %vm4301 = vcmp.eq.f32.partialorder %v4300, 8.507059e+37
    %v4302 = vand.u32 %v4255, 2147483648
    %v4303 = vor.u32 1.1754944e-38, %v4302
    %v4304 = vsel %vm4301, %v4303, %v4299
    %v4305 = vmul.f32 1.0, %v4304
    %v4306 = vrcp.pop %v4256
    %v4307 = vmul.f32 %v4256, %v4306
    %v4308 = vsub.f32 1.0, %v4307
    %v4309 = vmul.f32 %v4306, %v4308
    %v4310 = vadd.f32 %v4306, %v4309
    %vm4311 = vweird.f32 %v4256
    %vm4312 = vweird.f32 %v4306
    %vm4313 = vmor %vm4311, %vm4312
    %v4314 = vsel %vm4313, %v4306, %v4310
    %v4315 = vand.u32 2147483647, %v4256
    %vm4316 = vcmp.eq.f32.partialorder %v4315, 8.507059e+37
    %v4317 = vand.u32 %v4256, 2147483648
    %v4318 = vor.u32 1.1754944e-38, %v4317
    %v4319 = vsel %vm4316, %v4318, %v4314
    %v4320 = vmul.f32 1.0, %v4319
    %v4321 = vrcp.pop %v4257
    %v4322 = vmul.f32 %v4257, %v4321
    %v4323 = vsub.f32 1.0, %v4322
    %v4324 = vmul.f32 %v4321, %v4323
    %v4325 = vadd.f32 %v4321, %v4324
    %vm4326 = vweird.f32 %v4257
    %vm4327 = vweird.f32 %v4321
    %vm4328 = vmor %vm4326, %vm4327
    %v4329 = vsel %vm4328, %v4321, %v4325
    %v4330 = vand.u32 2147483647, %v4257
    %vm4331 = vcmp.eq.f32.partialorder %v4330, 8.507059e+37
    %v4332 = vand.u32 %v4257, 2147483648
    %v4333 = vor.u32 1.1754944e-38, %v4332
    %v4334 = vsel %vm4331, %v4333, %v4329
    %v4335 = vmul.f32 1.0, %v4334
    %v4336 = vrcp.pop %v4258
    %v4337 = vmul.f32 %v4258, %v4336
    %v4338 = vsub.f32 1.0, %v4337
    %v4339 = vmul.f32 %v4336, %v4338
    %v4340 = vadd.f32 %v4336, %v4339
    %vm4341 = vweird.f32 %v4258
    %vm4342 = vweird.f32 %v4336
    %vm4343 = vmor %vm4341, %vm4342
    %v4344 = vsel %vm4343, %v4336, %v4340
    %v4345 = vand.u32 2147483647, %v4258
    %vm4346 = vcmp.eq.f32.partialorder %v4345, 8.507059e+37
    %v4347 = vand.u32 %v4258, 2147483648
    %v4348 = vor.u32 1.1754944e-38, %v4347
    %v4349 = vsel %vm4346, %v4348, %v4344
    %v4350 = vmul.f32 1.0, %v4349
    %v4351 = vrcp.pop %v4259
    %v4352 = vmul.f32 %v4259, %v4351
    %v4353 = vsub.f32 1.0, %v4352
    %v4354 = vmul.f32 %v4351, %v4353
    %v4355 = vadd.f32 %v4351, %v4354
    %vm4356 = vweird.f32 %v4259
    %vm4357 = vweird.f32 %v4351
    %vm4358 = vmor %vm4356, %vm4357
    %v4359 = vsel %vm4358, %v4351, %v4355
    %v4360 = vand.u32 2147483647, %v4259
    %vm4361 = vcmp.eq.f32.partialorder %v4360, 8.507059e+37
    %v4362 = vand.u32 %v4259, 2147483648
    %v4363 = vor.u32 1.1754944e-38, %v4362
    %v4364 = vsel %vm4361, %v4363, %v4359
    %v4365 = vmul.f32 1.0, %v4364
    %v4366 = vrcp.pop %v4260
    %v4367 = vmul.f32 %v4260, %v4366
    %v4368 = vsub.f32 1.0, %v4367
    %v4369 = vmul.f32 %v4366, %v4368
    %v4370 = vadd.f32 %v4366, %v4369
    %vm4371 = vweird.f32 %v4260
    %vm4372 = vweird.f32 %v4366
    %vm4373 = vmor %vm4371, %vm4372
    %v4374 = vsel %vm4373, %v4366, %v4370
    %v4375 = vand.u32 2147483647, %v4260
    %vm4376 = vcmp.eq.f32.partialorder %v4375, 8.507059e+37
    %v4377 = vand.u32 %v4260, 2147483648
    %v4378 = vor.u32 1.1754944e-38, %v4377
    %v4379 = vsel %vm4376, %v4378, %v4374
    %v4380 = vmul.f32 1.0, %v4379
    %v4381 = vrot.slane %v4045, 2
    %v4382 = vrot.slane %v4046, 2
    %v4383 = vrot.slane %v4047, 2
    %v4384 = vrot.slane %v4048, 2
    %v4385 = vrot.slane %v4049, 2
    %v4386 = vrot.slane %v4050, 2
    %v4387 = vrot.slane %v4051, 2
    %v4388 = vrot.slane %v4052, 2
    %v4397 = vtanh.pop %v4381
    %v4398 = vtanh.pop %v4382
    %v4399 = vtanh.pop %v4383
    %v4400 = vtanh.pop %v4384
    %v4401 = vtanh.pop %v4385
    %v4402 = vtanh.pop %v4386
    %v4403 = vtanh.pop %v4387
    %v4404 = vtanh.pop %v4388
    %s4405 = sadd.f32 %s165, 5.0
    %s4406 = ssub.f32 %s4405, 0.001
    %v4407 = vstv %s4406
    %v4408 = vmul.f32 %v4099, %v4407
    %v4409 = vmul.f32 %v4114, %v4407
    %v4410 = vmul.f32 %v4129, %v4407
    %v4411 = vmul.f32 %v4144, %v4407
    %v4412 = vmul.f32 %v4159, %v4407
    %v4413 = vmul.f32 %v4174, %v4407
    %v4414 = vmul.f32 %v4189, %v4407
    %v4415 = vmul.f32 %v4204, %v4407
    %v4416 = vsub.f32 1.0, %v4099
    %v4417 = vsub.f32 1.0, %v4114
    %v4418 = vsub.f32 1.0, %v4129
    %v4419 = vsub.f32 1.0, %v4144
    %v4420 = vsub.f32 1.0, %v4159
    %v4421 = vsub.f32 1.0, %v4174
    %v4422 = vsub.f32 1.0, %v4189
    %v4423 = vsub.f32 1.0, %v4204
    %v4424 = vmul.f32 %v4416, %v3691
    %v4425 = vmul.f32 %v4417, %v3692
    %v4426 = vmul.f32 %v4418, %v3693
    %v4427 = vmul.f32 %v4419, %v3694
    %v4428 = vmul.f32 %v4420, %v3695
    %v4429 = vmul.f32 %v4421, %v3696
    %v4430 = vmul.f32 %v4422, %v3697
    %v4431 = vmul.f32 %v4423, %v3698
    %v4432 = vadd.f32 %v4408, %v4424
    %v4433 = vadd.f32 %v4409, %v4425
    %v4434 = vadd.f32 %v4410, %v4426
    %v4435 = vadd.f32 %v4411, %v4427
    %v4436 = vadd.f32 %v4412, %v4428
    %v4437 = vadd.f32 %v4413, %v4429
    %v4438 = vadd.f32 %v4414, %v4430
    %v4439 = vadd.f32 %v4415, %v4431
    %v4440 = vstv %s4405
    %v4441 = vsub.f32 %v4440, %v4432
    %v4442 = vsub.f32 %v4440, %v4433
    %v4443 = vsub.f32 %v4440, %v4434
    %v4444 = vsub.f32 %v4440, %v4435
    %v4445 = vsub.f32 %v4440, %v4436
    %v4446 = vsub.f32 %v4440, %v4437
    %v4447 = vsub.f32 %v4440, %v4438
    %v4448 = vsub.f32 %v4440, %v4439
    %v4449 = vadd.f32 %v4441, 0.001
    %v4450 = vadd.f32 %v4442, 0.001
    %v4451 = vadd.f32 %v4443, 0.001
    %v4452 = vadd.f32 %v4444, 0.001
    %v4453 = vadd.f32 %v4445, 0.001
    %v4454 = vadd.f32 %v4446, 0.001
    %v4455 = vadd.f32 %v4447, 0.001
    %v4456 = vadd.f32 %v4448, 0.001
    %v4457 = vadd.f32 %v4441, 1.0
    %v4458 = vadd.f32 %v4442, 1.0
    %v4459 = vadd.f32 %v4443, 1.0
    %v4460 = vadd.f32 %v4444, 1.0
    %v4461 = vadd.f32 %v4445, 1.0
    %v4462 = vadd.f32 %v4446, 1.0
    %v4463 = vadd.f32 %v4447, 1.0
    %v4464 = vadd.f32 %v4448, 1.0
    %v4465 = vrcp.pop %v4457
    %v4466 = vmul.f32 %v4457, %v4465
    %v4467 = vsub.f32 1.0, %v4466
    %v4468 = vmul.f32 %v4465, %v4467
    %v4469 = vadd.f32 %v4465, %v4468
    %vm4470 = vweird.f32 %v4457
    %vm4471 = vweird.f32 %v4465
    %vm4472 = vmor %vm4470, %vm4471
    %v4473 = vsel %vm4472, %v4465, %v4469
    %v4474 = vand.u32 2147483647, %v4457
    %vm4475 = vcmp.eq.f32.partialorder %v4474, 8.507059e+37
    %v4476 = vand.u32 %v4457, 2147483648
    %v4477 = vor.u32 1.1754944e-38, %v4476
    %v4478 = vsel %vm4475, %v4477, %v4473
    %v4479 = vmul.f32 %v4449, %v4478
    %v4480 = vrcp.pop %v4458
    %v4481 = vmul.f32 %v4458, %v4480
    %v4482 = vsub.f32 1.0, %v4481
    %v4483 = vmul.f32 %v4480, %v4482
    %v4484 = vadd.f32 %v4480, %v4483
    %vm4485 = vweird.f32 %v4458
    %vm4486 = vweird.f32 %v4480
    %vm4487 = vmor %vm4485, %vm4486
    %v4488 = vsel %vm4487, %v4480, %v4484
    %v4489 = vand.u32 2147483647, %v4458
    %vm4490 = vcmp.eq.f32.partialorder %v4489, 8.507059e+37
    %v4491 = vand.u32 %v4458, 2147483648
    %v4492 = vor.u32 1.1754944e-38, %v4491
    %v4493 = vsel %vm4490, %v4492, %v4488
    %v4494 = vmul.f32 %v4450, %v4493
    %v4495 = vrcp.pop %v4459
    %v4496 = vmul.f32 %v4459, %v4495
    %v4497 = vsub.f32 1.0, %v4496
    %v4498 = vmul.f32 %v4495, %v4497
    %v4499 = vadd.f32 %v4495, %v4498
    %vm4500 = vweird.f32 %v4459
    %vm4501 = vweird.f32 %v4495
    %vm4502 = vmor %vm4500, %vm4501
    %v4503 = vsel %vm4502, %v4495, %v4499
    %v4504 = vand.u32 2147483647, %v4459
    %vm4505 = vcmp.eq.f32.partialorder %v4504, 8.507059e+37
    %v4506 = vand.u32 %v4459, 2147483648
    %v4507 = vor.u32 1.1754944e-38, %v4506
    %v4508 = vsel %vm4505, %v4507, %v4503
    %v4509 = vmul.f32 %v4451, %v4508
    %v4510 = vrcp.pop %v4460
    %v4511 = vmul.f32 %v4460, %v4510
    %v4512 = vsub.f32 1.0, %v4511
    %v4513 = vmul.f32 %v4510, %v4512
    %v4514 = vadd.f32 %v4510, %v4513
    %vm4515 = vweird.f32 %v4460
    %vm4516 = vweird.f32 %v4510
    %vm4517 = vmor %vm4515, %vm4516
    %v4518 = vsel %vm4517, %v4510, %v4514
    %v4519 = vand.u32 2147483647, %v4460
    %vm4520 = vcmp.eq.f32.partialorder %v4519, 8.507059e+37
    %v4521 = vand.u32 %v4460, 2147483648
    %v4522 = vor.u32 1.1754944e-38, %v4521
    %v4523 = vsel %vm4520, %v4522, %v4518
    %v4524 = vmul.f32 %v4452, %v4523
    %v4525 = vrcp.pop %v4461
    %v4526 = vmul.f32 %v4461, %v4525
    %v4527 = vsub.f32 1.0, %v4526
    %v4528 = vmul.f32 %v4525, %v4527
    %v4529 = vadd.f32 %v4525, %v4528
    %vm4530 = vweird.f32 %v4461
    %vm4531 = vweird.f32 %v4525
    %vm4532 = vmor %vm4530, %vm4531
    %v4533 = vsel %vm4532, %v4525, %v4529
    %v4534 = vand.u32 2147483647, %v4461
    %vm4535 = vcmp.eq.f32.partialorder %v4534, 8.507059e+37
    %v4536 = vand.u32 %v4461, 2147483648
    %v4537 = vor.u32 1.1754944e-38, %v4536
    %v4538 = vsel %vm4535, %v4537, %v4533
    %v4539 = vmul.f32 %v4453, %v4538
    %v4540 = vrcp.pop %v4462
    %v4541 = vmul.f32 %v4462, %v4540
    %v4542 = vsub.f32 1.0, %v4541
    %v4543 = vmul.f32 %v4540, %v4542
    %v4544 = vadd.f32 %v4540, %v4543
    %vm4545 = vweird.f32 %v4462
    %vm4546 = vweird.f32 %v4540
    %vm4547 = vmor %vm4545, %vm4546
    %v4548 = vsel %vm4547, %v4540, %v4544
    %v4549 = vand.u32 2147483647, %v4462
    %vm4550 = vcmp.eq.f32.partialorder %v4549, 8.507059e+37
    %v4551 = vand.u32 %v4462, 2147483648
    %v4552 = vor.u32 1.1754944e-38, %v4551
    %v4553 = vsel %vm4550, %v4552, %v4548
    %v4554 = vmul.f32 %v4454, %v4553
    %v4555 = vrcp.pop %v4463
    %v4556 = vmul.f32 %v4463, %v4555
    %v4557 = vsub.f32 1.0, %v4556
    %v4558 = vmul.f32 %v4555, %v4557
    %v4559 = vadd.f32 %v4555, %v4558
    %vm4560 = vweird.f32 %v4463
    %vm4561 = vweird.f32 %v4555
    %vm4562 = vmor %vm4560, %vm4561
    %v4563 = vsel %vm4562, %v4555, %v4559
    %v4564 = vand.u32 2147483647, %v4463
    %vm4565 = vcmp.eq.f32.partialorder %v4564, 8.507059e+37
    %v4566 = vand.u32 %v4463, 2147483648
    %v4567 = vor.u32 1.1754944e-38, %v4566
    %v4568 = vsel %vm4565, %v4567, %v4563
    %v4569 = vmul.f32 %v4455, %v4568
    %v4570 = vrcp.pop %v4464
    %v4571 = vmul.f32 %v4464, %v4570
    %v4572 = vsub.f32 1.0, %v4571
    %v4573 = vmul.f32 %v4570, %v4572
    %v4574 = vadd.f32 %v4570, %v4573
    %vm4575 = vweird.f32 %v4464
    %vm4576 = vweird.f32 %v4570
    %vm4577 = vmor %vm4575, %vm4576
    %v4578 = vsel %vm4577, %v4570, %v4574
    %v4579 = vand.u32 2147483647, %v4464
    %vm4580 = vcmp.eq.f32.partialorder %v4579, 8.507059e+37
    %v4581 = vand.u32 %v4464, 2147483648
    %v4582 = vor.u32 1.1754944e-38, %v4581
    %v4583 = vsel %vm4580, %v4582, %v4578
    %v4584 = vmul.f32 %v4456, %v4583
    %v4585 = vpow.f32 %v4479, %v162
    %v4586 = vpow.f32 %v4494, %v851
    %v4587 = vpow.f32 %v4509, %v852
    %v4588 = vpow.f32 %v4524, %v853
    %v4589 = vpow.f32 %v4539, %v854
    %v4590 = vpow.f32 %v4554, %v855
    %v4591 = vpow.f32 %v4569, %v856
    %v4592 = vpow.f32 %v4584, %v857
    %v4593 = vmul.f32 %v4585, %v3876
    %v4594 = vmul.f32 %v4586, %v3877
    %v4595 = vmul.f32 %v4587, %v3878
    %v4596 = vmul.f32 %v4588, %v3879
    %v4597 = vmul.f32 %v4589, %v3880
    %v4598 = vmul.f32 %v4590, %v3881
    %v4599 = vmul.f32 %v4591, %v3882
    %v4600 = vmul.f32 %v4592, %v3883
    %v4601 = vsub.f32 1.0, %v4585
    %v4602 = vsub.f32 1.0, %v4586
    %v4603 = vsub.f32 1.0, %v4587
    %v4604 = vsub.f32 1.0, %v4588
    %v4605 = vsub.f32 1.0, %v4589
    %v4606 = vsub.f32 1.0, %v4590
    %v4607 = vsub.f32 1.0, %v4591
    %v4608 = vsub.f32 1.0, %v4592
    %v4609 = vmul.f32 %v4601, %v4397
    %v4610 = vmul.f32 %v4602, %v4398
    %v4611 = vmul.f32 %v4603, %v4399
    %v4612 = vmul.f32 %v4604, %v4400
    %v4613 = vmul.f32 %v4605, %v4401
    %v4614 = vmul.f32 %v4606, %v4402
    %v4615 = vmul.f32 %v4607, %v4403
    %v4616 = vmul.f32 %v4608, %v4404
    %v4617 = vadd.f32 %v4593, %v4609
    %v4618 = vadd.f32 %v4594, %v4610
    %v4619 = vadd.f32 %v4595, %v4611
    %v4620 = vadd.f32 %v4596, %v4612
    %v4621 = vadd.f32 %v4597, %v4613
    %v4622 = vadd.f32 %v4598, %v4614
    %v4623 = vadd.f32 %v4599, %v4615
    %v4624 = vadd.f32 %v4600, %v4616
    %v4625 = vtanh.pop %v4617
    %v4626 = vtanh.pop %v4618
    %v4627 = vtanh.pop %v4619
    %v4628 = vtanh.pop %v4620
    %v4629 = vtanh.pop %v4621
    %v4630 = vtanh.pop %v4622
    %v4631 = vtanh.pop %v4623
    %v4632 = vtanh.pop %v4624
    %v4633 = vmul.f32 %v4275, %v4625
    %v4634 = vmul.f32 %v4290, %v4626
    %v4635 = vmul.f32 %v4305, %v4627
    %v4636 = vmul.f32 %v4320, %v4628
    %v4637 = vmul.f32 %v4335, %v4629
    %v4638 = vmul.f32 %v4350, %v4630
    %v4639 = vmul.f32 %v4365, %v4631
    %v4640 = vmul.f32 %v4380, %v4632
    %4641 = vst [vmem:[#allocation14 + $0x5] sm:$0x1] %v4633
    %4642 = vst [vmem:[#allocation14 + $0xd] sm:$0x1] %v4634
    %4643 = vst [vmem:[#allocation14 + $0x15] sm:$0x1] %v4635
    %4644 = vst [vmem:[#allocation14 + $0x1d] sm:$0x1] %v4636
    %4645 = vst [vmem:[#allocation14 + $0x25] sm:$0x1] %v4637
    %4646 = vst [vmem:[#allocation14 + $0x2d] sm:$0x1] %v4638
    %4647 = vst [vmem:[#allocation14 + $0x35] sm:$0x1] %v4639
    %4648 = vst [vmem:[#allocation14 + $0x3d] sm:$0x1] %v4640
    %s4649 = scalar_lea.vmem [#allocation5], 6
    %v4650 = vld [vmem:[%s4649] ss:$8 sm:$0x7]
    %s4651 = scalar_lea.vmem [#allocation5], 30
    %v4652 = vld [vmem:[%s4651] ss:$8 sm:$0x7]
    %s4653 = scalar_lea.vmem [#allocation5], 54
    %v4654 = vld [vmem:[%s4653] ss:$8 sm:$0x7]
    %s4655 = scalar_lea.vmem [#allocation5], 78
    %v4656 = vld [vmem:[%s4655] ss:$8 sm:$0x7]
    %s4657 = scalar_lea.vmem [#allocation5], 102
    %v4658 = vld [vmem:[%s4657] ss:$8 sm:$0x7]
    %s4659 = scalar_lea.vmem [#allocation5], 126
    %v4660 = vld [vmem:[%s4659] ss:$8 sm:$0x7]
    %s4661 = scalar_lea.vmem [#allocation5], 150
    %v4662 = vld [vmem:[%s4661] ss:$8 sm:$0x7]
    %s4663 = scalar_lea.vmem [#allocation5], 174
    %v4664 = vld [vmem:[%s4663] ss:$8 sm:$0x7]
    %4673 = vst [vmem:[#allocation1] ss:$9 sm:$0xff] %v4633
    %s4674 = scalar_lea.vmem [#allocation1], 1
    %4675 = vst [vmem:[%s4674] ss:$9 sm:$0xff] %v4634
    %s4676 = scalar_lea.vmem [#allocation1], 2
    %4677 = vst [vmem:[%s4676] ss:$9 sm:$0xff] %v4635
    %s4678 = scalar_lea.vmem [#allocation1], 3
    %4679 = vst [vmem:[%s4678] ss:$9 sm:$0xff] %v4636
    %s4680 = scalar_lea.vmem [#allocation1], 4
    %4681 = vst [vmem:[%s4680] ss:$9 sm:$0xff] %v4637
    %s4682 = scalar_lea.vmem [#allocation1], 5
    %4683 = vst [vmem:[%s4682] ss:$9 sm:$0xff] %v4638
    %s4684 = scalar_lea.vmem [#allocation1], 6
    %4685 = vst [vmem:[%s4684] ss:$9 sm:$0xff] %v4639
    %s4686 = scalar_lea.vmem [#allocation1], 7
    %4687 = vst [vmem:[%s4686] ss:$9 sm:$0xff] %v4640
    %v4688 = vld [vmem:[#allocation1] sm:$0xff]
    %4690 = vmatpush.msra.mxu0 %v157
    %4691 = vmatpush.msra.mxu0 %v154
    %4692 = vmatpush.msra.mxu0 %v151
    %4693 = vmatpush.msra.mxu0 %v148
    %4694 = vmatpush.msra.mxu0 %v145
    %4695 = vmatpush.msra.mxu0 %v142
    %4696 = vmatpush.msra.mxu0 %v139
    %4697 = vmatpush.msra.mxu0 %v136
    %4698 = vmatpush.msra.mxu0 %v133
    %4699 = vmatpush.msra.mxu0 %v130
    %4700 = vmatpush.msra.mxu0 %v127
    %4701 = vmatpush.msra.mxu0 %v124
    %4702 = vmatpush.msra.mxu0 %v121
    %4703 = vmatpush.msra.mxu0 %v118
    %4704 = vmatpush.msra.mxu0 %v115
    %4705 = vmatpush.msra.mxu0 %v112
    %4706 = vmatmul.f32.gmra.mxu0 %v4688
    %v4707 = vpop.f32.mrf.mxu0
    %v4708 = vadd.f32 0.0, %v4707
    %4709 = vdwg.mxu0
    %4710 = vmatpush.msra.mxu0 %v158
    %4711 = vmatpush.msra.mxu0 %v155
    %4712 = vmatpush.msra.mxu0 %v152
    %4713 = vmatpush.msra.mxu0 %v149
    %4714 = vmatpush.msra.mxu0 %v146
    %4715 = vmatpush.msra.mxu0 %v143
    %4716 = vmatpush.msra.mxu0 %v140
    %4717 = vmatpush.msra.mxu0 %v137
    %4718 = vmatpush.msra.mxu0 %v134
    %4719 = vmatpush.msra.mxu0 %v131
    %4720 = vmatpush.msra.mxu0 %v128
    %4721 = vmatpush.msra.mxu0 %v125
    %4722 = vmatpush.msra.mxu0 %v122
    %4723 = vmatpush.msra.mxu0 %v119
    %4724 = vmatpush.msra.mxu0 %v116
    %4725 = vmatpush.msra.mxu0 %v113
    %4726 = vmatmul.f32.gmra.mxu0 %v4688
    %v4727 = vpop.f32.mrf.mxu0
    %v4728 = vadd.f32 0.0, %v4727
    %4729 = vdwg.mxu0
    %4730 = vmatpush.msra.mxu0 %v159
    %4731 = vmatpush.msra.mxu0 %v156
    %4732 = vmatpush.msra.mxu0 %v153
    %4733 = vmatpush.msra.mxu0 %v150
    %4734 = vmatpush.msra.mxu0 %v147
    %4735 = vmatpush.msra.mxu0 %v144
    %4736 = vmatpush.msra.mxu0 %v141
    %4737 = vmatpush.msra.mxu0 %v138
    %4738 = vmatpush.msra.mxu0 %v135
    %4739 = vmatpush.msra.mxu0 %v132
    %4740 = vmatpush.msra.mxu0 %v129
    %4741 = vmatpush.msra.mxu0 %v126
    %4742 = vmatpush.msra.mxu0 %v123
    %4743 = vmatpush.msra.mxu0 %v120
    %4744 = vmatpush.msra.mxu0 %v117
    %4745 = vmatpush.msra.mxu0 %v114
    %4746 = vmatmul.f32.gmra.mxu0 %v4688
    %v4747 = vpop.f32.mrf.mxu0
    %v4748 = vadd.f32 0.0, %v4747
    %4749 = vdwg.mxu0
    %v4753 = vrot.slane %v4728, 7
    %v4754 = vrot.slane %v4748, 6
    %v4755 = vsel %vm249, %v4708, %v4753
    %v4756 = vsel %vm251, %v4755, %v4754
    %v4757 = vsel %vm253, %v4708, %v4753
    %v4758 = vsel %vm255, %v4757, %v4754
    %v4759 = vrot.slane %v4758, 1
    %v4760 = vsel %vm258, %v4708, %v4753
    %v4761 = vsel %vm260, %v4760, %v4754
    %v4762 = vrot.slane %v4761, 2
    %v4763 = vsel %vm263, %v4708, %v4753
    %v4764 = vsel %vm265, %v4763, %v4754
    %v4765 = vrot.slane %v4764, 3
    %v4766 = vsel %vm268, %v4708, %v4753
    %v4767 = vsel %vm270, %v4766, %v4754
    %v4768 = vrot.slane %v4767, 4
    %v4769 = vsel %vm273, %v4708, %v4753
    %v4770 = vsel %vm275, %v4769, %v4754
    %v4771 = vrot.slane %v4770, 5
    %v4772 = vsel %vm278, %v4708, %v4753
    %v4773 = vsel %vm280, %v4754, %v4772
    %v4774 = vrot.slane %v4773, 6
    %v4775 = vsel %vm283, %v4753, %v4708
    %v4776 = vsel %vm285, %v4754, %v4775
    %v4777 = vrot.slane %v4776, 7
    %v4786 = vadd.f32 %v4650, %v4756
    %v4787 = vadd.f32 %v4652, %v4759
    %v4788 = vadd.f32 %v4654, %v4762
    %v4789 = vadd.f32 %v4656, %v4765
    %v4790 = vadd.f32 %v4658, %v4768
    %v4791 = vadd.f32 %v4660, %v4771
    %v4792 = vadd.f32 %v4662, %v4774
    %v4793 = vadd.f32 %v4664, %v4777
    %v4794 = vxor.u32 %v4786, 2147483648
    %v4795 = vxor.u32 %v4787, 2147483648
    %v4796 = vxor.u32 %v4788, 2147483648
    %v4797 = vxor.u32 %v4789, 2147483648
    %v4798 = vxor.u32 %v4790, 2147483648
    %v4799 = vxor.u32 %v4791, 2147483648
    %v4800 = vxor.u32 %v4792, 2147483648
    %v4801 = vxor.u32 %v4793, 2147483648
    %v4802 = vmul.f32 %v4794, 1.442695
    %v4803 = vpow.pop %v4802
    %v4804 = vmul.f32 %v4795, 1.442695
    %v4805 = vpow.pop %v4804
    %v4806 = vmul.f32 %v4796, 1.442695
    %v4807 = vpow.pop %v4806
    %v4808 = vmul.f32 %v4797, 1.442695
    %v4809 = vpow.pop %v4808
    %v4810 = vmul.f32 %v4798, 1.442695
    %v4811 = vpow.pop %v4810
    %v4812 = vmul.f32 %v4799, 1.442695
    %v4813 = vpow.pop %v4812
    %v4814 = vmul.f32 %v4800, 1.442695
    %v4815 = vpow.pop %v4814
    %v4816 = vmul.f32 %v4801, 1.442695
    %v4817 = vpow.pop %v4816
    %v4818 = vadd.f32 %v4803, 1.0
    %v4819 = vadd.f32 %v4805, 1.0
    %v4820 = vadd.f32 %v4807, 1.0
    %v4821 = vadd.f32 %v4809, 1.0
    %v4822 = vadd.f32 %v4811, 1.0
    %v4823 = vadd.f32 %v4813, 1.0
    %v4824 = vadd.f32 %v4815, 1.0
    %v4825 = vadd.f32 %v4817, 1.0
    %v4826 = vrcp.pop %v4818
    %v4827 = vmul.f32 %v4818, %v4826
    %v4828 = vsub.f32 1.0, %v4827
    %v4829 = vmul.f32 %v4826, %v4828
    %v4830 = vadd.f32 %v4826, %v4829
    %vm4831 = vweird.f32 %v4818
    %vm4832 = vweird.f32 %v4826
    %vm4833 = vmor %vm4831, %vm4832
    %v4834 = vsel %vm4833, %v4826, %v4830
    %v4835 = vand.u32 2147483647, %v4818
    %vm4836 = vcmp.eq.f32.partialorder %v4835, 8.507059e+37
    %v4837 = vand.u32 %v4818, 2147483648
    %v4838 = vor.u32 1.1754944e-38, %v4837
    %v4839 = vsel %vm4836, %v4838, %v4834
    %v4840 = vmul.f32 1.0, %v4839
    %v4841 = vrcp.pop %v4819
    %v4842 = vmul.f32 %v4819, %v4841
    %v4843 = vsub.f32 1.0, %v4842
    %v4844 = vmul.f32 %v4841, %v4843
    %v4845 = vadd.f32 %v4841, %v4844
    %vm4846 = vweird.f32 %v4819
    %vm4847 = vweird.f32 %v4841
    %vm4848 = vmor %vm4846, %vm4847
    %v4849 = vsel %vm4848, %v4841, %v4845
    %v4850 = vand.u32 2147483647, %v4819
    %vm4851 = vcmp.eq.f32.partialorder %v4850, 8.507059e+37
    %v4852 = vand.u32 %v4819, 2147483648
    %v4853 = vor.u32 1.1754944e-38, %v4852
    %v4854 = vsel %vm4851, %v4853, %v4849
    %v4855 = vmul.f32 1.0, %v4854
    %v4856 = vrcp.pop %v4820
    %v4857 = vmul.f32 %v4820, %v4856
    %v4858 = vsub.f32 1.0, %v4857
    %v4859 = vmul.f32 %v4856, %v4858
    %v4860 = vadd.f32 %v4856, %v4859
    %vm4861 = vweird.f32 %v4820
    %vm4862 = vweird.f32 %v4856
    %vm4863 = vmor %vm4861, %vm4862
    %v4864 = vsel %vm4863, %v4856, %v4860
    %v4865 = vand.u32 2147483647, %v4820
    %vm4866 = vcmp.eq.f32.partialorder %v4865, 8.507059e+37
    %v4867 = vand.u32 %v4820, 2147483648
    %v4868 = vor.u32 1.1754944e-38, %v4867
    %v4869 = vsel %vm4866, %v4868, %v4864
    %v4870 = vmul.f32 1.0, %v4869
    %v4871 = vrcp.pop %v4821
    %v4872 = vmul.f32 %v4821, %v4871
    %v4873 = vsub.f32 1.0, %v4872
    %v4874 = vmul.f32 %v4871, %v4873
    %v4875 = vadd.f32 %v4871, %v4874
    %vm4876 = vweird.f32 %v4821
    %vm4877 = vweird.f32 %v4871
    %vm4878 = vmor %vm4876, %vm4877
    %v4879 = vsel %vm4878, %v4871, %v4875
    %v4880 = vand.u32 2147483647, %v4821
    %vm4881 = vcmp.eq.f32.partialorder %v4880, 8.507059e+37
    %v4882 = vand.u32 %v4821, 2147483648
    %v4883 = vor.u32 1.1754944e-38, %v4882
    %v4884 = vsel %vm4881, %v4883, %v4879
    %v4885 = vmul.f32 1.0, %v4884
    %v4886 = vrcp.pop %v4822
    %v4887 = vmul.f32 %v4822, %v4886
    %v4888 = vsub.f32 1.0, %v4887
    %v4889 = vmul.f32 %v4886, %v4888
    %v4890 = vadd.f32 %v4886, %v4889
    %vm4891 = vweird.f32 %v4822
    %vm4892 = vweird.f32 %v4886
    %vm4893 = vmor %vm4891, %vm4892
    %v4894 = vsel %vm4893, %v4886, %v4890
    %v4895 = vand.u32 2147483647, %v4822
    %vm4896 = vcmp.eq.f32.partialorder %v4895, 8.507059e+37
    %v4897 = vand.u32 %v4822, 2147483648
    %v4898 = vor.u32 1.1754944e-38, %v4897
    %v4899 = vsel %vm4896, %v4898, %v4894
    %v4900 = vmul.f32 1.0, %v4899
    %v4901 = vrcp.pop %v4823
    %v4902 = vmul.f32 %v4823, %v4901
    %v4903 = vsub.f32 1.0, %v4902
    %v4904 = vmul.f32 %v4901, %v4903
    %v4905 = vadd.f32 %v4901, %v4904
    %vm4906 = vweird.f32 %v4823
    %vm4907 = vweird.f32 %v4901
    %vm4908 = vmor %vm4906, %vm4907
    %v4909 = vsel %vm4908, %v4901, %v4905
    %v4910 = vand.u32 2147483647, %v4823
    %vm4911 = vcmp.eq.f32.partialorder %v4910, 8.507059e+37
    %v4912 = vand.u32 %v4823, 2147483648
    %v4913 = vor.u32 1.1754944e-38, %v4912
    %v4914 = vsel %vm4911, %v4913, %v4909
    %v4915 = vmul.f32 1.0, %v4914
    %v4916 = vrcp.pop %v4824
    %v4917 = vmul.f32 %v4824, %v4916
    %v4918 = vsub.f32 1.0, %v4917
    %v4919 = vmul.f32 %v4916, %v4918
    %v4920 = vadd.f32 %v4916, %v4919
    %vm4921 = vweird.f32 %v4824
    %vm4922 = vweird.f32 %v4916
    %vm4923 = vmor %vm4921, %vm4922
    %v4924 = vsel %vm4923, %v4916, %v4920
    %v4925 = vand.u32 2147483647, %v4824
    %vm4926 = vcmp.eq.f32.partialorder %v4925, 8.507059e+37
    %v4927 = vand.u32 %v4824, 2147483648
    %v4928 = vor.u32 1.1754944e-38, %v4927
    %v4929 = vsel %vm4926, %v4928, %v4924
    %v4930 = vmul.f32 1.0, %v4929
    %v4931 = vrcp.pop %v4825
    %v4932 = vmul.f32 %v4825, %v4931
    %v4933 = vsub.f32 1.0, %v4932
    %v4934 = vmul.f32 %v4931, %v4933
    %v4935 = vadd.f32 %v4931, %v4934
    %vm4936 = vweird.f32 %v4825
    %vm4937 = vweird.f32 %v4931
    %vm4938 = vmor %vm4936, %vm4937
    %v4939 = vsel %vm4938, %v4931, %v4935
    %v4940 = vand.u32 2147483647, %v4825
    %vm4941 = vcmp.eq.f32.partialorder %v4940, 8.507059e+37
    %v4942 = vand.u32 %v4825, 2147483648
    %v4943 = vor.u32 1.1754944e-38, %v4942
    %v4944 = vsel %vm4941, %v4943, %v4939
    %v4945 = vmul.f32 1.0, %v4944
    %v4954 = vrot.slane %v4786, 1
    %v4955 = vrot.slane %v4787, 1
    %v4956 = vrot.slane %v4788, 1
    %v4957 = vrot.slane %v4789, 1
    %v4958 = vrot.slane %v4790, 1
    %v4959 = vrot.slane %v4791, 1
    %v4960 = vrot.slane %v4792, 1
    %v4961 = vrot.slane %v4793, 1
    %v4970 = vxor.u32 %v4954, 2147483648
    %v4971 = vxor.u32 %v4955, 2147483648
    %v4972 = vxor.u32 %v4956, 2147483648
    %v4973 = vxor.u32 %v4957, 2147483648
    %v4974 = vxor.u32 %v4958, 2147483648
    %v4975 = vxor.u32 %v4959, 2147483648
    %v4976 = vxor.u32 %v4960, 2147483648
    %v4977 = vxor.u32 %v4961, 2147483648
    %v4978 = vmul.f32 %v4970, 1.442695
    %v4979 = vpow.pop %v4978
    %v4980 = vmul.f32 %v4971, 1.442695
    %v4981 = vpow.pop %v4980
    %v4982 = vmul.f32 %v4972, 1.442695
    %v4983 = vpow.pop %v4982
    %v4984 = vmul.f32 %v4973, 1.442695
    %v4985 = vpow.pop %v4984
    %v4986 = vmul.f32 %v4974, 1.442695
    %v4987 = vpow.pop %v4986
    %v4988 = vmul.f32 %v4975, 1.442695
    %v4989 = vpow.pop %v4988
    %v4990 = vmul.f32 %v4976, 1.442695
    %v4991 = vpow.pop %v4990
    %v4992 = vmul.f32 %v4977, 1.442695
    %v4993 = vpow.pop %v4992
    %v4994 = vadd.f32 %v4979, 1.0
    %v4995 = vadd.f32 %v4981, 1.0
    %v4996 = vadd.f32 %v4983, 1.0
    %v4997 = vadd.f32 %v4985, 1.0
    %v4998 = vadd.f32 %v4987, 1.0
    %v4999 = vadd.f32 %v4989, 1.0
    %v5000 = vadd.f32 %v4991, 1.0
    %v5001 = vadd.f32 %v4993, 1.0
    %v5002 = vrcp.pop %v4994
    %v5003 = vmul.f32 %v4994, %v5002
    %v5004 = vsub.f32 1.0, %v5003
    %v5005 = vmul.f32 %v5002, %v5004
    %v5006 = vadd.f32 %v5002, %v5005
    %vm5007 = vweird.f32 %v4994
    %vm5008 = vweird.f32 %v5002
    %vm5009 = vmor %vm5007, %vm5008
    %v5010 = vsel %vm5009, %v5002, %v5006
    %v5011 = vand.u32 2147483647, %v4994
    %vm5012 = vcmp.eq.f32.partialorder %v5011, 8.507059e+37
    %v5013 = vand.u32 %v4994, 2147483648
    %v5014 = vor.u32 1.1754944e-38, %v5013
    %v5015 = vsel %vm5012, %v5014, %v5010
    %v5016 = vmul.f32 1.0, %v5015
    %v5017 = vrcp.pop %v4995
    %v5018 = vmul.f32 %v4995, %v5017
    %v5019 = vsub.f32 1.0, %v5018
    %v5020 = vmul.f32 %v5017, %v5019
    %v5021 = vadd.f32 %v5017, %v5020
    %vm5022 = vweird.f32 %v4995
    %vm5023 = vweird.f32 %v5017
    %vm5024 = vmor %vm5022, %vm5023
    %v5025 = vsel %vm5024, %v5017, %v5021
    %v5026 = vand.u32 2147483647, %v4995
    %vm5027 = vcmp.eq.f32.partialorder %v5026, 8.507059e+37
    %v5028 = vand.u32 %v4995, 2147483648
    %v5029 = vor.u32 1.1754944e-38, %v5028
    %v5030 = vsel %vm5027, %v5029, %v5025
    %v5031 = vmul.f32 1.0, %v5030
    %v5032 = vrcp.pop %v4996
    %v5033 = vmul.f32 %v4996, %v5032
    %v5034 = vsub.f32 1.0, %v5033
    %v5035 = vmul.f32 %v5032, %v5034
    %v5036 = vadd.f32 %v5032, %v5035
    %vm5037 = vweird.f32 %v4996
    %vm5038 = vweird.f32 %v5032
    %vm5039 = vmor %vm5037, %vm5038
    %v5040 = vsel %vm5039, %v5032, %v5036
    %v5041 = vand.u32 2147483647, %v4996
    %vm5042 = vcmp.eq.f32.partialorder %v5041, 8.507059e+37
    %v5043 = vand.u32 %v4996, 2147483648
    %v5044 = vor.u32 1.1754944e-38, %v5043
    %v5045 = vsel %vm5042, %v5044, %v5040
    %v5046 = vmul.f32 1.0, %v5045
    %v5047 = vrcp.pop %v4997
    %v5048 = vmul.f32 %v4997, %v5047
    %v5049 = vsub.f32 1.0, %v5048
    %v5050 = vmul.f32 %v5047, %v5049
    %v5051 = vadd.f32 %v5047, %v5050
    %vm5052 = vweird.f32 %v4997
    %vm5053 = vweird.f32 %v5047
    %vm5054 = vmor %vm5052, %vm5053
    %v5055 = vsel %vm5054, %v5047, %v5051
    %v5056 = vand.u32 2147483647, %v4997
    %vm5057 = vcmp.eq.f32.partialorder %v5056, 8.507059e+37
    %v5058 = vand.u32 %v4997, 2147483648
    %v5059 = vor.u32 1.1754944e-38, %v5058
    %v5060 = vsel %vm5057, %v5059, %v5055
    %v5061 = vmul.f32 1.0, %v5060
    %v5062 = vrcp.pop %v4998
    %v5063 = vmul.f32 %v4998, %v5062
    %v5064 = vsub.f32 1.0, %v5063
    %v5065 = vmul.f32 %v5062, %v5064
    %v5066 = vadd.f32 %v5062, %v5065
    %vm5067 = vweird.f32 %v4998
    %vm5068 = vweird.f32 %v5062
    %vm5069 = vmor %vm5067, %vm5068
    %v5070 = vsel %vm5069, %v5062, %v5066
    %v5071 = vand.u32 2147483647, %v4998
    %vm5072 = vcmp.eq.f32.partialorder %v5071, 8.507059e+37
    %v5073 = vand.u32 %v4998, 2147483648
    %v5074 = vor.u32 1.1754944e-38, %v5073
    %v5075 = vsel %vm5072, %v5074, %v5070
    %v5076 = vmul.f32 1.0, %v5075
    %v5077 = vrcp.pop %v4999
    %v5078 = vmul.f32 %v4999, %v5077
    %v5079 = vsub.f32 1.0, %v5078
    %v5080 = vmul.f32 %v5077, %v5079
    %v5081 = vadd.f32 %v5077, %v5080
    %vm5082 = vweird.f32 %v4999
    %vm5083 = vweird.f32 %v5077
    %vm5084 = vmor %vm5082, %vm5083
    %v5085 = vsel %vm5084, %v5077, %v5081
    %v5086 = vand.u32 2147483647, %v4999
    %vm5087 = vcmp.eq.f32.partialorder %v5086, 8.507059e+37
    %v5088 = vand.u32 %v4999, 2147483648
    %v5089 = vor.u32 1.1754944e-38, %v5088
    %v5090 = vsel %vm5087, %v5089, %v5085
    %v5091 = vmul.f32 1.0, %v5090
    %v5092 = vrcp.pop %v5000
    %v5093 = vmul.f32 %v5000, %v5092
    %v5094 = vsub.f32 1.0, %v5093
    %v5095 = vmul.f32 %v5092, %v5094
    %v5096 = vadd.f32 %v5092, %v5095
    %vm5097 = vweird.f32 %v5000
    %vm5098 = vweird.f32 %v5092
    %vm5099 = vmor %vm5097, %vm5098
    %v5100 = vsel %vm5099, %v5092, %v5096
    %v5101 = vand.u32 2147483647, %v5000
    %vm5102 = vcmp.eq.f32.partialorder %v5101, 8.507059e+37
    %v5103 = vand.u32 %v5000, 2147483648
    %v5104 = vor.u32 1.1754944e-38, %v5103
    %v5105 = vsel %vm5102, %v5104, %v5100
    %v5106 = vmul.f32 1.0, %v5105
    %v5107 = vrcp.pop %v5001
    %v5108 = vmul.f32 %v5001, %v5107
    %v5109 = vsub.f32 1.0, %v5108
    %v5110 = vmul.f32 %v5107, %v5109
    %v5111 = vadd.f32 %v5107, %v5110
    %vm5112 = vweird.f32 %v5001
    %vm5113 = vweird.f32 %v5107
    %vm5114 = vmor %vm5112, %vm5113
    %v5115 = vsel %vm5114, %v5107, %v5111
    %v5116 = vand.u32 2147483647, %v5001
    %vm5117 = vcmp.eq.f32.partialorder %v5116, 8.507059e+37
    %v5118 = vand.u32 %v5001, 2147483648
    %v5119 = vor.u32 1.1754944e-38, %v5118
    %v5120 = vsel %vm5117, %v5119, %v5115
    %v5121 = vmul.f32 1.0, %v5120
    %v5122 = vrot.slane %v4786, 2
    %v5123 = vrot.slane %v4787, 2
    %v5124 = vrot.slane %v4788, 2
    %v5125 = vrot.slane %v4789, 2
    %v5126 = vrot.slane %v4790, 2
    %v5127 = vrot.slane %v4791, 2
    %v5128 = vrot.slane %v4792, 2
    %v5129 = vrot.slane %v4793, 2
    %v5138 = vtanh.pop %v5122
    %v5139 = vtanh.pop %v5123
    %v5140 = vtanh.pop %v5124
    %v5141 = vtanh.pop %v5125
    %v5142 = vtanh.pop %v5126
    %v5143 = vtanh.pop %v5127
    %v5144 = vtanh.pop %v5128
    %v5145 = vtanh.pop %v5129
    %s5146 = sadd.f32 %s165, 6.0
    %s5147 = ssub.f32 %s5146, 0.001
    %v5148 = vstv %s5147
    %v5149 = vmul.f32 %v4840, %v5148
    %v5150 = vmul.f32 %v4855, %v5148
    %v5151 = vmul.f32 %v4870, %v5148
    %v5152 = vmul.f32 %v4885, %v5148
    %v5153 = vmul.f32 %v4900, %v5148
    %v5154 = vmul.f32 %v4915, %v5148
    %v5155 = vmul.f32 %v4930, %v5148
    %v5156 = vmul.f32 %v4945, %v5148
    %v5157 = vsub.f32 1.0, %v4840
    %v5158 = vsub.f32 1.0, %v4855
    %v5159 = vsub.f32 1.0, %v4870
    %v5160 = vsub.f32 1.0, %v4885
    %v5161 = vsub.f32 1.0, %v4900
    %v5162 = vsub.f32 1.0, %v4915
    %v5163 = vsub.f32 1.0, %v4930
    %v5164 = vsub.f32 1.0, %v4945
    %v5165 = vmul.f32 %v5157, %v4432
    %v5166 = vmul.f32 %v5158, %v4433
    %v5167 = vmul.f32 %v5159, %v4434
    %v5168 = vmul.f32 %v5160, %v4435
    %v5169 = vmul.f32 %v5161, %v4436
    %v5170 = vmul.f32 %v5162, %v4437
    %v5171 = vmul.f32 %v5163, %v4438
    %v5172 = vmul.f32 %v5164, %v4439
    %v5173 = vadd.f32 %v5149, %v5165
    %v5174 = vadd.f32 %v5150, %v5166
    %v5175 = vadd.f32 %v5151, %v5167
    %v5176 = vadd.f32 %v5152, %v5168
    %v5177 = vadd.f32 %v5153, %v5169
    %v5178 = vadd.f32 %v5154, %v5170
    %v5179 = vadd.f32 %v5155, %v5171
    %v5180 = vadd.f32 %v5156, %v5172
    %v5181 = vstv %s5146
    %v5182 = vsub.f32 %v5181, %v5173
    %v5183 = vsub.f32 %v5181, %v5174
    %v5184 = vsub.f32 %v5181, %v5175
    %v5185 = vsub.f32 %v5181, %v5176
    %v5186 = vsub.f32 %v5181, %v5177
    %v5187 = vsub.f32 %v5181, %v5178
    %v5188 = vsub.f32 %v5181, %v5179
    %v5189 = vsub.f32 %v5181, %v5180
    %v5190 = vadd.f32 %v5182, 0.001
    %v5191 = vadd.f32 %v5183, 0.001
    %v5192 = vadd.f32 %v5184, 0.001
    %v5193 = vadd.f32 %v5185, 0.001
    %v5194 = vadd.f32 %v5186, 0.001
    %v5195 = vadd.f32 %v5187, 0.001
    %v5196 = vadd.f32 %v5188, 0.001
    %v5197 = vadd.f32 %v5189, 0.001
    %v5198 = vadd.f32 %v5182, 1.0
    %v5199 = vadd.f32 %v5183, 1.0
    %v5200 = vadd.f32 %v5184, 1.0
    %v5201 = vadd.f32 %v5185, 1.0
    %v5202 = vadd.f32 %v5186, 1.0
    %v5203 = vadd.f32 %v5187, 1.0
    %v5204 = vadd.f32 %v5188, 1.0
    %v5205 = vadd.f32 %v5189, 1.0
    %v5206 = vrcp.pop %v5198
    %v5207 = vmul.f32 %v5198, %v5206
    %v5208 = vsub.f32 1.0, %v5207
    %v5209 = vmul.f32 %v5206, %v5208
    %v5210 = vadd.f32 %v5206, %v5209
    %vm5211 = vweird.f32 %v5198
    %vm5212 = vweird.f32 %v5206
    %vm5213 = vmor %vm5211, %vm5212
    %v5214 = vsel %vm5213, %v5206, %v5210
    %v5215 = vand.u32 2147483647, %v5198
    %vm5216 = vcmp.eq.f32.partialorder %v5215, 8.507059e+37
    %v5217 = vand.u32 %v5198, 2147483648
    %v5218 = vor.u32 1.1754944e-38, %v5217
    %v5219 = vsel %vm5216, %v5218, %v5214
    %v5220 = vmul.f32 %v5190, %v5219
    %v5221 = vrcp.pop %v5199
    %v5222 = vmul.f32 %v5199, %v5221
    %v5223 = vsub.f32 1.0, %v5222
    %v5224 = vmul.f32 %v5221, %v5223
    %v5225 = vadd.f32 %v5221, %v5224
    %vm5226 = vweird.f32 %v5199
    %vm5227 = vweird.f32 %v5221
    %vm5228 = vmor %vm5226, %vm5227
    %v5229 = vsel %vm5228, %v5221, %v5225
    %v5230 = vand.u32 2147483647, %v5199
    %vm5231 = vcmp.eq.f32.partialorder %v5230, 8.507059e+37
    %v5232 = vand.u32 %v5199, 2147483648
    %v5233 = vor.u32 1.1754944e-38, %v5232
    %v5234 = vsel %vm5231, %v5233, %v5229
    %v5235 = vmul.f32 %v5191, %v5234
    %v5236 = vrcp.pop %v5200
    %v5237 = vmul.f32 %v5200, %v5236
    %v5238 = vsub.f32 1.0, %v5237
    %v5239 = vmul.f32 %v5236, %v5238
    %v5240 = vadd.f32 %v5236, %v5239
    %vm5241 = vweird.f32 %v5200
    %vm5242 = vweird.f32 %v5236
    %vm5243 = vmor %vm5241, %vm5242
    %v5244 = vsel %vm5243, %v5236, %v5240
    %v5245 = vand.u32 2147483647, %v5200
    %vm5246 = vcmp.eq.f32.partialorder %v5245, 8.507059e+37
    %v5247 = vand.u32 %v5200, 2147483648
    %v5248 = vor.u32 1.1754944e-38, %v5247
    %v5249 = vsel %vm5246, %v5248, %v5244
    %v5250 = vmul.f32 %v5192, %v5249
    %v5251 = vrcp.pop %v5201
    %v5252 = vmul.f32 %v5201, %v5251
    %v5253 = vsub.f32 1.0, %v5252
    %v5254 = vmul.f32 %v5251, %v5253
    %v5255 = vadd.f32 %v5251, %v5254
    %vm5256 = vweird.f32 %v5201
    %vm5257 = vweird.f32 %v5251
    %vm5258 = vmor %vm5256, %vm5257
    %v5259 = vsel %vm5258, %v5251, %v5255
    %v5260 = vand.u32 2147483647, %v5201
    %vm5261 = vcmp.eq.f32.partialorder %v5260, 8.507059e+37
    %v5262 = vand.u32 %v5201, 2147483648
    %v5263 = vor.u32 1.1754944e-38, %v5262
    %v5264 = vsel %vm5261, %v5263, %v5259
    %v5265 = vmul.f32 %v5193, %v5264
    %v5266 = vrcp.pop %v5202
    %v5267 = vmul.f32 %v5202, %v5266
    %v5268 = vsub.f32 1.0, %v5267
    %v5269 = vmul.f32 %v5266, %v5268
    %v5270 = vadd.f32 %v5266, %v5269
    %vm5271 = vweird.f32 %v5202
    %vm5272 = vweird.f32 %v5266
    %vm5273 = vmor %vm5271, %vm5272
    %v5274 = vsel %vm5273, %v5266, %v5270
    %v5275 = vand.u32 2147483647, %v5202
    %vm5276 = vcmp.eq.f32.partialorder %v5275, 8.507059e+37
    %v5277 = vand.u32 %v5202, 2147483648
    %v5278 = vor.u32 1.1754944e-38, %v5277
    %v5279 = vsel %vm5276, %v5278, %v5274
    %v5280 = vmul.f32 %v5194, %v5279
    %v5281 = vrcp.pop %v5203
    %v5282 = vmul.f32 %v5203, %v5281
    %v5283 = vsub.f32 1.0, %v5282
    %v5284 = vmul.f32 %v5281, %v5283
    %v5285 = vadd.f32 %v5281, %v5284
    %vm5286 = vweird.f32 %v5203
    %vm5287 = vweird.f32 %v5281
    %vm5288 = vmor %vm5286, %vm5287
    %v5289 = vsel %vm5288, %v5281, %v5285
    %v5290 = vand.u32 2147483647, %v5203
    %vm5291 = vcmp.eq.f32.partialorder %v5290, 8.507059e+37
    %v5292 = vand.u32 %v5203, 2147483648
    %v5293 = vor.u32 1.1754944e-38, %v5292
    %v5294 = vsel %vm5291, %v5293, %v5289
    %v5295 = vmul.f32 %v5195, %v5294
    %v5296 = vrcp.pop %v5204
    %v5297 = vmul.f32 %v5204, %v5296
    %v5298 = vsub.f32 1.0, %v5297
    %v5299 = vmul.f32 %v5296, %v5298
    %v5300 = vadd.f32 %v5296, %v5299
    %vm5301 = vweird.f32 %v5204
    %vm5302 = vweird.f32 %v5296
    %vm5303 = vmor %vm5301, %vm5302
    %v5304 = vsel %vm5303, %v5296, %v5300
    %v5305 = vand.u32 2147483647, %v5204
    %vm5306 = vcmp.eq.f32.partialorder %v5305, 8.507059e+37
    %v5307 = vand.u32 %v5204, 2147483648
    %v5308 = vor.u32 1.1754944e-38, %v5307
    %v5309 = vsel %vm5306, %v5308, %v5304
    %v5310 = vmul.f32 %v5196, %v5309
    %v5311 = vrcp.pop %v5205
    %v5312 = vmul.f32 %v5205, %v5311
    %v5313 = vsub.f32 1.0, %v5312
    %v5314 = vmul.f32 %v5311, %v5313
    %v5315 = vadd.f32 %v5311, %v5314
    %vm5316 = vweird.f32 %v5205
    %vm5317 = vweird.f32 %v5311
    %vm5318 = vmor %vm5316, %vm5317
    %v5319 = vsel %vm5318, %v5311, %v5315
    %v5320 = vand.u32 2147483647, %v5205
    %vm5321 = vcmp.eq.f32.partialorder %v5320, 8.507059e+37
    %v5322 = vand.u32 %v5205, 2147483648
    %v5323 = vor.u32 1.1754944e-38, %v5322
    %v5324 = vsel %vm5321, %v5323, %v5319
    %v5325 = vmul.f32 %v5197, %v5324
    %v5326 = vpow.f32 %v5220, %v162
    %v5327 = vpow.f32 %v5235, %v851
    %v5328 = vpow.f32 %v5250, %v852
    %v5329 = vpow.f32 %v5265, %v853
    %v5330 = vpow.f32 %v5280, %v854
    %v5331 = vpow.f32 %v5295, %v855
    %v5332 = vpow.f32 %v5310, %v856
    %v5333 = vpow.f32 %v5325, %v857
    %v5334 = vmul.f32 %v5326, %v4617
    %v5335 = vmul.f32 %v5327, %v4618
    %v5336 = vmul.f32 %v5328, %v4619
    %v5337 = vmul.f32 %v5329, %v4620
    %v5338 = vmul.f32 %v5330, %v4621
    %v5339 = vmul.f32 %v5331, %v4622
    %v5340 = vmul.f32 %v5332, %v4623
    %v5341 = vmul.f32 %v5333, %v4624
    %v5342 = vsub.f32 1.0, %v5326
    %v5343 = vsub.f32 1.0, %v5327
    %v5344 = vsub.f32 1.0, %v5328
    %v5345 = vsub.f32 1.0, %v5329
    %v5346 = vsub.f32 1.0, %v5330
    %v5347 = vsub.f32 1.0, %v5331
    %v5348 = vsub.f32 1.0, %v5332
    %v5349 = vsub.f32 1.0, %v5333
    %v5350 = vmul.f32 %v5342, %v5138
    %v5351 = vmul.f32 %v5343, %v5139
    %v5352 = vmul.f32 %v5344, %v5140
    %v5353 = vmul.f32 %v5345, %v5141
    %v5354 = vmul.f32 %v5346, %v5142
    %v5355 = vmul.f32 %v5347, %v5143
    %v5356 = vmul.f32 %v5348, %v5144
    %v5357 = vmul.f32 %v5349, %v5145
    %v5358 = vadd.f32 %v5334, %v5350
    %v5359 = vadd.f32 %v5335, %v5351
    %v5360 = vadd.f32 %v5336, %v5352
    %v5361 = vadd.f32 %v5337, %v5353
    %v5362 = vadd.f32 %v5338, %v5354
    %v5363 = vadd.f32 %v5339, %v5355
    %v5364 = vadd.f32 %v5340, %v5356
    %v5365 = vadd.f32 %v5341, %v5357
    %v5366 = vtanh.pop %v5358
    %v5367 = vtanh.pop %v5359
    %v5368 = vtanh.pop %v5360
    %v5369 = vtanh.pop %v5361
    %v5370 = vtanh.pop %v5362
    %v5371 = vtanh.pop %v5363
    %v5372 = vtanh.pop %v5364
    %v5373 = vtanh.pop %v5365
    %v5374 = vmul.f32 %v5016, %v5366
    %v5375 = vmul.f32 %v5031, %v5367
    %v5376 = vmul.f32 %v5046, %v5368
    %v5377 = vmul.f32 %v5061, %v5369
    %v5378 = vmul.f32 %v5076, %v5370
    %v5379 = vmul.f32 %v5091, %v5371
    %v5380 = vmul.f32 %v5106, %v5372
    %v5381 = vmul.f32 %v5121, %v5373
    %5382 = vst [vmem:[#allocation14 + $0x6] sm:$0x1] %v5374
    %5383 = vst [vmem:[#allocation14 + $0xe] sm:$0x1] %v5375
    %5384 = vst [vmem:[#allocation14 + $0x16] sm:$0x1] %v5376
    %5385 = vst [vmem:[#allocation14 + $0x1e] sm:$0x1] %v5377
    %5386 = vst [vmem:[#allocation14 + $0x26] sm:$0x1] %v5378
    %5387 = vst [vmem:[#allocation14 + $0x2e] sm:$0x1] %v5379
    %5388 = vst [vmem:[#allocation14 + $0x36] sm:$0x1] %v5380
    %5389 = vst [vmem:[#allocation14 + $0x3e] sm:$0x1] %v5381
    %s5390 = scalar_lea.vmem [#allocation5], 7
    %v5391 = vld [vmem:[%s5390] ss:$8 sm:$0x7]
    %s5392 = scalar_lea.vmem [#allocation5], 31
    %v5393 = vld [vmem:[%s5392] ss:$8 sm:$0x7]
    %s5394 = scalar_lea.vmem [#allocation5], 55
    %v5395 = vld [vmem:[%s5394] ss:$8 sm:$0x7]
    %s5396 = scalar_lea.vmem [#allocation5], 79
    %v5397 = vld [vmem:[%s5396] ss:$8 sm:$0x7]
    %s5398 = scalar_lea.vmem [#allocation5], 103
    %v5399 = vld [vmem:[%s5398] ss:$8 sm:$0x7]
    %s5400 = scalar_lea.vmem [#allocation5], 127
    %v5401 = vld [vmem:[%s5400] ss:$8 sm:$0x7]
    %s5402 = scalar_lea.vmem [#allocation5], 151
    %v5403 = vld [vmem:[%s5402] ss:$8 sm:$0x7]
    %s5404 = scalar_lea.vmem [#allocation5], 175
    %v5405 = vld [vmem:[%s5404] ss:$8 sm:$0x7]
    %5414 = vst [vmem:[#allocation1] ss:$9 sm:$0xff] %v5374
    %s5415 = scalar_lea.vmem [#allocation1], 1
    %5416 = vst [vmem:[%s5415] ss:$9 sm:$0xff] %v5375
    %s5417 = scalar_lea.vmem [#allocation1], 2
    %5418 = vst [vmem:[%s5417] ss:$9 sm:$0xff] %v5376
    %s5419 = scalar_lea.vmem [#allocation1], 3
    %5420 = vst [vmem:[%s5419] ss:$9 sm:$0xff] %v5377
    %s5421 = scalar_lea.vmem [#allocation1], 4
    %5422 = vst [vmem:[%s5421] ss:$9 sm:$0xff] %v5378
    %s5423 = scalar_lea.vmem [#allocation1], 5
    %5424 = vst [vmem:[%s5423] ss:$9 sm:$0xff] %v5379
    %s5425 = scalar_lea.vmem [#allocation1], 6
    %5426 = vst [vmem:[%s5425] ss:$9 sm:$0xff] %v5380
    %s5427 = scalar_lea.vmem [#allocation1], 7
    %5428 = vst [vmem:[%s5427] ss:$9 sm:$0xff] %v5381
    %v5429 = vld [vmem:[#allocation1] sm:$0xff]
    %5431 = vmatpush.msra.mxu0 %v157
    %5432 = vmatpush.msra.mxu0 %v154
    %5433 = vmatpush.msra.mxu0 %v151
    %5434 = vmatpush.msra.mxu0 %v148
    %5435 = vmatpush.msra.mxu0 %v145
    %5436 = vmatpush.msra.mxu0 %v142
    %5437 = vmatpush.msra.mxu0 %v139
    %5438 = vmatpush.msra.mxu0 %v136
    %5439 = vmatpush.msra.mxu0 %v133
    %5440 = vmatpush.msra.mxu0 %v130
    %5441 = vmatpush.msra.mxu0 %v127
    %5442 = vmatpush.msra.mxu0 %v124
    %5443 = vmatpush.msra.mxu0 %v121
    %5444 = vmatpush.msra.mxu0 %v118
    %5445 = vmatpush.msra.mxu0 %v115
    %5446 = vmatpush.msra.mxu0 %v112
    %5447 = vmatmul.f32.gmra.mxu0 %v5429
    %v5448 = vpop.f32.mrf.mxu0
    %v5449 = vadd.f32 0.0, %v5448
    %5450 = vdwg.mxu0
    %5451 = vmatpush.msra.mxu0 %v158
    %5452 = vmatpush.msra.mxu0 %v155
    %5453 = vmatpush.msra.mxu0 %v152
    %5454 = vmatpush.msra.mxu0 %v149
    %5455 = vmatpush.msra.mxu0 %v146
    %5456 = vmatpush.msra.mxu0 %v143
    %5457 = vmatpush.msra.mxu0 %v140
    %5458 = vmatpush.msra.mxu0 %v137
    %5459 = vmatpush.msra.mxu0 %v134
    %5460 = vmatpush.msra.mxu0 %v131
    %5461 = vmatpush.msra.mxu0 %v128
    %5462 = vmatpush.msra.mxu0 %v125
    %5463 = vmatpush.msra.mxu0 %v122
    %5464 = vmatpush.msra.mxu0 %v119
    %5465 = vmatpush.msra.mxu0 %v116
    %5466 = vmatpush.msra.mxu0 %v113
    %5467 = vmatmul.f32.gmra.mxu0 %v5429
    %v5468 = vpop.f32.mrf.mxu0
    %v5469 = vadd.f32 0.0, %v5468
    %5470 = vdwg.mxu0
    %5471 = vmatpush.msra.mxu0 %v159
    %5472 = vmatpush.msra.mxu0 %v156
    %5473 = vmatpush.msra.mxu0 %v153
    %5474 = vmatpush.msra.mxu0 %v150
    %5475 = vmatpush.msra.mxu0 %v147
    %5476 = vmatpush.msra.mxu0 %v144
    %5477 = vmatpush.msra.mxu0 %v141
    %5478 = vmatpush.msra.mxu0 %v138
    %5479 = vmatpush.msra.mxu0 %v135
    %5480 = vmatpush.msra.mxu0 %v132
    %5481 = vmatpush.msra.mxu0 %v129
    %5482 = vmatpush.msra.mxu0 %v126
    %5483 = vmatpush.msra.mxu0 %v123
    %5484 = vmatpush.msra.mxu0 %v120
    %5485 = vmatpush.msra.mxu0 %v117
    %5486 = vmatpush.msra.mxu0 %v114
    %5487 = vmatmul.f32.gmra.mxu0 %v5429
    %v5488 = vpop.f32.mrf.mxu0
    %v5489 = vadd.f32 0.0, %v5488
    %5490 = vdwg.mxu0
    %v5494 = vrot.slane %v5469, 7
    %v5495 = vrot.slane %v5489, 6
    %v5496 = vsel %vm249, %v5449, %v5494
    %v5497 = vsel %vm251, %v5496, %v5495
    %v5498 = vsel %vm253, %v5449, %v5494
    %v5499 = vsel %vm255, %v5498, %v5495
    %v5500 = vrot.slane %v5499, 1
    %v5501 = vsel %vm258, %v5449, %v5494
    %v5502 = vsel %vm260, %v5501, %v5495
    %v5503 = vrot.slane %v5502, 2
    %v5504 = vsel %vm263, %v5449, %v5494
    %v5505 = vsel %vm265, %v5504, %v5495
    %v5506 = vrot.slane %v5505, 3
    %v5507 = vsel %vm268, %v5449, %v5494
    %v5508 = vsel %vm270, %v5507, %v5495
    %v5509 = vrot.slane %v5508, 4
    %v5510 = vsel %vm273, %v5449, %v5494
    %v5511 = vsel %vm275, %v5510, %v5495
    %v5512 = vrot.slane %v5511, 5
    %v5513 = vsel %vm278, %v5449, %v5494
    %v5514 = vsel %vm280, %v5495, %v5513
    %v5515 = vrot.slane %v5514, 6
    %v5516 = vsel %vm283, %v5494, %v5449
    %v5517 = vsel %vm285, %v5495, %v5516
    %v5518 = vrot.slane %v5517, 7
    %v5527 = vadd.f32 %v5391, %v5497
    %v5528 = vadd.f32 %v5393, %v5500
    %v5529 = vadd.f32 %v5395, %v5503
    %v5530 = vadd.f32 %v5397, %v5506
    %v5531 = vadd.f32 %v5399, %v5509
    %v5532 = vadd.f32 %v5401, %v5512
    %v5533 = vadd.f32 %v5403, %v5515
    %v5534 = vadd.f32 %v5405, %v5518
    %v5535 = vxor.u32 %v5527, 2147483648
    %v5536 = vxor.u32 %v5528, 2147483648
    %v5537 = vxor.u32 %v5529, 2147483648
    %v5538 = vxor.u32 %v5530, 2147483648
    %v5539 = vxor.u32 %v5531, 2147483648
    %v5540 = vxor.u32 %v5532, 2147483648
    %v5541 = vxor.u32 %v5533, 2147483648
    %v5542 = vxor.u32 %v5534, 2147483648
    %v5543 = vmul.f32 %v5535, 1.442695
    %v5544 = vpow.pop %v5543
    %v5545 = vmul.f32 %v5536, 1.442695
    %v5546 = vpow.pop %v5545
    %v5547 = vmul.f32 %v5537, 1.442695
    %v5548 = vpow.pop %v5547
    %v5549 = vmul.f32 %v5538, 1.442695
    %v5550 = vpow.pop %v5549
    %v5551 = vmul.f32 %v5539, 1.442695
    %v5552 = vpow.pop %v5551
    %v5553 = vmul.f32 %v5540, 1.442695
    %v5554 = vpow.pop %v5553
    %v5555 = vmul.f32 %v5541, 1.442695
    %v5556 = vpow.pop %v5555
    %v5557 = vmul.f32 %v5542, 1.442695
    %v5558 = vpow.pop %v5557
    %v5559 = vadd.f32 %v5544, 1.0
    %v5560 = vadd.f32 %v5546, 1.0
    %v5561 = vadd.f32 %v5548, 1.0
    %v5562 = vadd.f32 %v5550, 1.0
    %v5563 = vadd.f32 %v5552, 1.0
    %v5564 = vadd.f32 %v5554, 1.0
    %v5565 = vadd.f32 %v5556, 1.0
    %v5566 = vadd.f32 %v5558, 1.0
    %v5567 = vrcp.pop %v5559
    %v5568 = vmul.f32 %v5559, %v5567
    %v5569 = vsub.f32 1.0, %v5568
    %v5570 = vmul.f32 %v5567, %v5569
    %v5571 = vadd.f32 %v5567, %v5570
    %vm5572 = vweird.f32 %v5559
    %vm5573 = vweird.f32 %v5567
    %vm5574 = vmor %vm5572, %vm5573
    %v5575 = vsel %vm5574, %v5567, %v5571
    %v5576 = vand.u32 2147483647, %v5559
    %vm5577 = vcmp.eq.f32.partialorder %v5576, 8.507059e+37
    %v5578 = vand.u32 %v5559, 2147483648
    %v5579 = vor.u32 1.1754944e-38, %v5578
    %v5580 = vsel %vm5577, %v5579, %v5575
    %v5581 = vmul.f32 1.0, %v5580
    %v5582 = vrcp.pop %v5560
    %v5583 = vmul.f32 %v5560, %v5582
    %v5584 = vsub.f32 1.0, %v5583
    %v5585 = vmul.f32 %v5582, %v5584
    %v5586 = vadd.f32 %v5582, %v5585
    %vm5587 = vweird.f32 %v5560
    %vm5588 = vweird.f32 %v5582
    %vm5589 = vmor %vm5587, %vm5588
    %v5590 = vsel %vm5589, %v5582, %v5586
    %v5591 = vand.u32 2147483647, %v5560
    %vm5592 = vcmp.eq.f32.partialorder %v5591, 8.507059e+37
    %v5593 = vand.u32 %v5560, 2147483648
    %v5594 = vor.u32 1.1754944e-38, %v5593
    %v5595 = vsel %vm5592, %v5594, %v5590
    %v5596 = vmul.f32 1.0, %v5595
    %v5597 = vrcp.pop %v5561
    %v5598 = vmul.f32 %v5561, %v5597
    %v5599 = vsub.f32 1.0, %v5598
    %v5600 = vmul.f32 %v5597, %v5599
    %v5601 = vadd.f32 %v5597, %v5600
    %vm5602 = vweird.f32 %v5561
    %vm5603 = vweird.f32 %v5597
    %vm5604 = vmor %vm5602, %vm5603
    %v5605 = vsel %vm5604, %v5597, %v5601
    %v5606 = vand.u32 2147483647, %v5561
    %vm5607 = vcmp.eq.f32.partialorder %v5606, 8.507059e+37
    %v5608 = vand.u32 %v5561, 2147483648
    %v5609 = vor.u32 1.1754944e-38, %v5608
    %v5610 = vsel %vm5607, %v5609, %v5605
    %v5611 = vmul.f32 1.0, %v5610
    %v5612 = vrcp.pop %v5562
    %v5613 = vmul.f32 %v5562, %v5612
    %v5614 = vsub.f32 1.0, %v5613
    %v5615 = vmul.f32 %v5612, %v5614
    %v5616 = vadd.f32 %v5612, %v5615
    %vm5617 = vweird.f32 %v5562
    %vm5618 = vweird.f32 %v5612
    %vm5619 = vmor %vm5617, %vm5618
    %v5620 = vsel %vm5619, %v5612, %v5616
    %v5621 = vand.u32 2147483647, %v5562
    %vm5622 = vcmp.eq.f32.partialorder %v5621, 8.507059e+37
    %v5623 = vand.u32 %v5562, 2147483648
    %v5624 = vor.u32 1.1754944e-38, %v5623
    %v5625 = vsel %vm5622, %v5624, %v5620
    %v5626 = vmul.f32 1.0, %v5625
    %v5627 = vrcp.pop %v5563
    %v5628 = vmul.f32 %v5563, %v5627
    %v5629 = vsub.f32 1.0, %v5628
    %v5630 = vmul.f32 %v5627, %v5629
    %v5631 = vadd.f32 %v5627, %v5630
    %vm5632 = vweird.f32 %v5563
    %vm5633 = vweird.f32 %v5627
    %vm5634 = vmor %vm5632, %vm5633
    %v5635 = vsel %vm5634, %v5627, %v5631
    %v5636 = vand.u32 2147483647, %v5563
    %vm5637 = vcmp.eq.f32.partialorder %v5636, 8.507059e+37
    %v5638 = vand.u32 %v5563, 2147483648
    %v5639 = vor.u32 1.1754944e-38, %v5638
    %v5640 = vsel %vm5637, %v5639, %v5635
    %v5641 = vmul.f32 1.0, %v5640
    %v5642 = vrcp.pop %v5564
    %v5643 = vmul.f32 %v5564, %v5642
    %v5644 = vsub.f32 1.0, %v5643
    %v5645 = vmul.f32 %v5642, %v5644
    %v5646 = vadd.f32 %v5642, %v5645
    %vm5647 = vweird.f32 %v5564
    %vm5648 = vweird.f32 %v5642
    %vm5649 = vmor %vm5647, %vm5648
    %v5650 = vsel %vm5649, %v5642, %v5646
    %v5651 = vand.u32 2147483647, %v5564
    %vm5652 = vcmp.eq.f32.partialorder %v5651, 8.507059e+37
    %v5653 = vand.u32 %v5564, 2147483648
    %v5654 = vor.u32 1.1754944e-38, %v5653
    %v5655 = vsel %vm5652, %v5654, %v5650
    %v5656 = vmul.f32 1.0, %v5655
    %v5657 = vrcp.pop %v5565
    %v5658 = vmul.f32 %v5565, %v5657
    %v5659 = vsub.f32 1.0, %v5658
    %v5660 = vmul.f32 %v5657, %v5659
    %v5661 = vadd.f32 %v5657, %v5660
    %vm5662 = vweird.f32 %v5565
    %vm5663 = vweird.f32 %v5657
    %vm5664 = vmor %vm5662, %vm5663
    %v5665 = vsel %vm5664, %v5657, %v5661
    %v5666 = vand.u32 2147483647, %v5565
    %vm5667 = vcmp.eq.f32.partialorder %v5666, 8.507059e+37
    %v5668 = vand.u32 %v5565, 2147483648
    %v5669 = vor.u32 1.1754944e-38, %v5668
    %v5670 = vsel %vm5667, %v5669, %v5665
    %v5671 = vmul.f32 1.0, %v5670
    %v5672 = vrcp.pop %v5566
    %v5673 = vmul.f32 %v5566, %v5672
    %v5674 = vsub.f32 1.0, %v5673
    %v5675 = vmul.f32 %v5672, %v5674
    %v5676 = vadd.f32 %v5672, %v5675
    %vm5677 = vweird.f32 %v5566
    %vm5678 = vweird.f32 %v5672
    %vm5679 = vmor %vm5677, %vm5678
    %v5680 = vsel %vm5679, %v5672, %v5676
    %v5681 = vand.u32 2147483647, %v5566
    %vm5682 = vcmp.eq.f32.partialorder %v5681, 8.507059e+37
    %v5683 = vand.u32 %v5566, 2147483648
    %v5684 = vor.u32 1.1754944e-38, %v5683
    %v5685 = vsel %vm5682, %v5684, %v5680
    %v5686 = vmul.f32 1.0, %v5685
    %v5695 = vrot.slane %v5527, 1
    %v5696 = vrot.slane %v5528, 1
    %v5697 = vrot.slane %v5529, 1
    %v5698 = vrot.slane %v5530, 1
    %v5699 = vrot.slane %v5531, 1
    %v5700 = vrot.slane %v5532, 1
    %v5701 = vrot.slane %v5533, 1
    %v5702 = vrot.slane %v5534, 1
    %v5711 = vxor.u32 %v5695, 2147483648
    %v5712 = vxor.u32 %v5696, 2147483648
    %v5713 = vxor.u32 %v5697, 2147483648
    %v5714 = vxor.u32 %v5698, 2147483648
    %v5715 = vxor.u32 %v5699, 2147483648
    %v5716 = vxor.u32 %v5700, 2147483648
    %v5717 = vxor.u32 %v5701, 2147483648
    %v5718 = vxor.u32 %v5702, 2147483648
    %v5719 = vmul.f32 %v5711, 1.442695
    %v5720 = vpow.pop %v5719
    %v5721 = vmul.f32 %v5712, 1.442695
    %v5722 = vpow.pop %v5721
    %v5723 = vmul.f32 %v5713, 1.442695
    %v5724 = vpow.pop %v5723
    %v5725 = vmul.f32 %v5714, 1.442695
    %v5726 = vpow.pop %v5725
    %v5727 = vmul.f32 %v5715, 1.442695
    %v5728 = vpow.pop %v5727
    %v5729 = vmul.f32 %v5716, 1.442695
    %v5730 = vpow.pop %v5729
    %v5731 = vmul.f32 %v5717, 1.442695
    %v5732 = vpow.pop %v5731
    %v5733 = vmul.f32 %v5718, 1.442695
    %v5734 = vpow.pop %v5733
    %v5735 = vadd.f32 %v5720, 1.0
    %v5736 = vadd.f32 %v5722, 1.0
    %v5737 = vadd.f32 %v5724, 1.0
    %v5738 = vadd.f32 %v5726, 1.0
    %v5739 = vadd.f32 %v5728, 1.0
    %v5740 = vadd.f32 %v5730, 1.0
    %v5741 = vadd.f32 %v5732, 1.0
    %v5742 = vadd.f32 %v5734, 1.0
    %v5743 = vrcp.pop %v5735
    %v5744 = vmul.f32 %v5735, %v5743
    %v5745 = vsub.f32 1.0, %v5744
    %v5746 = vmul.f32 %v5743, %v5745
    %v5747 = vadd.f32 %v5743, %v5746
    %vm5748 = vweird.f32 %v5735
    %vm5749 = vweird.f32 %v5743
    %vm5750 = vmor %vm5748, %vm5749
    %v5751 = vsel %vm5750, %v5743, %v5747
    %v5752 = vand.u32 2147483647, %v5735
    %vm5753 = vcmp.eq.f32.partialorder %v5752, 8.507059e+37
    %v5754 = vand.u32 %v5735, 2147483648
    %v5755 = vor.u32 1.1754944e-38, %v5754
    %v5756 = vsel %vm5753, %v5755, %v5751
    %v5757 = vmul.f32 1.0, %v5756
    %v5758 = vrcp.pop %v5736
    %v5759 = vmul.f32 %v5736, %v5758
    %v5760 = vsub.f32 1.0, %v5759
    %v5761 = vmul.f32 %v5758, %v5760
    %v5762 = vadd.f32 %v5758, %v5761
    %vm5763 = vweird.f32 %v5736
    %vm5764 = vweird.f32 %v5758
    %vm5765 = vmor %vm5763, %vm5764
    %v5766 = vsel %vm5765, %v5758, %v5762
    %v5767 = vand.u32 2147483647, %v5736
    %vm5768 = vcmp.eq.f32.partialorder %v5767, 8.507059e+37
    %v5769 = vand.u32 %v5736, 2147483648
    %v5770 = vor.u32 1.1754944e-38, %v5769
    %v5771 = vsel %vm5768, %v5770, %v5766
    %v5772 = vmul.f32 1.0, %v5771
    %v5773 = vrcp.pop %v5737
    %v5774 = vmul.f32 %v5737, %v5773
    %v5775 = vsub.f32 1.0, %v5774
    %v5776 = vmul.f32 %v5773, %v5775
    %v5777 = vadd.f32 %v5773, %v5776
    %vm5778 = vweird.f32 %v5737
    %vm5779 = vweird.f32 %v5773
    %vm5780 = vmor %vm5778, %vm5779
    %v5781 = vsel %vm5780, %v5773, %v5777
    %v5782 = vand.u32 2147483647, %v5737
    %vm5783 = vcmp.eq.f32.partialorder %v5782, 8.507059e+37
    %v5784 = vand.u32 %v5737, 2147483648
    %v5785 = vor.u32 1.1754944e-38, %v5784
    %v5786 = vsel %vm5783, %v5785, %v5781
    %v5787 = vmul.f32 1.0, %v5786
    %v5788 = vrcp.pop %v5738
    %v5789 = vmul.f32 %v5738, %v5788
    %v5790 = vsub.f32 1.0, %v5789
    %v5791 = vmul.f32 %v5788, %v5790
    %v5792 = vadd.f32 %v5788, %v5791
    %vm5793 = vweird.f32 %v5738
    %vm5794 = vweird.f32 %v5788
    %vm5795 = vmor %vm5793, %vm5794
    %v5796 = vsel %vm5795, %v5788, %v5792
    %v5797 = vand.u32 2147483647, %v5738
    %vm5798 = vcmp.eq.f32.partialorder %v5797, 8.507059e+37
    %v5799 = vand.u32 %v5738, 2147483648
    %v5800 = vor.u32 1.1754944e-38, %v5799
    %v5801 = vsel %vm5798, %v5800, %v5796
    %v5802 = vmul.f32 1.0, %v5801
    %v5803 = vrcp.pop %v5739
    %v5804 = vmul.f32 %v5739, %v5803
    %v5805 = vsub.f32 1.0, %v5804
    %v5806 = vmul.f32 %v5803, %v5805
    %v5807 = vadd.f32 %v5803, %v5806
    %vm5808 = vweird.f32 %v5739
    %vm5809 = vweird.f32 %v5803
    %vm5810 = vmor %vm5808, %vm5809
    %v5811 = vsel %vm5810, %v5803, %v5807
    %v5812 = vand.u32 2147483647, %v5739
    %vm5813 = vcmp.eq.f32.partialorder %v5812, 8.507059e+37
    %v5814 = vand.u32 %v5739, 2147483648
    %v5815 = vor.u32 1.1754944e-38, %v5814
    %v5816 = vsel %vm5813, %v5815, %v5811
    %v5817 = vmul.f32 1.0, %v5816
    %v5818 = vrcp.pop %v5740
    %v5819 = vmul.f32 %v5740, %v5818
    %v5820 = vsub.f32 1.0, %v5819
    %v5821 = vmul.f32 %v5818, %v5820
    %v5822 = vadd.f32 %v5818, %v5821
    %vm5823 = vweird.f32 %v5740
    %vm5824 = vweird.f32 %v5818
    %vm5825 = vmor %vm5823, %vm5824
    %v5826 = vsel %vm5825, %v5818, %v5822
    %v5827 = vand.u32 2147483647, %v5740
    %vm5828 = vcmp.eq.f32.partialorder %v5827, 8.507059e+37
    %v5829 = vand.u32 %v5740, 2147483648
    %v5830 = vor.u32 1.1754944e-38, %v5829
    %v5831 = vsel %vm5828, %v5830, %v5826
    %v5832 = vmul.f32 1.0, %v5831
    %v5833 = vrcp.pop %v5741
    %v5834 = vmul.f32 %v5741, %v5833
    %v5835 = vsub.f32 1.0, %v5834
    %v5836 = vmul.f32 %v5833, %v5835
    %v5837 = vadd.f32 %v5833, %v5836
    %vm5838 = vweird.f32 %v5741
    %vm5839 = vweird.f32 %v5833
    %vm5840 = vmor %vm5838, %vm5839
    %v5841 = vsel %vm5840, %v5833, %v5837
    %v5842 = vand.u32 2147483647, %v5741
    %vm5843 = vcmp.eq.f32.partialorder %v5842, 8.507059e+37
    %v5844 = vand.u32 %v5741, 2147483648
    %v5845 = vor.u32 1.1754944e-38, %v5844
    %v5846 = vsel %vm5843, %v5845, %v5841
    %v5847 = vmul.f32 1.0, %v5846
    %v5848 = vrcp.pop %v5742
    %v5849 = vmul.f32 %v5742, %v5848
    %v5850 = vsub.f32 1.0, %v5849
    %v5851 = vmul.f32 %v5848, %v5850
    %v5852 = vadd.f32 %v5848, %v5851
    %vm5853 = vweird.f32 %v5742
    %vm5854 = vweird.f32 %v5848
    %vm5855 = vmor %vm5853, %vm5854
    %v5856 = vsel %vm5855, %v5848, %v5852
    %v5857 = vand.u32 2147483647, %v5742
    %vm5858 = vcmp.eq.f32.partialorder %v5857, 8.507059e+37
    %v5859 = vand.u32 %v5742, 2147483648
    %v5860 = vor.u32 1.1754944e-38, %v5859
    %v5861 = vsel %vm5858, %v5860, %v5856
    %v5862 = vmul.f32 1.0, %v5861
    %v5863 = vrot.slane %v5527, 2
    %v5864 = vrot.slane %v5528, 2
    %v5865 = vrot.slane %v5529, 2
    %v5866 = vrot.slane %v5530, 2
    %v5867 = vrot.slane %v5531, 2
    %v5868 = vrot.slane %v5532, 2
    %v5869 = vrot.slane %v5533, 2
    %v5870 = vrot.slane %v5534, 2
    %v5879 = vtanh.pop %v5863
    %v5880 = vtanh.pop %v5864
    %v5881 = vtanh.pop %v5865
    %v5882 = vtanh.pop %v5866
    %v5883 = vtanh.pop %v5867
    %v5884 = vtanh.pop %v5868
    %v5885 = vtanh.pop %v5869
    %v5886 = vtanh.pop %v5870
    %s5887 = sadd.f32 %s165, 7.0
    %s5888 = ssub.f32 %s5887, 0.001
    %v5889 = vstv %s5888
    %v5890 = vmul.f32 %v5581, %v5889
    %v5891 = vmul.f32 %v5596, %v5889
    %v5892 = vmul.f32 %v5611, %v5889
    %v5893 = vmul.f32 %v5626, %v5889
    %v5894 = vmul.f32 %v5641, %v5889
    %v5895 = vmul.f32 %v5656, %v5889
    %v5896 = vmul.f32 %v5671, %v5889
    %v5897 = vmul.f32 %v5686, %v5889
    %v5898 = vsub.f32 1.0, %v5581
    %v5899 = vsub.f32 1.0, %v5596
    %v5900 = vsub.f32 1.0, %v5611
    %v5901 = vsub.f32 1.0, %v5626
    %v5902 = vsub.f32 1.0, %v5641
    %v5903 = vsub.f32 1.0, %v5656
    %v5904 = vsub.f32 1.0, %v5671
    %v5905 = vsub.f32 1.0, %v5686
    %v5906 = vmul.f32 %v5898, %v5173
    %v5907 = vmul.f32 %v5899, %v5174
    %v5908 = vmul.f32 %v5900, %v5175
    %v5909 = vmul.f32 %v5901, %v5176
    %v5910 = vmul.f32 %v5902, %v5177
    %v5911 = vmul.f32 %v5903, %v5178
    %v5912 = vmul.f32 %v5904, %v5179
    %v5913 = vmul.f32 %v5905, %v5180
    %v5914 = vadd.f32 %v5890, %v5906
    %v5915 = vadd.f32 %v5891, %v5907
    %v5916 = vadd.f32 %v5892, %v5908
    %v5917 = vadd.f32 %v5893, %v5909
    %v5918 = vadd.f32 %v5894, %v5910
    %v5919 = vadd.f32 %v5895, %v5911
    %v5920 = vadd.f32 %v5896, %v5912
    %v5921 = vadd.f32 %v5897, %v5913
    %v5922 = vstv %s5887
    %v5923 = vsub.f32 %v5922, %v5914
    %v5924 = vsub.f32 %v5922, %v5915
    %v5925 = vsub.f32 %v5922, %v5916
    %v5926 = vsub.f32 %v5922, %v5917
    %v5927 = vsub.f32 %v5922, %v5918
    %v5928 = vsub.f32 %v5922, %v5919
    %v5929 = vsub.f32 %v5922, %v5920
    %v5930 = vsub.f32 %v5922, %v5921
    %v5931 = vadd.f32 %v5923, 0.001
    %v5932 = vadd.f32 %v5924, 0.001
    %v5933 = vadd.f32 %v5925, 0.001
    %v5934 = vadd.f32 %v5926, 0.001
    %v5935 = vadd.f32 %v5927, 0.001
    %v5936 = vadd.f32 %v5928, 0.001
    %v5937 = vadd.f32 %v5929, 0.001
    %v5938 = vadd.f32 %v5930, 0.001
    %v5939 = vadd.f32 %v5923, 1.0
    %v5940 = vadd.f32 %v5924, 1.0
    %v5941 = vadd.f32 %v5925, 1.0
    %v5942 = vadd.f32 %v5926, 1.0
    %v5943 = vadd.f32 %v5927, 1.0
    %v5944 = vadd.f32 %v5928, 1.0
    %v5945 = vadd.f32 %v5929, 1.0
    %v5946 = vadd.f32 %v5930, 1.0
    %v5947 = vrcp.pop %v5939
    %v5948 = vmul.f32 %v5939, %v5947
    %v5949 = vsub.f32 1.0, %v5948
    %v5950 = vmul.f32 %v5947, %v5949
    %v5951 = vadd.f32 %v5947, %v5950
    %vm5952 = vweird.f32 %v5939
    %vm5953 = vweird.f32 %v5947
    %vm5954 = vmor %vm5952, %vm5953
    %v5955 = vsel %vm5954, %v5947, %v5951
    %v5956 = vand.u32 2147483647, %v5939
    %vm5957 = vcmp.eq.f32.partialorder %v5956, 8.507059e+37
    %v5958 = vand.u32 %v5939, 2147483648
    %v5959 = vor.u32 1.1754944e-38, %v5958
    %v5960 = vsel %vm5957, %v5959, %v5955
    %v5961 = vmul.f32 %v5931, %v5960
    %v5962 = vrcp.pop %v5940
    %v5963 = vmul.f32 %v5940, %v5962
    %v5964 = vsub.f32 1.0, %v5963
    %v5965 = vmul.f32 %v5962, %v5964
    %v5966 = vadd.f32 %v5962, %v5965
    %vm5967 = vweird.f32 %v5940
    %vm5968 = vweird.f32 %v5962
    %vm5969 = vmor %vm5967, %vm5968
    %v5970 = vsel %vm5969, %v5962, %v5966
    %v5971 = vand.u32 2147483647, %v5940
    %vm5972 = vcmp.eq.f32.partialorder %v5971, 8.507059e+37
    %v5973 = vand.u32 %v5940, 2147483648
    %v5974 = vor.u32 1.1754944e-38, %v5973
    %v5975 = vsel %vm5972, %v5974, %v5970
    %v5976 = vmul.f32 %v5932, %v5975
    %v5977 = vrcp.pop %v5941
    %v5978 = vmul.f32 %v5941, %v5977
    %v5979 = vsub.f32 1.0, %v5978
    %v5980 = vmul.f32 %v5977, %v5979
    %v5981 = vadd.f32 %v5977, %v5980
    %vm5982 = vweird.f32 %v5941
    %vm5983 = vweird.f32 %v5977
    %vm5984 = vmor %vm5982, %vm5983
    %v5985 = vsel %vm5984, %v5977, %v5981
    %v5986 = vand.u32 2147483647, %v5941
    %vm5987 = vcmp.eq.f32.partialorder %v5986, 8.507059e+37
    %v5988 = vand.u32 %v5941, 2147483648
    %v5989 = vor.u32 1.1754944e-38, %v5988
    %v5990 = vsel %vm5987, %v5989, %v5985
    %v5991 = vmul.f32 %v5933, %v5990
    %v5992 = vrcp.pop %v5942
    %v5993 = vmul.f32 %v5942, %v5992
    %v5994 = vsub.f32 1.0, %v5993
    %v5995 = vmul.f32 %v5992, %v5994
    %v5996 = vadd.f32 %v5992, %v5995
    %vm5997 = vweird.f32 %v5942
    %vm5998 = vweird.f32 %v5992
    %vm5999 = vmor %vm5997, %vm5998
    %v6000 = vsel %vm5999, %v5992, %v5996
    %v6001 = vand.u32 2147483647, %v5942
    %vm6002 = vcmp.eq.f32.partialorder %v6001, 8.507059e+37
    %v6003 = vand.u32 %v5942, 2147483648
    %v6004 = vor.u32 1.1754944e-38, %v6003
    %v6005 = vsel %vm6002, %v6004, %v6000
    %v6006 = vmul.f32 %v5934, %v6005
    %v6007 = vrcp.pop %v5943
    %v6008 = vmul.f32 %v5943, %v6007
    %v6009 = vsub.f32 1.0, %v6008
    %v6010 = vmul.f32 %v6007, %v6009
    %v6011 = vadd.f32 %v6007, %v6010
    %vm6012 = vweird.f32 %v5943
    %vm6013 = vweird.f32 %v6007
    %vm6014 = vmor %vm6012, %vm6013
    %v6015 = vsel %vm6014, %v6007, %v6011
    %v6016 = vand.u32 2147483647, %v5943
    %vm6017 = vcmp.eq.f32.partialorder %v6016, 8.507059e+37
    %v6018 = vand.u32 %v5943, 2147483648
    %v6019 = vor.u32 1.1754944e-38, %v6018
    %v6020 = vsel %vm6017, %v6019, %v6015
    %v6021 = vmul.f32 %v5935, %v6020
    %v6022 = vrcp.pop %v5944
    %v6023 = vmul.f32 %v5944, %v6022
    %v6024 = vsub.f32 1.0, %v6023
    %v6025 = vmul.f32 %v6022, %v6024
    %v6026 = vadd.f32 %v6022, %v6025
    %vm6027 = vweird.f32 %v5944
    %vm6028 = vweird.f32 %v6022
    %vm6029 = vmor %vm6027, %vm6028
    %v6030 = vsel %vm6029, %v6022, %v6026
    %v6031 = vand.u32 2147483647, %v5944
    %vm6032 = vcmp.eq.f32.partialorder %v6031, 8.507059e+37
    %v6033 = vand.u32 %v5944, 2147483648
    %v6034 = vor.u32 1.1754944e-38, %v6033
    %v6035 = vsel %vm6032, %v6034, %v6030
    %v6036 = vmul.f32 %v5936, %v6035
    %v6037 = vrcp.pop %v5945
    %v6038 = vmul.f32 %v5945, %v6037
    %v6039 = vsub.f32 1.0, %v6038
    %v6040 = vmul.f32 %v6037, %v6039
    %v6041 = vadd.f32 %v6037, %v6040
    %vm6042 = vweird.f32 %v5945
    %vm6043 = vweird.f32 %v6037
    %vm6044 = vmor %vm6042, %vm6043
    %v6045 = vsel %vm6044, %v6037, %v6041
    %v6046 = vand.u32 2147483647, %v5945
    %vm6047 = vcmp.eq.f32.partialorder %v6046, 8.507059e+37
    %v6048 = vand.u32 %v5945, 2147483648
    %v6049 = vor.u32 1.1754944e-38, %v6048
    %v6050 = vsel %vm6047, %v6049, %v6045
    %v6051 = vmul.f32 %v5937, %v6050
    %v6052 = vrcp.pop %v5946
    %v6053 = vmul.f32 %v5946, %v6052
    %v6054 = vsub.f32 1.0, %v6053
    %v6055 = vmul.f32 %v6052, %v6054
    %v6056 = vadd.f32 %v6052, %v6055
    %vm6057 = vweird.f32 %v5946
    %vm6058 = vweird.f32 %v6052
    %vm6059 = vmor %vm6057, %vm6058
    %v6060 = vsel %vm6059, %v6052, %v6056
    %v6061 = vand.u32 2147483647, %v5946
    %vm6062 = vcmp.eq.f32.partialorder %v6061, 8.507059e+37
    %v6063 = vand.u32 %v5946, 2147483648
    %v6064 = vor.u32 1.1754944e-38, %v6063
    %v6065 = vsel %vm6062, %v6064, %v6060
    %v6066 = vmul.f32 %v5938, %v6065
    %v6067 = vpow.f32 %v5961, %v162
    %v6068 = vpow.f32 %v5976, %v851
    %v6069 = vpow.f32 %v5991, %v852
    %v6070 = vpow.f32 %v6006, %v853
    %v6071 = vpow.f32 %v6021, %v854
    %v6072 = vpow.f32 %v6036, %v855
    %v6073 = vpow.f32 %v6051, %v856
    %v6074 = vpow.f32 %v6066, %v857
    %v6075 = vmul.f32 %v6067, %v5358
    %v6076 = vmul.f32 %v6068, %v5359
    %v6077 = vmul.f32 %v6069, %v5360
    %v6078 = vmul.f32 %v6070, %v5361
    %v6079 = vmul.f32 %v6071, %v5362
    %v6080 = vmul.f32 %v6072, %v5363
    %v6081 = vmul.f32 %v6073, %v5364
    %v6082 = vmul.f32 %v6074, %v5365
    %v6083 = vsub.f32 1.0, %v6067
    %v6084 = vsub.f32 1.0, %v6068
    %v6085 = vsub.f32 1.0, %v6069
    %v6086 = vsub.f32 1.0, %v6070
    %v6087 = vsub.f32 1.0, %v6071
    %v6088 = vsub.f32 1.0, %v6072
    %v6089 = vsub.f32 1.0, %v6073
    %v6090 = vsub.f32 1.0, %v6074
    %v6091 = vmul.f32 %v6083, %v5879
    %v6092 = vmul.f32 %v6084, %v5880
    %v6093 = vmul.f32 %v6085, %v5881
    %v6094 = vmul.f32 %v6086, %v5882
    %v6095 = vmul.f32 %v6087, %v5883
    %v6096 = vmul.f32 %v6088, %v5884
    %v6097 = vmul.f32 %v6089, %v5885
    %v6098 = vmul.f32 %v6090, %v5886
    %v6099 = vadd.f32 %v6075, %v6091
    %v6100 = vadd.f32 %v6076, %v6092
    %v6101 = vadd.f32 %v6077, %v6093
    %v6102 = vadd.f32 %v6078, %v6094
    %v6103 = vadd.f32 %v6079, %v6095
    %v6104 = vadd.f32 %v6080, %v6096
    %v6105 = vadd.f32 %v6081, %v6097
    %v6106 = vadd.f32 %v6082, %v6098
    %v6107 = vtanh.pop %v6099
    %v6108 = vtanh.pop %v6100
    %v6109 = vtanh.pop %v6101
    %v6110 = vtanh.pop %v6102
    %v6111 = vtanh.pop %v6103
    %v6112 = vtanh.pop %v6104
    %v6113 = vtanh.pop %v6105
    %v6114 = vtanh.pop %v6106
    %v6115 = vmul.f32 %v5757, %v6107
    %v6116 = vmul.f32 %v5772, %v6108
    %v6117 = vmul.f32 %v5787, %v6109
    %v6118 = vmul.f32 %v5802, %v6110
    %v6119 = vmul.f32 %v5817, %v6111
    %v6120 = vmul.f32 %v5832, %v6112
    %v6121 = vmul.f32 %v5847, %v6113
    %v6122 = vmul.f32 %v5862, %v6114
    %6123 = vst [vmem:[#allocation14 + $0x7] sm:$0x1] %v6115
    %6124 = vst [vmem:[#allocation14 + $0xf] sm:$0x1] %v6116
    %6125 = vst [vmem:[#allocation14 + $0x17] sm:$0x1] %v6117
    %6126 = vst [vmem:[#allocation14 + $0x1f] sm:$0x1] %v6118
    %6127 = vst [vmem:[#allocation14 + $0x27] sm:$0x1] %v6119
    %6128 = vst [vmem:[#allocation14 + $0x2f] sm:$0x1] %v6120
    %6129 = vst [vmem:[#allocation14 + $0x37] sm:$0x1] %v6121
    %6130 = vst [vmem:[#allocation14 + $0x3f] sm:$0x1] %v6122
    %6139 = vst [vmem:[#allocation1] ss:$9 sm:$0xff] %v6115
    %s6140 = scalar_lea.vmem [#allocation1], 1
    %6141 = vst [vmem:[%s6140] ss:$9 sm:$0xff] %v6116
    %s6142 = scalar_lea.vmem [#allocation1], 2
    %6143 = vst [vmem:[%s6142] ss:$9 sm:$0xff] %v6117
    %s6144 = scalar_lea.vmem [#allocation1], 3
    %6145 = vst [vmem:[%s6144] ss:$9 sm:$0xff] %v6118
    %s6146 = scalar_lea.vmem [#allocation1], 4
    %6147 = vst [vmem:[%s6146] ss:$9 sm:$0xff] %v6119
    %s6148 = scalar_lea.vmem [#allocation1], 5
    %6149 = vst [vmem:[%s6148] ss:$9 sm:$0xff] %v6120
    %s6150 = scalar_lea.vmem [#allocation1], 6
    %6151 = vst [vmem:[%s6150] ss:$9 sm:$0xff] %v6121
    %s6152 = scalar_lea.vmem [#allocation1], 7
    %6153 = vst [vmem:[%s6152] ss:$9 sm:$0xff] %v6122
    %v6154 = vld [vmem:[#allocation1] sm:$0xff]
    %6156 = vst [vmem:[#allocation2] sm:$0xff] %v6154
    %6165 = vst [vmem:[#allocation1] ss:$9 sm:$0xff] %v6099
    %s6166 = scalar_lea.vmem [#allocation1], 1
    %6167 = vst [vmem:[%s6166] ss:$9 sm:$0xff] %v6100
    %s6168 = scalar_lea.vmem [#allocation1], 2
    %6169 = vst [vmem:[%s6168] ss:$9 sm:$0xff] %v6101
    %s6170 = scalar_lea.vmem [#allocation1], 3
    %6171 = vst [vmem:[%s6170] ss:$9 sm:$0xff] %v6102
    %s6172 = scalar_lea.vmem [#allocation1], 4
    %6173 = vst [vmem:[%s6172] ss:$9 sm:$0xff] %v6103
    %s6174 = scalar_lea.vmem [#allocation1], 5
    %6175 = vst [vmem:[%s6174] ss:$9 sm:$0xff] %v6104
    %s6176 = scalar_lea.vmem [#allocation1], 6
    %6177 = vst [vmem:[%s6176] ss:$9 sm:$0xff] %v6105
    %s6178 = scalar_lea.vmem [#allocation1], 7
    %6179 = vst [vmem:[%s6178] ss:$9 sm:$0xff] %v6106
    %v6180 = vld [vmem:[#allocation1] sm:$0xff]
    %6182 = vst [vmem:[#allocation3] sm:$0xff] %v6180
    %6191 = vst [vmem:[#allocation1] ss:$9 sm:$0xff] %v5914
    %s6192 = scalar_lea.vmem [#allocation1], 1
    %6193 = vst [vmem:[%s6192] ss:$9 sm:$0xff] %v5915
    %s6194 = scalar_lea.vmem [#allocation1], 2
    %6195 = vst [vmem:[%s6194] ss:$9 sm:$0xff] %v5916
    %s6196 = scalar_lea.vmem [#allocation1], 3
    %6197 = vst [vmem:[%s6196] ss:$9 sm:$0xff] %v5917
    %s6198 = scalar_lea.vmem [#allocation1], 4
    %6199 = vst [vmem:[%s6198] ss:$9 sm:$0xff] %v5918
    %s6200 = scalar_lea.vmem [#allocation1], 5
    %6201 = vst [vmem:[%s6200] ss:$9 sm:$0xff] %v5919
    %s6202 = scalar_lea.vmem [#allocation1], 6
    %6203 = vst [vmem:[%s6202] ss:$9 sm:$0xff] %v5920
    %s6204 = scalar_lea.vmem [#allocation1], 7
    %6205 = vst [vmem:[%s6204] ss:$9 sm:$0xff] %v5921
    %v6206 = vld [vmem:[#allocation1] sm:$0xff]
    %6208 = vst [vmem:[#allocation4] sm:$0xff] %v6206
    // Predicated region
    $region50: #{tpu_custom_call.1} parent=1 // pred_check
      %p6209 = pneg %p102
    $region51: #{tpu_custom_call.1} parent=1 // pred_check_branch
      %6211 = sbr.rel (%p6209) target = $region53
    $region52: #{tpu_custom_call.1} parent=1 // pred_region
      %6212 = vst [vmem:[#allocation1] ss:$9 sm:$0xff] %v6115
      %s6213 = scalar_lea.vmem [#allocation1], 1
      %6214 = vst [vmem:[%s6213] ss:$9 sm:$0xff] %v6116
      %s6215 = scalar_lea.vmem [#allocation1], 2
      %6216 = vst [vmem:[%s6215] ss:$9 sm:$0xff] %v6117
      %s6217 = scalar_lea.vmem [#allocation1], 3
      %6218 = vst [vmem:[%s6217] ss:$9 sm:$0xff] %v6118
      %s6219 = scalar_lea.vmem [#allocation1], 4
      %6220 = vst [vmem:[%s6219] ss:$9 sm:$0xff] %v6119
      %s6221 = scalar_lea.vmem [#allocation1], 5
      %6222 = vst [vmem:[%s6221] ss:$9 sm:$0xff] %v6120
      %s6223 = scalar_lea.vmem [#allocation1], 6
      %6224 = vst [vmem:[%s6223] ss:$9 sm:$0xff] %v6121
      %s6225 = scalar_lea.vmem [#allocation1], 7
      %6226 = vst [vmem:[%s6225] ss:$9 sm:$0xff] %v6122
      %v6227 = vld [vmem:[#allocation1] sm:$0xff]
      %6229 = vst [vmem:[#allocation15] sm:$0xff] %v6227
      %6230 = vst [vmem:[#allocation1] ss:$9 sm:$0xff] %v6099
      %s6231 = scalar_lea.vmem [#allocation1], 1
      %6232 = vst [vmem:[%s6231] ss:$9 sm:$0xff] %v6100
      %s6233 = scalar_lea.vmem [#allocation1], 2
      %6234 = vst [vmem:[%s6233] ss:$9 sm:$0xff] %v6101
      %s6235 = scalar_lea.vmem [#allocation1], 3
      %6236 = vst [vmem:[%s6235] ss:$9 sm:$0xff] %v6102
      %s6237 = scalar_lea.vmem [#allocation1], 4
      %6238 = vst [vmem:[%s6237] ss:$9 sm:$0xff] %v6103
      %s6239 = scalar_lea.vmem [#allocation1], 5
      %6240 = vst [vmem:[%s6239] ss:$9 sm:$0xff] %v6104
      %s6241 = scalar_lea.vmem [#allocation1], 6
      %6242 = vst [vmem:[%s6241] ss:$9 sm:$0xff] %v6105
      %s6243 = scalar_lea.vmem [#allocation1], 7
      %6244 = vst [vmem:[%s6243] ss:$9 sm:$0xff] %v6106
      %v6245 = vld [vmem:[#allocation1] sm:$0xff]
      %6247 = vst [vmem:[#allocation17] sm:$0xff] %v6245
      %6248 = vst [vmem:[#allocation1] ss:$9 sm:$0xff] %v5914
      %s6249 = scalar_lea.vmem [#allocation1], 1
      %6250 = vst [vmem:[%s6249] ss:$9 sm:$0xff] %v5915
      %s6251 = scalar_lea.vmem [#allocation1], 2
      %6252 = vst [vmem:[%s6251] ss:$9 sm:$0xff] %v5916
      %s6253 = scalar_lea.vmem [#allocation1], 3
      %6254 = vst [vmem:[%s6253] ss:$9 sm:$0xff] %v5917
      %s6255 = scalar_lea.vmem [#allocation1], 4
      %6256 = vst [vmem:[%s6255] ss:$9 sm:$0xff] %v5918
      %s6257 = scalar_lea.vmem [#allocation1], 5
      %6258 = vst [vmem:[%s6257] ss:$9 sm:$0xff] %v5919
      %s6259 = scalar_lea.vmem [#allocation1], 6
      %6260 = vst [vmem:[%s6259] ss:$9 sm:$0xff] %v5920
      %s6261 = scalar_lea.vmem [#allocation1], 7
      %6262 = vst [vmem:[%s6261] ss:$9 sm:$0xff] %v5921
      %v6263 = vld [vmem:[#allocation1] sm:$0xff]
      %6265 = vst [vmem:[#allocation18] sm:$0xff] %v6263
    $region53: #{tpu_custom_call.1} parent=1 // pred_fallthru
      _
    // Predicated region
    $region54: #{tpu_custom_call.1} parent=1 // pred_check
      _
    $region55: #{tpu_custom_call.1} parent=1 // pred_check_branch
      %6267 = sbr.rel (0) target = $region57
    $region56: #{tpu_custom_call.1} parent=1 // pred_region
      %6269 = vsyncadd [#allocation7], 0
      %s6270 = sshll.u32 [#allocation14], 4
      %s6271 = int_to_ptr.vmem [resolvable:$true] %s6270
      %s6272 = sshll.u32 %s6, 4
      %s6273 = int_to_ptr.hbm [resolvable:$true] %s6272
      %6278 = dma.vmem_to_hbm [thread:$0]  %s6271, 1024, %s6273, [#allocation7], 128, 128, 8
    $region57: #{tpu_custom_call.1} parent=1 // pred_fallthru
      _
    // Predicated region
    $region58: #{tpu_custom_call.1} parent=1 // pred_check
      _
    $region59: #{tpu_custom_call.1} parent=1 // pred_check_branch
      %6280 = sbr.rel (0) target = $region61
    $region60: #{tpu_custom_call.1} parent=1 // pred_region
      %6282 = vsyncadd [#allocation16], 0
      %s6284 = sshll.u32 [#allocation15], 4
      %s6285 = int_to_ptr.vmem [resolvable:$true] %s6284
      %s6286 = sshll.u32 %s7, 4
      %s6287 = int_to_ptr.hbm [resolvable:$true] %s6286
      %6289 = dma.vmem_to_hbm [thread:$0]  %s6285, 128, %s6287, [#allocation16]
    $region61: #{tpu_custom_call.1} parent=1 // pred_fallthru
      _
    // Predicated region
    $region62: #{tpu_custom_call.1} parent=1 // pred_check
      _
    $region63: #{tpu_custom_call.1} parent=1 // pred_check_branch
      %6291 = sbr.rel (0) target = $region65
    $region64: #{tpu_custom_call.1} parent=1 // pred_region
      %6293 = vsyncadd [#allocation16], 0
      %s6295 = sshll.u32 [#allocation17], 4
      %s6296 = int_to_ptr.vmem [resolvable:$true] %s6295
      %s6297 = sshll.u32 %s8, 4
      %s6298 = int_to_ptr.hbm [resolvable:$true] %s6297
      %6300 = dma.vmem_to_hbm [thread:$0]  %s6296, 128, %s6298, [#allocation16]
    $region65: #{tpu_custom_call.1} parent=1 // pred_fallthru
      _
    // Predicated region
    $region66: #{tpu_custom_call.1} parent=1 // pred_check
      _
    $region67: #{tpu_custom_call.1} parent=1 // pred_check_branch
      %6302 = sbr.rel (0) target = $region69
    $region68: #{tpu_custom_call.1} parent=1 // pred_region
      %6304 = vsyncadd [#allocation19], 0
      %s6306 = sshll.u32 [#allocation18], 4
      %s6307 = int_to_ptr.vmem [resolvable:$true] %s6306
      %s6308 = sshll.u32 %s9, 4
      %s6309 = int_to_ptr.hbm [resolvable:$true] %s6308
      %6311 = dma.vmem_to_hbm [thread:$0]  %s6307, 128, %s6309, [#allocation19]
    $region69: #{tpu_custom_call.1} parent=1 // pred_fallthru
      _
    // Predicated region
    $region70: #{tpu_custom_call.1} parent=1 // pred_check
      _
    $region71: #{tpu_custom_call.1} parent=1 // pred_check_branch
      %6313 = sbr.rel (0) target = $region73
    $region72: #{tpu_custom_call.1} parent=1 // pred_region
      %6315 = dma.done [#allocation7], 1024
    $region73: #{tpu_custom_call.1} parent=1 // pred_fallthru
      _
    // Predicated region
    $region74: #{tpu_custom_call.1} parent=1 // pred_check
      _
    $region75: #{tpu_custom_call.1} parent=1 // pred_check_branch
      %6317 = sbr.rel (0) target = $region77
    $region76: #{tpu_custom_call.1} parent=1 // pred_region
      %6319 = dma.done [#allocation16], 128
    $region77: #{tpu_custom_call.1} parent=1 // pred_fallthru
      _
    // Predicated region
    $region78: #{tpu_custom_call.1} parent=1 // pred_check
      _
    $region79: #{tpu_custom_call.1} parent=1 // pred_check_branch
      %6321 = sbr.rel (0) target = $region81
    $region80: #{tpu_custom_call.1} parent=1 // pred_region
      %6323 = dma.done [#allocation16], 128
    $region81: #{tpu_custom_call.1} parent=1 // pred_fallthru
      _
    // Predicated region
    $region82: #{tpu_custom_call.1} parent=1 // pred_check
      _
    $region83: #{tpu_custom_call.1} parent=1 // pred_check_branch
      %6325 = sbr.rel (0) target = $region85
    $region84: #{tpu_custom_call.1} parent=1 // pred_region
      %6327 = dma.done [#allocation19], 128
    $region85: #{tpu_custom_call.1} parent=1 // pred_fallthru
      _
    %6328 = vsyncpa [#allocation6], 1
    %6329 = vsyncpa [#allocation9], 1
    %6330 = vsyncpa [#allocation12], 1
    %6331 = vsyncpa [#allocation7], 1
    %6332 = vsyncpa [#allocation16], 1
    %6333 = vsyncpa [#allocation19], 1

</llo_original>
